<compile_context>
chip_gen: v7x
topology: tpu7x:2x2x1
jax: 0.10.0
libtpu: 0.0.40
codegen_flags: <defaults>
</compile_context>

<pallas_src>
import functools
import math

import jax
import jax.numpy as jnp
from jax.experimental import pallas as pl
from jax.experimental.pallas import tpu as pltpu


# ---------------------------------------------------------------------------
# In-kernel math helpers (f32; only Mosaic-supported primitives).
# ---------------------------------------------------------------------------
def _erf(x):
    # Abramowitz & Stegun 7.1.26, |err| <= 1.5e-7 (f32-exact for GELU).
    a1, a2, a3, a4, a5 = 0.254829592, -0.284496736, 1.421413741, -1.453152027, 1.061405429
    p = 0.3275911
    ax = jnp.abs(x)
    t = 1.0 / (1.0 + p * ax)
    poly = ((((a5 * t + a4) * t + a3) * t + a2) * t + a1) * t
    y = 1.0 - poly * jnp.exp(-ax * ax)
    return jnp.where(x < 0.0, -y, y)


def _gelu(x):
    return 0.5 * x * (1.0 + _erf(x * 0.7071067811865476))


def _ln(x, g, b, eps):
    mu = jnp.mean(x, axis=-1, keepdims=True)
    var = jnp.mean(jnp.square(x - mu), axis=-1, keepdims=True)
    return (x - mu) * jax.lax.rsqrt(var + eps) * g + b


def _softmax(s):
    s = s - jnp.max(s, axis=-1, keepdims=True)
    p = jnp.exp(s)
    return p * pl.reciprocal(jnp.sum(p, axis=-1, keepdims=True), approx=True)


def _mm(a, w, b=None):
    """bf16 MXU matmul with f32 accumulation (+ optional f32 bias)."""
    y = jnp.dot(a.astype(jnp.bfloat16), w.astype(jnp.bfloat16),
                preferred_element_type=jnp.float32)
    if b is not None:
        y = y + b
    return y


def _mha(q, k, v, mask, num_heads, scale):
    """Multi-head attention on one batch element.  q/k/v: (T, D), mask: (1, T)."""
    T, D = q.shape
    Dh = D // num_heads
    outs = []
    for h in range(num_heads):                       # static unroll, H small
        sl = slice(h * Dh, (h + 1) * Dh)
        qh = q[:, sl].astype(jnp.bfloat16)
        kh = k[:, sl].astype(jnp.bfloat16)
        vh = v[:, sl].astype(jnp.bfloat16)
        scores = jax.lax.dot_general(
            qh, kh, (((1,), (1,)), ((), ())),
            preferred_element_type=jnp.float32) * scale + mask
        probs = _softmax(scores)
        outs.append(jnp.dot(probs.astype(jnp.bfloat16), vh,
                            preferred_element_type=jnp.float32))
    return jnp.concatenate(outs, axis=-1)            # (T, D)


# ---------------------------------------------------------------------------
# BlockSpec helpers
# ---------------------------------------------------------------------------
_VMEM = pl.BlockSpec(memory_space=pltpu.MemorySpace.VMEM)


def _zero_map(*args, nd):
    return (0,) * nd


def _const_spec(a):
    """Full-array block with a constant index map (fetched once, stays in VMEM)."""
    return pl.BlockSpec(a.shape, functools.partial(_zero_map, nd=a.ndim))


# ---------------------------------------------------------------------------
# Fused pre-norm ViT encoder block (one kernel per layer, grid over batch)
# ---------------------------------------------------------------------------
def _vit_layer_kernel(*refs, num_heads, eps, scale, ident1, has_smap):
    if has_smap:
        (x_ref, m_ref, s_in_ref,
         ln1g, ln1b, qkv_w, qkv_b, o_w, o_b, ln2g, ln2b,
         fc1_w, fc1_b, fc2_w, fc2_b, sm_w, sm_b,
         xo_ref, so_ref) = refs
    else:
        (x_ref, m_ref,
         ln1g, ln1b, qkv_w, qkv_b, o_w, o_b, ln2g, ln2b,
         fc1_w, fc1_b, fc2_w, fc2_b,
         xo_ref) = refs

    x = x_ref[0].astype(jnp.float32)           # (T, D)
    mask = m_ref[0].astype(jnp.float32)        # (1, T) additive key mask
    D = x.shape[-1]

    # --- attention sub-block ---
    h = x if ident1 else _ln(x, ln1g[...], ln1b[...], eps)
    qkv = _mm(h, qkv_w[...], qkv_b[...])       # (T, 3D), fused Q/K/V matmul
    ctx = _mha(qkv[:, :D], qkv[:, D:2 * D], qkv[:, 2 * D:], mask, num_heads, scale)
    x = x + _mm(ctx, o_w[...], o_b[...])       # out-proj + residual (fused)

    # --- FFN sub-block ---
    h2 = _ln(x, ln2g[...], ln2b[...], eps)
    y = _gelu(_mm(h2, fc1_w[...], fc1_b[...]))
    x = x + _mm(y, fc2_w[...], fc2_b[...])     # fc2 + residual (fused)

    xo_ref[0] = x.astype(xo_ref.dtype)

    if has_smap:
        # side branch: side += gelu(hidden_out @ s_w + s_b), fused in-kernel.
        s_out = s_in_ref[0].astype(jnp.float32) + _gelu(_mm(x, sm_w[...], sm_b[...]))
        so_ref[0] = s_out.astype(so_ref.dtype)


def fused_vit_layer(x, mask3, p, num_heads, eps, *, ident1=False,
                    side=None, smap=None):
    """One VanillaViTLayer as a single Pallas kernel.  x: (B, T, D)."""
    B, T, D = x.shape
    scale = 1.0 / math.sqrt(D // num_heads)
    has_smap = smap is not None
    if has_smap:
        assert side is not None
    Ds = smap["w"].shape[1] if has_smap else 0

    weights = [p["ln1_g"], p["ln1_b"], p["qkv_w"], p["qkv_b"], p["o_w"], p["o_b"],
               p["ln2_g"], p["ln2_b"], p["fc1_w"], p["fc1_b"], p["fc2_w"], p["fc2_b"]]
    inputs = [x, mask3]
    in_specs = [pl.BlockSpec((1, T, D), lambda b: (b, 0, 0)),
                pl.BlockSpec((1, 1, T), lambda b: (b, 0, 0))]
    out_shape = jax.ShapeDtypeStruct((B, T, D), jnp.float32)
    out_specs = pl.BlockSpec((1, T, D), lambda b: (b, 0, 0))
    if has_smap:
        inputs.append(side)
        in_specs.append(pl.BlockSpec((1, T, Ds), lambda b: (b, 0, 0)))
        weights = weights + [smap["w"], smap["b"]]
        out_shape = (out_shape, jax.ShapeDtypeStruct((B, T, Ds), jnp.float32))
        out_specs = (out_specs, pl.BlockSpec((1, T, Ds), lambda b: (b, 0, 0)))
    inputs += weights
    in_specs += [_const_spec(w) for w in weights]

    # Advisory cost estimate so XLA can schedule the surrounding glue.
    dff = p["fc1_w"].shape[1]
    flops = 2 * B * T * D * (3 * D + 2 * T + D + 2 * dff) + 2 * B * T * D * Ds
    transc = B * T * (num_heads * T + dff + Ds)
    bytes_acc = int(sum(int(a.size) * a.dtype.itemsize for a in inputs)
                    + B * T * (D + Ds) * 4)
    cost = pl.CostEstimate(flops=int(flops), transcendentals=int(transc),
                           bytes_accessed=bytes_acc)

    return pl.pallas_call(
        functools.partial(_vit_layer_kernel, num_heads=num_heads, eps=eps,
                          scale=scale, ident1=ident1, has_smap=has_smap),
        grid=(B,),
        in_specs=in_specs,
        out_specs=out_specs,
        out_shape=out_shape,
        compiler_params=pltpu.CompilerParams(dimension_semantics=("parallel",)),
        cost_estimate=cost,
    )(*inputs)


# ---------------------------------------------------------------------------
# Fused patch embedding: conv(kernel=stride=P) as matmul + cls token + pos emb
# ---------------------------------------------------------------------------
def _embed_kernel(patch_ref, w_ref, b_ref, cls_ref, pos_ref, o_ref):
    pe = _mm(patch_ref[0], w_ref[...], b_ref[...])          # (n_patches, D)
    cls = cls_ref[0].astype(jnp.float32)                    # (1, D)
    h = jnp.concatenate([cls, pe], axis=0) + pos_ref[0].astype(jnp.float32)
    o_ref[0] = h.astype(o_ref.dtype)


def embed(patches, params):
    B, n_patches, K = patches.shape
    D = params["patch_w"].shape[1]
    T = n_patches + 1
    weights = [params["patch_w"], params["patch_b"],
               params["cls_token"], params["pos_emb"]]
    return pl.pallas_call(
        _embed_kernel,
        grid=(B,),
        in_specs=[pl.BlockSpec((1, n_patches, K), lambda b: (b, 0, 0))]
                 + [_const_spec(w) for w in weights],
        out_specs=pl.BlockSpec((1, T, D), lambda b: (b, 0, 0)),
        out_shape=jax.ShapeDtypeStruct((B, T, D), jnp.float32),
        compiler_params=pltpu.CompilerParams(dimension_semantics=("parallel",)),
    )(patches, *weights)


# ---------------------------------------------------------------------------
# Standalone LayerNorm over a (B, T, D) tensor (side-branch final norm)
# ---------------------------------------------------------------------------
def _ln3_kernel(x_ref, g_ref, b_ref, o_ref, *, eps):
    o_ref[0] = _ln(x_ref[0].astype(jnp.float32), g_ref[...], b_ref[...],
                   eps).astype(o_ref.dtype)


def layernorm3(x, g, b, eps):
    B, T, D = x.shape
    return pl.pallas_call(
        functools.partial(_ln3_kernel, eps=eps),
        grid=(B,),
        in_specs=[pl.BlockSpec((1, T, D), lambda i: (i, 0, 0)),
                  _const_spec(g), _const_spec(b)],
        out_specs=pl.BlockSpec((1, T, D), lambda i: (i, 0, 0)),
        out_shape=jax.ShapeDtypeStruct((B, T, D), jnp.float32),
        compiler_params=pltpu.CompilerParams(dimension_semantics=("parallel",)),
    )(x, g, b)


# ---------------------------------------------------------------------------
# Classifier head: final LayerNorm (CLS row) + Linear + Softmax, one kernel
# ---------------------------------------------------------------------------
def _classifier_kernel(x_ref, g_ref, bg_ref, w_ref, b_ref, o_ref, *, eps):
    x = x_ref[...].astype(jnp.float32)                       # (B, D) CLS tokens
    h = _ln(x, g_ref[...], bg_ref[...], eps)
    o_ref[...] = _softmax(_mm(h, w_ref[...], b_ref[...])).astype(o_ref.dtype)


def classifier_head(cls_tokens, params, eps):
    B, _ = cls_tokens.shape
    L = params["cls_w"].shape[1]
    return pl.pallas_call(
        functools.partial(_classifier_kernel, eps=eps),
        in_specs=[_VMEM] * 5,
        out_specs=_VMEM,
        out_shape=jax.ShapeDtypeStruct((B, L), jnp.float32),
    )(cls_tokens, params["final_ln_g"], params["final_ln_b"],
      params["cls_w"], params["cls_b"])


# ---------------------------------------------------------------------------
# Explainer MLP head: LN -> Linear -> GELU -> Linear -> GELU -> Linear (fused)
# ---------------------------------------------------------------------------
def _explainer_mlp_kernel(x_ref, g_ref, bg_ref, w1, b1, w2, b2, w3, b3, o_ref, *, eps):
    x = x_ref[0].astype(jnp.float32)
    h = _ln(x, g_ref[...], bg_ref[...], eps)
    h = _gelu(_mm(h, w1[...], b1[...]))
    h = _gelu(_mm(h, w2[...], b2[...]))
    o_ref[0] = _mm(h, w3[...], b3[...]).astype(o_ref.dtype)


def explainer_mlp(x, params):
    B, T, Ds = x.shape
    L = params["mlp3_w"].shape[1]
    weights = [params["mlp_ln_g"], params["mlp_ln_b"],
               params["mlp1_w"], params["mlp1_b"],
               params["mlp2_w"], params["mlp2_b"],
               params["mlp3_w"], params["mlp3_b"]]
    return pl.pallas_call(
        functools.partial(_explainer_mlp_kernel, eps=1e-5),  # nn.LayerNorm default
        grid=(B,),
        in_specs=[pl.BlockSpec((1, T, Ds), lambda b: (b, 0, 0))]
                 + [_const_spec(w) for w in weights],
        out_specs=pl.BlockSpec((1, T, L), lambda b: (b, 0, 0)),
        out_shape=jax.ShapeDtypeStruct((B, T, L), jnp.float32),
        compiler_params=pltpu.CompilerParams(dimension_semantics=("parallel",)),
    )(x, *weights)


# ---------------------------------------------------------------------------
# Parameter initialization (deterministic, synthetic).  Matmul weights are
# stored in bf16 (halves HBM/DMA bytes); biases / LN params stay f32.
# ---------------------------------------------------------------------------
def _init_linear(key, d_in, d_out, scale=0.02):
    kw, kb = jax.random.split(key)
    w = (jax.random.normal(kw, (d_in, d_out), jnp.float32) * scale).astype(jnp.bfloat16)
    b = jax.random.normal(kb, (1, d_out), jnp.float32) * scale
    return w, b


def _init_vit_layer(key, d, d_ff):
    ks = jax.random.split(key, 6)
    qw, qb = _init_linear(ks[0], d, d)
    kw, kb = _init_linear(ks[1], d, d)
    vw, vb = _init_linear(ks[2], d, d)
    ow, ob = _init_linear(ks[3], d, d)
    f1w, f1b = _init_linear(ks[4], d, d_ff)
    f2w, f2b = _init_linear(ks[5], d_ff, d)
    ones = jnp.ones((1, d), jnp.float32)
    zeros = jnp.zeros((1, d), jnp.float32)
    return dict(
        ln1_g=ones, ln1_b=zeros,
        qkv_w=jnp.concatenate([qw, kw, vw], axis=1),   # (d, 3d) fused QKV
        qkv_b=jnp.concatenate([qb, kb, vb], axis=1),   # (1, 3d)
        o_w=ow, o_b=ob,
        ln2_g=ones, ln2_b=zeros,
        fc1_w=f1w, fc1_b=f1b, fc2_w=f2w, fc2_b=f2b,
    )


def init_params(key, cfg):
    D = cfg["hidden_size"]
    Ds = cfg["s_attn_hidden_size"]
    L = cfg["num_labels"]
    W = cfg["explainer_s_head_hidden_size"]
    C = cfg["img_channels"]
    P = cfg["img_patch_size"]
    n_patches = (cfg["img_px_size"] // P) ** 2

    keys = iter(jax.random.split(key, 64))
    nxt = lambda: next(keys)

    p = {}
    # VanillaViTEmbeddings: patch conv (hidden, C, P, P) stored pre-flattened.
    p["patch_w"], p["patch_b"] = _init_linear(nxt(), C * P * P, D)
    p["cls_token"] = jax.random.normal(nxt(), (1, 1, D), jnp.float32) * 0.02
    p["pos_emb"] = jax.random.normal(nxt(), (1, n_patches + 1, D), jnp.float32) * 0.02
    # Main encoder layers.
    p["layers"] = [_init_vit_layer(nxt(), D, cfg["intermediate_size"])
                   for _ in range(cfg["num_hidden_layers"])]
    # Side branch (num_side_branches = 1) maps + layers.
    p["s_map"], p["s_layers"] = [], []
    for _ in range(cfg["num_hidden_layers"]):
        w, b = _init_linear(nxt(), D, Ds)
        p["s_map"].append(dict(w=w, b=b))
        p["s_layers"].append(_init_vit_layer(nxt(), Ds, cfg["s_attn_intermediate_size"]))
    # Final norms.
    p["final_ln_g"] = jnp.ones((1, D), jnp.float32)
    p["final_ln_b"] = jnp.zeros((1, D), jnp.float32)
    p["s_ln_g"] = jnp.ones((1, Ds), jnp.float32)
    p["s_ln_b"] = jnp.zeros((1, Ds), jnp.float32)
    # Classifier head.
    p["cls_w"], p["cls_b"] = _init_linear(nxt(), D, L)
    # Explainer attention stack.
    p["exp_attn"] = [_init_vit_layer(nxt(), Ds, cfg["s_attn_intermediate_size"])
                     for _ in range(cfg["explainer_s_attn_num_layers"])]
    # Explainer MLP head.
    p["mlp_ln_g"] = jnp.ones((1, Ds), jnp.float32)
    p["mlp_ln_b"] = jnp.zeros((1, Ds), jnp.float32)
    p["mlp1_w"], p["mlp1_b"] = _init_linear(nxt(), Ds, W)
    p["mlp2_w"], p["mlp2_b"] = _init_linear(nxt(), W, W)
    p["mlp3_w"], p["mlp3_b"] = _init_linear(nxt(), W, L)
    return p


# ---------------------------------------------------------------------------
# LttViTExplainer.forward (eval mode: dropouts are identities)
# ---------------------------------------------------------------------------
def ltt_vit_explainer_forward(params, pixel_values, attention_mask,
                              surrogate_grand, surrogate_null, cfg):
    B, C, HW, _ = pixel_values.shape
    P = cfg["img_patch_size"]
    n_side = HW // P
    n_patches = n_side * n_side
    T = n_patches + 1
    Ds = cfg["s_attn_hidden_size"]
    H = cfg["num_attention_heads"]
    eps = cfg["layer_norm_eps"]

    # --- patch extraction (layout glue only) + fused embedding kernel ---
    patches = pixel_values.reshape(B, C, n_side, P, n_side, P)
    patches = patches.transpose(0, 2, 4, 1, 3, 5).reshape(B, n_patches, C * P * P)
    hidden = embed(patches, params)                           # (B, T, D)

    # Additive attention mask over keys (1 = keep, 0 = masked), per batch elem.
    mask3 = ((1.0 - attention_mask.astype(jnp.float32))
             * jnp.float32(-1e9)).reshape(B, 1, T)

    # --- LttViTMultiEncoder, single side branch, no frozen layers ---
    side = jnp.zeros((B, T, Ds), jnp.float32)
    for i_ly in range(cfg["num_hidden_layers"]):
        hidden, side = fused_vit_layer(hidden, mask3, params["layers"][i_ly], H, eps,
                                       side=side, smap=params["s_map"][i_ly])
        side = fused_vit_layer(side, mask3, params["s_layers"][i_ly], H, eps)

    # --- classifier: LN(hidden)[:,0,:] == LN(hidden[:,0,:]); fused LN+Linear+Softmax ---
    logits = classifier_head(hidden[:, 0, :], params, eps)

    # --- side-branch final LayerNorm ---
    side = layernorm3(side, params["s_ln_g"], params["s_ln_b"], eps)

    # --- explainer attention stack (layer 0 replaces its pre-norm with identity) ---
    exp_out = side
    for i_ly in range(cfg["explainer_s_attn_num_layers"]):
        exp_out = fused_vit_layer(exp_out, mask3, params["exp_attn"][i_ly], H, eps,
                                  ident1=(i_ly == 0))

    # --- explainer MLP head (LN + 3 linears + 2 GELUs, one kernel) ---
    exp_out = explainer_mlp(exp_out, params)                  # (B, T, num_labels)

    if cfg["explainer_normalize"]:
        # TODO(synk): normalize_shapley_explanation is not defined in the reference
        # snippet; running with explainer_normalize=False.
        pass

    # Drop CLS token, (B, n_players, num_labels) -> (B, num_labels, n_players).
    exp_out = jnp.transpose(exp_out[:, 1:, :], (0, 2, 1))
    return exp_out, logits


# ---------------------------------------------------------------------------
if __name__ == "__main__":
    cfg = dict(
        attention_probs_dropout_prob=0.0,
        explainer_s_attn_num_layers=2,
        explainer_s_head_hidden_size=24,
        explainer_normalize=False,
        hidden_dropout_prob=0.0,
        hidden_size=32,
        intermediate_size=64,
        layer_norm_eps=1e-12,
        num_attention_heads=4,
        num_hidden_layers=2,
        num_labels=10,
        s_attn_hidden_size=16,
        s_attn_intermediate_size=32,
        img_channels=3,
        img_px_size=16,
        img_patch_size=8,
    )

    key = jax.random.PRNGKey(0)
    k_params, k_px, k_grand, k_null = jax.random.split(key, 4)
    params = init_params(k_params, cfg)

    B = 2
    n_players = (cfg["img_px_size"] // cfg["img_patch_size"]) ** 2
    T = 1 + n_players

    pixel_values = jax.random.normal(
        k_px, (B, cfg["img_channels"], cfg["img_px_size"], cfg["img_px_size"]),
        jnp.float32)
    attention_mask = jnp.ones((B, T), jnp.float32)
    surrogate_grand = jax.random.normal(k_grand, (B, cfg["num_labels"]), jnp.float32)
    surrogate_null = jax.random.normal(k_null, (1, cfg["num_labels"]), jnp.float32)

    fwd = jax.jit(functools.partial(ltt_vit_explainer_forward, cfg=cfg))
    exp_out, logits = fwd(params, pixel_values, attention_mask,
                          surrogate_grand, surrogate_null)
    jax.block_until_ready((exp_out, logits))

    assert exp_out.shape == (B, cfg["num_labels"], n_players), exp_out.shape
    assert logits.shape == (B, cfg["num_labels"]), logits.shape
    assert bool(jnp.all(jnp.isfinite(exp_out))) and bool(jnp.all(jnp.isfinite(logits)))
    print("KERNEL_OK")
</pallas_src>

<mosaic_0001>
module attributes {stable_mosaic.version = 11 : i64} {
  func.func @_embed_kernel(%arg0: i32, %arg1: memref<1x4x192xf32, #tpu.memory_space<vmem>>, %arg2: memref<192x32xbf16, #tpu.memory_space<vmem>>, %arg3: memref<1x32xf32, #tpu.memory_space<vmem>>, %arg4: memref<1x1x32xf32, #tpu.memory_space<vmem>>, %arg5: memref<1x5x32xf32, #tpu.memory_space<vmem>>, %arg6: memref<1x5x32xf32, #tpu.memory_space<vmem>>) attributes {dimension_semantics = [#tpu.dimension_semantics<parallel>], iteration_bounds = array<i64: 2>, scalar_prefetch = 0 : i64, scratch_operands = 0 : i64, tpu.core_type = #tpu.core_type<tc>, window_params = [{transform_indices = @transform_0, window_bounds = array<i64: 1, 4, 192>}, {pipeline_mode = #tpu.pipeline_mode<synchronous>, transform_indices = @transform_1, window_bounds = array<i64: 192, 32>}, {pipeline_mode = #tpu.pipeline_mode<synchronous>, transform_indices = @transform_2, window_bounds = array<i64: 1, 32>}, {pipeline_mode = #tpu.pipeline_mode<synchronous>, transform_indices = @transform_3, window_bounds = array<i64: 1, 1, 32>}, {pipeline_mode = #tpu.pipeline_mode<synchronous>, transform_indices = @transform_4, window_bounds = array<i64: 1, 5, 32>}, {transform_indices = @transform_5, window_bounds = array<i64: 1, 5, 32>}]} {
    %c0 = arith.constant 0 : index
    %c0_0 = arith.constant 0 : index
    %c0_1 = arith.constant 0 : index
    %0 = vector.load %arg1[%c0, %c0_0, %c0_1] : memref<1x4x192xf32, #tpu.memory_space<vmem>>, vector<1x4x192xf32>
    %1 = vector.shape_cast %0 : vector<1x4x192xf32> to vector<4x192xf32>
    %c0_2 = arith.constant 0 : index
    %c0_3 = arith.constant 0 : index
    %2 = vector.load %arg2[%c0_2, %c0_3] : memref<192x32xbf16, #tpu.memory_space<vmem>>, vector<192x32xbf16>
    %c0_4 = arith.constant 0 : index
    %c0_5 = arith.constant 0 : index
    %3 = vector.load %arg3[%c0_4, %c0_5] : memref<1x32xf32, #tpu.memory_space<vmem>>, vector<1x32xf32>
    %4 = arith.truncf %1 : vector<4x192xf32> to vector<4x192xbf16>
    %cst = arith.constant dense<0.000000e+00> : vector<4x32xf32>
    %5 = tpu.matmul %4, %2, %cst {dimension_numbers = #tpu.dot_dimension_numbers<[1], [0], [0], [1], [0, 0, 1, 1], [], []>} : vector<4x192xbf16>, vector<192x32xbf16>, vector<4x32xf32> -> vector<4x32xf32>
    %6 = vector.broadcast %3 : vector<1x32xf32> to vector<4x32xf32>
    %7 = arith.addf %5, %6 : vector<4x32xf32>
    %c0_6 = arith.constant 0 : index
    %c0_7 = arith.constant 0 : index
    %c0_8 = arith.constant 0 : index
    %8 = vector.load %arg4[%c0_6, %c0_7, %c0_8] : memref<1x1x32xf32, #tpu.memory_space<vmem>>, vector<1x1x32xf32>
    %9 = vector.shape_cast %8 : vector<1x1x32xf32> to vector<1x32xf32>
    %10 = tpu.concatenate %9, %7 in 0 : vector<1x32xf32>, vector<4x32xf32> -> vector<5x32xf32>
    %c0_9 = arith.constant 0 : index
    %c0_10 = arith.constant 0 : index
    %c0_11 = arith.constant 0 : index
    %11 = vector.load %arg5[%c0_9, %c0_10, %c0_11] : memref<1x5x32xf32, #tpu.memory_space<vmem>>, vector<1x5x32xf32>
    %12 = vector.shape_cast %11 : vector<1x5x32xf32> to vector<5x32xf32>
    %13 = arith.addf %10, %12 : vector<5x32xf32>
    %c0_12 = arith.constant 0 : index
    %c0_13 = arith.constant 0 : index
    %c0_14 = arith.constant 0 : index
    %14 = vector.load %arg6[%c0_12, %c0_13, %c0_14] : memref<1x5x32xf32, #tpu.memory_space<vmem>>, vector<1x5x32xf32>
    %15 = vector.shape_cast %14 : vector<1x5x32xf32> to vector<5x32xf32>
    %16 = vector.shape_cast %13 : vector<5x32xf32> to vector<1x5x32xf32>
    tpu.vector_store %arg6[%c0_12, %c0_13, %c0_14], %16 {strides = array<i32>} : memref<1x5x32xf32, #tpu.memory_space<vmem>>, vector<1x5x32xf32>,
    return
  }
  func.func @transform_0(%arg0: i32) -> (i32, i32, i32) {
    %c0_i32 = arith.constant 0 : i32
    %c0_i32_0 = arith.constant 0 : i32
    %c0_i32_1 = arith.constant 0 : i32
    return %arg0, %c0_i32, %c0_i32_0 : i32, i32, i32
  }
  func.func @transform_1(%arg0: i32) -> (i32, i32) {
    %c0_i32 = arith.constant 0 : i32
    %c0_i32_0 = arith.constant 0 : i32
    %c0_i32_1 = arith.constant 0 : i32
    return %c0_i32, %c0_i32_0 : i32, i32
  }
  func.func @transform_2(%arg0: i32) -> (i32, i32) {
    %c0_i32 = arith.constant 0 : i32
    %c0_i32_0 = arith.constant 0 : i32
    %c0_i32_1 = arith.constant 0 : i32
    return %c0_i32, %c0_i32_0 : i32, i32
  }
  func.func @transform_3(%arg0: i32) -> (i32, i32, i32) {
    %c0_i32 = arith.constant 0 : i32
    %c0_i32_0 = arith.constant 0 : i32
    %c0_i32_1 = arith.constant 0 : i32
    %c0_i32_2 = arith.constant 0 : i32
    return %c0_i32, %c0_i32_0, %c0_i32_1 : i32, i32, i32
  }
  func.func @transform_4(%arg0: i32) -> (i32, i32, i32) {
    %c0_i32 = arith.constant 0 : i32
    %c0_i32_0 = arith.constant 0 : i32
    %c0_i32_1 = arith.constant 0 : i32
    %c0_i32_2 = arith.constant 0 : i32
    return %c0_i32, %c0_i32_0, %c0_i32_1 : i32, i32, i32
  }
  func.func @transform_5(%arg0: i32) -> (i32, i32, i32) {
    %c0_i32 = arith.constant 0 : i32
    %c0_i32_0 = arith.constant 0 : i32
    %c0_i32_1 = arith.constant 0 : i32
    return %arg0, %c0_i32, %c0_i32_0 : i32, i32, i32
  }
}

module attributes {stable_mosaic.version = 11 : i64} {
  func.func @_vit_layer_kernel(%arg0: i32, %arg1: memref<1x5x16xf32, #tpu.memory_space<vmem>>, %arg2: memref<1x1x5xf32, #tpu.memory_space<vmem>>, %arg3: memref<1x16xf32, #tpu.memory_space<vmem>>, %arg4: memref<1x16xf32, #tpu.memory_space<vmem>>, %arg5: memref<16x48xbf16, #tpu.memory_space<vmem>>, %arg6: memref<1x48xf32, #tpu.memory_space<vmem>>, %arg7: memref<16x16xbf16, #tpu.memory_space<vmem>>, %arg8: memref<1x16xf32, #tpu.memory_space<vmem>>, %arg9: memref<1x16xf32, #tpu.memory_space<vmem>>, %arg10: memref<1x16xf32, #tpu.memory_space<vmem>>, %arg11: memref<16x32xbf16, #tpu.memory_space<vmem>>, %arg12: memref<1x32xf32, #tpu.memory_space<vmem>>, %arg13: memref<32x16xbf16, #tpu.memory_space<vmem>>, %arg14: memref<1x16xf32, #tpu.memory_space<vmem>>, %arg15: memref<1x5x16xf32, #tpu.memory_space<vmem>>) attributes {dimension_semantics = [#tpu.dimension_semantics<parallel>], iteration_bounds = array<i64: 2>, scalar_prefetch = 0 : i64, scratch_operands = 0 : i64, tpu.core_type = #tpu.core_type<tc>, window_params = [{transform_indices = @transform_0, window_bounds = array<i64: 1, 5, 16>}, {transform_indices = @transform_1, window_bounds = array<i64: 1, 1, 5>}, {pipeline_mode = #tpu.pipeline_mode<synchronous>, transform_indices = @transform_2, window_bounds = array<i64: 1, 16>}, {pipeline_mode = #tpu.pipeline_mode<synchronous>, transform_indices = @transform_3, window_bounds = array<i64: 1, 16>}, {pipeline_mode = #tpu.pipeline_mode<synchronous>, transform_indices = @transform_4, window_bounds = array<i64: 16, 48>}, {pipeline_mode = #tpu.pipeline_mode<synchronous>, transform_indices = @transform_5, window_bounds = array<i64: 1, 48>}, {pipeline_mode = #tpu.pipeline_mode<synchronous>, transform_indices = @transform_6, window_bounds = array<i64: 16, 16>}, {pipeline_mode = #tpu.pipeline_mode<synchronous>, transform_indices = @transform_7, window_bounds = array<i64: 1, 16>}, {pipeline_mode = #tpu.pipeline_mode<synchronous>, transform_indices = @transform_8, window_bounds = array<i64: 1, 16>}, {pipeline_mode = #tpu.pipeline_mode<synchronous>, transform_indices = @transform_9, window_bounds = array<i64: 1, 16>}, {pipeline_mode = #tpu.pipeline_mode<synchronous>, transform_indices = @transform_10, window_bounds = array<i64: 16, 32>}, {pipeline_mode = #tpu.pipeline_mode<synchronous>, transform_indices = @transform_11, window_bounds = array<i64: 1, 32>}, {pipeline_mode = #tpu.pipeline_mode<synchronous>, transform_indices = @transform_12, window_bounds = array<i64: 32, 16>}, {pipeline_mode = #tpu.pipeline_mode<synchronous>, transform_indices = @transform_13, window_bounds = array<i64: 1, 16>}, {transform_indices = @transform_14, window_bounds = array<i64: 1, 5, 16>}]} {
    %c0 = arith.constant 0 : index
    %c0_0 = arith.constant 0 : index
    %c0_1 = arith.constant 0 : index
    %0 = vector.load %arg1[%c0, %c0_0, %c0_1] : memref<1x5x16xf32, #tpu.memory_space<vmem>>, vector<1x5x16xf32>
    %1 = vector.shape_cast %0 : vector<1x5x16xf32> to vector<5x16xf32>
    %c0_2 = arith.constant 0 : index
    %c0_3 = arith.constant 0 : index
    %c0_4 = arith.constant 0 : index
    %2 = vector.load %arg2[%c0_2, %c0_3, %c0_4] : memref<1x1x5xf32, #tpu.memory_space<vmem>>, vector<1x1x5xf32>
    %3 = vector.shape_cast %2 : vector<1x1x5xf32> to vector<1x5xf32>
    %c0_5 = arith.constant 0 : index
    %c0_6 = arith.constant 0 : index
    %4 = vector.load %arg3[%c0_5, %c0_6] : memref<1x16xf32, #tpu.memory_space<vmem>>, vector<1x16xf32>
    %c0_7 = arith.constant 0 : index
    %c0_8 = arith.constant 0 : index
    %5 = vector.load %arg4[%c0_7, %c0_8] : memref<1x16xf32, #tpu.memory_space<vmem>>, vector<1x16xf32>
    %cst = arith.constant dense<0.000000e+00> : vector<5xf32>
    %6 = vector.multi_reduction <add>, %1, %cst [1] : vector<5x16xf32> to vector<5xf32>
    %7 = vector.shape_cast %6 : vector<5xf32> to vector<5x1xf32>
    %cst_9 = arith.constant 1.600000e+01 : f32
    %8 = vector.broadcast %cst_9 : f32 to vector<5x1xf32>
    %9 = arith.divf %7, %8 : vector<5x1xf32>
    %10 = vector.broadcast %9 : vector<5x1xf32> to vector<5x16xf32>
    %11 = arith.subf %1, %10 : vector<5x16xf32>
    %12 = arith.mulf %11, %11 : vector<5x16xf32>
    %cst_10 = arith.constant dense<0.000000e+00> : vector<5xf32>
    %13 = vector.multi_reduction <add>, %12, %cst_10 [1] : vector<5x16xf32> to vector<5xf32>
    %14 = vector.shape_cast %13 : vector<5xf32> to vector<5x1xf32>
    %cst_11 = arith.constant 1.600000e+01 : f32
    %15 = vector.broadcast %cst_11 : f32 to vector<5x1xf32>
    %16 = arith.divf %14, %15 : vector<5x1xf32>
    %17 = vector.broadcast %9 : vector<5x1xf32> to vector<5x16xf32>
    %18 = arith.subf %1, %17 : vector<5x16xf32>
    %cst_12 = arith.constant 9.99999996E-13 : f32
    %19 = vector.broadcast %cst_12 : f32 to vector<5x1xf32>
    %20 = arith.addf %16, %19 : vector<5x1xf32>
    %21 = math.rsqrt %20 : vector<5x1xf32>
    %22 = vector.broadcast %21 : vector<5x1xf32> to vector<5x16xf32>
    %23 = arith.mulf %18, %22 : vector<5x16xf32>
    %24 = vector.broadcast %4 : vector<1x16xf32> to vector<5x16xf32>
    %25 = arith.mulf %23, %24 : vector<5x16xf32>
    %26 = vector.broadcast %5 : vector<1x16xf32> to vector<5x16xf32>
    %27 = arith.addf %25, %26 : vector<5x16xf32>
    %c0_13 = arith.constant 0 : index
    %c0_14 = arith.constant 0 : index
    %28 = vector.load %arg5[%c0_13, %c0_14] : memref<16x48xbf16, #tpu.memory_space<vmem>>, vector<16x48xbf16>
    %c0_15 = arith.constant 0 : index
    %c0_16 = arith.constant 0 : index
    %29 = vector.load %arg6[%c0_15, %c0_16] : memref<1x48xf32, #tpu.memory_space<vmem>>, vector<1x48xf32>
    %30 = arith.truncf %27 : vector<5x16xf32> to vector<5x16xbf16>
    %cst_17 = arith.constant dense<0.000000e+00> : vector<5x48xf32>
    %31 = tpu.matmul %30, %28, %cst_17 {dimension_numbers = #tpu.dot_dimension_numbers<[1], [0], [0], [1], [0, 0, 1, 1], [], []>} : vector<5x16xbf16>, vector<16x48xbf16>, vector<5x48xf32> -> vector<5x48xf32>
    %32 = vector.broadcast %29 : vector<1x48xf32> to vector<5x48xf32>
    %33 = arith.addf %31, %32 : vector<5x48xf32>
    %34 = vector.extract_strided_slice %33 {offsets = [0, 0], sizes = [5, 16], strides = [1, 1]} : vector<5x48xf32> to vector<5x16xf32>
    %35 = vector.extract_strided_slice %33 {offsets = [0, 16], sizes = [5, 16], strides = [1, 1]} : vector<5x48xf32> to vector<5x16xf32>
    %36 = vector.extract_strided_slice %33 {offsets = [0, 32], sizes = [5, 16], strides = [1, 1]} : vector<5x48xf32> to vector<5x16xf32>
    %37 = vector.extract_strided_slice %34 {offsets = [0, 0], sizes = [5, 4], strides = [1, 1]} : vector<5x16xf32> to vector<5x4xf32>
    %38 = arith.truncf %37 : vector<5x4xf32> to vector<5x4xbf16>
    %39 = vector.extract_strided_slice %35 {offsets = [0, 0], sizes = [5, 4], strides = [1, 1]} : vector<5x16xf32> to vector<5x4xf32>
    %40 = arith.truncf %39 : vector<5x4xf32> to vector<5x4xbf16>
    %41 = vector.extract_strided_slice %36 {offsets = [0, 0], sizes = [5, 4], strides = [1, 1]} : vector<5x16xf32> to vector<5x4xf32>
    %42 = arith.truncf %41 : vector<5x4xf32> to vector<5x4xbf16>
    %cst_18 = arith.constant dense<0.000000e+00> : vector<5x5xf32>
    %43 = tpu.matmul %38, %40, %cst_18 {dimension_numbers = #tpu.dot_dimension_numbers<[1], [1], [0], [0], [0, 0, 1, 0], [], []>} : vector<5x4xbf16>, vector<5x4xbf16>, vector<5x5xf32> -> vector<5x5xf32>
    %cst_19 = arith.constant 5.000000e-01 : f32
    %44 = vector.broadcast %cst_19 : f32 to vector<5x5xf32>
    %45 = arith.mulf %43, %44 : vector<5x5xf32>
    %46 = vector.broadcast %3 : vector<1x5xf32> to vector<5x5xf32>
    %47 = arith.addf %45, %46 : vector<5x5xf32>
    %cst_20 = arith.constant dense<0xFF800000> : vector<5xf32>
    %48 = vector.multi_reduction <maximumf>, %47, %cst_20 [1] : vector<5x5xf32> to vector<5xf32>
    %49 = vector.shape_cast %48 : vector<5xf32> to vector<5x1xf32>
    %50 = vector.broadcast %49 : vector<5x1xf32> to vector<5x5xf32>
    %51 = arith.subf %47, %50 : vector<5x5xf32>
    %52 = math.exp %51 : vector<5x5xf32>
    %cst_21 = arith.constant dense<0.000000e+00> : vector<5xf32>
    %53 = vector.multi_reduction <add>, %52, %cst_21 [1] : vector<5x5xf32> to vector<5xf32>
    %54 = vector.shape_cast %53 : vector<5xf32> to vector<5x1xf32>
    %55 = tpu.reciprocal %54 {approx = true} : vector<5x1xf32> -> vector<5x1xf32>
    %56 = vector.broadcast %55 : vector<5x1xf32> to vector<5x5xf32>
    %57 = arith.mulf %52, %56 : vector<5x5xf32>
    %58 = arith.truncf %57 : vector<5x5xf32> to vector<5x5xbf16>
    %cst_22 = arith.constant dense<0.000000e+00> : vector<5x4xf32>
    %59 = tpu.matmul %58, %42, %cst_22 {dimension_numbers = #tpu.dot_dimension_numbers<[1], [0], [0], [1], [0, 0, 1, 1], [], []>} : vector<5x5xbf16>, vector<5x4xbf16>, vector<5x4xf32> -> vector<5x4xf32>
    %60 = vector.extract_strided_slice %34 {offsets = [0, 4], sizes = [5, 4], strides = [1, 1]} : vector<5x16xf32> to vector<5x4xf32>
    %61 = arith.truncf %60 : vector<5x4xf32> to vector<5x4xbf16>
    %62 = vector.extract_strided_slice %35 {offsets = [0, 4], sizes = [5, 4], strides = [1, 1]} : vector<5x16xf32> to vector<5x4xf32>
    %63 = arith.truncf %62 : vector<5x4xf32> to vector<5x4xbf16>
    %64 = vector.extract_strided_slice %36 {offsets = [0, 4], sizes = [5, 4], strides = [1, 1]} : vector<5x16xf32> to vector<5x4xf32>
    %65 = arith.truncf %64 : vector<5x4xf32> to vector<5x4xbf16>
    %cst_23 = arith.constant dense<0.000000e+00> : vector<5x5xf32>
    %66 = tpu.matmul %61, %63, %cst_23 {dimension_numbers = #tpu.dot_dimension_numbers<[1], [1], [0], [0], [0, 0, 1, 0], [], []>} : vector<5x4xbf16>, vector<5x4xbf16>, vector<5x5xf32> -> vector<5x5xf32>
    %cst_24 = arith.constant 5.000000e-01 : f32
    %67 = vector.broadcast %cst_24 : f32 to vector<5x5xf32>
    %68 = arith.mulf %66, %67 : vector<5x5xf32>
    %69 = vector.broadcast %3 : vector<1x5xf32> to vector<5x5xf32>
    %70 = arith.addf %68, %69 : vector<5x5xf32>
    %cst_25 = arith.constant dense<0xFF800000> : vector<5xf32>
    %71 = vector.multi_reduction <maximumf>, %70, %cst_25 [1] : vector<5x5xf32> to vector<5xf32>
    %72 = vector.shape_cast %71 : vector<5xf32> to vector<5x1xf32>
    %73 = vector.broadcast %72 : vector<5x1xf32> to vector<5x5xf32>
    %74 = arith.subf %70, %73 : vector<5x5xf32>
    %75 = math.exp %74 : vector<5x5xf32>
    %cst_26 = arith.constant dense<0.000000e+00> : vector<5xf32>
    %76 = vector.multi_reduction <add>, %75, %cst_26 [1] : vector<5x5xf32> to vector<5xf32>
    %77 = vector.shape_cast %76 : vector<5xf32> to vector<5x1xf32>
    %78 = tpu.reciprocal %77 {approx = true} : vector<5x1xf32> -> vector<5x1xf32>
    %79 = vector.broadcast %78 : vector<5x1xf32> to vector<5x5xf32>
    %80 = arith.mulf %75, %79 : vector<5x5xf32>
    %81 = arith.truncf %80 : vector<5x5xf32> to vector<5x5xbf16>
    %cst_27 = arith.constant dense<0.000000e+00> : vector<5x4xf32>
    %82 = tpu.matmul %81, %65, %cst_27 {dimension_numbers = #tpu.dot_dimension_numbers<[1], [0], [0], [1], [0, 0, 1, 1], [], []>} : vector<5x5xbf16>, vector<5x4xbf16>, vector<5x4xf32> -> vector<5x4xf32>
    %83 = vector.extract_strided_slice %34 {offsets = [0, 8], sizes = [5, 4], strides = [1, 1]} : vector<5x16xf32> to vector<5x4xf32>
    %84 = arith.truncf %83 : vector<5x4xf32> to vector<5x4xbf16>
    %85 = vector.extract_strided_slice %35 {offsets = [0, 8], sizes = [5, 4], strides = [1, 1]} : vector<5x16xf32> to vector<5x4xf32>
    %86 = arith.truncf %85 : vector<5x4xf32> to vector<5x4xbf16>
    %87 = vector.extract_strided_slice %36 {offsets = [0, 8], sizes = [5, 4], strides = [1, 1]} : vector<5x16xf32> to vector<5x4xf32>
    %88 = arith.truncf %87 : vector<5x4xf32> to vector<5x4xbf16>
    %cst_28 = arith.constant dense<0.000000e+00> : vector<5x5xf32>
    %89 = tpu.matmul %84, %86, %cst_28 {dimension_numbers = #tpu.dot_dimension_numbers<[1], [1], [0], [0], [0, 0, 1, 0], [], []>} : vector<5x4xbf16>, vector<5x4xbf16>, vector<5x5xf32> -> vector<5x5xf32>
    %cst_29 = arith.constant 5.000000e-01 : f32
    %90 = vector.broadcast %cst_29 : f32 to vector<5x5xf32>
    %91 = arith.mulf %89, %90 : vector<5x5xf32>
    %92 = vector.broadcast %3 : vector<1x5xf32> to vector<5x5xf32>
    %93 = arith.addf %91, %92 : vector<5x5xf32>
    %cst_30 = arith.constant dense<0xFF800000> : vector<5xf32>
    %94 = vector.multi_reduction <maximumf>, %93, %cst_30 [1] : vector<5x5xf32> to vector<5xf32>
    %95 = vector.shape_cast %94 : vector<5xf32> to vector<5x1xf32>
    %96 = vector.broadcast %95 : vector<5x1xf32> to vector<5x5xf32>
    %97 = arith.subf %93, %96 : vector<5x5xf32>
    %98 = math.exp %97 : vector<5x5xf32>
    %cst_31 = arith.constant dense<0.000000e+00> : vector<5xf32>
    %99 = vector.multi_reduction <add>, %98, %cst_31 [1] : vector<5x5xf32> to vector<5xf32>
    %100 = vector.shape_cast %99 : vector<5xf32> to vector<5x1xf32>
    %101 = tpu.reciprocal %100 {approx = true} : vector<5x1xf32> -> vector<5x1xf32>
    %102 = vector.broadcast %101 : vector<5x1xf32> to vector<5x5xf32>
    %103 = arith.mulf %98, %102 : vector<5x5xf32>
    %104 = arith.truncf %103 : vector<5x5xf32> to vector<5x5xbf16>
    %cst_32 = arith.constant dense<0.000000e+00> : vector<5x4xf32>
    %105 = tpu.matmul %104, %88, %cst_32 {dimension_numbers = #tpu.dot_dimension_numbers<[1], [0], [0], [1], [0, 0, 1, 1], [], []>} : vector<5x5xbf16>, vector<5x4xbf16>, vector<5x4xf32> -> vector<5x4xf32>
    %106 = vector.extract_strided_slice %34 {offsets = [0, 12], sizes = [5, 4], strides = [1, 1]} : vector<5x16xf32> to vector<5x4xf32>
    %107 = arith.truncf %106 : vector<5x4xf32> to vector<5x4xbf16>
    %108 = vector.extract_strided_slice %35 {offsets = [0, 12], sizes = [5, 4], strides = [1, 1]} : vector<5x16xf32> to vector<5x4xf32>
    %109 = arith.truncf %108 : vector<5x4xf32> to vector<5x4xbf16>
    %110 = vector.extract_strided_slice %36 {offsets = [0, 12], sizes = [5, 4], strides = [1, 1]} : vector<5x16xf32> to vector<5x4xf32>
    %111 = arith.truncf %110 : vector<5x4xf32> to vector<5x4xbf16>
    %cst_33 = arith.constant dense<0.000000e+00> : vector<5x5xf32>
    %112 = tpu.matmul %107, %109, %cst_33 {dimension_numbers = #tpu.dot_dimension_numbers<[1], [1], [0], [0], [0, 0, 1, 0], [], []>} : vector<5x4xbf16>, vector<5x4xbf16>, vector<5x5xf32> -> vector<5x5xf32>
    %cst_34 = arith.constant 5.000000e-01 : f32
    %113 = vector.broadcast %cst_34 : f32 to vector<5x5xf32>
    %114 = arith.mulf %112, %113 : vector<5x5xf32>
    %115 = vector.broadcast %3 : vector<1x5xf32> to vector<5x5xf32>
    %116 = arith.addf %114, %115 : vector<5x5xf32>
    %cst_35 = arith.constant dense<0xFF800000> : vector<5xf32>
    %117 = vector.multi_reduction <maximumf>, %116, %cst_35 [1] : vector<5x5xf32> to vector<5xf32>
    %118 = vector.shape_cast %117 : vector<5xf32> to vector<5x1xf32>
    %119 = vector.broadcast %118 : vector<5x1xf32> to vector<5x5xf32>
    %120 = arith.subf %116, %119 : vector<5x5xf32>
    %121 = math.exp %120 : vector<5x5xf32>
    %cst_36 = arith.constant dense<0.000000e+00> : vector<5xf32>
    %122 = vector.multi_reduction <add>, %121, %cst_36 [1] : vector<5x5xf32> to vector<5xf32>
    %123 = vector.shape_cast %122 : vector<5xf32> to vector<5x1xf32>
    %124 = tpu.reciprocal %123 {approx = true} : vector<5x1xf32> -> vector<5x1xf32>
    %125 = vector.broadcast %124 : vector<5x1xf32> to vector<5x5xf32>
    %126 = arith.mulf %121, %125 : vector<5x5xf32>
    %127 = arith.truncf %126 : vector<5x5xf32> to vector<5x5xbf16>
    %cst_37 = arith.constant dense<0.000000e+00> : vector<5x4xf32>
    %128 = tpu.matmul %127, %111, %cst_37 {dimension_numbers = #tpu.dot_dimension_numbers<[1], [0], [0], [1], [0, 0, 1, 1], [], []>} : vector<5x5xbf16>, vector<5x4xbf16>, vector<5x4xf32> -> vector<5x4xf32>
    %129 = tpu.concatenate %59, %82, %105, %128 in 1 : vector<5x4xf32>, vector<5x4xf32>, vector<5x4xf32>, vector<5x4xf32> -> vector<5x16xf32>
    %c0_38 = arith.constant 0 : index
    %c0_39 = arith.constant 0 : index
    %130 = vector.load %arg7[%c0_38, %c0_39] : memref<16x16xbf16, #tpu.memory_space<vmem>>, vector<16x16xbf16>
    %c0_40 = arith.constant 0 : index
    %c0_41 = arith.constant 0 : index
    %131 = vector.load %arg8[%c0_40, %c0_41] : memref<1x16xf32, #tpu.memory_space<vmem>>, vector<1x16xf32>
    %132 = arith.truncf %129 : vector<5x16xf32> to vector<5x16xbf16>
    %cst_42 = arith.constant dense<0.000000e+00> : vector<5x16xf32>
    %133 = tpu.matmul %132, %130, %cst_42 {dimension_numbers = #tpu.dot_dimension_numbers<[1], [0], [0], [1], [0, 0, 1, 1], [], []>} : vector<5x16xbf16>, vector<16x16xbf16>, vector<5x16xf32> -> vector<5x16xf32>
    %134 = vector.broadcast %131 : vector<1x16xf32> to vector<5x16xf32>
    %135 = arith.addf %133, %134 : vector<5x16xf32>
    %136 = arith.addf %1, %135 : vector<5x16xf32>
    %c0_43 = arith.constant 0 : index
    %c0_44 = arith.constant 0 : index
    %137 = vector.load %arg9[%c0_43, %c0_44] : memref<1x16xf32, #tpu.memory_space<vmem>>, vector<1x16xf32>
    %c0_45 = arith.constant 0 : index
    %c0_46 = arith.constant 0 : index
    %138 = vector.load %arg10[%c0_45, %c0_46] : memref<1x16xf32, #tpu.memory_space<vmem>>, vector<1x16xf32>
    %cst_47 = arith.constant dense<0.000000e+00> : vector<5xf32>
    %139 = vector.multi_reduction <add>, %136, %cst_47 [1] : vector<5x16xf32> to vector<5xf32>
    %140 = vector.shape_cast %139 : vector<5xf32> to vector<5x1xf32>
    %cst_48 = arith.constant 1.600000e+01 : f32
    %141 = vector.broadcast %cst_48 : f32 to vector<5x1xf32>
    %142 = arith.divf %140, %141 : vector<5x1xf32>
    %143 = vector.broadcast %142 : vector<5x1xf32> to vector<5x16xf32>
    %144 = arith.subf %136, %143 : vector<5x16xf32>
    %145 = arith.mulf %144, %144 : vector<5x16xf32>
    %cst_49 = arith.constant dense<0.000000e+00> : vector<5xf32>
    %146 = vector.multi_reduction <add>, %145, %cst_49 [1] : vector<5x16xf32> to vector<5xf32>
    %147 = vector.shape_cast %146 : vector<5xf32> to vector<5x1xf32>
    %cst_50 = arith.constant 1.600000e+01 : f32
    %148 = vector.broadcast %cst_50 : f32 to vector<5x1xf32>
    %149 = arith.divf %147, %148 : vector<5x1xf32>
    %150 = vector.broadcast %142 : vector<5x1xf32> to vector<5x16xf32>
    %151 = arith.subf %136, %150 : vector<5x16xf32>
    %cst_51 = arith.constant 9.99999996E-13 : f32
    %152 = vector.broadcast %cst_51 : f32 to vector<5x1xf32>
    %153 = arith.addf %149, %152 : vector<5x1xf32>
    %154 = math.rsqrt %153 : vector<5x1xf32>
    %155 = vector.broadcast %154 : vector<5x1xf32> to vector<5x16xf32>
    %156 = arith.mulf %151, %155 : vector<5x16xf32>
    %157 = vector.broadcast %137 : vector<1x16xf32> to vector<5x16xf32>
    %158 = arith.mulf %156, %157 : vector<5x16xf32>
    %159 = vector.broadcast %138 : vector<1x16xf32> to vector<5x16xf32>
    %160 = arith.addf %158, %159 : vector<5x16xf32>
    %c0_52 = arith.constant 0 : index
    %c0_53 = arith.constant 0 : index
    %161 = vector.load %arg11[%c0_52, %c0_53] : memref<16x32xbf16, #tpu.memory_space<vmem>>, vector<16x32xbf16>
    %c0_54 = arith.constant 0 : index
    %c0_55 = arith.constant 0 : index
    %162 = vector.load %arg12[%c0_54, %c0_55] : memref<1x32xf32, #tpu.memory_space<vmem>>, vector<1x32xf32>
    %163 = arith.truncf %160 : vector<5x16xf32> to vector<5x16xbf16>
    %cst_56 = arith.constant dense<0.000000e+00> : vector<5x32xf32>
    %164 = tpu.matmul %163, %161, %cst_56 {dimension_numbers = #tpu.dot_dimension_numbers<[1], [0], [0], [1], [0, 0, 1, 1], [], []>} : vector<5x16xbf16>, vector<16x32xbf16>, vector<5x32xf32> -> vector<5x32xf32>
    %165 = vector.broadcast %162 : vector<1x32xf32> to vector<5x32xf32>
    %166 = arith.addf %164, %165 : vector<5x32xf32>
    %cst_57 = arith.constant 5.000000e-01 : f32
    %167 = vector.broadcast %cst_57 : f32 to vector<5x32xf32>
    %168 = arith.mulf %167, %166 : vector<5x32xf32>
    %cst_58 = arith.constant 0.707106769 : f32
    %169 = vector.broadcast %cst_58 : f32 to vector<5x32xf32>
    %170 = arith.mulf %166, %169 : vector<5x32xf32>
    %171 = math.absf %170 : vector<5x32xf32>
    %cst_59 = arith.constant 0.327591091 : f32
    %172 = vector.broadcast %cst_59 : f32 to vector<5x32xf32>
    %173 = arith.mulf %172, %171 : vector<5x32xf32>
    %cst_60 = arith.constant 1.000000e+00 : f32
    %174 = vector.broadcast %cst_60 : f32 to vector<5x32xf32>
    %175 = arith.addf %174, %173 : vector<5x32xf32>
    %cst_61 = arith.constant 1.000000e+00 : f32
    %176 = vector.broadcast %cst_61 : f32 to vector<5x32xf32>
    %177 = arith.divf %176, %175 : vector<5x32xf32>
    %cst_62 = arith.constant 1.06140542 : f32
    %178 = vector.broadcast %cst_62 : f32 to vector<5x32xf32>
    %179 = arith.mulf %178, %177 : vector<5x32xf32>
    %cst_63 = arith.constant -1.45315206 : f32
    %180 = vector.broadcast %cst_63 : f32 to vector<5x32xf32>
    %181 = arith.addf %179, %180 : vector<5x32xf32>
    %182 = arith.mulf %181, %177 : vector<5x32xf32>
    %cst_64 = arith.constant 1.42141378 : f32
    %183 = vector.broadcast %cst_64 : f32 to vector<5x32xf32>
    %184 = arith.addf %182, %183 : vector<5x32xf32>
    %185 = arith.mulf %184, %177 : vector<5x32xf32>
    %cst_65 = arith.constant -0.284496725 : f32
    %186 = vector.broadcast %cst_65 : f32 to vector<5x32xf32>
    %187 = arith.addf %185, %186 : vector<5x32xf32>
    %188 = arith.mulf %187, %177 : vector<5x32xf32>
    %cst_66 = arith.constant 0.254829586 : f32
    %189 = vector.broadcast %cst_66 : f32 to vector<5x32xf32>
    %190 = arith.addf %188, %189 : vector<5x32xf32>
    %191 = arith.mulf %190, %177 : vector<5x32xf32>
    %cst_67 = arith.constant 0.000000e+00 : f32
    %192 = vector.broadcast %cst_67 : f32 to vector<5x32xf32>
    %193 = arith.subf %192, %171 : vector<5x32xf32>
    %194 = arith.mulf %193, %171 : vector<5x32xf32>
    %195 = math.exp %194 : vector<5x32xf32>
    %196 = arith.mulf %191, %195 : vector<5x32xf32>
    %cst_68 = arith.constant 1.000000e+00 : f32
    %197 = vector.broadcast %cst_68 : f32 to vector<5x32xf32>
    %198 = arith.subf %197, %196 : vector<5x32xf32>
    %cst_69 = arith.constant 0.000000e+00 : f32
    %199 = vector.broadcast %cst_69 : f32 to vector<5x32xf32>
    %200 = arith.cmpf olt, %170, %199 : vector<5x32xf32>
    %cst_70 = arith.constant 0.000000e+00 : f32
    %201 = vector.broadcast %cst_70 : f32 to vector<5x32xf32>
    %202 = arith.subf %201, %198 : vector<5x32xf32>
    %203 = arith.select %200, %202, %198 : vector<5x32xi1>, vector<5x32xf32>
    %cst_71 = arith.constant 1.000000e+00 : f32
    %204 = vector.broadcast %cst_71 : f32 to vector<5x32xf32>
    %205 = arith.addf %204, %203 : vector<5x32xf32>
    %206 = arith.mulf %168, %205 : vector<5x32xf32>
    %c0_72 = arith.constant 0 : index
    %c0_73 = arith.constant 0 : index
    %207 = vector.load %arg13[%c0_72, %c0_73] : memref<32x16xbf16, #tpu.memory_space<vmem>>, vector<32x16xbf16>
    %c0_74 = arith.constant 0 : index
    %c0_75 = arith.constant 0 : index
    %208 = vector.load %arg14[%c0_74, %c0_75] : memref<1x16xf32, #tpu.memory_space<vmem>>, vector<1x16xf32>
    %209 = arith.truncf %206 : vector<5x32xf32> to vector<5x32xbf16>
    %cst_76 = arith.constant dense<0.000000e+00> : vector<5x16xf32>
    %210 = tpu.matmul %209, %207, %cst_76 {dimension_numbers = #tpu.dot_dimension_numbers<[1], [0], [0], [1], [0, 0, 1, 1], [], []>} : vector<5x32xbf16>, vector<32x16xbf16>, vector<5x16xf32> -> vector<5x16xf32>
    %211 = vector.broadcast %208 : vector<1x16xf32> to vector<5x16xf32>
    %212 = arith.addf %210, %211 : vector<5x16xf32>
    %213 = arith.addf %136, %212 : vector<5x16xf32>
    %c0_77 = arith.constant 0 : index
    %c0_78 = arith.constant 0 : index
    %c0_79 = arith.constant 0 : index
    %214 = vector.load %arg15[%c0_77, %c0_78, %c0_79] : memref<1x5x16xf32, #tpu.memory_space<vmem>>, vector<1x5x16xf32>
    %215 = vector.shape_cast %214 : vector<1x5x16xf32> to vector<5x16xf32>
    %216 = vector.shape_cast %213 : vector<5x16xf32> to vector<1x5x16xf32>
    tpu.vector_store %arg15[%c0_77, %c0_78, %c0_79], %216 {strides = array<i32>} : memref<1x5x16xf32, #tpu.memory_space<vmem>>, vector<1x5x16xf32>,
    return
  }
  func.func @transform_0(%arg0: i32) -> (i32, i32, i32) {
    %c0_i32 = arith.constant 0 : i32
    %c0_i32_0 = arith.constant 0 : i32
    %c0_i32_1 = arith.constant 0 : i32
    return %arg0, %c0_i32, %c0_i32_0 : i32, i32, i32
  }
  func.func @transform_1(%arg0: i32) -> (i32, i32, i32) {
    %c0_i32 = arith.constant 0 : i32
    %c0_i32_0 = arith.constant 0 : i32
    %c0_i32_1 = arith.constant 0 : i32
    return %arg0, %c0_i32, %c0_i32_0 : i32, i32, i32
  }
  func.func @transform_2(%arg0: i32) -> (i32, i32) {
    %c0_i32 = arith.constant 0 : i32
    %c0_i32_0 = arith.constant 0 : i32
    %c0_i32_1 = arith.constant 0 : i32
    return %c0_i32, %c0_i32_0 : i32, i32
  }
  func.func @transform_3(%arg0: i32) -> (i32, i32) {
    %c0_i32 = arith.constant 0 : i32
    %c0_i32_0 = arith.constant 0 : i32
    %c0_i32_1 = arith.constant 0 : i32
    return %c0_i32, %c0_i32_0 : i32, i32
  }
  func.func @transform_4(%arg0: i32) -> (i32, i32) {
    %c0_i32 = arith.constant 0 : i32
    %c0_i32_0 = arith.constant 0 : i32
    %c0_i32_1 = arith.constant 0 : i32
    return %c0_i32, %c0_i32_0 : i32, i32
  }
  func.func @transform_5(%arg0: i32) -> (i32, i32) {
    %c0_i32 = arith.constant 0 : i32
    %c0_i32_0 = arith.constant 0 : i32
    %c0_i32_1 = arith.constant 0 : i32
    return %c0_i32, %c0_i32_0 : i32, i32
  }
  func.func @transform_6(%arg0: i32) -> (i32, i32) {
    %c0_i32 = arith.constant 0 : i32
    %c0_i32_0 = arith.constant 0 : i32
    %c0_i32_1 = arith.constant 0 : i32
    return %c0_i32, %c0_i32_0 : i32, i32
  }
  func.func @transform_7(%arg0: i32) -> (i32, i32) {
    %c0_i32 = arith.constant 0 : i32
    %c0_i32_0 = arith.constant 0 : i32
    %c0_i32_1 = arith.constant 0 : i32
    return %c0_i32, %c0_i32_0 : i32, i32
  }
  func.func @transform_8(%arg0: i32) -> (i32, i32) {
    %c0_i32 = arith.constant 0 : i32
    %c0_i32_0 = arith.constant 0 : i32
    %c0_i32_1 = arith.constant 0 : i32
    return %c0_i32, %c0_i32_0 : i32, i32
  }
  func.func @transform_9(%arg0: i32) -> (i32, i32) {
    %c0_i32 = arith.constant 0 : i32
    %c0_i32_0 = arith.constant 0 : i32
    %c0_i32_1 = arith.constant 0 : i32
    return %c0_i32, %c0_i32_0 : i32, i32
  }
  func.func @transform_10(%arg0: i32) -> (i32, i32) {
    %c0_i32 = arith.constant 0 : i32
    %c0_i32_0 = arith.constant 0 : i32
    %c0_i32_1 = arith.constant 0 : i32
    return %c0_i32, %c0_i32_0 : i32, i32
  }
  func.func @transform_11(%arg0: i32) -> (i32, i32) {
    %c0_i32 = arith.constant 0 : i32
    %c0_i32_0 = arith.constant 0 : i32
    %c0_i32_1 = arith.constant 0 : i32
    return %c0_i32, %c0_i32_0 : i32, i32
  }
  func.func @transform_12(%arg0: i32) -> (i32, i32) {
    %c0_i32 = arith.constant 0 : i32
    %c0_i32_0 = arith.constant 0 : i32
    %c0_i32_1 = arith.constant 0 : i32
    return %c0_i32, %c0_i32_0 : i32, i32
  }
  func.func @transform_13(%arg0: i32) -> (i32, i32) {
    %c0_i32 = arith.constant 0 : i32
    %c0_i32_0 = arith.constant 0 : i32
    %c0_i32_1 = arith.constant 0 : i32
    return %c0_i32, %c0_i32_0 : i32, i32
  }
  func.func @transform_14(%arg0: i32) -> (i32, i32, i32) {
    %c0_i32 = arith.constant 0 : i32
    %c0_i32_0 = arith.constant 0 : i32
    %c0_i32_1 = arith.constant 0 : i32
    return %arg0, %c0_i32, %c0_i32_0 : i32, i32, i32
  }
}

module attributes {stable_mosaic.version = 11 : i64} {
  func.func @_ln3_kernel(%arg0: i32, %arg1: memref<1x5x16xf32, #tpu.memory_space<vmem>>, %arg2: memref<1x16xf32, #tpu.memory_space<vmem>>, %arg3: memref<1x16xf32, #tpu.memory_space<vmem>>, %arg4: memref<1x5x16xf32, #tpu.memory_space<vmem>>) attributes {dimension_semantics = [#tpu.dimension_semantics<parallel>], iteration_bounds = array<i64: 2>, scalar_prefetch = 0 : i64, scratch_operands = 0 : i64, tpu.core_type = #tpu.core_type<tc>, window_params = [{transform_indices = @transform_0, window_bounds = array<i64: 1, 5, 16>}, {pipeline_mode = #tpu.pipeline_mode<synchronous>, transform_indices = @transform_1, window_bounds = array<i64: 1, 16>}, {pipeline_mode = #tpu.pipeline_mode<synchronous>, transform_indices = @transform_2, window_bounds = array<i64: 1, 16>}, {transform_indices = @transform_3, window_bounds = array<i64: 1, 5, 16>}]} {
    %c0 = arith.constant 0 : index
    %c0_0 = arith.constant 0 : index
    %c0_1 = arith.constant 0 : index
    %0 = vector.load %arg1[%c0, %c0_0, %c0_1] : memref<1x5x16xf32, #tpu.memory_space<vmem>>, vector<1x5x16xf32>
    %1 = vector.shape_cast %0 : vector<1x5x16xf32> to vector<5x16xf32>
    %c0_2 = arith.constant 0 : index
    %c0_3 = arith.constant 0 : index
    %2 = vector.load %arg2[%c0_2, %c0_3] : memref<1x16xf32, #tpu.memory_space<vmem>>, vector<1x16xf32>
    %c0_4 = arith.constant 0 : index
    %c0_5 = arith.constant 0 : index
    %3 = vector.load %arg3[%c0_4, %c0_5] : memref<1x16xf32, #tpu.memory_space<vmem>>, vector<1x16xf32>
    %cst = arith.constant dense<0.000000e+00> : vector<5xf32>
    %4 = vector.multi_reduction <add>, %1, %cst [1] : vector<5x16xf32> to vector<5xf32>
    %5 = vector.shape_cast %4 : vector<5xf32> to vector<5x1xf32>
    %cst_6 = arith.constant 1.600000e+01 : f32
    %6 = vector.broadcast %cst_6 : f32 to vector<5x1xf32>
    %7 = arith.divf %5, %6 : vector<5x1xf32>
    %8 = vector.broadcast %7 : vector<5x1xf32> to vector<5x16xf32>
    %9 = arith.subf %1, %8 : vector<5x16xf32>
    %10 = arith.mulf %9, %9 : vector<5x16xf32>
    %cst_7 = arith.constant dense<0.000000e+00> : vector<5xf32>
    %11 = vector.multi_reduction <add>, %10, %cst_7 [1] : vector<5x16xf32> to vector<5xf32>
    %12 = vector.shape_cast %11 : vector<5xf32> to vector<5x1xf32>
    %cst_8 = arith.constant 1.600000e+01 : f32
    %13 = vector.broadcast %cst_8 : f32 to vector<5x1xf32>
    %14 = arith.divf %12, %13 : vector<5x1xf32>
    %15 = vector.broadcast %7 : vector<5x1xf32> to vector<5x16xf32>
    %16 = arith.subf %1, %15 : vector<5x16xf32>
    %cst_9 = arith.constant 9.99999996E-13 : f32
    %17 = vector.broadcast %cst_9 : f32 to vector<5x1xf32>
    %18 = arith.addf %14, %17 : vector<5x1xf32>
    %19 = math.rsqrt %18 : vector<5x1xf32>
    %20 = vector.broadcast %19 : vector<5x1xf32> to vector<5x16xf32>
    %21 = arith.mulf %16, %20 : vector<5x16xf32>
    %22 = vector.broadcast %2 : vector<1x16xf32> to vector<5x16xf32>
    %23 = arith.mulf %21, %22 : vector<5x16xf32>
    %24 = vector.broadcast %3 : vector<1x16xf32> to vector<5x16xf32>
    %25 = arith.addf %23, %24 : vector<5x16xf32>
    %c0_10 = arith.constant 0 : index
    %c0_11 = arith.constant 0 : index
    %c0_12 = arith.constant 0 : index
    %26 = vector.load %arg4[%c0_10, %c0_11, %c0_12] : memref<1x5x16xf32, #tpu.memory_space<vmem>>, vector<1x5x16xf32>
    %27 = vector.shape_cast %26 : vector<1x5x16xf32> to vector<5x16xf32>
    %28 = vector.shape_cast %25 : vector<5x16xf32> to vector<1x5x16xf32>
    tpu.vector_store %arg4[%c0_10, %c0_11, %c0_12], %28 {strides = array<i32>} : memref<1x5x16xf32, #tpu.memory_space<vmem>>, vector<1x5x16xf32>,
    return
  }
  func.func @transform_0(%arg0: i32) -> (i32, i32, i32) {
    %c0_i32 = arith.constant 0 : i32
    %c0_i32_0 = arith.constant 0 : i32
    %c0_i32_1 = arith.constant 0 : i32
    return %arg0, %c0_i32, %c0_i32_0 : i32, i32, i32
  }
  func.func @transform_1(%arg0: i32) -> (i32, i32) {
    %c0_i32 = arith.constant 0 : i32
    %c0_i32_0 = arith.constant 0 : i32
    %c0_i32_1 = arith.constant 0 : i32
    return %c0_i32, %c0_i32_0 : i32, i32
  }
  func.func @transform_2(%arg0: i32) -> (i32, i32) {
    %c0_i32 = arith.constant 0 : i32
    %c0_i32_0 = arith.constant 0 : i32
    %c0_i32_1 = arith.constant 0 : i32
    return %c0_i32, %c0_i32_0 : i32, i32
  }
  func.func @transform_3(%arg0: i32) -> (i32, i32, i32) {
    %c0_i32 = arith.constant 0 : i32
    %c0_i32_0 = arith.constant 0 : i32
    %c0_i32_1 = arith.constant 0 : i32
    return %arg0, %c0_i32, %c0_i32_0 : i32, i32, i32
  }
}

module attributes {stable_mosaic.version = 11 : i64} {
  func.func @_vit_layer_kernel(%arg0: i32, %arg1: memref<1x5x32xf32, #tpu.memory_space<vmem>>, %arg2: memref<1x1x5xf32, #tpu.memory_space<vmem>>, %arg3: memref<1x5x16xf32, #tpu.memory_space<vmem>>, %arg4: memref<1x32xf32, #tpu.memory_space<vmem>>, %arg5: memref<1x32xf32, #tpu.memory_space<vmem>>, %arg6: memref<32x96xbf16, #tpu.memory_space<vmem>>, %arg7: memref<1x96xf32, #tpu.memory_space<vmem>>, %arg8: memref<32x32xbf16, #tpu.memory_space<vmem>>, %arg9: memref<1x32xf32, #tpu.memory_space<vmem>>, %arg10: memref<1x32xf32, #tpu.memory_space<vmem>>, %arg11: memref<1x32xf32, #tpu.memory_space<vmem>>, %arg12: memref<32x64xbf16, #tpu.memory_space<vmem>>, %arg13: memref<1x64xf32, #tpu.memory_space<vmem>>, %arg14: memref<64x32xbf16, #tpu.memory_space<vmem>>, %arg15: memref<1x32xf32, #tpu.memory_space<vmem>>, %arg16: memref<32x16xbf16, #tpu.memory_space<vmem>>, %arg17: memref<1x16xf32, #tpu.memory_space<vmem>>, %arg18: memref<1x5x32xf32, #tpu.memory_space<vmem>>, %arg19: memref<1x5x16xf32, #tpu.memory_space<vmem>>) attributes {dimension_semantics = [#tpu.dimension_semantics<parallel>], iteration_bounds = array<i64: 2>, scalar_prefetch = 0 : i64, scratch_operands = 0 : i64, tpu.core_type = #tpu.core_type<tc>, window_params = [{transform_indices = @transform_0, window_bounds = array<i64: 1, 5, 32>}, {transform_indices = @transform_1, window_bounds = array<i64: 1, 1, 5>}, {transform_indices = @transform_2, window_bounds = array<i64: 1, 5, 16>}, {pipeline_mode = #tpu.pipeline_mode<synchronous>, transform_indices = @transform_3, window_bounds = array<i64: 1, 32>}, {pipeline_mode = #tpu.pipeline_mode<synchronous>, transform_indices = @transform_4, window_bounds = array<i64: 1, 32>}, {pipeline_mode = #tpu.pipeline_mode<synchronous>, transform_indices = @transform_5, window_bounds = array<i64: 32, 96>}, {pipeline_mode = #tpu.pipeline_mode<synchronous>, transform_indices = @transform_6, window_bounds = array<i64: 1, 96>}, {pipeline_mode = #tpu.pipeline_mode<synchronous>, transform_indices = @transform_7, window_bounds = array<i64: 32, 32>}, {pipeline_mode = #tpu.pipeline_mode<synchronous>, transform_indices = @transform_8, window_bounds = array<i64: 1, 32>}, {pipeline_mode = #tpu.pipeline_mode<synchronous>, transform_indices = @transform_9, window_bounds = array<i64: 1, 32>}, {pipeline_mode = #tpu.pipeline_mode<synchronous>, transform_indices = @transform_10, window_bounds = array<i64: 1, 32>}, {pipeline_mode = #tpu.pipeline_mode<synchronous>, transform_indices = @transform_11, window_bounds = array<i64: 32, 64>}, {pipeline_mode = #tpu.pipeline_mode<synchronous>, transform_indices = @transform_12, window_bounds = array<i64: 1, 64>}, {pipeline_mode = #tpu.pipeline_mode<synchronous>, transform_indices = @transform_13, window_bounds = array<i64: 64, 32>}, {pipeline_mode = #tpu.pipeline_mode<synchronous>, transform_indices = @transform_14, window_bounds = array<i64: 1, 32>}, {pipeline_mode = #tpu.pipeline_mode<synchronous>, transform_indices = @transform_15, window_bounds = array<i64: 32, 16>}, {pipeline_mode = #tpu.pipeline_mode<synchronous>, transform_indices = @transform_16, window_bounds = array<i64: 1, 16>}, {transform_indices = @transform_17, window_bounds = array<i64: 1, 5, 32>}, {transform_indices = @transform_18, window_bounds = array<i64: 1, 5, 16>}]} {
    %c0 = arith.constant 0 : index
    %c0_0 = arith.constant 0 : index
    %c0_1 = arith.constant 0 : index
    %0 = vector.load %arg1[%c0, %c0_0, %c0_1] : memref<1x5x32xf32, #tpu.memory_space<vmem>>, vector<1x5x32xf32>
    %1 = vector.shape_cast %0 : vector<1x5x32xf32> to vector<5x32xf32>
    %c0_2 = arith.constant 0 : index
    %c0_3 = arith.constant 0 : index
    %c0_4 = arith.constant 0 : index
    %2 = vector.load %arg2[%c0_2, %c0_3, %c0_4] : memref<1x1x5xf32, #tpu.memory_space<vmem>>, vector<1x1x5xf32>
    %3 = vector.shape_cast %2 : vector<1x1x5xf32> to vector<1x5xf32>
    %c0_5 = arith.constant 0 : index
    %c0_6 = arith.constant 0 : index
    %4 = vector.load %arg4[%c0_5, %c0_6] : memref<1x32xf32, #tpu.memory_space<vmem>>, vector<1x32xf32>
    %c0_7 = arith.constant 0 : index
    %c0_8 = arith.constant 0 : index
    %5 = vector.load %arg5[%c0_7, %c0_8] : memref<1x32xf32, #tpu.memory_space<vmem>>, vector<1x32xf32>
    %cst = arith.constant dense<0.000000e+00> : vector<5xf32>
    %6 = vector.multi_reduction <add>, %1, %cst [1] : vector<5x32xf32> to vector<5xf32>
    %7 = vector.shape_cast %6 : vector<5xf32> to vector<5x1xf32>
    %cst_9 = arith.constant 3.200000e+01 : f32
    %8 = vector.broadcast %cst_9 : f32 to vector<5x1xf32>
    %9 = arith.divf %7, %8 : vector<5x1xf32>
    %10 = vector.broadcast %9 : vector<5x1xf32> to vector<5x32xf32>
    %11 = arith.subf %1, %10 : vector<5x32xf32>
    %12 = arith.mulf %11, %11 : vector<5x32xf32>
    %cst_10 = arith.constant dense<0.000000e+00> : vector<5xf32>
    %13 = vector.multi_reduction <add>, %12, %cst_10 [1] : vector<5x32xf32> to vector<5xf32>
    %14 = vector.shape_cast %13 : vector<5xf32> to vector<5x1xf32>
    %cst_11 = arith.constant 3.200000e+01 : f32
    %15 = vector.broadcast %cst_11 : f32 to vector<5x1xf32>
    %16 = arith.divf %14, %15 : vector<5x1xf32>
    %17 = vector.broadcast %9 : vector<5x1xf32> to vector<5x32xf32>
    %18 = arith.subf %1, %17 : vector<5x32xf32>
    %cst_12 = arith.constant 9.99999996E-13 : f32
    %19 = vector.broadcast %cst_12 : f32 to vector<5x1xf32>
    %20 = arith.addf %16, %19 : vector<5x1xf32>
    %21 = math.rsqrt %20 : vector<5x1xf32>
    %22 = vector.broadcast %21 : vector<5x1xf32> to vector<5x32xf32>
    %23 = arith.mulf %18, %22 : vector<5x32xf32>
    %24 = vector.broadcast %4 : vector<1x32xf32> to vector<5x32xf32>
    %25 = arith.mulf %23, %24 : vector<5x32xf32>
    %26 = vector.broadcast %5 : vector<1x32xf32> to vector<5x32xf32>
    %27 = arith.addf %25, %26 : vector<5x32xf32>
    %c0_13 = arith.constant 0 : index
    %c0_14 = arith.constant 0 : index
    %28 = vector.load %arg6[%c0_13, %c0_14] : memref<32x96xbf16, #tpu.memory_space<vmem>>, vector<32x96xbf16>
    %c0_15 = arith.constant 0 : index
    %c0_16 = arith.constant 0 : index
    %29 = vector.load %arg7[%c0_15, %c0_16] : memref<1x96xf32, #tpu.memory_space<vmem>>, vector<1x96xf32>
    %30 = arith.truncf %27 : vector<5x32xf32> to vector<5x32xbf16>
    %cst_17 = arith.constant dense<0.000000e+00> : vector<5x96xf32>
    %31 = tpu.matmul %30, %28, %cst_17 {dimension_numbers = #tpu.dot_dimension_numbers<[1], [0], [0], [1], [0, 0, 1, 1], [], []>} : vector<5x32xbf16>, vector<32x96xbf16>, vector<5x96xf32> -> vector<5x96xf32>
    %32 = vector.broadcast %29 : vector<1x96xf32> to vector<5x96xf32>
    %33 = arith.addf %31, %32 : vector<5x96xf32>
    %34 = vector.extract_strided_slice %33 {offsets = [0, 0], sizes = [5, 32], strides = [1, 1]} : vector<5x96xf32> to vector<5x32xf32>
    %35 = vector.extract_strided_slice %33 {offsets = [0, 32], sizes = [5, 32], strides = [1, 1]} : vector<5x96xf32> to vector<5x32xf32>
    %36 = vector.extract_strided_slice %33 {offsets = [0, 64], sizes = [5, 32], strides = [1, 1]} : vector<5x96xf32> to vector<5x32xf32>
    %37 = vector.extract_strided_slice %34 {offsets = [0, 0], sizes = [5, 8], strides = [1, 1]} : vector<5x32xf32> to vector<5x8xf32>
    %38 = arith.truncf %37 : vector<5x8xf32> to vector<5x8xbf16>
    %39 = vector.extract_strided_slice %35 {offsets = [0, 0], sizes = [5, 8], strides = [1, 1]} : vector<5x32xf32> to vector<5x8xf32>
    %40 = arith.truncf %39 : vector<5x8xf32> to vector<5x8xbf16>
    %41 = vector.extract_strided_slice %36 {offsets = [0, 0], sizes = [5, 8], strides = [1, 1]} : vector<5x32xf32> to vector<5x8xf32>
    %42 = arith.truncf %41 : vector<5x8xf32> to vector<5x8xbf16>
    %cst_18 = arith.constant dense<0.000000e+00> : vector<5x5xf32>
    %43 = tpu.matmul %38, %40, %cst_18 {dimension_numbers = #tpu.dot_dimension_numbers<[1], [1], [0], [0], [0, 0, 1, 0], [], []>} : vector<5x8xbf16>, vector<5x8xbf16>, vector<5x5xf32> -> vector<5x5xf32>
    %cst_19 = arith.constant 0.353553385 : f32
    %44 = vector.broadcast %cst_19 : f32 to vector<5x5xf32>
    %45 = arith.mulf %43, %44 : vector<5x5xf32>
    %46 = vector.broadcast %3 : vector<1x5xf32> to vector<5x5xf32>
    %47 = arith.addf %45, %46 : vector<5x5xf32>
    %cst_20 = arith.constant dense<0xFF800000> : vector<5xf32>
    %48 = vector.multi_reduction <maximumf>, %47, %cst_20 [1] : vector<5x5xf32> to vector<5xf32>
    %49 = vector.shape_cast %48 : vector<5xf32> to vector<5x1xf32>
    %50 = vector.broadcast %49 : vector<5x1xf32> to vector<5x5xf32>
    %51 = arith.subf %47, %50 : vector<5x5xf32>
    %52 = math.exp %51 : vector<5x5xf32>
    %cst_21 = arith.constant dense<0.000000e+00> : vector<5xf32>
    %53 = vector.multi_reduction <add>, %52, %cst_21 [1] : vector<5x5xf32> to vector<5xf32>
    %54 = vector.shape_cast %53 : vector<5xf32> to vector<5x1xf32>
    %55 = tpu.reciprocal %54 {approx = true} : vector<5x1xf32> -> vector<5x1xf32>
    %56 = vector.broadcast %55 : vector<5x1xf32> to vector<5x5xf32>
    %57 = arith.mulf %52, %56 : vector<5x5xf32>
    %58 = arith.truncf %57 : vector<5x5xf32> to vector<5x5xbf16>
    %cst_22 = arith.constant dense<0.000000e+00> : vector<5x8xf32>
    %59 = tpu.matmul %58, %42, %cst_22 {dimension_numbers = #tpu.dot_dimension_numbers<[1], [0], [0], [1], [0, 0, 1, 1], [], []>} : vector<5x5xbf16>, vector<5x8xbf16>, vector<5x8xf32> -> vector<5x8xf32>
    %60 = vector.extract_strided_slice %34 {offsets = [0, 8], sizes = [5, 8], strides = [1, 1]} : vector<5x32xf32> to vector<5x8xf32>
    %61 = arith.truncf %60 : vector<5x8xf32> to vector<5x8xbf16>
    %62 = vector.extract_strided_slice %35 {offsets = [0, 8], sizes = [5, 8], strides = [1, 1]} : vector<5x32xf32> to vector<5x8xf32>
    %63 = arith.truncf %62 : vector<5x8xf32> to vector<5x8xbf16>
    %64 = vector.extract_strided_slice %36 {offsets = [0, 8], sizes = [5, 8], strides = [1, 1]} : vector<5x32xf32> to vector<5x8xf32>
    %65 = arith.truncf %64 : vector<5x8xf32> to vector<5x8xbf16>
    %cst_23 = arith.constant dense<0.000000e+00> : vector<5x5xf32>
    %66 = tpu.matmul %61, %63, %cst_23 {dimension_numbers = #tpu.dot_dimension_numbers<[1], [1], [0], [0], [0, 0, 1, 0], [], []>} : vector<5x8xbf16>, vector<5x8xbf16>, vector<5x5xf32> -> vector<5x5xf32>
    %cst_24 = arith.constant 0.353553385 : f32
    %67 = vector.broadcast %cst_24 : f32 to vector<5x5xf32>
    %68 = arith.mulf %66, %67 : vector<5x5xf32>
    %69 = vector.broadcast %3 : vector<1x5xf32> to vector<5x5xf32>
    %70 = arith.addf %68, %69 : vector<5x5xf32>
    %cst_25 = arith.constant dense<0xFF800000> : vector<5xf32>
    %71 = vector.multi_reduction <maximumf>, %70, %cst_25 [1] : vector<5x5xf32> to vector<5xf32>
    %72 = vector.shape_cast %71 : vector<5xf32> to vector<5x1xf32>
    %73 = vector.broadcast %72 : vector<5x1xf32> to vector<5x5xf32>
    %74 = arith.subf %70, %73 : vector<5x5xf32>
    %75 = math.exp %74 : vector<5x5xf32>
    %cst_26 = arith.constant dense<0.000000e+00> : vector<5xf32>
    %76 = vector.multi_reduction <add>, %75, %cst_26 [1] : vector<5x5xf32> to vector<5xf32>
    %77 = vector.shape_cast %76 : vector<5xf32> to vector<5x1xf32>
    %78 = tpu.reciprocal %77 {approx = true} : vector<5x1xf32> -> vector<5x1xf32>
    %79 = vector.broadcast %78 : vector<5x1xf32> to vector<5x5xf32>
    %80 = arith.mulf %75, %79 : vector<5x5xf32>
    %81 = arith.truncf %80 : vector<5x5xf32> to vector<5x5xbf16>
    %cst_27 = arith.constant dense<0.000000e+00> : vector<5x8xf32>
    %82 = tpu.matmul %81, %65, %cst_27 {dimension_numbers = #tpu.dot_dimension_numbers<[1], [0], [0], [1], [0, 0, 1, 1], [], []>} : vector<5x5xbf16>, vector<5x8xbf16>, vector<5x8xf32> -> vector<5x8xf32>
    %83 = vector.extract_strided_slice %34 {offsets = [0, 16], sizes = [5, 8], strides = [1, 1]} : vector<5x32xf32> to vector<5x8xf32>
    %84 = arith.truncf %83 : vector<5x8xf32> to vector<5x8xbf16>
    %85 = vector.extract_strided_slice %35 {offsets = [0, 16], sizes = [5, 8], strides = [1, 1]} : vector<5x32xf32> to vector<5x8xf32>
    %86 = arith.truncf %85 : vector<5x8xf32> to vector<5x8xbf16>
    %87 = vector.extract_strided_slice %36 {offsets = [0, 16], sizes = [5, 8], strides = [1, 1]} : vector<5x32xf32> to vector<5x8xf32>
    %88 = arith.truncf %87 : vector<5x8xf32> to vector<5x8xbf16>
    %cst_28 = arith.constant dense<0.000000e+00> : vector<5x5xf32>
    %89 = tpu.matmul %84, %86, %cst_28 {dimension_numbers = #tpu.dot_dimension_numbers<[1], [1], [0], [0], [0, 0, 1, 0], [], []>} : vector<5x8xbf16>, vector<5x8xbf16>, vector<5x5xf32> -> vector<5x5xf32>
    %cst_29 = arith.constant 0.353553385 : f32
    %90 = vector.broadcast %cst_29 : f32 to vector<5x5xf32>
    %91 = arith.mulf %89, %90 : vector<5x5xf32>
    %92 = vector.broadcast %3 : vector<1x5xf32> to vector<5x5xf32>
    %93 = arith.addf %91, %92 : vector<5x5xf32>
    %cst_30 = arith.constant dense<0xFF800000> : vector<5xf32>
    %94 = vector.multi_reduction <maximumf>, %93, %cst_30 [1] : vector<5x5xf32> to vector<5xf32>
    %95 = vector.shape_cast %94 : vector<5xf32> to vector<5x1xf32>
    %96 = vector.broadcast %95 : vector<5x1xf32> to vector<5x5xf32>
    %97 = arith.subf %93, %96 : vector<5x5xf32>
    %98 = math.exp %97 : vector<5x5xf32>
    %cst_31 = arith.constant dense<0.000000e+00> : vector<5xf32>
    %99 = vector.multi_reduction <add>, %98, %cst_31 [1] : vector<5x5xf32> to vector<5xf32>
    %100 = vector.shape_cast %99 : vector<5xf32> to vector<5x1xf32>
    %101 = tpu.reciprocal %100 {approx = true} : vector<5x1xf32> -> vector<5x1xf32>
    %102 = vector.broadcast %101 : vector<5x1xf32> to vector<5x5xf32>
    %103 = arith.mulf %98, %102 : vector<5x5xf32>
    %104 = arith.truncf %103 : vector<5x5xf32> to vector<5x5xbf16>
    %cst_32 = arith.constant dense<0.000000e+00> : vector<5x8xf32>
    %105 = tpu.matmul %104, %88, %cst_32 {dimension_numbers = #tpu.dot_dimension_numbers<[1], [0], [0], [1], [0, 0, 1, 1], [], []>} : vector<5x5xbf16>, vector<5x8xbf16>, vector<5x8xf32> -> vector<5x8xf32>
    %106 = vector.extract_strided_slice %34 {offsets = [0, 24], sizes = [5, 8], strides = [1, 1]} : vector<5x32xf32> to vector<5x8xf32>
    %107 = arith.truncf %106 : vector<5x8xf32> to vector<5x8xbf16>
    %108 = vector.extract_strided_slice %35 {offsets = [0, 24], sizes = [5, 8], strides = [1, 1]} : vector<5x32xf32> to vector<5x8xf32>
    %109 = arith.truncf %108 : vector<5x8xf32> to vector<5x8xbf16>
    %110 = vector.extract_strided_slice %36 {offsets = [0, 24], sizes = [5, 8], strides = [1, 1]} : vector<5x32xf32> to vector<5x8xf32>
    %111 = arith.truncf %110 : vector<5x8xf32> to vector<5x8xbf16>
    %cst_33 = arith.constant dense<0.000000e+00> : vector<5x5xf32>
    %112 = tpu.matmul %107, %109, %cst_33 {dimension_numbers = #tpu.dot_dimension_numbers<[1], [1], [0], [0], [0, 0, 1, 0], [], []>} : vector<5x8xbf16>, vector<5x8xbf16>, vector<5x5xf32> -> vector<5x5xf32>
    %cst_34 = arith.constant 0.353553385 : f32
    %113 = vector.broadcast %cst_34 : f32 to vector<5x5xf32>
    %114 = arith.mulf %112, %113 : vector<5x5xf32>
    %115 = vector.broadcast %3 : vector<1x5xf32> to vector<5x5xf32>
    %116 = arith.addf %114, %115 : vector<5x5xf32>
    %cst_35 = arith.constant dense<0xFF800000> : vector<5xf32>
    %117 = vector.multi_reduction <maximumf>, %116, %cst_35 [1] : vector<5x5xf32> to vector<5xf32>
    %118 = vector.shape_cast %117 : vector<5xf32> to vector<5x1xf32>
    %119 = vector.broadcast %118 : vector<5x1xf32> to vector<5x5xf32>
    %120 = arith.subf %116, %119 : vector<5x5xf32>
    %121 = math.exp %120 : vector<5x5xf32>
    %cst_36 = arith.constant dense<0.000000e+00> : vector<5xf32>
    %122 = vector.multi_reduction <add>, %121, %cst_36 [1] : vector<5x5xf32> to vector<5xf32>
    %123 = vector.shape_cast %122 : vector<5xf32> to vector<5x1xf32>
    %124 = tpu.reciprocal %123 {approx = true} : vector<5x1xf32> -> vector<5x1xf32>
    %125 = vector.broadcast %124 : vector<5x1xf32> to vector<5x5xf32>
    %126 = arith.mulf %121, %125 : vector<5x5xf32>
    %127 = arith.truncf %126 : vector<5x5xf32> to vector<5x5xbf16>
    %cst_37 = arith.constant dense<0.000000e+00> : vector<5x8xf32>
    %128 = tpu.matmul %127, %111, %cst_37 {dimension_numbers = #tpu.dot_dimension_numbers<[1], [0], [0], [1], [0, 0, 1, 1], [], []>} : vector<5x5xbf16>, vector<5x8xbf16>, vector<5x8xf32> -> vector<5x8xf32>
    %129 = tpu.concatenate %59, %82, %105, %128 in 1 : vector<5x8xf32>, vector<5x8xf32>, vector<5x8xf32>, vector<5x8xf32> -> vector<5x32xf32>
    %c0_38 = arith.constant 0 : index
    %c0_39 = arith.constant 0 : index
    %130 = vector.load %arg8[%c0_38, %c0_39] : memref<32x32xbf16, #tpu.memory_space<vmem>>, vector<32x32xbf16>
    %c0_40 = arith.constant 0 : index
    %c0_41 = arith.constant 0 : index
    %131 = vector.load %arg9[%c0_40, %c0_41] : memref<1x32xf32, #tpu.memory_space<vmem>>, vector<1x32xf32>
    %132 = arith.truncf %129 : vector<5x32xf32> to vector<5x32xbf16>
    %cst_42 = arith.constant dense<0.000000e+00> : vector<5x32xf32>
    %133 = tpu.matmul %132, %130, %cst_42 {dimension_numbers = #tpu.dot_dimension_numbers<[1], [0], [0], [1], [0, 0, 1, 1], [], []>} : vector<5x32xbf16>, vector<32x32xbf16>, vector<5x32xf32> -> vector<5x32xf32>
    %134 = vector.broadcast %131 : vector<1x32xf32> to vector<5x32xf32>
    %135 = arith.addf %133, %134 : vector<5x32xf32>
    %136 = arith.addf %1, %135 : vector<5x32xf32>
    %c0_43 = arith.constant 0 : index
    %c0_44 = arith.constant 0 : index
    %137 = vector.load %arg10[%c0_43, %c0_44] : memref<1x32xf32, #tpu.memory_space<vmem>>, vector<1x32xf32>
    %c0_45 = arith.constant 0 : index
    %c0_46 = arith.constant 0 : index
    %138 = vector.load %arg11[%c0_45, %c0_46] : memref<1x32xf32, #tpu.memory_space<vmem>>, vector<1x32xf32>
    %cst_47 = arith.constant dense<0.000000e+00> : vector<5xf32>
    %139 = vector.multi_reduction <add>, %136, %cst_47 [1] : vector<5x32xf32> to vector<5xf32>
    %140 = vector.shape_cast %139 : vector<5xf32> to vector<5x1xf32>
    %cst_48 = arith.constant 3.200000e+01 : f32
    %141 = vector.broadcast %cst_48 : f32 to vector<5x1xf32>
    %142 = arith.divf %140, %141 : vector<5x1xf32>
    %143 = vector.broadcast %142 : vector<5x1xf32> to vector<5x32xf32>
    %144 = arith.subf %136, %143 : vector<5x32xf32>
    %145 = arith.mulf %144, %144 : vector<5x32xf32>
    %cst_49 = arith.constant dense<0.000000e+00> : vector<5xf32>
    %146 = vector.multi_reduction <add>, %145, %cst_49 [1] : vector<5x32xf32> to vector<5xf32>
    %147 = vector.shape_cast %146 : vector<5xf32> to vector<5x1xf32>
    %cst_50 = arith.constant 3.200000e+01 : f32
    %148 = vector.broadcast %cst_50 : f32 to vector<5x1xf32>
    %149 = arith.divf %147, %148 : vector<5x1xf32>
    %150 = vector.broadcast %142 : vector<5x1xf32> to vector<5x32xf32>
    %151 = arith.subf %136, %150 : vector<5x32xf32>
    %cst_51 = arith.constant 9.99999996E-13 : f32
    %152 = vector.broadcast %cst_51 : f32 to vector<5x1xf32>
    %153 = arith.addf %149, %152 : vector<5x1xf32>
    %154 = math.rsqrt %153 : vector<5x1xf32>
    %155 = vector.broadcast %154 : vector<5x1xf32> to vector<5x32xf32>
    %156 = arith.mulf %151, %155 : vector<5x32xf32>
    %157 = vector.broadcast %137 : vector<1x32xf32> to vector<5x32xf32>
    %158 = arith.mulf %156, %157 : vector<5x32xf32>
    %159 = vector.broadcast %138 : vector<1x32xf32> to vector<5x32xf32>
    %160 = arith.addf %158, %159 : vector<5x32xf32>
    %c0_52 = arith.constant 0 : index
    %c0_53 = arith.constant 0 : index
    %161 = vector.load %arg12[%c0_52, %c0_53] : memref<32x64xbf16, #tpu.memory_space<vmem>>, vector<32x64xbf16>
    %c0_54 = arith.constant 0 : index
    %c0_55 = arith.constant 0 : index
    %162 = vector.load %arg13[%c0_54, %c0_55] : memref<1x64xf32, #tpu.memory_space<vmem>>, vector<1x64xf32>
    %163 = arith.truncf %160 : vector<5x32xf32> to vector<5x32xbf16>
    %cst_56 = arith.constant dense<0.000000e+00> : vector<5x64xf32>
    %164 = tpu.matmul %163, %161, %cst_56 {dimension_numbers = #tpu.dot_dimension_numbers<[1], [0], [0], [1], [0, 0, 1, 1], [], []>} : vector<5x32xbf16>, vector<32x64xbf16>, vector<5x64xf32> -> vector<5x64xf32>
    %165 = vector.broadcast %162 : vector<1x64xf32> to vector<5x64xf32>
    %166 = arith.addf %164, %165 : vector<5x64xf32>
    %cst_57 = arith.constant 5.000000e-01 : f32
    %167 = vector.broadcast %cst_57 : f32 to vector<5x64xf32>
    %168 = arith.mulf %167, %166 : vector<5x64xf32>
    %cst_58 = arith.constant 0.707106769 : f32
    %169 = vector.broadcast %cst_58 : f32 to vector<5x64xf32>
    %170 = arith.mulf %166, %169 : vector<5x64xf32>
    %171 = math.absf %170 : vector<5x64xf32>
    %cst_59 = arith.constant 0.327591091 : f32
    %172 = vector.broadcast %cst_59 : f32 to vector<5x64xf32>
    %173 = arith.mulf %172, %171 : vector<5x64xf32>
    %cst_60 = arith.constant 1.000000e+00 : f32
    %174 = vector.broadcast %cst_60 : f32 to vector<5x64xf32>
    %175 = arith.addf %174, %173 : vector<5x64xf32>
    %cst_61 = arith.constant 1.000000e+00 : f32
    %176 = vector.broadcast %cst_61 : f32 to vector<5x64xf32>
    %177 = arith.divf %176, %175 : vector<5x64xf32>
    %cst_62 = arith.constant 1.06140542 : f32
    %178 = vector.broadcast %cst_62 : f32 to vector<5x64xf32>
    %179 = arith.mulf %178, %177 : vector<5x64xf32>
    %cst_63 = arith.constant -1.45315206 : f32
    %180 = vector.broadcast %cst_63 : f32 to vector<5x64xf32>
    %181 = arith.addf %179, %180 : vector<5x64xf32>
    %182 = arith.mulf %181, %177 : vector<5x64xf32>
    %cst_64 = arith.constant 1.42141378 : f32
    %183 = vector.broadcast %cst_64 : f32 to vector<5x64xf32>
    %184 = arith.addf %182, %183 : vector<5x64xf32>
    %185 = arith.mulf %184, %177 : vector<5x64xf32>
    %cst_65 = arith.constant -0.284496725 : f32
    %186 = vector.broadcast %cst_65 : f32 to vector<5x64xf32>
    %187 = arith.addf %185, %186 : vector<5x64xf32>
    %188 = arith.mulf %187, %177 : vector<5x64xf32>
    %cst_66 = arith.constant 0.254829586 : f32
    %189 = vector.broadcast %cst_66 : f32 to vector<5x64xf32>
    %190 = arith.addf %188, %189 : vector<5x64xf32>
    %191 = arith.mulf %190, %177 : vector<5x64xf32>
    %cst_67 = arith.constant 0.000000e+00 : f32
    %192 = vector.broadcast %cst_67 : f32 to vector<5x64xf32>
    %193 = arith.subf %192, %171 : vector<5x64xf32>
    %194 = arith.mulf %193, %171 : vector<5x64xf32>
    %195 = math.exp %194 : vector<5x64xf32>
    %196 = arith.mulf %191, %195 : vector<5x64xf32>
    %cst_68 = arith.constant 1.000000e+00 : f32
    %197 = vector.broadcast %cst_68 : f32 to vector<5x64xf32>
    %198 = arith.subf %197, %196 : vector<5x64xf32>
    %cst_69 = arith.constant 0.000000e+00 : f32
    %199 = vector.broadcast %cst_69 : f32 to vector<5x64xf32>
    %200 = arith.cmpf olt, %170, %199 : vector<5x64xf32>
    %cst_70 = arith.constant 0.000000e+00 : f32
    %201 = vector.broadcast %cst_70 : f32 to vector<5x64xf32>
    %202 = arith.subf %201, %198 : vector<5x64xf32>
    %203 = arith.select %200, %202, %198 : vector<5x64xi1>, vector<5x64xf32>
    %cst_71 = arith.constant 1.000000e+00 : f32
    %204 = vector.broadcast %cst_71 : f32 to vector<5x64xf32>
    %205 = arith.addf %204, %203 : vector<5x64xf32>
    %206 = arith.mulf %168, %205 : vector<5x64xf32>
    %c0_72 = arith.constant 0 : index
    %c0_73 = arith.constant 0 : index
    %207 = vector.load %arg14[%c0_72, %c0_73] : memref<64x32xbf16, #tpu.memory_space<vmem>>, vector<64x32xbf16>
    %c0_74 = arith.constant 0 : index
    %c0_75 = arith.constant 0 : index
    %208 = vector.load %arg15[%c0_74, %c0_75] : memref<1x32xf32, #tpu.memory_space<vmem>>, vector<1x32xf32>
    %209 = arith.truncf %206 : vector<5x64xf32> to vector<5x64xbf16>
    %cst_76 = arith.constant dense<0.000000e+00> : vector<5x32xf32>
    %210 = tpu.matmul %209, %207, %cst_76 {dimension_numbers = #tpu.dot_dimension_numbers<[1], [0], [0], [1], [0, 0, 1, 1], [], []>} : vector<5x64xbf16>, vector<64x32xbf16>, vector<5x32xf32> -> vector<5x32xf32>
    %211 = vector.broadcast %208 : vector<1x32xf32> to vector<5x32xf32>
    %212 = arith.addf %210, %211 : vector<5x32xf32>
    %213 = arith.addf %136, %212 : vector<5x32xf32>
    %c0_77 = arith.constant 0 : index
    %c0_78 = arith.constant 0 : index
    %c0_79 = arith.constant 0 : index
    %214 = vector.load %arg18[%c0_77, %c0_78, %c0_79] : memref<1x5x32xf32, #tpu.memory_space<vmem>>, vector<1x5x32xf32>
    %215 = vector.shape_cast %214 : vector<1x5x32xf32> to vector<5x32xf32>
    %216 = vector.shape_cast %213 : vector<5x32xf32> to vector<1x5x32xf32>
    tpu.vector_store %arg18[%c0_77, %c0_78, %c0_79], %216 {strides = array<i32>} : memref<1x5x32xf32, #tpu.memory_space<vmem>>, vector<1x5x32xf32>,
    %c0_80 = arith.constant 0 : index
    %c0_81 = arith.constant 0 : index
    %c0_82 = arith.constant 0 : index
    %217 = vector.load %arg3[%c0_80, %c0_81, %c0_82] : memref<1x5x16xf32, #tpu.memory_space<vmem>>, vector<1x5x16xf32>
    %218 = vector.shape_cast %217 : vector<1x5x16xf32> to vector<5x16xf32>
    %c0_83 = arith.constant 0 : index
    %c0_84 = arith.constant 0 : index
    %219 = vector.load %arg16[%c0_83, %c0_84] : memref<32x16xbf16, #tpu.memory_space<vmem>>, vector<32x16xbf16>
    %c0_85 = arith.constant 0 : index
    %c0_86 = arith.constant 0 : index
    %220 = vector.load %arg17[%c0_85, %c0_86] : memref<1x16xf32, #tpu.memory_space<vmem>>, vector<1x16xf32>
    %221 = arith.truncf %213 : vector<5x32xf32> to vector<5x32xbf16>
    %cst_87 = arith.constant dense<0.000000e+00> : vector<5x16xf32>
    %222 = tpu.matmul %221, %219, %cst_87 {dimension_numbers = #tpu.dot_dimension_numbers<[1], [0], [0], [1], [0, 0, 1, 1], [], []>} : vector<5x32xbf16>, vector<32x16xbf16>, vector<5x16xf32> -> vector<5x16xf32>
    %223 = vector.broadcast %220 : vector<1x16xf32> to vector<5x16xf32>
    %224 = arith.addf %222, %223 : vector<5x16xf32>
    %cst_88 = arith.constant 5.000000e-01 : f32
    %225 = vector.broadcast %cst_88 : f32 to vector<5x16xf32>
    %226 = arith.mulf %225, %224 : vector<5x16xf32>
    %cst_89 = arith.constant 0.707106769 : f32
    %227 = vector.broadcast %cst_89 : f32 to vector<5x16xf32>
    %228 = arith.mulf %224, %227 : vector<5x16xf32>
    %229 = math.absf %228 : vector<5x16xf32>
    %cst_90 = arith.constant 0.327591091 : f32
    %230 = vector.broadcast %cst_90 : f32 to vector<5x16xf32>
    %231 = arith.mulf %230, %229 : vector<5x16xf32>
    %cst_91 = arith.constant 1.000000e+00 : f32
    %232 = vector.broadcast %cst_91 : f32 to vector<5x16xf32>
    %233 = arith.addf %232, %231 : vector<5x16xf32>
    %cst_92 = arith.constant 1.000000e+00 : f32
    %234 = vector.broadcast %cst_92 : f32 to vector<5x16xf32>
    %235 = arith.divf %234, %233 : vector<5x16xf32>
    %cst_93 = arith.constant 1.06140542 : f32
    %236 = vector.broadcast %cst_93 : f32 to vector<5x16xf32>
    %237 = arith.mulf %236, %235 : vector<5x16xf32>
    %cst_94 = arith.constant -1.45315206 : f32
    %238 = vector.broadcast %cst_94 : f32 to vector<5x16xf32>
    %239 = arith.addf %237, %238 : vector<5x16xf32>
    %240 = arith.mulf %239, %235 : vector<5x16xf32>
    %cst_95 = arith.constant 1.42141378 : f32
    %241 = vector.broadcast %cst_95 : f32 to vector<5x16xf32>
    %242 = arith.addf %240, %241 : vector<5x16xf32>
    %243 = arith.mulf %242, %235 : vector<5x16xf32>
    %cst_96 = arith.constant -0.284496725 : f32
    %244 = vector.broadcast %cst_96 : f32 to vector<5x16xf32>
    %245 = arith.addf %243, %244 : vector<5x16xf32>
    %246 = arith.mulf %245, %235 : vector<5x16xf32>
    %cst_97 = arith.constant 0.254829586 : f32
    %247 = vector.broadcast %cst_97 : f32 to vector<5x16xf32>
    %248 = arith.addf %246, %247 : vector<5x16xf32>
    %249 = arith.mulf %248, %235 : vector<5x16xf32>
    %cst_98 = arith.constant 0.000000e+00 : f32
    %250 = vector.broadcast %cst_98 : f32 to vector<5x16xf32>
    %251 = arith.subf %250, %229 : vector<5x16xf32>
    %252 = arith.mulf %251, %229 : vector<5x16xf32>
    %253 = math.exp %252 : vector<5x16xf32>
    %254 = arith.mulf %249, %253 : vector<5x16xf32>
    %cst_99 = arith.constant 1.000000e+00 : f32
    %255 = vector.broadcast %cst_99 : f32 to vector<5x16xf32>
    %256 = arith.subf %255, %254 : vector<5x16xf32>
    %cst_100 = arith.constant 0.000000e+00 : f32
    %257 = vector.broadcast %cst_100 : f32 to vector<5x16xf32>
    %258 = arith.cmpf olt, %228, %257 : vector<5x16xf32>
    %cst_101 = arith.constant 0.000000e+00 : f32
    %259 = vector.broadcast %cst_101 : f32 to vector<5x16xf32>
    %260 = arith.subf %259, %256 : vector<5x16xf32>
    %261 = arith.select %258, %260, %256 : vector<5x16xi1>, vector<5x16xf32>
    %cst_102 = arith.constant 1.000000e+00 : f32
    %262 = vector.broadcast %cst_102 : f32 to vector<5x16xf32>
    %263 = arith.addf %262, %261 : vector<5x16xf32>
    %264 = arith.mulf %226, %263 : vector<5x16xf32>
    %265 = arith.addf %218, %264 : vector<5x16xf32>
    %c0_103 = arith.constant 0 : index
    %c0_104 = arith.constant 0 : index
    %c0_105 = arith.constant 0 : index
    %266 = vector.load %arg19[%c0_103, %c0_104, %c0_105] : memref<1x5x16xf32, #tpu.memory_space<vmem>>, vector<1x5x16xf32>
    %267 = vector.shape_cast %266 : vector<1x5x16xf32> to vector<5x16xf32>
    %268 = vector.shape_cast %265 : vector<5x16xf32> to vector<1x5x16xf32>
    tpu.vector_store %arg19[%c0_103, %c0_104, %c0_105], %268 {strides = array<i32>} : memref<1x5x16xf32, #tpu.memory_space<vmem>>, vector<1x5x16xf32>,
    return
  }
  func.func @transform_0(%arg0: i32) -> (i32, i32, i32) {
    %c0_i32 = arith.constant 0 : i32
    %c0_i32_0 = arith.constant 0 : i32
    %c0_i32_1 = arith.constant 0 : i32
    return %arg0, %c0_i32, %c0_i32_0 : i32, i32, i32
  }
  func.func @transform_1(%arg0: i32) -> (i32, i32, i32) {
    %c0_i32 = arith.constant 0 : i32
    %c0_i32_0 = arith.constant 0 : i32
    %c0_i32_1 = arith.constant 0 : i32
    return %arg0, %c0_i32, %c0_i32_0 : i32, i32, i32
  }
  func.func @transform_2(%arg0: i32) -> (i32, i32, i32) {
    %c0_i32 = arith.constant 0 : i32
    %c0_i32_0 = arith.constant 0 : i32
    %c0_i32_1 = arith.constant 0 : i32
    return %arg0, %c0_i32, %c0_i32_0 : i32, i32, i32
  }
  func.func @transform_3(%arg0: i32) -> (i32, i32) {
    %c0_i32 = arith.constant 0 : i32
    %c0_i32_0 = arith.constant 0 : i32
    %c0_i32_1 = arith.constant 0 : i32
    return %c0_i32, %c0_i32_0 : i32, i32
  }
  func.func @transform_4(%arg0: i32) -> (i32, i32) {
    %c0_i32 = arith.constant 0 : i32
    %c0_i32_0 = arith.constant 0 : i32
    %c0_i32_1 = arith.constant 0 : i32
    return %c0_i32, %c0_i32_0 : i32, i32
  }
  func.func @transform_5(%arg0: i32) -> (i32, i32) {
    %c0_i32 = arith.constant 0 : i32
    %c0_i32_0 = arith.constant 0 : i32
    %c0_i32_1 = arith.constant 0 : i32
    return %c0_i32, %c0_i32_0 : i32, i32
  }
  func.func @transform_6(%arg0: i32) -> (i32, i32) {
    %c0_i32 = arith.constant 0 : i32
    %c0_i32_0 = arith.constant 0 : i32
    %c0_i32_1 = arith.constant 0 : i32
    return %c0_i32, %c0_i32_0 : i32, i32
  }
  func.func @transform_7(%arg0: i32) -> (i32, i32) {
    %c0_i32 = arith.constant 0 : i32
    %c0_i32_0 = arith.constant 0 : i32
    %c0_i32_1 = arith.constant 0 : i32
    return %c0_i32, %c0_i32_0 : i32, i32
  }
  func.func @transform_8(%arg0: i32) -> (i32, i32) {
    %c0_i32 = arith.constant 0 : i32
    %c0_i32_0 = arith.constant 0 : i32
    %c0_i32_1 = arith.constant 0 : i32
    return %c0_i32, %c0_i32_0 : i32, i32
  }
  func.func @transform_9(%arg0: i32) -> (i32, i32) {
    %c0_i32 = arith.constant 0 : i32
    %c0_i32_0 = arith.constant 0 : i32
    %c0_i32_1 = arith.constant 0 : i32
    return %c0_i32, %c0_i32_0 : i32, i32
  }
  func.func @transform_10(%arg0: i32) -> (i32, i32) {
    %c0_i32 = arith.constant 0 : i32
    %c0_i32_0 = arith.constant 0 : i32
    %c0_i32_1 = arith.constant 0 : i32
    return %c0_i32, %c0_i32_0 : i32, i32
  }
  func.func @transform_11(%arg0: i32) -> (i32, i32) {
    %c0_i32 = arith.constant 0 : i32
    %c0_i32_0 = arith.constant 0 : i32
    %c0_i32_1 = arith.constant 0 : i32
    return %c0_i32, %c0_i32_0 : i32, i32
  }
  func.func @transform_12(%arg0: i32) -> (i32, i32) {
    %c0_i32 = arith.constant 0 : i32
    %c0_i32_0 = arith.constant 0 : i32
    %c0_i32_1 = arith.constant 0 : i32
    return %c0_i32, %c0_i32_0 : i32, i32
  }
  func.func @transform_13(%arg0: i32) -> (i32, i32) {
    %c0_i32 = arith.constant 0 : i32
    %c0_i32_0 = arith.constant 0 : i32
    %c0_i32_1 = arith.constant 0 : i32
    return %c0_i32, %c0_i32_0 : i32, i32
  }
  func.func @transform_14(%arg0: i32) -> (i32, i32) {
    %c0_i32 = arith.constant 0 : i32
    %c0_i32_0 = arith.constant 0 : i32
    %c0_i32_1 = arith.constant 0 : i32
    return %c0_i32, %c0_i32_0 : i32, i32
  }
  func.func @transform_15(%arg0: i32) -> (i32, i32) {
    %c0_i32 = arith.constant 0 : i32
    %c0_i32_0 = arith.constant 0 : i32
    %c0_i32_1 = arith.constant 0 : i32
    return %c0_i32, %c0_i32_0 : i32, i32
  }
  func.func @transform_16(%arg0: i32) -> (i32, i32) {
    %c0_i32 = arith.constant 0 : i32
    %c0_i32_0 = arith.constant 0 : i32
    %c0_i32_1 = arith.constant 0 : i32
    return %c0_i32, %c0_i32_0 : i32, i32
  }
  func.func @transform_17(%arg0: i32) -> (i32, i32, i32) {
    %c0_i32 = arith.constant 0 : i32
    %c0_i32_0 = arith.constant 0 : i32
    %c0_i32_1 = arith.constant 0 : i32
    return %arg0, %c0_i32, %c0_i32_0 : i32, i32, i32
  }
  func.func @transform_18(%arg0: i32) -> (i32, i32, i32) {
    %c0_i32 = arith.constant 0 : i32
    %c0_i32_0 = arith.constant 0 : i32
    %c0_i32_1 = arith.constant 0 : i32
    return %arg0, %c0_i32, %c0_i32_0 : i32, i32, i32
  }
}

module attributes {stable_mosaic.version = 11 : i64} {
  func.func @_vit_layer_kernel(%arg0: i32, %arg1: memref<1x5x16xf32, #tpu.memory_space<vmem>>, %arg2: memref<1x1x5xf32, #tpu.memory_space<vmem>>, %arg3: memref<1x16xf32, #tpu.memory_space<vmem>>, %arg4: memref<1x16xf32, #tpu.memory_space<vmem>>, %arg5: memref<16x48xbf16, #tpu.memory_space<vmem>>, %arg6: memref<1x48xf32, #tpu.memory_space<vmem>>, %arg7: memref<16x16xbf16, #tpu.memory_space<vmem>>, %arg8: memref<1x16xf32, #tpu.memory_space<vmem>>, %arg9: memref<1x16xf32, #tpu.memory_space<vmem>>, %arg10: memref<1x16xf32, #tpu.memory_space<vmem>>, %arg11: memref<16x32xbf16, #tpu.memory_space<vmem>>, %arg12: memref<1x32xf32, #tpu.memory_space<vmem>>, %arg13: memref<32x16xbf16, #tpu.memory_space<vmem>>, %arg14: memref<1x16xf32, #tpu.memory_space<vmem>>, %arg15: memref<1x5x16xf32, #tpu.memory_space<vmem>>) attributes {dimension_semantics = [#tpu.dimension_semantics<parallel>], iteration_bounds = array<i64: 2>, scalar_prefetch = 0 : i64, scratch_operands = 0 : i64, tpu.core_type = #tpu.core_type<tc>, window_params = [{transform_indices = @transform_0, window_bounds = array<i64: 1, 5, 16>}, {transform_indices = @transform_1, window_bounds = array<i64: 1, 1, 5>}, {pipeline_mode = #tpu.pipeline_mode<synchronous>, transform_indices = @transform_2, window_bounds = array<i64: 1, 16>}, {pipeline_mode = #tpu.pipeline_mode<synchronous>, transform_indices = @transform_3, window_bounds = array<i64: 1, 16>}, {pipeline_mode = #tpu.pipeline_mode<synchronous>, transform_indices = @transform_4, window_bounds = array<i64: 16, 48>}, {pipeline_mode = #tpu.pipeline_mode<synchronous>, transform_indices = @transform_5, window_bounds = array<i64: 1, 48>}, {pipeline_mode = #tpu.pipeline_mode<synchronous>, transform_indices = @transform_6, window_bounds = array<i64: 16, 16>}, {pipeline_mode = #tpu.pipeline_mode<synchronous>, transform_indices = @transform_7, window_bounds = array<i64: 1, 16>}, {pipeline_mode = #tpu.pipeline_mode<synchronous>, transform_indices = @transform_8, window_bounds = array<i64: 1, 16>}, {pipeline_mode = #tpu.pipeline_mode<synchronous>, transform_indices = @transform_9, window_bounds = array<i64: 1, 16>}, {pipeline_mode = #tpu.pipeline_mode<synchronous>, transform_indices = @transform_10, window_bounds = array<i64: 16, 32>}, {pipeline_mode = #tpu.pipeline_mode<synchronous>, transform_indices = @transform_11, window_bounds = array<i64: 1, 32>}, {pipeline_mode = #tpu.pipeline_mode<synchronous>, transform_indices = @transform_12, window_bounds = array<i64: 32, 16>}, {pipeline_mode = #tpu.pipeline_mode<synchronous>, transform_indices = @transform_13, window_bounds = array<i64: 1, 16>}, {transform_indices = @transform_14, window_bounds = array<i64: 1, 5, 16>}]} {
    %c0 = arith.constant 0 : index
    %c0_0 = arith.constant 0 : index
    %c0_1 = arith.constant 0 : index
    %0 = vector.load %arg1[%c0, %c0_0, %c0_1] : memref<1x5x16xf32, #tpu.memory_space<vmem>>, vector<1x5x16xf32>
    %1 = vector.shape_cast %0 : vector<1x5x16xf32> to vector<5x16xf32>
    %c0_2 = arith.constant 0 : index
    %c0_3 = arith.constant 0 : index
    %c0_4 = arith.constant 0 : index
    %2 = vector.load %arg2[%c0_2, %c0_3, %c0_4] : memref<1x1x5xf32, #tpu.memory_space<vmem>>, vector<1x1x5xf32>
    %3 = vector.shape_cast %2 : vector<1x1x5xf32> to vector<1x5xf32>
    %c0_5 = arith.constant 0 : index
    %c0_6 = arith.constant 0 : index
    %4 = vector.load %arg5[%c0_5, %c0_6] : memref<16x48xbf16, #tpu.memory_space<vmem>>, vector<16x48xbf16>
    %c0_7 = arith.constant 0 : index
    %c0_8 = arith.constant 0 : index
    %5 = vector.load %arg6[%c0_7, %c0_8] : memref<1x48xf32, #tpu.memory_space<vmem>>, vector<1x48xf32>
    %6 = arith.truncf %1 : vector<5x16xf32> to vector<5x16xbf16>
    %cst = arith.constant dense<0.000000e+00> : vector<5x48xf32>
    %7 = tpu.matmul %6, %4, %cst {dimension_numbers = #tpu.dot_dimension_numbers<[1], [0], [0], [1], [0, 0, 1, 1], [], []>} : vector<5x16xbf16>, vector<16x48xbf16>, vector<5x48xf32> -> vector<5x48xf32>
    %8 = vector.broadcast %5 : vector<1x48xf32> to vector<5x48xf32>
    %9 = arith.addf %7, %8 : vector<5x48xf32>
    %10 = vector.extract_strided_slice %9 {offsets = [0, 0], sizes = [5, 16], strides = [1, 1]} : vector<5x48xf32> to vector<5x16xf32>
    %11 = vector.extract_strided_slice %9 {offsets = [0, 16], sizes = [5, 16], strides = [1, 1]} : vector<5x48xf32> to vector<5x16xf32>
    %12 = vector.extract_strided_slice %9 {offsets = [0, 32], sizes = [5, 16], strides = [1, 1]} : vector<5x48xf32> to vector<5x16xf32>
    %13 = vector.extract_strided_slice %10 {offsets = [0, 0], sizes = [5, 4], strides = [1, 1]} : vector<5x16xf32> to vector<5x4xf32>
    %14 = arith.truncf %13 : vector<5x4xf32> to vector<5x4xbf16>
    %15 = vector.extract_strided_slice %11 {offsets = [0, 0], sizes = [5, 4], strides = [1, 1]} : vector<5x16xf32> to vector<5x4xf32>
    %16 = arith.truncf %15 : vector<5x4xf32> to vector<5x4xbf16>
    %17 = vector.extract_strided_slice %12 {offsets = [0, 0], sizes = [5, 4], strides = [1, 1]} : vector<5x16xf32> to vector<5x4xf32>
    %18 = arith.truncf %17 : vector<5x4xf32> to vector<5x4xbf16>
    %cst_9 = arith.constant dense<0.000000e+00> : vector<5x5xf32>
    %19 = tpu.matmul %14, %16, %cst_9 {dimension_numbers = #tpu.dot_dimension_numbers<[1], [1], [0], [0], [0, 0, 1, 0], [], []>} : vector<5x4xbf16>, vector<5x4xbf16>, vector<5x5xf32> -> vector<5x5xf32>
    %cst_10 = arith.constant 5.000000e-01 : f32
    %20 = vector.broadcast %cst_10 : f32 to vector<5x5xf32>
    %21 = arith.mulf %19, %20 : vector<5x5xf32>
    %22 = vector.broadcast %3 : vector<1x5xf32> to vector<5x5xf32>
    %23 = arith.addf %21, %22 : vector<5x5xf32>
    %cst_11 = arith.constant dense<0xFF800000> : vector<5xf32>
    %24 = vector.multi_reduction <maximumf>, %23, %cst_11 [1] : vector<5x5xf32> to vector<5xf32>
    %25 = vector.shape_cast %24 : vector<5xf32> to vector<5x1xf32>
    %26 = vector.broadcast %25 : vector<5x1xf32> to vector<5x5xf32>
    %27 = arith.subf %23, %26 : vector<5x5xf32>
    %28 = math.exp %27 : vector<5x5xf32>
    %cst_12 = arith.constant dense<0.000000e+00> : vector<5xf32>
    %29 = vector.multi_reduction <add>, %28, %cst_12 [1] : vector<5x5xf32> to vector<5xf32>
    %30 = vector.shape_cast %29 : vector<5xf32> to vector<5x1xf32>
    %31 = tpu.reciprocal %30 {approx = true} : vector<5x1xf32> -> vector<5x1xf32>
    %32 = vector.broadcast %31 : vector<5x1xf32> to vector<5x5xf32>
    %33 = arith.mulf %28, %32 : vector<5x5xf32>
    %34 = arith.truncf %33 : vector<5x5xf32> to vector<5x5xbf16>
    %cst_13 = arith.constant dense<0.000000e+00> : vector<5x4xf32>
    %35 = tpu.matmul %34, %18, %cst_13 {dimension_numbers = #tpu.dot_dimension_numbers<[1], [0], [0], [1], [0, 0, 1, 1], [], []>} : vector<5x5xbf16>, vector<5x4xbf16>, vector<5x4xf32> -> vector<5x4xf32>
    %36 = vector.extract_strided_slice %10 {offsets = [0, 4], sizes = [5, 4], strides = [1, 1]} : vector<5x16xf32> to vector<5x4xf32>
    %37 = arith.truncf %36 : vector<5x4xf32> to vector<5x4xbf16>
    %38 = vector.extract_strided_slice %11 {offsets = [0, 4], sizes = [5, 4], strides = [1, 1]} : vector<5x16xf32> to vector<5x4xf32>
    %39 = arith.truncf %38 : vector<5x4xf32> to vector<5x4xbf16>
    %40 = vector.extract_strided_slice %12 {offsets = [0, 4], sizes = [5, 4], strides = [1, 1]} : vector<5x16xf32> to vector<5x4xf32>
    %41 = arith.truncf %40 : vector<5x4xf32> to vector<5x4xbf16>
    %cst_14 = arith.constant dense<0.000000e+00> : vector<5x5xf32>
    %42 = tpu.matmul %37, %39, %cst_14 {dimension_numbers = #tpu.dot_dimension_numbers<[1], [1], [0], [0], [0, 0, 1, 0], [], []>} : vector<5x4xbf16>, vector<5x4xbf16>, vector<5x5xf32> -> vector<5x5xf32>
    %cst_15 = arith.constant 5.000000e-01 : f32
    %43 = vector.broadcast %cst_15 : f32 to vector<5x5xf32>
    %44 = arith.mulf %42, %43 : vector<5x5xf32>
    %45 = vector.broadcast %3 : vector<1x5xf32> to vector<5x5xf32>
    %46 = arith.addf %44, %45 : vector<5x5xf32>
    %cst_16 = arith.constant dense<0xFF800000> : vector<5xf32>
    %47 = vector.multi_reduction <maximumf>, %46, %cst_16 [1] : vector<5x5xf32> to vector<5xf32>
    %48 = vector.shape_cast %47 : vector<5xf32> to vector<5x1xf32>
    %49 = vector.broadcast %48 : vector<5x1xf32> to vector<5x5xf32>
    %50 = arith.subf %46, %49 : vector<5x5xf32>
    %51 = math.exp %50 : vector<5x5xf32>
    %cst_17 = arith.constant dense<0.000000e+00> : vector<5xf32>
    %52 = vector.multi_reduction <add>, %51, %cst_17 [1] : vector<5x5xf32> to vector<5xf32>
    %53 = vector.shape_cast %52 : vector<5xf32> to vector<5x1xf32>
    %54 = tpu.reciprocal %53 {approx = true} : vector<5x1xf32> -> vector<5x1xf32>
    %55 = vector.broadcast %54 : vector<5x1xf32> to vector<5x5xf32>
    %56 = arith.mulf %51, %55 : vector<5x5xf32>
    %57 = arith.truncf %56 : vector<5x5xf32> to vector<5x5xbf16>
    %cst_18 = arith.constant dense<0.000000e+00> : vector<5x4xf32>
    %58 = tpu.matmul %57, %41, %cst_18 {dimension_numbers = #tpu.dot_dimension_numbers<[1], [0], [0], [1], [0, 0, 1, 1], [], []>} : vector<5x5xbf16>, vector<5x4xbf16>, vector<5x4xf32> -> vector<5x4xf32>
    %59 = vector.extract_strided_slice %10 {offsets = [0, 8], sizes = [5, 4], strides = [1, 1]} : vector<5x16xf32> to vector<5x4xf32>
    %60 = arith.truncf %59 : vector<5x4xf32> to vector<5x4xbf16>
    %61 = vector.extract_strided_slice %11 {offsets = [0, 8], sizes = [5, 4], strides = [1, 1]} : vector<5x16xf32> to vector<5x4xf32>
    %62 = arith.truncf %61 : vector<5x4xf32> to vector<5x4xbf16>
    %63 = vector.extract_strided_slice %12 {offsets = [0, 8], sizes = [5, 4], strides = [1, 1]} : vector<5x16xf32> to vector<5x4xf32>
    %64 = arith.truncf %63 : vector<5x4xf32> to vector<5x4xbf16>
    %cst_19 = arith.constant dense<0.000000e+00> : vector<5x5xf32>
    %65 = tpu.matmul %60, %62, %cst_19 {dimension_numbers = #tpu.dot_dimension_numbers<[1], [1], [0], [0], [0, 0, 1, 0], [], []>} : vector<5x4xbf16>, vector<5x4xbf16>, vector<5x5xf32> -> vector<5x5xf32>
    %cst_20 = arith.constant 5.000000e-01 : f32
    %66 = vector.broadcast %cst_20 : f32 to vector<5x5xf32>
    %67 = arith.mulf %65, %66 : vector<5x5xf32>
    %68 = vector.broadcast %3 : vector<1x5xf32> to vector<5x5xf32>
    %69 = arith.addf %67, %68 : vector<5x5xf32>
    %cst_21 = arith.constant dense<0xFF800000> : vector<5xf32>
    %70 = vector.multi_reduction <maximumf>, %69, %cst_21 [1] : vector<5x5xf32> to vector<5xf32>
    %71 = vector.shape_cast %70 : vector<5xf32> to vector<5x1xf32>
    %72 = vector.broadcast %71 : vector<5x1xf32> to vector<5x5xf32>
    %73 = arith.subf %69, %72 : vector<5x5xf32>
    %74 = math.exp %73 : vector<5x5xf32>
    %cst_22 = arith.constant dense<0.000000e+00> : vector<5xf32>
    %75 = vector.multi_reduction <add>, %74, %cst_22 [1] : vector<5x5xf32> to vector<5xf32>
    %76 = vector.shape_cast %75 : vector<5xf32> to vector<5x1xf32>
    %77 = tpu.reciprocal %76 {approx = true} : vector<5x1xf32> -> vector<5x1xf32>
    %78 = vector.broadcast %77 : vector<5x1xf32> to vector<5x5xf32>
    %79 = arith.mulf %74, %78 : vector<5x5xf32>
    %80 = arith.truncf %79 : vector<5x5xf32> to vector<5x5xbf16>
    %cst_23 = arith.constant dense<0.000000e+00> : vector<5x4xf32>
    %81 = tpu.matmul %80, %64, %cst_23 {dimension_numbers = #tpu.dot_dimension_numbers<[1], [0], [0], [1], [0, 0, 1, 1], [], []>} : vector<5x5xbf16>, vector<5x4xbf16>, vector<5x4xf32> -> vector<5x4xf32>
    %82 = vector.extract_strided_slice %10 {offsets = [0, 12], sizes = [5, 4], strides = [1, 1]} : vector<5x16xf32> to vector<5x4xf32>
    %83 = arith.truncf %82 : vector<5x4xf32> to vector<5x4xbf16>
    %84 = vector.extract_strided_slice %11 {offsets = [0, 12], sizes = [5, 4], strides = [1, 1]} : vector<5x16xf32> to vector<5x4xf32>
    %85 = arith.truncf %84 : vector<5x4xf32> to vector<5x4xbf16>
    %86 = vector.extract_strided_slice %12 {offsets = [0, 12], sizes = [5, 4], strides = [1, 1]} : vector<5x16xf32> to vector<5x4xf32>
    %87 = arith.truncf %86 : vector<5x4xf32> to vector<5x4xbf16>
    %cst_24 = arith.constant dense<0.000000e+00> : vector<5x5xf32>
    %88 = tpu.matmul %83, %85, %cst_24 {dimension_numbers = #tpu.dot_dimension_numbers<[1], [1], [0], [0], [0, 0, 1, 0], [], []>} : vector<5x4xbf16>, vector<5x4xbf16>, vector<5x5xf32> -> vector<5x5xf32>
    %cst_25 = arith.constant 5.000000e-01 : f32
    %89 = vector.broadcast %cst_25 : f32 to vector<5x5xf32>
    %90 = arith.mulf %88, %89 : vector<5x5xf32>
    %91 = vector.broadcast %3 : vector<1x5xf32> to vector<5x5xf32>
    %92 = arith.addf %90, %91 : vector<5x5xf32>
    %cst_26 = arith.constant dense<0xFF800000> : vector<5xf32>
    %93 = vector.multi_reduction <maximumf>, %92, %cst_26 [1] : vector<5x5xf32> to vector<5xf32>
    %94 = vector.shape_cast %93 : vector<5xf32> to vector<5x1xf32>
    %95 = vector.broadcast %94 : vector<5x1xf32> to vector<5x5xf32>
    %96 = arith.subf %92, %95 : vector<5x5xf32>
    %97 = math.exp %96 : vector<5x5xf32>
    %cst_27 = arith.constant dense<0.000000e+00> : vector<5xf32>
    %98 = vector.multi_reduction <add>, %97, %cst_27 [1] : vector<5x5xf32> to vector<5xf32>
    %99 = vector.shape_cast %98 : vector<5xf32> to vector<5x1xf32>
    %100 = tpu.reciprocal %99 {approx = true} : vector<5x1xf32> -> vector<5x1xf32>
    %101 = vector.broadcast %100 : vector<5x1xf32> to vector<5x5xf32>
    %102 = arith.mulf %97, %101 : vector<5x5xf32>
    %103 = arith.truncf %102 : vector<5x5xf32> to vector<5x5xbf16>
    %cst_28 = arith.constant dense<0.000000e+00> : vector<5x4xf32>
    %104 = tpu.matmul %103, %87, %cst_28 {dimension_numbers = #tpu.dot_dimension_numbers<[1], [0], [0], [1], [0, 0, 1, 1], [], []>} : vector<5x5xbf16>, vector<5x4xbf16>, vector<5x4xf32> -> vector<5x4xf32>
    %105 = tpu.concatenate %35, %58, %81, %104 in 1 : vector<5x4xf32>, vector<5x4xf32>, vector<5x4xf32>, vector<5x4xf32> -> vector<5x16xf32>
    %c0_29 = arith.constant 0 : index
    %c0_30 = arith.constant 0 : index
    %106 = vector.load %arg7[%c0_29, %c0_30] : memref<16x16xbf16, #tpu.memory_space<vmem>>, vector<16x16xbf16>
    %c0_31 = arith.constant 0 : index
    %c0_32 = arith.constant 0 : index
    %107 = vector.load %arg8[%c0_31, %c0_32] : memref<1x16xf32, #tpu.memory_space<vmem>>, vector<1x16xf32>
    %108 = arith.truncf %105 : vector<5x16xf32> to vector<5x16xbf16>
    %cst_33 = arith.constant dense<0.000000e+00> : vector<5x16xf32>
    %109 = tpu.matmul %108, %106, %cst_33 {dimension_numbers = #tpu.dot_dimension_numbers<[1], [0], [0], [1], [0, 0, 1, 1], [], []>} : vector<5x16xbf16>, vector<16x16xbf16>, vector<5x16xf32> -> vector<5x16xf32>
    %110 = vector.broadcast %107 : vector<1x16xf32> to vector<5x16xf32>
    %111 = arith.addf %109, %110 : vector<5x16xf32>
    %112 = arith.addf %1, %111 : vector<5x16xf32>
    %c0_34 = arith.constant 0 : index
    %c0_35 = arith.constant 0 : index
    %113 = vector.load %arg9[%c0_34, %c0_35] : memref<1x16xf32, #tpu.memory_space<vmem>>, vector<1x16xf32>
    %c0_36 = arith.constant 0 : index
    %c0_37 = arith.constant 0 : index
    %114 = vector.load %arg10[%c0_36, %c0_37] : memref<1x16xf32, #tpu.memory_space<vmem>>, vector<1x16xf32>
    %cst_38 = arith.constant dense<0.000000e+00> : vector<5xf32>
    %115 = vector.multi_reduction <add>, %112, %cst_38 [1] : vector<5x16xf32> to vector<5xf32>
    %116 = vector.shape_cast %115 : vector<5xf32> to vector<5x1xf32>
    %cst_39 = arith.constant 1.600000e+01 : f32
    %117 = vector.broadcast %cst_39 : f32 to vector<5x1xf32>
    %118 = arith.divf %116, %117 : vector<5x1xf32>
    %119 = vector.broadcast %118 : vector<5x1xf32> to vector<5x16xf32>
    %120 = arith.subf %112, %119 : vector<5x16xf32>
    %121 = arith.mulf %120, %120 : vector<5x16xf32>
    %cst_40 = arith.constant dense<0.000000e+00> : vector<5xf32>
    %122 = vector.multi_reduction <add>, %121, %cst_40 [1] : vector<5x16xf32> to vector<5xf32>
    %123 = vector.shape_cast %122 : vector<5xf32> to vector<5x1xf32>
    %cst_41 = arith.constant 1.600000e+01 : f32
    %124 = vector.broadcast %cst_41 : f32 to vector<5x1xf32>
    %125 = arith.divf %123, %124 : vector<5x1xf32>
    %126 = vector.broadcast %118 : vector<5x1xf32> to vector<5x16xf32>
    %127 = arith.subf %112, %126 : vector<5x16xf32>
    %cst_42 = arith.constant 9.99999996E-13 : f32
    %128 = vector.broadcast %cst_42 : f32 to vector<5x1xf32>
    %129 = arith.addf %125, %128 : vector<5x1xf32>
    %130 = math.rsqrt %129 : vector<5x1xf32>
    %131 = vector.broadcast %130 : vector<5x1xf32> to vector<5x16xf32>
    %132 = arith.mulf %127, %131 : vector<5x16xf32>
    %133 = vector.broadcast %113 : vector<1x16xf32> to vector<5x16xf32>
    %134 = arith.mulf %132, %133 : vector<5x16xf32>
    %135 = vector.broadcast %114 : vector<1x16xf32> to vector<5x16xf32>
    %136 = arith.addf %134, %135 : vector<5x16xf32>
    %c0_43 = arith.constant 0 : index
    %c0_44 = arith.constant 0 : index
    %137 = vector.load %arg11[%c0_43, %c0_44] : memref<16x32xbf16, #tpu.memory_space<vmem>>, vector<16x32xbf16>
    %c0_45 = arith.constant 0 : index
    %c0_46 = arith.constant 0 : index
    %138 = vector.load %arg12[%c0_45, %c0_46] : memref<1x32xf32, #tpu.memory_space<vmem>>, vector<1x32xf32>
    %139 = arith.truncf %136 : vector<5x16xf32> to vector<5x16xbf16>
    %cst_47 = arith.constant dense<0.000000e+00> : vector<5x32xf32>
    %140 = tpu.matmul %139, %137, %cst_47 {dimension_numbers = #tpu.dot_dimension_numbers<[1], [0], [0], [1], [0, 0, 1, 1], [], []>} : vector<5x16xbf16>, vector<16x32xbf16>, vector<5x32xf32> -> vector<5x32xf32>
    %141 = vector.broadcast %138 : vector<1x32xf32> to vector<5x32xf32>
    %142 = arith.addf %140, %141 : vector<5x32xf32>
    %cst_48 = arith.constant 5.000000e-01 : f32
    %143 = vector.broadcast %cst_48 : f32 to vector<5x32xf32>
    %144 = arith.mulf %143, %142 : vector<5x32xf32>
    %cst_49 = arith.constant 0.707106769 : f32
    %145 = vector.broadcast %cst_49 : f32 to vector<5x32xf32>
    %146 = arith.mulf %142, %145 : vector<5x32xf32>
    %147 = math.absf %146 : vector<5x32xf32>
    %cst_50 = arith.constant 0.327591091 : f32
    %148 = vector.broadcast %cst_50 : f32 to vector<5x32xf32>
    %149 = arith.mulf %148, %147 : vector<5x32xf32>
    %cst_51 = arith.constant 1.000000e+00 : f32
    %150 = vector.broadcast %cst_51 : f32 to vector<5x32xf32>
    %151 = arith.addf %150, %149 : vector<5x32xf32>
    %cst_52 = arith.constant 1.000000e+00 : f32
    %152 = vector.broadcast %cst_52 : f32 to vector<5x32xf32>
    %153 = arith.divf %152, %151 : vector<5x32xf32>
    %cst_53 = arith.constant 1.06140542 : f32
    %154 = vector.broadcast %cst_53 : f32 to vector<5x32xf32>
    %155 = arith.mulf %154, %153 : vector<5x32xf32>
    %cst_54 = arith.constant -1.45315206 : f32
    %156 = vector.broadcast %cst_54 : f32 to vector<5x32xf32>
    %157 = arith.addf %155, %156 : vector<5x32xf32>
    %158 = arith.mulf %157, %153 : vector<5x32xf32>
    %cst_55 = arith.constant 1.42141378 : f32
    %159 = vector.broadcast %cst_55 : f32 to vector<5x32xf32>
    %160 = arith.addf %158, %159 : vector<5x32xf32>
    %161 = arith.mulf %160, %153 : vector<5x32xf32>
    %cst_56 = arith.constant -0.284496725 : f32
    %162 = vector.broadcast %cst_56 : f32 to vector<5x32xf32>
    %163 = arith.addf %161, %162 : vector<5x32xf32>
    %164 = arith.mulf %163, %153 : vector<5x32xf32>
    %cst_57 = arith.constant 0.254829586 : f32
    %165 = vector.broadcast %cst_57 : f32 to vector<5x32xf32>
    %166 = arith.addf %164, %165 : vector<5x32xf32>
    %167 = arith.mulf %166, %153 : vector<5x32xf32>
    %cst_58 = arith.constant 0.000000e+00 : f32
    %168 = vector.broadcast %cst_58 : f32 to vector<5x32xf32>
    %169 = arith.subf %168, %147 : vector<5x32xf32>
    %170 = arith.mulf %169, %147 : vector<5x32xf32>
    %171 = math.exp %170 : vector<5x32xf32>
    %172 = arith.mulf %167, %171 : vector<5x32xf32>
    %cst_59 = arith.constant 1.000000e+00 : f32
    %173 = vector.broadcast %cst_59 : f32 to vector<5x32xf32>
    %174 = arith.subf %173, %172 : vector<5x32xf32>
    %cst_60 = arith.constant 0.000000e+00 : f32
    %175 = vector.broadcast %cst_60 : f32 to vector<5x32xf32>
    %176 = arith.cmpf olt, %146, %175 : vector<5x32xf32>
    %cst_61 = arith.constant 0.000000e+00 : f32
    %177 = vector.broadcast %cst_61 : f32 to vector<5x32xf32>
    %178 = arith.subf %177, %174 : vector<5x32xf32>
    %179 = arith.select %176, %178, %174 : vector<5x32xi1>, vector<5x32xf32>
    %cst_62 = arith.constant 1.000000e+00 : f32
    %180 = vector.broadcast %cst_62 : f32 to vector<5x32xf32>
    %181 = arith.addf %180, %179 : vector<5x32xf32>
    %182 = arith.mulf %144, %181 : vector<5x32xf32>
    %c0_63 = arith.constant 0 : index
    %c0_64 = arith.constant 0 : index
    %183 = vector.load %arg13[%c0_63, %c0_64] : memref<32x16xbf16, #tpu.memory_space<vmem>>, vector<32x16xbf16>
    %c0_65 = arith.constant 0 : index
    %c0_66 = arith.constant 0 : index
    %184 = vector.load %arg14[%c0_65, %c0_66] : memref<1x16xf32, #tpu.memory_space<vmem>>, vector<1x16xf32>
    %185 = arith.truncf %182 : vector<5x32xf32> to vector<5x32xbf16>
    %cst_67 = arith.constant dense<0.000000e+00> : vector<5x16xf32>
    %186 = tpu.matmul %185, %183, %cst_67 {dimension_numbers = #tpu.dot_dimension_numbers<[1], [0], [0], [1], [0, 0, 1, 1], [], []>} : vector<5x32xbf16>, vector<32x16xbf16>, vector<5x16xf32> -> vector<5x16xf32>
    %187 = vector.broadcast %184 : vector<1x16xf32> to vector<5x16xf32>
    %188 = arith.addf %186, %187 : vector<5x16xf32>
    %189 = arith.addf %112, %188 : vector<5x16xf32>
    %c0_68 = arith.constant 0 : index
    %c0_69 = arith.constant 0 : index
    %c0_70 = arith.constant 0 : index
    %190 = vector.load %arg15[%c0_68, %c0_69, %c0_70] : memref<1x5x16xf32, #tpu.memory_space<vmem>>, vector<1x5x16xf32>
    %191 = vector.shape_cast %190 : vector<1x5x16xf32> to vector<5x16xf32>
    %192 = vector.shape_cast %189 : vector<5x16xf32> to vector<1x5x16xf32>
    tpu.vector_store %arg15[%c0_68, %c0_69, %c0_70], %192 {strides = array<i32>} : memref<1x5x16xf32, #tpu.memory_space<vmem>>, vector<1x5x16xf32>,
    return
  }
  func.func @transform_0(%arg0: i32) -> (i32, i32, i32) {
    %c0_i32 = arith.constant 0 : i32
    %c0_i32_0 = arith.constant 0 : i32
    %c0_i32_1 = arith.constant 0 : i32
    return %arg0, %c0_i32, %c0_i32_0 : i32, i32, i32
  }
  func.func @transform_1(%arg0: i32) -> (i32, i32, i32) {
    %c0_i32 = arith.constant 0 : i32
    %c0_i32_0 = arith.constant 0 : i32
    %c0_i32_1 = arith.constant 0 : i32
    return %arg0, %c0_i32, %c0_i32_0 : i32, i32, i32
  }
  func.func @transform_2(%arg0: i32) -> (i32, i32) {
    %c0_i32 = arith.constant 0 : i32
    %c0_i32_0 = arith.constant 0 : i32
    %c0_i32_1 = arith.constant 0 : i32
    return %c0_i32, %c0_i32_0 : i32, i32
  }
  func.func @transform_3(%arg0: i32) -> (i32, i32) {
    %c0_i32 = arith.constant 0 : i32
    %c0_i32_0 = arith.constant 0 : i32
    %c0_i32_1 = arith.constant 0 : i32
    return %c0_i32, %c0_i32_0 : i32, i32
  }
  func.func @transform_4(%arg0: i32) -> (i32, i32) {
    %c0_i32 = arith.constant 0 : i32
    %c0_i32_0 = arith.constant 0 : i32
    %c0_i32_1 = arith.constant 0 : i32
    return %c0_i32, %c0_i32_0 : i32, i32
  }
  func.func @transform_5(%arg0: i32) -> (i32, i32) {
    %c0_i32 = arith.constant 0 : i32
    %c0_i32_0 = arith.constant 0 : i32
    %c0_i32_1 = arith.constant 0 : i32
    return %c0_i32, %c0_i32_0 : i32, i32
  }
  func.func @transform_6(%arg0: i32) -> (i32, i32) {
    %c0_i32 = arith.constant 0 : i32
    %c0_i32_0 = arith.constant 0 : i32
    %c0_i32_1 = arith.constant 0 : i32
    return %c0_i32, %c0_i32_0 : i32, i32
  }
  func.func @transform_7(%arg0: i32) -> (i32, i32) {
    %c0_i32 = arith.constant 0 : i32
    %c0_i32_0 = arith.constant 0 : i32
    %c0_i32_1 = arith.constant 0 : i32
    return %c0_i32, %c0_i32_0 : i32, i32
  }
  func.func @transform_8(%arg0: i32) -> (i32, i32) {
    %c0_i32 = arith.constant 0 : i32
    %c0_i32_0 = arith.constant 0 : i32
    %c0_i32_1 = arith.constant 0 : i32
    return %c0_i32, %c0_i32_0 : i32, i32
  }
  func.func @transform_9(%arg0: i32) -> (i32, i32) {
    %c0_i32 = arith.constant 0 : i32
    %c0_i32_0 = arith.constant 0 : i32
    %c0_i32_1 = arith.constant 0 : i32
    return %c0_i32, %c0_i32_0 : i32, i32
  }
  func.func @transform_10(%arg0: i32) -> (i32, i32) {
    %c0_i32 = arith.constant 0 : i32
    %c0_i32_0 = arith.constant 0 : i32
    %c0_i32_1 = arith.constant 0 : i32
    return %c0_i32, %c0_i32_0 : i32, i32
  }
  func.func @transform_11(%arg0: i32) -> (i32, i32) {
    %c0_i32 = arith.constant 0 : i32
    %c0_i32_0 = arith.constant 0 : i32
    %c0_i32_1 = arith.constant 0 : i32
    return %c0_i32, %c0_i32_0 : i32, i32
  }
  func.func @transform_12(%arg0: i32) -> (i32, i32) {
    %c0_i32 = arith.constant 0 : i32
    %c0_i32_0 = arith.constant 0 : i32
    %c0_i32_1 = arith.constant 0 : i32
    return %c0_i32, %c0_i32_0 : i32, i32
  }
  func.func @transform_13(%arg0: i32) -> (i32, i32) {
    %c0_i32 = arith.constant 0 : i32
    %c0_i32_0 = arith.constant 0 : i32
    %c0_i32_1 = arith.constant 0 : i32
    return %c0_i32, %c0_i32_0 : i32, i32
  }
  func.func @transform_14(%arg0: i32) -> (i32, i32, i32) {
    %c0_i32 = arith.constant 0 : i32
    %c0_i32_0 = arith.constant 0 : i32
    %c0_i32_1 = arith.constant 0 : i32
    return %arg0, %c0_i32, %c0_i32_0 : i32, i32, i32
  }
}

module attributes {stable_mosaic.version = 11 : i64} {
  func.func @_explainer_mlp_kernel(%arg0: i32, %arg1: memref<1x5x16xf32, #tpu.memory_space<vmem>>, %arg2: memref<1x16xf32, #tpu.memory_space<vmem>>, %arg3: memref<1x16xf32, #tpu.memory_space<vmem>>, %arg4: memref<16x24xbf16, #tpu.memory_space<vmem>>, %arg5: memref<1x24xf32, #tpu.memory_space<vmem>>, %arg6: memref<24x24xbf16, #tpu.memory_space<vmem>>, %arg7: memref<1x24xf32, #tpu.memory_space<vmem>>, %arg8: memref<24x10xbf16, #tpu.memory_space<vmem>>, %arg9: memref<1x10xf32, #tpu.memory_space<vmem>>, %arg10: memref<1x5x10xf32, #tpu.memory_space<vmem>>) attributes {dimension_semantics = [#tpu.dimension_semantics<parallel>], iteration_bounds = array<i64: 2>, scalar_prefetch = 0 : i64, scratch_operands = 0 : i64, tpu.core_type = #tpu.core_type<tc>, window_params = [{transform_indices = @transform_0, window_bounds = array<i64: 1, 5, 16>}, {pipeline_mode = #tpu.pipeline_mode<synchronous>, transform_indices = @transform_1, window_bounds = array<i64: 1, 16>}, {pipeline_mode = #tpu.pipeline_mode<synchronous>, transform_indices = @transform_2, window_bounds = array<i64: 1, 16>}, {pipeline_mode = #tpu.pipeline_mode<synchronous>, transform_indices = @transform_3, window_bounds = array<i64: 16, 24>}, {pipeline_mode = #tpu.pipeline_mode<synchronous>, transform_indices = @transform_4, window_bounds = array<i64: 1, 24>}, {pipeline_mode = #tpu.pipeline_mode<synchronous>, transform_indices = @transform_5, window_bounds = array<i64: 24, 24>}, {pipeline_mode = #tpu.pipeline_mode<synchronous>, transform_indices = @transform_6, window_bounds = array<i64: 1, 24>}, {pipeline_mode = #tpu.pipeline_mode<synchronous>, transform_indices = @transform_7, window_bounds = array<i64: 24, 10>}, {pipeline_mode = #tpu.pipeline_mode<synchronous>, transform_indices = @transform_8, window_bounds = array<i64: 1, 10>}, {transform_indices = @transform_9, window_bounds = array<i64: 1, 5, 10>}]} {
    %c0 = arith.constant 0 : index
    %c0_0 = arith.constant 0 : index
    %c0_1 = arith.constant 0 : index
    %0 = vector.load %arg1[%c0, %c0_0, %c0_1] : memref<1x5x16xf32, #tpu.memory_space<vmem>>, vector<1x5x16xf32>
    %1 = vector.shape_cast %0 : vector<1x5x16xf32> to vector<5x16xf32>
    %c0_2 = arith.constant 0 : index
    %c0_3 = arith.constant 0 : index
    %2 = vector.load %arg2[%c0_2, %c0_3] : memref<1x16xf32, #tpu.memory_space<vmem>>, vector<1x16xf32>
    %c0_4 = arith.constant 0 : index
    %c0_5 = arith.constant 0 : index
    %3 = vector.load %arg3[%c0_4, %c0_5] : memref<1x16xf32, #tpu.memory_space<vmem>>, vector<1x16xf32>
    %cst = arith.constant dense<0.000000e+00> : vector<5xf32>
    %4 = vector.multi_reduction <add>, %1, %cst [1] : vector<5x16xf32> to vector<5xf32>
    %5 = vector.shape_cast %4 : vector<5xf32> to vector<5x1xf32>
    %cst_6 = arith.constant 1.600000e+01 : f32
    %6 = vector.broadcast %cst_6 : f32 to vector<5x1xf32>
    %7 = arith.divf %5, %6 : vector<5x1xf32>
    %8 = vector.broadcast %7 : vector<5x1xf32> to vector<5x16xf32>
    %9 = arith.subf %1, %8 : vector<5x16xf32>
    %10 = arith.mulf %9, %9 : vector<5x16xf32>
    %cst_7 = arith.constant dense<0.000000e+00> : vector<5xf32>
    %11 = vector.multi_reduction <add>, %10, %cst_7 [1] : vector<5x16xf32> to vector<5xf32>
    %12 = vector.shape_cast %11 : vector<5xf32> to vector<5x1xf32>
    %cst_8 = arith.constant 1.600000e+01 : f32
    %13 = vector.broadcast %cst_8 : f32 to vector<5x1xf32>
    %14 = arith.divf %12, %13 : vector<5x1xf32>
    %15 = vector.broadcast %7 : vector<5x1xf32> to vector<5x16xf32>
    %16 = arith.subf %1, %15 : vector<5x16xf32>
    %cst_9 = arith.constant 9.99999974E-6 : f32
    %17 = vector.broadcast %cst_9 : f32 to vector<5x1xf32>
    %18 = arith.addf %14, %17 : vector<5x1xf32>
    %19 = math.rsqrt %18 : vector<5x1xf32>
    %20 = vector.broadcast %19 : vector<5x1xf32> to vector<5x16xf32>
    %21 = arith.mulf %16, %20 : vector<5x16xf32>
    %22 = vector.broadcast %2 : vector<1x16xf32> to vector<5x16xf32>
    %23 = arith.mulf %21, %22 : vector<5x16xf32>
    %24 = vector.broadcast %3 : vector<1x16xf32> to vector<5x16xf32>
    %25 = arith.addf %23, %24 : vector<5x16xf32>
    %c0_10 = arith.constant 0 : index
    %c0_11 = arith.constant 0 : index
    %26 = vector.load %arg4[%c0_10, %c0_11] : memref<16x24xbf16, #tpu.memory_space<vmem>>, vector<16x24xbf16>
    %c0_12 = arith.constant 0 : index
    %c0_13 = arith.constant 0 : index
    %27 = vector.load %arg5[%c0_12, %c0_13] : memref<1x24xf32, #tpu.memory_space<vmem>>, vector<1x24xf32>
    %28 = arith.truncf %25 : vector<5x16xf32> to vector<5x16xbf16>
    %cst_14 = arith.constant dense<0.000000e+00> : vector<5x24xf32>
    %29 = tpu.matmul %28, %26, %cst_14 {dimension_numbers = #tpu.dot_dimension_numbers<[1], [0], [0], [1], [0, 0, 1, 1], [], []>} : vector<5x16xbf16>, vector<16x24xbf16>, vector<5x24xf32> -> vector<5x24xf32>
    %30 = vector.broadcast %27 : vector<1x24xf32> to vector<5x24xf32>
    %31 = arith.addf %29, %30 : vector<5x24xf32>
    %cst_15 = arith.constant 5.000000e-01 : f32
    %32 = vector.broadcast %cst_15 : f32 to vector<5x24xf32>
    %33 = arith.mulf %32, %31 : vector<5x24xf32>
    %cst_16 = arith.constant 0.707106769 : f32
    %34 = vector.broadcast %cst_16 : f32 to vector<5x24xf32>
    %35 = arith.mulf %31, %34 : vector<5x24xf32>
    %36 = math.absf %35 : vector<5x24xf32>
    %cst_17 = arith.constant 0.327591091 : f32
    %37 = vector.broadcast %cst_17 : f32 to vector<5x24xf32>
    %38 = arith.mulf %37, %36 : vector<5x24xf32>
    %cst_18 = arith.constant 1.000000e+00 : f32
    %39 = vector.broadcast %cst_18 : f32 to vector<5x24xf32>
    %40 = arith.addf %39, %38 : vector<5x24xf32>
    %cst_19 = arith.constant 1.000000e+00 : f32
    %41 = vector.broadcast %cst_19 : f32 to vector<5x24xf32>
    %42 = arith.divf %41, %40 : vector<5x24xf32>
    %cst_20 = arith.constant 1.06140542 : f32
    %43 = vector.broadcast %cst_20 : f32 to vector<5x24xf32>
    %44 = arith.mulf %43, %42 : vector<5x24xf32>
    %cst_21 = arith.constant -1.45315206 : f32
    %45 = vector.broadcast %cst_21 : f32 to vector<5x24xf32>
    %46 = arith.addf %44, %45 : vector<5x24xf32>
    %47 = arith.mulf %46, %42 : vector<5x24xf32>
    %cst_22 = arith.constant 1.42141378 : f32
    %48 = vector.broadcast %cst_22 : f32 to vector<5x24xf32>
    %49 = arith.addf %47, %48 : vector<5x24xf32>
    %50 = arith.mulf %49, %42 : vector<5x24xf32>
    %cst_23 = arith.constant -0.284496725 : f32
    %51 = vector.broadcast %cst_23 : f32 to vector<5x24xf32>
    %52 = arith.addf %50, %51 : vector<5x24xf32>
    %53 = arith.mulf %52, %42 : vector<5x24xf32>
    %cst_24 = arith.constant 0.254829586 : f32
    %54 = vector.broadcast %cst_24 : f32 to vector<5x24xf32>
    %55 = arith.addf %53, %54 : vector<5x24xf32>
    %56 = arith.mulf %55, %42 : vector<5x24xf32>
    %cst_25 = arith.constant 0.000000e+00 : f32
    %57 = vector.broadcast %cst_25 : f32 to vector<5x24xf32>
    %58 = arith.subf %57, %36 : vector<5x24xf32>
    %59 = arith.mulf %58, %36 : vector<5x24xf32>
    %60 = math.exp %59 : vector<5x24xf32>
    %61 = arith.mulf %56, %60 : vector<5x24xf32>
    %cst_26 = arith.constant 1.000000e+00 : f32
    %62 = vector.broadcast %cst_26 : f32 to vector<5x24xf32>
    %63 = arith.subf %62, %61 : vector<5x24xf32>
    %cst_27 = arith.constant 0.000000e+00 : f32
    %64 = vector.broadcast %cst_27 : f32 to vector<5x24xf32>
    %65 = arith.cmpf olt, %35, %64 : vector<5x24xf32>
    %cst_28 = arith.constant 0.000000e+00 : f32
    %66 = vector.broadcast %cst_28 : f32 to vector<5x24xf32>
    %67 = arith.subf %66, %63 : vector<5x24xf32>
    %68 = arith.select %65, %67, %63 : vector<5x24xi1>, vector<5x24xf32>
    %cst_29 = arith.constant 1.000000e+00 : f32
    %69 = vector.broadcast %cst_29 : f32 to vector<5x24xf32>
    %70 = arith.addf %69, %68 : vector<5x24xf32>
    %71 = arith.mulf %33, %70 : vector<5x24xf32>
    %c0_30 = arith.constant 0 : index
    %c0_31 = arith.constant 0 : index
    %72 = vector.load %arg6[%c0_30, %c0_31] : memref<24x24xbf16, #tpu.memory_space<vmem>>, vector<24x24xbf16>
    %c0_32 = arith.constant 0 : index
    %c0_33 = arith.constant 0 : index
    %73 = vector.load %arg7[%c0_32, %c0_33] : memref<1x24xf32, #tpu.memory_space<vmem>>, vector<1x24xf32>
    %74 = arith.truncf %71 : vector<5x24xf32> to vector<5x24xbf16>
    %cst_34 = arith.constant dense<0.000000e+00> : vector<5x24xf32>
    %75 = tpu.matmul %74, %72, %cst_34 {dimension_numbers = #tpu.dot_dimension_numbers<[1], [0], [0], [1], [0, 0, 1, 1], [], []>} : vector<5x24xbf16>, vector<24x24xbf16>, vector<5x24xf32> -> vector<5x24xf32>
    %76 = vector.broadcast %73 : vector<1x24xf32> to vector<5x24xf32>
    %77 = arith.addf %75, %76 : vector<5x24xf32>
    %cst_35 = arith.constant 5.000000e-01 : f32
    %78 = vector.broadcast %cst_35 : f32 to vector<5x24xf32>
    %79 = arith.mulf %78, %77 : vector<5x24xf32>
    %cst_36 = arith.constant 0.707106769 : f32
    %80 = vector.broadcast %cst_36 : f32 to vector<5x24xf32>
    %81 = arith.mulf %77, %80 : vector<5x24xf32>
    %82 = math.absf %81 : vector<5x24xf32>
    %cst_37 = arith.constant 0.327591091 : f32
    %83 = vector.broadcast %cst_37 : f32 to vector<5x24xf32>
    %84 = arith.mulf %83, %82 : vector<5x24xf32>
    %cst_38 = arith.constant 1.000000e+00 : f32
    %85 = vector.broadcast %cst_38 : f32 to vector<5x24xf32>
    %86 = arith.addf %85, %84 : vector<5x24xf32>
    %cst_39 = arith.constant 1.000000e+00 : f32
    %87 = vector.broadcast %cst_39 : f32 to vector<5x24xf32>
    %88 = arith.divf %87, %86 : vector<5x24xf32>
    %cst_40 = arith.constant 1.06140542 : f32
    %89 = vector.broadcast %cst_40 : f32 to vector<5x24xf32>
    %90 = arith.mulf %89, %88 : vector<5x24xf32>
    %cst_41 = arith.constant -1.45315206 : f32
    %91 = vector.broadcast %cst_41 : f32 to vector<5x24xf32>
    %92 = arith.addf %90, %91 : vector<5x24xf32>
    %93 = arith.mulf %92, %88 : vector<5x24xf32>
    %cst_42 = arith.constant 1.42141378 : f32
    %94 = vector.broadcast %cst_42 : f32 to vector<5x24xf32>
    %95 = arith.addf %93, %94 : vector<5x24xf32>
    %96 = arith.mulf %95, %88 : vector<5x24xf32>
    %cst_43 = arith.constant -0.284496725 : f32
    %97 = vector.broadcast %cst_43 : f32 to vector<5x24xf32>
    %98 = arith.addf %96, %97 : vector<5x24xf32>
    %99 = arith.mulf %98, %88 : vector<5x24xf32>
    %cst_44 = arith.constant 0.254829586 : f32
    %100 = vector.broadcast %cst_44 : f32 to vector<5x24xf32>
    %101 = arith.addf %99, %100 : vector<5x24xf32>
    %102 = arith.mulf %101, %88 : vector<5x24xf32>
    %cst_45 = arith.constant 0.000000e+00 : f32
    %103 = vector.broadcast %cst_45 : f32 to vector<5x24xf32>
    %104 = arith.subf %103, %82 : vector<5x24xf32>
    %105 = arith.mulf %104, %82 : vector<5x24xf32>
    %106 = math.exp %105 : vector<5x24xf32>
    %107 = arith.mulf %102, %106 : vector<5x24xf32>
    %cst_46 = arith.constant 1.000000e+00 : f32
    %108 = vector.broadcast %cst_46 : f32 to vector<5x24xf32>
    %109 = arith.subf %108, %107 : vector<5x24xf32>
    %cst_47 = arith.constant 0.000000e+00 : f32
    %110 = vector.broadcast %cst_47 : f32 to vector<5x24xf32>
    %111 = arith.cmpf olt, %81, %110 : vector<5x24xf32>
    %cst_48 = arith.constant 0.000000e+00 : f32
    %112 = vector.broadcast %cst_48 : f32 to vector<5x24xf32>
    %113 = arith.subf %112, %109 : vector<5x24xf32>
    %114 = arith.select %111, %113, %109 : vector<5x24xi1>, vector<5x24xf32>
    %cst_49 = arith.constant 1.000000e+00 : f32
    %115 = vector.broadcast %cst_49 : f32 to vector<5x24xf32>
    %116 = arith.addf %115, %114 : vector<5x24xf32>
    %117 = arith.mulf %79, %116 : vector<5x24xf32>
    %c0_50 = arith.constant 0 : index
    %c0_51 = arith.constant 0 : index
    %118 = vector.load %arg8[%c0_50, %c0_51] : memref<24x10xbf16, #tpu.memory_space<vmem>>, vector<24x10xbf16>
    %c0_52 = arith.constant 0 : index
    %c0_53 = arith.constant 0 : index
    %119 = vector.load %arg9[%c0_52, %c0_53] : memref<1x10xf32, #tpu.memory_space<vmem>>, vector<1x10xf32>
    %120 = arith.truncf %117 : vector<5x24xf32> to vector<5x24xbf16>
    %cst_54 = arith.constant dense<0.000000e+00> : vector<5x10xf32>
    %121 = tpu.matmul %120, %118, %cst_54 {dimension_numbers = #tpu.dot_dimension_numbers<[1], [0], [0], [1], [0, 0, 1, 1], [], []>} : vector<5x24xbf16>, vector<24x10xbf16>, vector<5x10xf32> -> vector<5x10xf32>
    %122 = vector.broadcast %119 : vector<1x10xf32> to vector<5x10xf32>
    %123 = arith.addf %121, %122 : vector<5x10xf32>
    %c0_55 = arith.constant 0 : index
    %c0_56 = arith.constant 0 : index
    %c0_57 = arith.constant 0 : index
    %124 = vector.load %arg10[%c0_55, %c0_56, %c0_57] : memref<1x5x10xf32, #tpu.memory_space<vmem>>, vector<1x5x10xf32>
    %125 = vector.shape_cast %124 : vector<1x5x10xf32> to vector<5x10xf32>
    %126 = vector.shape_cast %123 : vector<5x10xf32> to vector<1x5x10xf32>
    tpu.vector_store %arg10[%c0_55, %c0_56, %c0_57], %126 {strides = array<i32>} : memref<1x5x10xf32, #tpu.memory_space<vmem>>, vector<1x5x10xf32>,
    return
  }
  func.func @transform_0(%arg0: i32) -> (i32, i32, i32) {
    %c0_i32 = arith.constant 0 : i32
    %c0_i32_0 = arith.constant 0 : i32
    %c0_i32_1 = arith.constant 0 : i32
    return %arg0, %c0_i32, %c0_i32_0 : i32, i32, i32
  }
  func.func @transform_1(%arg0: i32) -> (i32, i32) {
    %c0_i32 = arith.constant 0 : i32
    %c0_i32_0 = arith.constant 0 : i32
    %c0_i32_1 = arith.constant 0 : i32
    return %c0_i32, %c0_i32_0 : i32, i32
  }
  func.func @transform_2(%arg0: i32) -> (i32, i32) {
    %c0_i32 = arith.constant 0 : i32
    %c0_i32_0 = arith.constant 0 : i32
    %c0_i32_1 = arith.constant 0 : i32
    return %c0_i32, %c0_i32_0 : i32, i32
  }
  func.func @transform_3(%arg0: i32) -> (i32, i32) {
    %c0_i32 = arith.constant 0 : i32
    %c0_i32_0 = arith.constant 0 : i32
    %c0_i32_1 = arith.constant 0 : i32
    return %c0_i32, %c0_i32_0 : i32, i32
  }
  func.func @transform_4(%arg0: i32) -> (i32, i32) {
    %c0_i32 = arith.constant 0 : i32
    %c0_i32_0 = arith.constant 0 : i32
    %c0_i32_1 = arith.constant 0 : i32
    return %c0_i32, %c0_i32_0 : i32, i32
  }
  func.func @transform_5(%arg0: i32) -> (i32, i32) {
    %c0_i32 = arith.constant 0 : i32
    %c0_i32_0 = arith.constant 0 : i32
    %c0_i32_1 = arith.constant 0 : i32
    return %c0_i32, %c0_i32_0 : i32, i32
  }
  func.func @transform_6(%arg0: i32) -> (i32, i32) {
    %c0_i32 = arith.constant 0 : i32
    %c0_i32_0 = arith.constant 0 : i32
    %c0_i32_1 = arith.constant 0 : i32
    return %c0_i32, %c0_i32_0 : i32, i32
  }
  func.func @transform_7(%arg0: i32) -> (i32, i32) {
    %c0_i32 = arith.constant 0 : i32
    %c0_i32_0 = arith.constant 0 : i32
    %c0_i32_1 = arith.constant 0 : i32
    return %c0_i32, %c0_i32_0 : i32, i32
  }
  func.func @transform_8(%arg0: i32) -> (i32, i32) {
    %c0_i32 = arith.constant 0 : i32
    %c0_i32_0 = arith.constant 0 : i32
    %c0_i32_1 = arith.constant 0 : i32
    return %c0_i32, %c0_i32_0 : i32, i32
  }
  func.func @transform_9(%arg0: i32) -> (i32, i32, i32) {
    %c0_i32 = arith.constant 0 : i32
    %c0_i32_0 = arith.constant 0 : i32
    %c0_i32_1 = arith.constant 0 : i32
    return %arg0, %c0_i32, %c0_i32_0 : i32, i32, i32
  }
}

module attributes {stable_mosaic.version = 11 : i64} {
  func.func @_classifier_kernel(%arg0: memref<2x32xf32, #tpu.memory_space<vmem>>, %arg1: memref<1x32xf32, #tpu.memory_space<vmem>>, %arg2: memref<1x32xf32, #tpu.memory_space<vmem>>, %arg3: memref<32x10xbf16, #tpu.memory_space<vmem>>, %arg4: memref<1x10xf32, #tpu.memory_space<vmem>>, %arg5: memref<2x10xf32, #tpu.memory_space<vmem>>) attributes {dimension_semantics = [], scalar_prefetch = 0 : i64, scratch_operands = 0 : i64, tpu.core_type = #tpu.core_type<tc>} {
    %c0 = arith.constant 0 : index
    %c0_0 = arith.constant 0 : index
    %0 = vector.load %arg0[%c0, %c0_0] : memref<2x32xf32, #tpu.memory_space<vmem>>, vector<2x32xf32>
    %c0_1 = arith.constant 0 : index
    %c0_2 = arith.constant 0 : index
    %1 = vector.load %arg1[%c0_1, %c0_2] : memref<1x32xf32, #tpu.memory_space<vmem>>, vector<1x32xf32>
    %c0_3 = arith.constant 0 : index
    %c0_4 = arith.constant 0 : index
    %2 = vector.load %arg2[%c0_3, %c0_4] : memref<1x32xf32, #tpu.memory_space<vmem>>, vector<1x32xf32>
    %cst = arith.constant dense<0.000000e+00> : vector<2xf32>
    %3 = vector.multi_reduction <add>, %0, %cst [1] : vector<2x32xf32> to vector<2xf32>
    %4 = vector.shape_cast %3 : vector<2xf32> to vector<2x1xf32>
    %cst_5 = arith.constant 3.200000e+01 : f32
    %5 = vector.broadcast %cst_5 : f32 to vector<2x1xf32>
    %6 = arith.divf %4, %5 : vector<2x1xf32>
    %7 = vector.broadcast %6 : vector<2x1xf32> to vector<2x32xf32>
    %8 = arith.subf %0, %7 : vector<2x32xf32>
    %9 = arith.mulf %8, %8 : vector<2x32xf32>
    %cst_6 = arith.constant dense<0.000000e+00> : vector<2xf32>
    %10 = vector.multi_reduction <add>, %9, %cst_6 [1] : vector<2x32xf32> to vector<2xf32>
    %11 = vector.shape_cast %10 : vector<2xf32> to vector<2x1xf32>
    %cst_7 = arith.constant 3.200000e+01 : f32
    %12 = vector.broadcast %cst_7 : f32 to vector<2x1xf32>
    %13 = arith.divf %11, %12 : vector<2x1xf32>
    %14 = vector.broadcast %6 : vector<2x1xf32> to vector<2x32xf32>
    %15 = arith.subf %0, %14 : vector<2x32xf32>
    %cst_8 = arith.constant 9.99999996E-13 : f32
    %16 = vector.broadcast %cst_8 : f32 to vector<2x1xf32>
    %17 = arith.addf %13, %16 : vector<2x1xf32>
    %18 = math.rsqrt %17 : vector<2x1xf32>
    %19 = vector.broadcast %18 : vector<2x1xf32> to vector<2x32xf32>
    %20 = arith.mulf %15, %19 : vector<2x32xf32>
    %21 = vector.broadcast %1 : vector<1x32xf32> to vector<2x32xf32>
    %22 = arith.mulf %20, %21 : vector<2x32xf32>
    %23 = vector.broadcast %2 : vector<1x32xf32> to vector<2x32xf32>
    %24 = arith.addf %22, %23 : vector<2x32xf32>
    %c0_9 = arith.constant 0 : index
    %c0_10 = arith.constant 0 : index
    %25 = vector.load %arg3[%c0_9, %c0_10] : memref<32x10xbf16, #tpu.memory_space<vmem>>, vector<32x10xbf16>
    %c0_11 = arith.constant 0 : index
    %c0_12 = arith.constant 0 : index
    %26 = vector.load %arg4[%c0_11, %c0_12] : memref<1x10xf32, #tpu.memory_space<vmem>>, vector<1x10xf32>
    %27 = arith.truncf %24 : vector<2x32xf32> to vector<2x32xbf16>
    %cst_13 = arith.constant dense<0.000000e+00> : vector<2x10xf32>
    %28 = tpu.matmul %27, %25, %cst_13 {dimension_numbers = #tpu.dot_dimension_numbers<[1], [0], [0], [1], [0, 0, 1, 1], [], []>} : vector<2x32xbf16>, vector<32x10xbf16>, vector<2x10xf32> -> vector<2x10xf32>
    %29 = vector.broadcast %26 : vector<1x10xf32> to vector<2x10xf32>
    %30 = arith.addf %28, %29 : vector<2x10xf32>
    %cst_14 = arith.constant dense<0xFF800000> : vector<2xf32>
    %31 = vector.multi_reduction <maximumf>, %30, %cst_14 [1] : vector<2x10xf32> to vector<2xf32>
    %32 = vector.shape_cast %31 : vector<2xf32> to vector<2x1xf32>
    %33 = vector.broadcast %32 : vector<2x1xf32> to vector<2x10xf32>
    %34 = arith.subf %30, %33 : vector<2x10xf32>
    %35 = math.exp %34 : vector<2x10xf32>
    %cst_15 = arith.constant dense<0.000000e+00> : vector<2xf32>
    %36 = vector.multi_reduction <add>, %35, %cst_15 [1] : vector<2x10xf32> to vector<2xf32>
    %37 = vector.shape_cast %36 : vector<2xf32> to vector<2x1xf32>
    %38 = tpu.reciprocal %37 {approx = true} : vector<2x1xf32> -> vector<2x1xf32>
    %39 = vector.broadcast %38 : vector<2x1xf32> to vector<2x10xf32>
    %40 = arith.mulf %35, %39 : vector<2x10xf32>
    %c0_16 = arith.constant 0 : index
    %c0_17 = arith.constant 0 : index
    %41 = vector.load %arg5[%c0_16, %c0_17] : memref<2x10xf32, #tpu.memory_space<vmem>>, vector<2x10xf32>
    tpu.vector_store %arg5[%c0_16, %c0_17], %40 {strides = array<i32>} : memref<2x10xf32, #tpu.memory_space<vmem>>, vector<2x10xf32>,
    return
  }
}

</mosaic_0001>

<llo_original>
// kernel: ltt_vit_explainer_forward.16
$region0: #{ltt_vit_explainer_forward.16}
  #allocation0 [shape = 'u32[]', space=smem, size = 0x4, offset = 0x4, fixed_abs, tag = 'smem constant byte address 0x4 - core index']
  #allocation1 [shape = 'u32[144,128]{1,0:T(1,128)}', space=vmem, size = 0x12000, scoped, tag = 'internal scratch']
  %s0 = inlined_call_operand.vmem [shape: f32[2,5,16], index: 0, kind: input, shape index: {}]
  %s1 = inlined_call_operand.vmem [shape: f32[1,16], index: 1, kind: input, shape index: {}]
  %s2 = inlined_call_operand.vmem [shape: f32[1,16], index: 2, kind: input, shape index: {}]
  %s3 = inlined_call_operand.vmem [shape: f32[2,5,16], index: 3, kind: output, shape index: {}]
  %s4 = sld [smem:[#allocation0]]
  $region45: #{ltt_vit_explainer_forward.16} parent=0
    _
  %s6 = ssub.s32 1, %s4
  %s7 = scalar_select 0, %s6, %s4
  loop: start=0, step=1, limit=4
  $region2: #{ltt_vit_explainer_forward.16} parent=0 // loop_pre_header
    _
  $region3: #{ltt_vit_explainer_forward.16} parent=0 // loop_header
    %s9 = sphi 0, %s13
    %p10 = scmp.ge.s32.totalorder %s9, 4
    %s19 = sphi 0, %s21
    %s22 = sphi 0, %s19
    %s23 = sphi 0, %s22
    %s39 = sphi 0, %s23
    %s43 = sphi 0, %s43
    %s45 = sphi 0, %s43
    %s46 = sphi 0, %s45
    %s60 = sphi 0, %s46
    %s64 = sphi 0, %s64
    %s66 = sphi 0, %s64
    %s67 = sphi 0, %s66
    %s81 = sphi 0, %s67
    %s87 = sphi 0, %s89
    %s90 = sphi 0, %s87
    %s91 = sphi 0, %s90
    %s107 = sphi 0, %s91
  $region4: #{ltt_vit_explainer_forward.16} parent=0 // loop_header_branch
    %12 = sbr.rel (%p10) target = $region8
  $region5: #{ltt_vit_explainer_forward.16} parent=0 // loop_body
    %s14 = ssub.s32 %s9, 1
    %s15 = ssub.s32 %s9, 2
    %s16 = sadd.s32 %s9, 1
    %s17 = ssub.s32 %s9, %s16
    %p18 = scmp.eq.s32.totalorder %s17, 0
    %s20 = sadd.s32 %s19, 1
    %s21 = scalar_select %p18, %s19, %s20
    %p24 = pneg %p18
    %p25 = scmp.eq.s32.totalorder %s9, 1
    %p26 = por %p24, %p25
    %p27 = scmp.ne.s32.totalorder %s19, %s22
    %p28 = scmp.eq.s32.totalorder %s9, 0
    %p29 = por %p27, %p28
    %p30 = scmp.ne.s32.totalorder %s19, %s22
    %p31 = scmp.eq.s32.totalorder %s14, 1
    %p32 = por %p30, %p31
    %p33 = scmp.ne.s32.totalorder %s22, %s23
    %p34 = scmp.eq.s32.totalorder %s14, 0
    %p35 = por %p33, %p34
    %p36 = scmp.ne.s32.totalorder %s22, %s23
    %p37 = scmp.eq.s32.totalorder %s15, 1
    %p38 = por %p36, %p37
    %p40 = scmp.ne.s32.totalorder %s23, %s39
    %p41 = scmp.eq.s32.totalorder %s15, 0
    %p42 = por %p40, %p41
    %s44 = sadd.s32 %s43, 1
    %p47 = scmp.eq.s32.totalorder %s9, 1
    %p48 = scmp.ne.s32.totalorder %s43, %s45
    %p49 = scmp.eq.s32.totalorder %s9, 0
    %p50 = por %p48, %p49
    %p51 = scmp.ne.s32.totalorder %s43, %s45
    %p52 = scmp.eq.s32.totalorder %s14, 1
    %p53 = por %p51, %p52
    %p54 = scmp.ne.s32.totalorder %s45, %s46
    %p55 = scmp.eq.s32.totalorder %s14, 0
    %p56 = por %p54, %p55
    %p57 = scmp.ne.s32.totalorder %s45, %s46
    %p58 = scmp.eq.s32.totalorder %s15, 1
    %p59 = por %p57, %p58
    %p61 = scmp.ne.s32.totalorder %s46, %s60
    %p62 = scmp.eq.s32.totalorder %s15, 0
    %p63 = por %p61, %p62
    %s65 = sadd.s32 %s64, 1
    %p68 = scmp.eq.s32.totalorder %s9, 1
    %p69 = scmp.ne.s32.totalorder %s64, %s66
    %p70 = scmp.eq.s32.totalorder %s9, 0
    %p71 = por %p69, %p70
    %p72 = scmp.ne.s32.totalorder %s64, %s66
    %p73 = scmp.eq.s32.totalorder %s14, 1
    %p74 = por %p72, %p73
    %p75 = scmp.ne.s32.totalorder %s66, %s67
    %p76 = scmp.eq.s32.totalorder %s14, 0
    %p77 = por %p75, %p76
    %p78 = scmp.ne.s32.totalorder %s66, %s67
    %p79 = scmp.eq.s32.totalorder %s15, 1
    %p80 = por %p78, %p79
    %p82 = scmp.ne.s32.totalorder %s67, %s81
    %p83 = scmp.eq.s32.totalorder %s15, 0
    %p84 = por %p82, %p83
    %s85 = ssub.s32 %s9, %s16
    %p86 = scmp.eq.s32.totalorder %s85, 0
    %s88 = sadd.s32 %s87, 1
    %s89 = scalar_select %p86, %s87, %s88
    %p92 = pneg %p86
    %p93 = scmp.eq.s32.totalorder %s9, 1
    %p94 = por %p92, %p93
    %p95 = scmp.ne.s32.totalorder %s87, %s90
    %p96 = scmp.eq.s32.totalorder %s9, 0
    %p97 = por %p95, %p96
    %p98 = scmp.ne.s32.totalorder %s87, %s90
    %p99 = scmp.eq.s32.totalorder %s14, 1
    %p100 = por %p98, %p99
    %p101 = scmp.ne.s32.totalorder %s90, %s91
    %p102 = scmp.eq.s32.totalorder %s14, 0
    %p103 = por %p101, %p102
    %p104 = scmp.ne.s32.totalorder %s90, %s91
    %p105 = scmp.eq.s32.totalorder %s15, 1
    %p106 = por %p104, %p105
    %p108 = scmp.ne.s32.totalorder %s91, %s107
    %p109 = scmp.eq.s32.totalorder %s15, 0
    %p110 = por %p108, %p109
    %p111 = scmp.le.s32.totalorder 1, %s9
    %p112 = scmp.lt.s32.totalorder %s9, 3
    %p113 = pnand %p111, %p112
    %p114 = pneg %p113
    // Predicated region
    $region9: #{ltt_vit_explainer_forward.16} parent=5 // pred_check
      _
    $region10: #{ltt_vit_explainer_forward.16} parent=5 // pred_check_branch
      %116 = sbr.rel (%p113) target = $region12
    $region11: #{ltt_vit_explainer_forward.16} parent=5 // pred_region
      %s117 = ssub.s32 %s9, 1
      // Predicated region
      $region13: #{ltt_vit_explainer_forward.16} parent=11 // pred_check
        %p118 = pneg %p56
      $region14: #{ltt_vit_explainer_forward.16} parent=11 // pred_check_branch
        %120 = sbr.rel (%p118) target = $region16
      $region15: #{ltt_vit_explainer_forward.16} parent=11 // pred_region
        _
      $region16: #{ltt_vit_explainer_forward.16} parent=11 // pred_fallthru
        _
      // Predicated region
      $region17: #{ltt_vit_explainer_forward.16} parent=11 // pred_check
        %p121 = pneg %p77
      $region18: #{ltt_vit_explainer_forward.16} parent=11 // pred_check_branch
        %123 = sbr.rel (%p121) target = $region20
      $region19: #{ltt_vit_explainer_forward.16} parent=11 // pred_region
        _
      $region20: #{ltt_vit_explainer_forward.16} parent=11 // pred_fallthru
        _
    $region12: #{ltt_vit_explainer_forward.16} parent=5 // pred_fallthru
      _
    %p124 = scmp.lt.s32.totalorder %s9, 2
    // Predicated region
    $region21: #{ltt_vit_explainer_forward.16} parent=5 // pred_check
      %p125 = pneg %p124
    $region22: #{ltt_vit_explainer_forward.16} parent=5 // pred_check_branch
      %127 = sbr.rel (%p125) target = $region24
    $region23: #{ltt_vit_explainer_forward.16} parent=5 // pred_region
      // Predicated region
      $region25: #{ltt_vit_explainer_forward.16} parent=23 // pred_check
        %p128 = pneg %p29
      $region26: #{ltt_vit_explainer_forward.16} parent=23 // pred_check_branch
        %130 = sbr.rel (%p128) target = $region28
      $region27: #{ltt_vit_explainer_forward.16} parent=23 // pred_region
        %p131 = scmp.lt.s32.totalorder %s9, 1
        %s132 = scalar_select %p131, %s9, 1
        %s133 = smul.addr %s132, 8
        %s134 = scalar_lea.vmem %s0, %s133
      $region28: #{ltt_vit_explainer_forward.16} parent=23 // pred_fallthru
        _
    $region24: #{ltt_vit_explainer_forward.16} parent=5 // pred_fallthru
      _
    %p135 = scmp.le.s32.totalorder 1, %s9
    %p136 = scmp.lt.s32.totalorder %s9, 3
    %p137 = pnand %p135, %p136
    %p138 = pneg %p137
    // Predicated region
    $region29: #{ltt_vit_explainer_forward.16} parent=5 // pred_check
      _
    $region30: #{ltt_vit_explainer_forward.16} parent=5 // pred_check_branch
      %140 = sbr.rel (%p137) target = $region32
    $region31: #{ltt_vit_explainer_forward.16} parent=5 // pred_region
      %s141 = ssub.s32 %s9, 1
      %p142 = scmp.lt.s32.totalorder %s14, 1
      %s143 = scalar_select %p142, %s14, 1
      %s144 = smul.addr %s143, 8
      %s145 = scalar_lea.vmem %s0, %s144
      %p146 = pneg %p35
      %p147 = pneg %p32
      %p148 = pneg %p56
      %p149 = pneg %p53
      %p150 = pneg %p77
      %p151 = pneg %p74
      %p152 = pneg %p103
      %p153 = pneg %p100
      %p154 = scmp.lt.s32.totalorder %s14, 1
      %s155 = scalar_select %p154, %s14, 1
      %s156 = smul.addr %s155, 8
      %s157 = scalar_lea.vmem %s3, %s156
      %p158 = scmp.lt.s32.totalorder %s14, 1
      %s159 = scalar_select %p158, %s14, 1
      %s160 = smul.addr %s159, 8
      %s161 = scalar_lea.vmem %s0, %s160
      %p162 = scmp.lt.s32.totalorder %s14, 1
      %s163 = scalar_select %p162, %s14, 1
      %s164 = smul.addr %s163, 8
      %s165 = scalar_lea.vmem %s3, %s164
      %v166 = vld [vmem:[%s161] sm:$0x1f]
      %v167 = vld [vmem:[%s1] sm:$0x1]
      %v168 = vld [vmem:[%s2] sm:$0x1]
      %vm169 = vcmask 126976
      %v170 = vsel %vm169, %v166, 0.0
      %171 = vadd.xlane.f32.xlu0 %v170
      %v172 = vpop.xlane.xlu0 %171
      %v173 = vrcp.pop 16.0
      %v174 = vmul.f32 %v172, %v173
      %v175 = vsub.f32 %v166, %v174
      %v176 = vmul.f32 %v175, %v175
      %v177 = vsel %vm169, %v176, 0.0
      %178 = vadd.xlane.f32.xlu0 %v177
      %v179 = vpop.xlane.xlu0 %178
      %v180 = vmul.f32 %v179, %v173
      %v181 = vadd.f32 %v180, 1e-12
      %v182 = vrsqrt.pop %v181
      %v183 = vmul.f32 %v175, %v182
      %v185 = vlaneseq
      %v186 = vshrl.u32 %v185, 7
      %v187 = vsub.s32 0, %v186
      %v188 = vrot.slane %v167, %v187
      %v190 = vmul.f32 %v183, %v188
      %v192 = vlaneseq
      %v193 = vshrl.u32 %v192, 7
      %v194 = vsub.s32 0, %v193
      %v195 = vrot.slane %v168, %v194
      %v197 = vadd.f32 %v190, %v195
      %198 = vst.msk [vmem:[%s165] sm:$0x1f] %vm169, %v197
      %p199 = scmp.lt.s32.totalorder %s14, 1
      %s200 = scalar_select %p199, %s14, 1
      %s201 = smul.addr %s200, 8
      %s202 = scalar_lea.vmem %s3, %s201
      // Predicated region
      $region33: #{ltt_vit_explainer_forward.16} parent=31 // pred_check
        %p203 = pneg %p100
      $region34: #{ltt_vit_explainer_forward.16} parent=31 // pred_check_branch
        %205 = sbr.rel (%p203) target = $region36
      $region35: #{ltt_vit_explainer_forward.16} parent=31 // pred_region
        _
      $region36: #{ltt_vit_explainer_forward.16} parent=31 // pred_fallthru
        _
    $region32: #{ltt_vit_explainer_forward.16} parent=5 // pred_fallthru
      _
    %p206 = scmp.le.s32.totalorder 2, %s9
    // Predicated region
    $region37: #{ltt_vit_explainer_forward.16} parent=5 // pred_check
      %p207 = pneg %p206
    $region38: #{ltt_vit_explainer_forward.16} parent=5 // pred_check_branch
      %209 = sbr.rel (%p207) target = $region40
    $region39: #{ltt_vit_explainer_forward.16} parent=5 // pred_region
      %s210 = ssub.s32 %s9, 2
      // Predicated region
      $region41: #{ltt_vit_explainer_forward.16} parent=39 // pred_check
        %p211 = pneg %p106
      $region42: #{ltt_vit_explainer_forward.16} parent=39 // pred_check_branch
        %213 = sbr.rel (%p211) target = $region44
      $region43: #{ltt_vit_explainer_forward.16} parent=39 // pred_region
        %p214 = scmp.lt.s32.totalorder %s15, 1
        %s215 = scalar_select %p214, %s15, 1
        %s216 = smul.addr %s215, 8
        %s217 = scalar_lea.vmem %s3, %s216
      $region44: #{ltt_vit_explainer_forward.16} parent=39 // pred_fallthru
        _
    $region40: #{ltt_vit_explainer_forward.16} parent=5 // pred_fallthru
      _
  $region6: #{ltt_vit_explainer_forward.16} parent=0 // loop_footer
    %s13 = sadd.s32 1, %s9
  $region7: #{ltt_vit_explainer_forward.16} parent=0 // loop_footer_branch
    %8 = sbr.rel target = $region3
  $region8: #{ltt_vit_explainer_forward.16} parent=0 // loop_exit
    _

// kernel: ltt_vit_explainer_forward.10
$region0: #{ltt_vit_explainer_forward.10}
  #allocation0 [shape = 'u32[]', space=smem, size = 0x4, offset = 0x4, fixed_abs, tag = 'smem constant byte address 0x4 - core index']
  #allocation1 [shape = 'u32[144,128]{1,0:T(1,128)}', space=vmem, size = 0x12000, scoped, tag = 'internal scratch']
  %s0 = inlined_call_operand.vmem [shape: f32[2,4,192], index: 0, kind: input, shape index: {}]
  %s1 = inlined_call_operand.vmem [shape: bf16[192,32], index: 1, kind: input, shape index: {}]
  %s2 = inlined_call_operand.vmem [shape: f32[1,32], index: 2, kind: input, shape index: {}]
  %s3 = inlined_call_operand.vmem [shape: f32[1,1,32], index: 3, kind: input, shape index: {}]
  %s4 = inlined_call_operand.vmem [shape: f32[1,5,32], index: 4, kind: input, shape index: {}]
  %s5 = inlined_call_operand.vmem [shape: f32[2,5,32], index: 5, kind: output, shape index: {}]
  %s6 = sld [smem:[#allocation0]]
  $region53: #{ltt_vit_explainer_forward.10} parent=0
    _
  %s8 = ssub.s32 1, %s6
  %s9 = scalar_select 0, %s8, %s6
  loop: start=0, step=1, limit=4
  $region2: #{ltt_vit_explainer_forward.10} parent=0 // loop_pre_header
    _
  $region3: #{ltt_vit_explainer_forward.10} parent=0 // loop_header
    %s11 = sphi 0, %s15
    %p12 = scmp.ge.s32.totalorder %s11, 4
    %s21 = sphi 0, %s23
    %s24 = sphi 0, %s21
    %s25 = sphi 0, %s24
    %s41 = sphi 0, %s25
    %s45 = sphi 0, %s45
    %s47 = sphi 0, %s45
    %s48 = sphi 0, %s47
    %s62 = sphi 0, %s48
    %s66 = sphi 0, %s66
    %s68 = sphi 0, %s66
    %s69 = sphi 0, %s68
    %s83 = sphi 0, %s69
    %s87 = sphi 0, %s87
    %s89 = sphi 0, %s87
    %s90 = sphi 0, %s89
    %s104 = sphi 0, %s90
    %s108 = sphi 0, %s108
    %s110 = sphi 0, %s108
    %s111 = sphi 0, %s110
    %s125 = sphi 0, %s111
    %s131 = sphi 0, %s133
    %s134 = sphi 0, %s131
    %s135 = sphi 0, %s134
    %s151 = sphi 0, %s135
  $region4: #{ltt_vit_explainer_forward.10} parent=0 // loop_header_branch
    %14 = sbr.rel (%p12) target = $region8
  $region5: #{ltt_vit_explainer_forward.10} parent=0 // loop_body
    %s16 = ssub.s32 %s11, 1
    %s17 = ssub.s32 %s11, 2
    %s18 = sadd.s32 %s11, 1
    %s19 = ssub.s32 %s11, %s18
    %p20 = scmp.eq.s32.totalorder %s19, 0
    %s22 = sadd.s32 %s21, 1
    %s23 = scalar_select %p20, %s21, %s22
    %p26 = pneg %p20
    %p27 = scmp.eq.s32.totalorder %s11, 1
    %p28 = por %p26, %p27
    %p29 = scmp.ne.s32.totalorder %s21, %s24
    %p30 = scmp.eq.s32.totalorder %s11, 0
    %p31 = por %p29, %p30
    %p32 = scmp.ne.s32.totalorder %s21, %s24
    %p33 = scmp.eq.s32.totalorder %s16, 1
    %p34 = por %p32, %p33
    %p35 = scmp.ne.s32.totalorder %s24, %s25
    %p36 = scmp.eq.s32.totalorder %s16, 0
    %p37 = por %p35, %p36
    %p38 = scmp.ne.s32.totalorder %s24, %s25
    %p39 = scmp.eq.s32.totalorder %s17, 1
    %p40 = por %p38, %p39
    %p42 = scmp.ne.s32.totalorder %s25, %s41
    %p43 = scmp.eq.s32.totalorder %s17, 0
    %p44 = por %p42, %p43
    %s46 = sadd.s32 %s45, 1
    %p49 = scmp.eq.s32.totalorder %s11, 1
    %p50 = scmp.ne.s32.totalorder %s45, %s47
    %p51 = scmp.eq.s32.totalorder %s11, 0
    %p52 = por %p50, %p51
    %p53 = scmp.ne.s32.totalorder %s45, %s47
    %p54 = scmp.eq.s32.totalorder %s16, 1
    %p55 = por %p53, %p54
    %p56 = scmp.ne.s32.totalorder %s47, %s48
    %p57 = scmp.eq.s32.totalorder %s16, 0
    %p58 = por %p56, %p57
    %p59 = scmp.ne.s32.totalorder %s47, %s48
    %p60 = scmp.eq.s32.totalorder %s17, 1
    %p61 = por %p59, %p60
    %p63 = scmp.ne.s32.totalorder %s48, %s62
    %p64 = scmp.eq.s32.totalorder %s17, 0
    %p65 = por %p63, %p64
    %s67 = sadd.s32 %s66, 1
    %p70 = scmp.eq.s32.totalorder %s11, 1
    %p71 = scmp.ne.s32.totalorder %s66, %s68
    %p72 = scmp.eq.s32.totalorder %s11, 0
    %p73 = por %p71, %p72
    %p74 = scmp.ne.s32.totalorder %s66, %s68
    %p75 = scmp.eq.s32.totalorder %s16, 1
    %p76 = por %p74, %p75
    %p77 = scmp.ne.s32.totalorder %s68, %s69
    %p78 = scmp.eq.s32.totalorder %s16, 0
    %p79 = por %p77, %p78
    %p80 = scmp.ne.s32.totalorder %s68, %s69
    %p81 = scmp.eq.s32.totalorder %s17, 1
    %p82 = por %p80, %p81
    %p84 = scmp.ne.s32.totalorder %s69, %s83
    %p85 = scmp.eq.s32.totalorder %s17, 0
    %p86 = por %p84, %p85
    %s88 = sadd.s32 %s87, 1
    %p91 = scmp.eq.s32.totalorder %s11, 1
    %p92 = scmp.ne.s32.totalorder %s87, %s89
    %p93 = scmp.eq.s32.totalorder %s11, 0
    %p94 = por %p92, %p93
    %p95 = scmp.ne.s32.totalorder %s87, %s89
    %p96 = scmp.eq.s32.totalorder %s16, 1
    %p97 = por %p95, %p96
    %p98 = scmp.ne.s32.totalorder %s89, %s90
    %p99 = scmp.eq.s32.totalorder %s16, 0
    %p100 = por %p98, %p99
    %p101 = scmp.ne.s32.totalorder %s89, %s90
    %p102 = scmp.eq.s32.totalorder %s17, 1
    %p103 = por %p101, %p102
    %p105 = scmp.ne.s32.totalorder %s90, %s104
    %p106 = scmp.eq.s32.totalorder %s17, 0
    %p107 = por %p105, %p106
    %s109 = sadd.s32 %s108, 1
    %p112 = scmp.eq.s32.totalorder %s11, 1
    %p113 = scmp.ne.s32.totalorder %s108, %s110
    %p114 = scmp.eq.s32.totalorder %s11, 0
    %p115 = por %p113, %p114
    %p116 = scmp.ne.s32.totalorder %s108, %s110
    %p117 = scmp.eq.s32.totalorder %s16, 1
    %p118 = por %p116, %p117
    %p119 = scmp.ne.s32.totalorder %s110, %s111
    %p120 = scmp.eq.s32.totalorder %s16, 0
    %p121 = por %p119, %p120
    %p122 = scmp.ne.s32.totalorder %s110, %s111
    %p123 = scmp.eq.s32.totalorder %s17, 1
    %p124 = por %p122, %p123
    %p126 = scmp.ne.s32.totalorder %s111, %s125
    %p127 = scmp.eq.s32.totalorder %s17, 0
    %p128 = por %p126, %p127
    %s129 = ssub.s32 %s11, %s18
    %p130 = scmp.eq.s32.totalorder %s129, 0
    %s132 = sadd.s32 %s131, 1
    %s133 = scalar_select %p130, %s131, %s132
    %p136 = pneg %p130
    %p137 = scmp.eq.s32.totalorder %s11, 1
    %p138 = por %p136, %p137
    %p139 = scmp.ne.s32.totalorder %s131, %s134
    %p140 = scmp.eq.s32.totalorder %s11, 0
    %p141 = por %p139, %p140
    %p142 = scmp.ne.s32.totalorder %s131, %s134
    %p143 = scmp.eq.s32.totalorder %s16, 1
    %p144 = por %p142, %p143
    %p145 = scmp.ne.s32.totalorder %s134, %s135
    %p146 = scmp.eq.s32.totalorder %s16, 0
    %p147 = por %p145, %p146
    %p148 = scmp.ne.s32.totalorder %s134, %s135
    %p149 = scmp.eq.s32.totalorder %s17, 1
    %p150 = por %p148, %p149
    %p152 = scmp.ne.s32.totalorder %s135, %s151
    %p153 = scmp.eq.s32.totalorder %s17, 0
    %p154 = por %p152, %p153
    %p155 = scmp.le.s32.totalorder 1, %s11
    %p156 = scmp.lt.s32.totalorder %s11, 3
    %p157 = pnand %p155, %p156
    %p158 = pneg %p157
    // Predicated region
    $region9: #{ltt_vit_explainer_forward.10} parent=5 // pred_check
      _
    $region10: #{ltt_vit_explainer_forward.10} parent=5 // pred_check_branch
      %160 = sbr.rel (%p157) target = $region12
    $region11: #{ltt_vit_explainer_forward.10} parent=5 // pred_region
      %s161 = ssub.s32 %s11, 1
      // Predicated region
      $region13: #{ltt_vit_explainer_forward.10} parent=11 // pred_check
        %p162 = pneg %p58
      $region14: #{ltt_vit_explainer_forward.10} parent=11 // pred_check_branch
        %164 = sbr.rel (%p162) target = $region16
      $region15: #{ltt_vit_explainer_forward.10} parent=11 // pred_region
        _
      $region16: #{ltt_vit_explainer_forward.10} parent=11 // pred_fallthru
        _
      // Predicated region
      $region17: #{ltt_vit_explainer_forward.10} parent=11 // pred_check
        %p165 = pneg %p79
      $region18: #{ltt_vit_explainer_forward.10} parent=11 // pred_check_branch
        %167 = sbr.rel (%p165) target = $region20
      $region19: #{ltt_vit_explainer_forward.10} parent=11 // pred_region
        _
      $region20: #{ltt_vit_explainer_forward.10} parent=11 // pred_fallthru
        _
      // Predicated region
      $region21: #{ltt_vit_explainer_forward.10} parent=11 // pred_check
        %p168 = pneg %p100
      $region22: #{ltt_vit_explainer_forward.10} parent=11 // pred_check_branch
        %170 = sbr.rel (%p168) target = $region24
      $region23: #{ltt_vit_explainer_forward.10} parent=11 // pred_region
        _
      $region24: #{ltt_vit_explainer_forward.10} parent=11 // pred_fallthru
        _
      // Predicated region
      $region25: #{ltt_vit_explainer_forward.10} parent=11 // pred_check
        %p171 = pneg %p121
      $region26: #{ltt_vit_explainer_forward.10} parent=11 // pred_check_branch
        %173 = sbr.rel (%p171) target = $region28
      $region27: #{ltt_vit_explainer_forward.10} parent=11 // pred_region
        _
      $region28: #{ltt_vit_explainer_forward.10} parent=11 // pred_fallthru
        _
    $region12: #{ltt_vit_explainer_forward.10} parent=5 // pred_fallthru
      _
    %p174 = scmp.lt.s32.totalorder %s11, 2
    // Predicated region
    $region29: #{ltt_vit_explainer_forward.10} parent=5 // pred_check
      %p175 = pneg %p174
    $region30: #{ltt_vit_explainer_forward.10} parent=5 // pred_check_branch
      %177 = sbr.rel (%p175) target = $region32
    $region31: #{ltt_vit_explainer_forward.10} parent=5 // pred_region
      // Predicated region
      $region33: #{ltt_vit_explainer_forward.10} parent=31 // pred_check
        %p178 = pneg %p31
      $region34: #{ltt_vit_explainer_forward.10} parent=31 // pred_check_branch
        %180 = sbr.rel (%p178) target = $region36
      $region35: #{ltt_vit_explainer_forward.10} parent=31 // pred_region
        %p181 = scmp.lt.s32.totalorder %s11, 1
        %s182 = scalar_select %p181, %s11, 1
        %s183 = smul.addr %s182, 2
        %s184 = smul.addr %s183, 4
        %s185 = scalar_lea.vmem %s0, %s184
      $region36: #{ltt_vit_explainer_forward.10} parent=31 // pred_fallthru
        _
    $region32: #{ltt_vit_explainer_forward.10} parent=5 // pred_fallthru
      _
    %p186 = scmp.le.s32.totalorder 1, %s11
    %p187 = scmp.lt.s32.totalorder %s11, 3
    %p188 = pnand %p186, %p187
    %p189 = pneg %p188
    // Predicated region
    $region37: #{ltt_vit_explainer_forward.10} parent=5 // pred_check
      _
    $region38: #{ltt_vit_explainer_forward.10} parent=5 // pred_check_branch
      %191 = sbr.rel (%p188) target = $region40
    $region39: #{ltt_vit_explainer_forward.10} parent=5 // pred_region
      %s192 = ssub.s32 %s11, 1
      %p193 = scmp.lt.s32.totalorder %s16, 1
      %s194 = scalar_select %p193, %s16, 1
      %s195 = smul.addr %s194, 2
      %s196 = smul.addr %s195, 4
      %s197 = scalar_lea.vmem %s0, %s196
      %p198 = pneg %p37
      %p199 = pneg %p34
      %p200 = pneg %p58
      %p201 = pneg %p55
      %p202 = pneg %p79
      %p203 = pneg %p76
      %p204 = pneg %p100
      %p205 = pneg %p97
      %p206 = pneg %p121
      %p207 = pneg %p118
      %p208 = pneg %p147
      %p209 = pneg %p144
      %p210 = scmp.lt.s32.totalorder %s16, 1
      %s211 = scalar_select %p210, %s16, 1
      %s212 = smul.addr %s211, 8
      %s213 = scalar_lea.vmem %s5, %s212
      %p214 = scmp.lt.s32.totalorder %s16, 1
      %s215 = scalar_select %p214, %s16, 1
      %s216 = smul.addr %s215, 2
      %s217 = smul.addr %s216, 4
      %s218 = scalar_lea.vmem %s0, %s217
      %p219 = scmp.lt.s32.totalorder %s16, 1
      %s220 = scalar_select %p219, %s16, 1
      %s221 = smul.addr %s220, 8
      %s222 = scalar_lea.vmem %s5, %s221
      %v224 = vld [vmem:[%s218] sm:$0xff]
      %v225 = vld [vmem:[%s1] sm:$0xf]
      %v226 = vld [vmem:[%s1 + $0x4] sm:$0xf]
      %v227 = vld [vmem:[%s1 + $0x8] sm:$0xf]
      %v228 = vld [vmem:[%s1 + $0xc] sm:$0xf]
      %v229 = vld [vmem:[%s1 + $0x10] sm:$0xf]
      %v230 = vld [vmem:[%s1 + $0x14] sm:$0xf]
      %v231 = vld [vmem:[%s1 + $0x18] sm:$0xf]
      %v232 = vld [vmem:[%s1 + $0x1c] sm:$0xf]
      %v233 = vld [vmem:[%s1 + $0x20] sm:$0xf]
      %v234 = vld [vmem:[%s1 + $0x24] sm:$0xf]
      %v235 = vld [vmem:[%s1 + $0x28] sm:$0xf]
      %v236 = vld [vmem:[%s1 + $0x2c] sm:$0xf]
      %v237 = vld [vmem:[%s1 + $0x30] sm:$0xf]
      %v238 = vld [vmem:[%s1 + $0x34] sm:$0xf]
      %v239 = vld [vmem:[%s1 + $0x38] sm:$0xf]
      %v240 = vld [vmem:[%s1 + $0x3c] sm:$0xf]
      %v241 = vld [vmem:[%s1 + $0x40] sm:$0xf]
      %v242 = vld [vmem:[%s1 + $0x44] sm:$0xf]
      %v243 = vld [vmem:[%s1 + $0x48] sm:$0xf]
      %v244 = vld [vmem:[%s1 + $0x4c] sm:$0xf]
      %v245 = vld [vmem:[%s1 + $0x50] sm:$0xf]
      %v246 = vld [vmem:[%s1 + $0x54] sm:$0xf]
      %v247 = vld [vmem:[%s1 + $0x58] sm:$0xf]
      %v248 = vld [vmem:[%s1 + $0x5c] sm:$0xf]
      %v249 = vld [vmem:[%s2] sm:$0x1]
      %v251 = vcombine.high %v224, %v224
      %v253 = vpack.c.bf16 %v224, %v224
      %v254 = vpack.c.bf16 %v251, %v251
      %v256 = vlaneseq
      %v257 = vshrl.u32 %v256, 7
      %v258 = vsub.s32 0, %v257
      %v259 = vrot.slane %v249, %v258
      %v285 = vunpack.c.l.b16 %v225
      %v286 = vunpack.c.l.b16 %v226
      %v287 = vunpack.c.l.b16 %v227
      %v288 = vunpack.c.l.b16 %v228
      %v289 = vunpack.c.l.b16 %v229
      %v290 = vunpack.c.l.b16 %v230
      %v291 = vunpack.c.l.b16 %v231
      %v292 = vunpack.c.l.b16 %v232
      %v293 = vunpack.c.l.b16 %v233
      %v294 = vunpack.c.l.b16 %v234
      %v295 = vunpack.c.l.b16 %v235
      %v296 = vunpack.c.l.b16 %v236
      %v297 = vunpack.c.l.b16 %v237
      %v298 = vunpack.c.l.b16 %v238
      %v299 = vunpack.c.l.b16 %v239
      %v300 = vunpack.c.l.b16 %v240
      %v301 = vunpack.c.l.b16 %v241
      %v302 = vunpack.c.l.b16 %v242
      %v303 = vunpack.c.l.b16 %v243
      %v304 = vunpack.c.l.b16 %v244
      %v305 = vunpack.c.l.b16 %v245
      %v306 = vunpack.c.l.b16 %v246
      %v307 = vunpack.c.l.b16 %v247
      %v308 = vunpack.c.l.b16 %v248
      %v309 = vpack.c.b16 %v286, %v285
      %v310 = vpack.c.b16 %v288, %v287
      %v311 = vpack.c.b16 %v290, %v289
      %v312 = vpack.c.b16 %v292, %v291
      %v313 = vpack.c.b16 %v294, %v293
      %v314 = vpack.c.b16 %v296, %v295
      %v315 = vpack.c.b16 %v298, %v297
      %v316 = vpack.c.b16 %v300, %v299
      %v317 = vpack.c.b16 %v302, %v301
      %v318 = vpack.c.b16 %v304, %v303
      %v319 = vpack.c.b16 %v306, %v305
      %v320 = vpack.c.b16 %v308, %v307
      %vm333 = vcmask 523264
      %v335 = vsel %vm333, %v254, 0
      %337 = vmatprep.subr.bf16.mxu0 0
      %338 = vmatpush1.bf16.msra.mxu0 %v309
      %339 = vmatprep.subr.bf16.mxu0 0
      %340 = vmatpush1.bf16.msra.mxu0 %v310
      %341 = vmatprep.subr.bf16.mxu0 0
      %342 = vmatpush1.bf16.msra.mxu0 %v311
      %343 = vmatprep.subr.bf16.mxu0 0
      %344 = vmatpush1.bf16.msra.mxu0 %v312
      %345 = vmatprep.subr.bf16.mxu0 0
      %346 = vmatpush1.bf16.msra.mxu0 %v313
      %347 = vmatprep.subr.bf16.mxu0 0
      %348 = vmatpush1.bf16.msra.mxu0 %v314
      %349 = vmatprep.subr.bf16.mxu0 0
      %350 = vmatpush1.bf16.msra.mxu0 %v315
      %351 = vmatprep.subr.bf16.mxu0 0
      %352 = vmatpush1.bf16.msra.mxu0 %v316
      %353 = vmatprep.subr.bf16.mxu0 0
      %354 = vmatpush1.bf16.msra.mxu0 %v317
      %355 = vmatprep.subr.bf16.mxu0 0
      %356 = vmatpush1.bf16.msra.mxu0 %v318
      %357 = vmatprep.subr.bf16.mxu0 0
      %358 = vmatpush1.bf16.msra.mxu0 %v319
      %359 = vmatprep.subr.bf16.mxu0 0
      %360 = vmatpush1.bf16.msra.mxu0 %v320
      %361 = vmatprep.subr.bf16.mxu0 0
      %362 = vmatpush1.bf16.msra.mxu0 0
      %363 = vmatprep.subr.bf16.mxu0 0
      %364 = vmatpush1.bf16.msra.mxu0 0
      %365 = vmatprep.subr.bf16.mxu0 0
      %366 = vmatpush1.bf16.msra.mxu0 0
      %367 = vmatprep.subr.bf16.mxu0 0
      %368 = vmatpush1.bf16.msra.mxu0 0
      %369 = vmatprep.mubr.bf16.mxu0 %v335
      %370 = vmatmul.mubr.bf16.gmra.mrb[0].mxu0 %v253
      %v371 = vpop.f32.mrb[0].mxu0
      %v372 = vadd.f32 %v259, %v371
      %v373 = vpop.f32.mrb[0].mxu0
      %v374 = vpop.f32.mrb[0].mxu0
      %v375 = vpop.f32.mrb[0].mxu0
      %376 = vdwg.mxu0
      %v377 = vld [vmem:[%s3] sm:$0x1]
      %v379 = vrot.slane %v372, 7
      %vm381 = vcmask 1040384
      %v382 = vsel %vm381, %v377, %v379
      %v383 = vld [vmem:[%s4] sm:$0x1f]
      %v384 = vadd.f32 %v382, %v383
      %vm385 = vcmask 258048
      %386 = vst.msk [vmem:[%s222] sm:$0x1f] %vm385, %v384
      %p387 = scmp.lt.s32.totalorder %s16, 1
      %s388 = scalar_select %p387, %s16, 1
      %s389 = smul.addr %s388, 8
      %s390 = scalar_lea.vmem %s5, %s389
      // Predicated region
      $region41: #{ltt_vit_explainer_forward.10} parent=39 // pred_check
        %p391 = pneg %p144
      $region42: #{ltt_vit_explainer_forward.10} parent=39 // pred_check_branch
        %393 = sbr.rel (%p391) target = $region44
      $region43: #{ltt_vit_explainer_forward.10} parent=39 // pred_region
        _
      $region44: #{ltt_vit_explainer_forward.10} parent=39 // pred_fallthru
        _
    $region40: #{ltt_vit_explainer_forward.10} parent=5 // pred_fallthru
      _
    %p394 = scmp.le.s32.totalorder 2, %s11
    // Predicated region
    $region45: #{ltt_vit_explainer_forward.10} parent=5 // pred_check
      %p395 = pneg %p394
    $region46: #{ltt_vit_explainer_forward.10} parent=5 // pred_check_branch
      %397 = sbr.rel (%p395) target = $region48
    $region47: #{ltt_vit_explainer_forward.10} parent=5 // pred_region
      %s398 = ssub.s32 %s11, 2
      // Predicated region
      $region49: #{ltt_vit_explainer_forward.10} parent=47 // pred_check
        %p399 = pneg %p150
      $region50: #{ltt_vit_explainer_forward.10} parent=47 // pred_check_branch
        %401 = sbr.rel (%p399) target = $region52
      $region51: #{ltt_vit_explainer_forward.10} parent=47 // pred_region
        %p402 = scmp.lt.s32.totalorder %s17, 1
        %s403 = scalar_select %p402, %s17, 1
        %s404 = smul.addr %s403, 8
        %s405 = scalar_lea.vmem %s5, %s404
      $region52: #{ltt_vit_explainer_forward.10} parent=47 // pred_fallthru
        _
    $region48: #{ltt_vit_explainer_forward.10} parent=5 // pred_fallthru
      _
  $region6: #{ltt_vit_explainer_forward.10} parent=0 // loop_footer
    %s15 = sadd.s32 1, %s11
  $region7: #{ltt_vit_explainer_forward.10} parent=0 // loop_footer_branch
    %10 = sbr.rel target = $region3
  $region8: #{ltt_vit_explainer_forward.10} parent=0 // loop_exit
    _

// kernel: ltt_vit_explainer_forward.12
$region0: #{ltt_vit_explainer_forward.12}
  #allocation0 [shape = 'u32[]', space=smem, size = 0x4, offset = 0x4, fixed_abs, tag = 'smem constant byte address 0x4 - core index']
  #allocation1 [shape = 'u32[144,128]{1,0:T(1,128)}', space=vmem, size = 0x12000, scoped, tag = 'internal scratch']
  %s0 = inlined_call_operand.vmem [shape: f32[2,5,16], index: 0, kind: input, shape index: {}]
  %s1 = inlined_call_operand.vmem [shape: f32[2,1,5], index: 1, kind: input, shape index: {}]
  %s2 = inlined_call_operand.vmem [shape: f32[1,16], index: 2, kind: input, shape index: {}]
  %s3 = inlined_call_operand.vmem [shape: f32[1,16], index: 3, kind: input, shape index: {}]
  %s4 = inlined_call_operand.vmem [shape: bf16[16,48], index: 4, kind: input, shape index: {}]
  %s5 = inlined_call_operand.vmem [shape: f32[1,48], index: 5, kind: input, shape index: {}]
  %s6 = inlined_call_operand.vmem [shape: bf16[16,16], index: 6, kind: input, shape index: {}]
  %s7 = inlined_call_operand.vmem [shape: f32[1,16], index: 7, kind: input, shape index: {}]
  %s8 = inlined_call_operand.vmem [shape: f32[1,16], index: 8, kind: input, shape index: {}]
  %s9 = inlined_call_operand.vmem [shape: f32[1,16], index: 9, kind: input, shape index: {}]
  %s10 = inlined_call_operand.vmem [shape: bf16[16,32], index: 10, kind: input, shape index: {}]
  %s11 = inlined_call_operand.vmem [shape: f32[1,32], index: 11, kind: input, shape index: {}]
  %s12 = inlined_call_operand.vmem [shape: bf16[32,16], index: 12, kind: input, shape index: {}]
  %s13 = inlined_call_operand.vmem [shape: f32[1,16], index: 13, kind: input, shape index: {}]
  %s14 = inlined_call_operand.vmem [shape: f32[2,5,16], index: 14, kind: output, shape index: {}]
  %s15 = sld [smem:[#allocation0]]
  $region89: #{ltt_vit_explainer_forward.12} parent=0
    _
  %s17 = ssub.s32 1, %s15
  %s18 = scalar_select 0, %s17, %s15
  loop: start=0, step=1, limit=4
  $region2: #{ltt_vit_explainer_forward.12} parent=0 // loop_pre_header
    _
  $region3: #{ltt_vit_explainer_forward.12} parent=0 // loop_header
    %s20 = sphi 0, %s24
    %p21 = scmp.ge.s32.totalorder %s20, 4
    %s30 = sphi 0, %s32
    %s33 = sphi 0, %s30
    %s34 = sphi 0, %s33
    %s50 = sphi 0, %s34
    %s56 = sphi 0, %s58
    %s59 = sphi 0, %s56
    %s60 = sphi 0, %s59
    %s76 = sphi 0, %s60
    %s80 = sphi 0, %s80
    %s82 = sphi 0, %s80
    %s83 = sphi 0, %s82
    %s97 = sphi 0, %s83
    %s101 = sphi 0, %s101
    %s103 = sphi 0, %s101
    %s104 = sphi 0, %s103
    %s118 = sphi 0, %s104
    %s122 = sphi 0, %s122
    %s124 = sphi 0, %s122
    %s125 = sphi 0, %s124
    %s139 = sphi 0, %s125
    %s143 = sphi 0, %s143
    %s145 = sphi 0, %s143
    %s146 = sphi 0, %s145
    %s160 = sphi 0, %s146
    %s164 = sphi 0, %s164
    %s166 = sphi 0, %s164
    %s167 = sphi 0, %s166
    %s181 = sphi 0, %s167
    %s185 = sphi 0, %s185
    %s187 = sphi 0, %s185
    %s188 = sphi 0, %s187
    %s202 = sphi 0, %s188
    %s206 = sphi 0, %s206
    %s208 = sphi 0, %s206
    %s209 = sphi 0, %s208
    %s223 = sphi 0, %s209
    %s227 = sphi 0, %s227
    %s229 = sphi 0, %s227
    %s230 = sphi 0, %s229
    %s244 = sphi 0, %s230
    %s248 = sphi 0, %s248
    %s250 = sphi 0, %s248
    %s251 = sphi 0, %s250
    %s265 = sphi 0, %s251
    %s269 = sphi 0, %s269
    %s271 = sphi 0, %s269
    %s272 = sphi 0, %s271
    %s286 = sphi 0, %s272
    %s290 = sphi 0, %s290
    %s292 = sphi 0, %s290
    %s293 = sphi 0, %s292
    %s307 = sphi 0, %s293
    %s311 = sphi 0, %s311
    %s313 = sphi 0, %s311
    %s314 = sphi 0, %s313
    %s328 = sphi 0, %s314
    %s334 = sphi 0, %s336
    %s337 = sphi 0, %s334
    %s338 = sphi 0, %s337
    %s354 = sphi 0, %s338
  $region4: #{ltt_vit_explainer_forward.12} parent=0 // loop_header_branch
    %23 = sbr.rel (%p21) target = $region8
  $region5: #{ltt_vit_explainer_forward.12} parent=0 // loop_body
    %s25 = ssub.s32 %s20, 1
    %s26 = ssub.s32 %s20, 2
    %s27 = sadd.s32 %s20, 1
    %s28 = ssub.s32 %s20, %s27
    %p29 = scmp.eq.s32.totalorder %s28, 0
    %s31 = sadd.s32 %s30, 1
    %s32 = scalar_select %p29, %s30, %s31
    %p35 = pneg %p29
    %p36 = scmp.eq.s32.totalorder %s20, 1
    %p37 = por %p35, %p36
    %p38 = scmp.ne.s32.totalorder %s30, %s33
    %p39 = scmp.eq.s32.totalorder %s20, 0
    %p40 = por %p38, %p39
    %p41 = scmp.ne.s32.totalorder %s30, %s33
    %p42 = scmp.eq.s32.totalorder %s25, 1
    %p43 = por %p41, %p42
    %p44 = scmp.ne.s32.totalorder %s33, %s34
    %p45 = scmp.eq.s32.totalorder %s25, 0
    %p46 = por %p44, %p45
    %p47 = scmp.ne.s32.totalorder %s33, %s34
    %p48 = scmp.eq.s32.totalorder %s26, 1
    %p49 = por %p47, %p48
    %p51 = scmp.ne.s32.totalorder %s34, %s50
    %p52 = scmp.eq.s32.totalorder %s26, 0
    %p53 = por %p51, %p52
    %s54 = ssub.s32 %s20, %s27
    %p55 = scmp.eq.s32.totalorder %s54, 0
    %s57 = sadd.s32 %s56, 1
    %s58 = scalar_select %p55, %s56, %s57
    %p61 = pneg %p55
    %p62 = scmp.eq.s32.totalorder %s20, 1
    %p63 = por %p61, %p62
    %p64 = scmp.ne.s32.totalorder %s56, %s59
    %p65 = scmp.eq.s32.totalorder %s20, 0
    %p66 = por %p64, %p65
    %p67 = scmp.ne.s32.totalorder %s56, %s59
    %p68 = scmp.eq.s32.totalorder %s25, 1
    %p69 = por %p67, %p68
    %p70 = scmp.ne.s32.totalorder %s59, %s60
    %p71 = scmp.eq.s32.totalorder %s25, 0
    %p72 = por %p70, %p71
    %p73 = scmp.ne.s32.totalorder %s59, %s60
    %p74 = scmp.eq.s32.totalorder %s26, 1
    %p75 = por %p73, %p74
    %p77 = scmp.ne.s32.totalorder %s60, %s76
    %p78 = scmp.eq.s32.totalorder %s26, 0
    %p79 = por %p77, %p78
    %s81 = sadd.s32 %s80, 1
    %p84 = scmp.eq.s32.totalorder %s20, 1
    %p85 = scmp.ne.s32.totalorder %s80, %s82
    %p86 = scmp.eq.s32.totalorder %s20, 0
    %p87 = por %p85, %p86
    %p88 = scmp.ne.s32.totalorder %s80, %s82
    %p89 = scmp.eq.s32.totalorder %s25, 1
    %p90 = por %p88, %p89
    %p91 = scmp.ne.s32.totalorder %s82, %s83
    %p92 = scmp.eq.s32.totalorder %s25, 0
    %p93 = por %p91, %p92
    %p94 = scmp.ne.s32.totalorder %s82, %s83
    %p95 = scmp.eq.s32.totalorder %s26, 1
    %p96 = por %p94, %p95
    %p98 = scmp.ne.s32.totalorder %s83, %s97
    %p99 = scmp.eq.s32.totalorder %s26, 0
    %p100 = por %p98, %p99
    %s102 = sadd.s32 %s101, 1
    %p105 = scmp.eq.s32.totalorder %s20, 1
    %p106 = scmp.ne.s32.totalorder %s101, %s103
    %p107 = scmp.eq.s32.totalorder %s20, 0
    %p108 = por %p106, %p107
    %p109 = scmp.ne.s32.totalorder %s101, %s103
    %p110 = scmp.eq.s32.totalorder %s25, 1
    %p111 = por %p109, %p110
    %p112 = scmp.ne.s32.totalorder %s103, %s104
    %p113 = scmp.eq.s32.totalorder %s25, 0
    %p114 = por %p112, %p113
    %p115 = scmp.ne.s32.totalorder %s103, %s104
    %p116 = scmp.eq.s32.totalorder %s26, 1
    %p117 = por %p115, %p116
    %p119 = scmp.ne.s32.totalorder %s104, %s118
    %p120 = scmp.eq.s32.totalorder %s26, 0
    %p121 = por %p119, %p120
    %s123 = sadd.s32 %s122, 1
    %p126 = scmp.eq.s32.totalorder %s20, 1
    %p127 = scmp.ne.s32.totalorder %s122, %s124
    %p128 = scmp.eq.s32.totalorder %s20, 0
    %p129 = por %p127, %p128
    %p130 = scmp.ne.s32.totalorder %s122, %s124
    %p131 = scmp.eq.s32.totalorder %s25, 1
    %p132 = por %p130, %p131
    %p133 = scmp.ne.s32.totalorder %s124, %s125
    %p134 = scmp.eq.s32.totalorder %s25, 0
    %p135 = por %p133, %p134
    %p136 = scmp.ne.s32.totalorder %s124, %s125
    %p137 = scmp.eq.s32.totalorder %s26, 1
    %p138 = por %p136, %p137
    %p140 = scmp.ne.s32.totalorder %s125, %s139
    %p141 = scmp.eq.s32.totalorder %s26, 0
    %p142 = por %p140, %p141
    %s144 = sadd.s32 %s143, 1
    %p147 = scmp.eq.s32.totalorder %s20, 1
    %p148 = scmp.ne.s32.totalorder %s143, %s145
    %p149 = scmp.eq.s32.totalorder %s20, 0
    %p150 = por %p148, %p149
    %p151 = scmp.ne.s32.totalorder %s143, %s145
    %p152 = scmp.eq.s32.totalorder %s25, 1
    %p153 = por %p151, %p152
    %p154 = scmp.ne.s32.totalorder %s145, %s146
    %p155 = scmp.eq.s32.totalorder %s25, 0
    %p156 = por %p154, %p155
    %p157 = scmp.ne.s32.totalorder %s145, %s146
    %p158 = scmp.eq.s32.totalorder %s26, 1
    %p159 = por %p157, %p158
    %p161 = scmp.ne.s32.totalorder %s146, %s160
    %p162 = scmp.eq.s32.totalorder %s26, 0
    %p163 = por %p161, %p162
    %s165 = sadd.s32 %s164, 1
    %p168 = scmp.eq.s32.totalorder %s20, 1
    %p169 = scmp.ne.s32.totalorder %s164, %s166
    %p170 = scmp.eq.s32.totalorder %s20, 0
    %p171 = por %p169, %p170
    %p172 = scmp.ne.s32.totalorder %s164, %s166
    %p173 = scmp.eq.s32.totalorder %s25, 1
    %p174 = por %p172, %p173
    %p175 = scmp.ne.s32.totalorder %s166, %s167
    %p176 = scmp.eq.s32.totalorder %s25, 0
    %p177 = por %p175, %p176
    %p178 = scmp.ne.s32.totalorder %s166, %s167
    %p179 = scmp.eq.s32.totalorder %s26, 1
    %p180 = por %p178, %p179
    %p182 = scmp.ne.s32.totalorder %s167, %s181
    %p183 = scmp.eq.s32.totalorder %s26, 0
    %p184 = por %p182, %p183
    %s186 = sadd.s32 %s185, 1
    %p189 = scmp.eq.s32.totalorder %s20, 1
    %p190 = scmp.ne.s32.totalorder %s185, %s187
    %p191 = scmp.eq.s32.totalorder %s20, 0
    %p192 = por %p190, %p191
    %p193 = scmp.ne.s32.totalorder %s185, %s187
    %p194 = scmp.eq.s32.totalorder %s25, 1
    %p195 = por %p193, %p194
    %p196 = scmp.ne.s32.totalorder %s187, %s188
    %p197 = scmp.eq.s32.totalorder %s25, 0
    %p198 = por %p196, %p197
    %p199 = scmp.ne.s32.totalorder %s187, %s188
    %p200 = scmp.eq.s32.totalorder %s26, 1
    %p201 = por %p199, %p200
    %p203 = scmp.ne.s32.totalorder %s188, %s202
    %p204 = scmp.eq.s32.totalorder %s26, 0
    %p205 = por %p203, %p204
    %s207 = sadd.s32 %s206, 1
    %p210 = scmp.eq.s32.totalorder %s20, 1
    %p211 = scmp.ne.s32.totalorder %s206, %s208
    %p212 = scmp.eq.s32.totalorder %s20, 0
    %p213 = por %p211, %p212
    %p214 = scmp.ne.s32.totalorder %s206, %s208
    %p215 = scmp.eq.s32.totalorder %s25, 1
    %p216 = por %p214, %p215
    %p217 = scmp.ne.s32.totalorder %s208, %s209
    %p218 = scmp.eq.s32.totalorder %s25, 0
    %p219 = por %p217, %p218
    %p220 = scmp.ne.s32.totalorder %s208, %s209
    %p221 = scmp.eq.s32.totalorder %s26, 1
    %p222 = por %p220, %p221
    %p224 = scmp.ne.s32.totalorder %s209, %s223
    %p225 = scmp.eq.s32.totalorder %s26, 0
    %p226 = por %p224, %p225
    %s228 = sadd.s32 %s227, 1
    %p231 = scmp.eq.s32.totalorder %s20, 1
    %p232 = scmp.ne.s32.totalorder %s227, %s229
    %p233 = scmp.eq.s32.totalorder %s20, 0
    %p234 = por %p232, %p233
    %p235 = scmp.ne.s32.totalorder %s227, %s229
    %p236 = scmp.eq.s32.totalorder %s25, 1
    %p237 = por %p235, %p236
    %p238 = scmp.ne.s32.totalorder %s229, %s230
    %p239 = scmp.eq.s32.totalorder %s25, 0
    %p240 = por %p238, %p239
    %p241 = scmp.ne.s32.totalorder %s229, %s230
    %p242 = scmp.eq.s32.totalorder %s26, 1
    %p243 = por %p241, %p242
    %p245 = scmp.ne.s32.totalorder %s230, %s244
    %p246 = scmp.eq.s32.totalorder %s26, 0
    %p247 = por %p245, %p246
    %s249 = sadd.s32 %s248, 1
    %p252 = scmp.eq.s32.totalorder %s20, 1
    %p253 = scmp.ne.s32.totalorder %s248, %s250
    %p254 = scmp.eq.s32.totalorder %s20, 0
    %p255 = por %p253, %p254
    %p256 = scmp.ne.s32.totalorder %s248, %s250
    %p257 = scmp.eq.s32.totalorder %s25, 1
    %p258 = por %p256, %p257
    %p259 = scmp.ne.s32.totalorder %s250, %s251
    %p260 = scmp.eq.s32.totalorder %s25, 0
    %p261 = por %p259, %p260
    %p262 = scmp.ne.s32.totalorder %s250, %s251
    %p263 = scmp.eq.s32.totalorder %s26, 1
    %p264 = por %p262, %p263
    %p266 = scmp.ne.s32.totalorder %s251, %s265
    %p267 = scmp.eq.s32.totalorder %s26, 0
    %p268 = por %p266, %p267
    %s270 = sadd.s32 %s269, 1
    %p273 = scmp.eq.s32.totalorder %s20, 1
    %p274 = scmp.ne.s32.totalorder %s269, %s271
    %p275 = scmp.eq.s32.totalorder %s20, 0
    %p276 = por %p274, %p275
    %p277 = scmp.ne.s32.totalorder %s269, %s271
    %p278 = scmp.eq.s32.totalorder %s25, 1
    %p279 = por %p277, %p278
    %p280 = scmp.ne.s32.totalorder %s271, %s272
    %p281 = scmp.eq.s32.totalorder %s25, 0
    %p282 = por %p280, %p281
    %p283 = scmp.ne.s32.totalorder %s271, %s272
    %p284 = scmp.eq.s32.totalorder %s26, 1
    %p285 = por %p283, %p284
    %p287 = scmp.ne.s32.totalorder %s272, %s286
    %p288 = scmp.eq.s32.totalorder %s26, 0
    %p289 = por %p287, %p288
    %s291 = sadd.s32 %s290, 1
    %p294 = scmp.eq.s32.totalorder %s20, 1
    %p295 = scmp.ne.s32.totalorder %s290, %s292
    %p296 = scmp.eq.s32.totalorder %s20, 0
    %p297 = por %p295, %p296
    %p298 = scmp.ne.s32.totalorder %s290, %s292
    %p299 = scmp.eq.s32.totalorder %s25, 1
    %p300 = por %p298, %p299
    %p301 = scmp.ne.s32.totalorder %s292, %s293
    %p302 = scmp.eq.s32.totalorder %s25, 0
    %p303 = por %p301, %p302
    %p304 = scmp.ne.s32.totalorder %s292, %s293
    %p305 = scmp.eq.s32.totalorder %s26, 1
    %p306 = por %p304, %p305
    %p308 = scmp.ne.s32.totalorder %s293, %s307
    %p309 = scmp.eq.s32.totalorder %s26, 0
    %p310 = por %p308, %p309
    %s312 = sadd.s32 %s311, 1
    %p315 = scmp.eq.s32.totalorder %s20, 1
    %p316 = scmp.ne.s32.totalorder %s311, %s313
    %p317 = scmp.eq.s32.totalorder %s20, 0
    %p318 = por %p316, %p317
    %p319 = scmp.ne.s32.totalorder %s311, %s313
    %p320 = scmp.eq.s32.totalorder %s25, 1
    %p321 = por %p319, %p320
    %p322 = scmp.ne.s32.totalorder %s313, %s314
    %p323 = scmp.eq.s32.totalorder %s25, 0
    %p324 = por %p322, %p323
    %p325 = scmp.ne.s32.totalorder %s313, %s314
    %p326 = scmp.eq.s32.totalorder %s26, 1
    %p327 = por %p325, %p326
    %p329 = scmp.ne.s32.totalorder %s314, %s328
    %p330 = scmp.eq.s32.totalorder %s26, 0
    %p331 = por %p329, %p330
    %s332 = ssub.s32 %s20, %s27
    %p333 = scmp.eq.s32.totalorder %s332, 0
    %s335 = sadd.s32 %s334, 1
    %s336 = scalar_select %p333, %s334, %s335
    %p339 = pneg %p333
    %p340 = scmp.eq.s32.totalorder %s20, 1
    %p341 = por %p339, %p340
    %p342 = scmp.ne.s32.totalorder %s334, %s337
    %p343 = scmp.eq.s32.totalorder %s20, 0
    %p344 = por %p342, %p343
    %p345 = scmp.ne.s32.totalorder %s334, %s337
    %p346 = scmp.eq.s32.totalorder %s25, 1
    %p347 = por %p345, %p346
    %p348 = scmp.ne.s32.totalorder %s337, %s338
    %p349 = scmp.eq.s32.totalorder %s25, 0
    %p350 = por %p348, %p349
    %p351 = scmp.ne.s32.totalorder %s337, %s338
    %p352 = scmp.eq.s32.totalorder %s26, 1
    %p353 = por %p351, %p352
    %p355 = scmp.ne.s32.totalorder %s338, %s354
    %p356 = scmp.eq.s32.totalorder %s26, 0
    %p357 = por %p355, %p356
    %p358 = scmp.le.s32.totalorder 1, %s20
    %p359 = scmp.lt.s32.totalorder %s20, 3
    %p360 = pnand %p358, %p359
    %p361 = pneg %p360
    // Predicated region
    $region9: #{ltt_vit_explainer_forward.12} parent=5 // pred_check
      _
    $region10: #{ltt_vit_explainer_forward.12} parent=5 // pred_check_branch
      %363 = sbr.rel (%p360) target = $region12
    $region11: #{ltt_vit_explainer_forward.12} parent=5 // pred_region
      %s364 = ssub.s32 %s20, 1
      // Predicated region
      $region13: #{ltt_vit_explainer_forward.12} parent=11 // pred_check
        %p365 = pneg %p93
      $region14: #{ltt_vit_explainer_forward.12} parent=11 // pred_check_branch
        %367 = sbr.rel (%p365) target = $region16
      $region15: #{ltt_vit_explainer_forward.12} parent=11 // pred_region
        _
      $region16: #{ltt_vit_explainer_forward.12} parent=11 // pred_fallthru
        _
      // Predicated region
      $region17: #{ltt_vit_explainer_forward.12} parent=11 // pred_check
        %p368 = pneg %p114
      $region18: #{ltt_vit_explainer_forward.12} parent=11 // pred_check_branch
        %370 = sbr.rel (%p368) target = $region20
      $region19: #{ltt_vit_explainer_forward.12} parent=11 // pred_region
        _
      $region20: #{ltt_vit_explainer_forward.12} parent=11 // pred_fallthru
        _
      // Predicated region
      $region21: #{ltt_vit_explainer_forward.12} parent=11 // pred_check
        %p371 = pneg %p135
      $region22: #{ltt_vit_explainer_forward.12} parent=11 // pred_check_branch
        %373 = sbr.rel (%p371) target = $region24
      $region23: #{ltt_vit_explainer_forward.12} parent=11 // pred_region
        _
      $region24: #{ltt_vit_explainer_forward.12} parent=11 // pred_fallthru
        _
      // Predicated region
      $region25: #{ltt_vit_explainer_forward.12} parent=11 // pred_check
        %p374 = pneg %p156
      $region26: #{ltt_vit_explainer_forward.12} parent=11 // pred_check_branch
        %376 = sbr.rel (%p374) target = $region28
      $region27: #{ltt_vit_explainer_forward.12} parent=11 // pred_region
        _
      $region28: #{ltt_vit_explainer_forward.12} parent=11 // pred_fallthru
        _
      // Predicated region
      $region29: #{ltt_vit_explainer_forward.12} parent=11 // pred_check
        %p377 = pneg %p177
      $region30: #{ltt_vit_explainer_forward.12} parent=11 // pred_check_branch
        %379 = sbr.rel (%p377) target = $region32
      $region31: #{ltt_vit_explainer_forward.12} parent=11 // pred_region
        _
      $region32: #{ltt_vit_explainer_forward.12} parent=11 // pred_fallthru
        _
      // Predicated region
      $region33: #{ltt_vit_explainer_forward.12} parent=11 // pred_check
        %p380 = pneg %p198
      $region34: #{ltt_vit_explainer_forward.12} parent=11 // pred_check_branch
        %382 = sbr.rel (%p380) target = $region36
      $region35: #{ltt_vit_explainer_forward.12} parent=11 // pred_region
        _
      $region36: #{ltt_vit_explainer_forward.12} parent=11 // pred_fallthru
        _
      // Predicated region
      $region37: #{ltt_vit_explainer_forward.12} parent=11 // pred_check
        %p383 = pneg %p219
      $region38: #{ltt_vit_explainer_forward.12} parent=11 // pred_check_branch
        %385 = sbr.rel (%p383) target = $region40
      $region39: #{ltt_vit_explainer_forward.12} parent=11 // pred_region
        _
      $region40: #{ltt_vit_explainer_forward.12} parent=11 // pred_fallthru
        _
      // Predicated region
      $region41: #{ltt_vit_explainer_forward.12} parent=11 // pred_check
        %p386 = pneg %p240
      $region42: #{ltt_vit_explainer_forward.12} parent=11 // pred_check_branch
        %388 = sbr.rel (%p386) target = $region44
      $region43: #{ltt_vit_explainer_forward.12} parent=11 // pred_region
        _
      $region44: #{ltt_vit_explainer_forward.12} parent=11 // pred_fallthru
        _
      // Predicated region
      $region45: #{ltt_vit_explainer_forward.12} parent=11 // pred_check
        %p389 = pneg %p261
      $region46: #{ltt_vit_explainer_forward.12} parent=11 // pred_check_branch
        %391 = sbr.rel (%p389) target = $region48
      $region47: #{ltt_vit_explainer_forward.12} parent=11 // pred_region
        _
      $region48: #{ltt_vit_explainer_forward.12} parent=11 // pred_fallthru
        _
      // Predicated region
      $region49: #{ltt_vit_explainer_forward.12} parent=11 // pred_check
        %p392 = pneg %p282
      $region50: #{ltt_vit_explainer_forward.12} parent=11 // pred_check_branch
        %394 = sbr.rel (%p392) target = $region52
      $region51: #{ltt_vit_explainer_forward.12} parent=11 // pred_region
        _
      $region52: #{ltt_vit_explainer_forward.12} parent=11 // pred_fallthru
        _
      // Predicated region
      $region53: #{ltt_vit_explainer_forward.12} parent=11 // pred_check
        %p395 = pneg %p303
      $region54: #{ltt_vit_explainer_forward.12} parent=11 // pred_check_branch
        %397 = sbr.rel (%p395) target = $region56
      $region55: #{ltt_vit_explainer_forward.12} parent=11 // pred_region
        _
      $region56: #{ltt_vit_explainer_forward.12} parent=11 // pred_fallthru
        _
      // Predicated region
      $region57: #{ltt_vit_explainer_forward.12} parent=11 // pred_check
        %p398 = pneg %p324
      $region58: #{ltt_vit_explainer_forward.12} parent=11 // pred_check_branch
        %400 = sbr.rel (%p398) target = $region60
      $region59: #{ltt_vit_explainer_forward.12} parent=11 // pred_region
        _
      $region60: #{ltt_vit_explainer_forward.12} parent=11 // pred_fallthru
        _
    $region12: #{ltt_vit_explainer_forward.12} parent=5 // pred_fallthru
      _
    %p401 = scmp.lt.s32.totalorder %s20, 2
    // Predicated region
    $region61: #{ltt_vit_explainer_forward.12} parent=5 // pred_check
      %p402 = pneg %p401
    $region62: #{ltt_vit_explainer_forward.12} parent=5 // pred_check_branch
      %404 = sbr.rel (%p402) target = $region64
    $region63: #{ltt_vit_explainer_forward.12} parent=5 // pred_region
      // Predicated region
      $region65: #{ltt_vit_explainer_forward.12} parent=63 // pred_check
        %p405 = pneg %p40
      $region66: #{ltt_vit_explainer_forward.12} parent=63 // pred_check_branch
        %407 = sbr.rel (%p405) target = $region68
      $region67: #{ltt_vit_explainer_forward.12} parent=63 // pred_region
        %p408 = scmp.lt.s32.totalorder %s20, 1
        %s409 = scalar_select %p408, %s20, 1
        %s410 = smul.addr %s409, 8
        %s411 = scalar_lea.vmem %s0, %s410
      $region68: #{ltt_vit_explainer_forward.12} parent=63 // pred_fallthru
        _
      // Predicated region
      $region69: #{ltt_vit_explainer_forward.12} parent=63 // pred_check
        %p412 = pneg %p66
      $region70: #{ltt_vit_explainer_forward.12} parent=63 // pred_check_branch
        %414 = sbr.rel (%p412) target = $region72
      $region71: #{ltt_vit_explainer_forward.12} parent=63 // pred_region
        %p415 = scmp.lt.s32.totalorder %s20, 1
        %s416 = scalar_select %p415, %s20, 1
        %s417 = scalar_lea.vmem %s1, %s416
      $region72: #{ltt_vit_explainer_forward.12} parent=63 // pred_fallthru
        _
    $region64: #{ltt_vit_explainer_forward.12} parent=5 // pred_fallthru
      _
    %p418 = scmp.le.s32.totalorder 1, %s20
    %p419 = scmp.lt.s32.totalorder %s20, 3
    %p420 = pnand %p418, %p419
    %p421 = pneg %p420
    // Predicated region
    $region73: #{ltt_vit_explainer_forward.12} parent=5 // pred_check
      _
    $region74: #{ltt_vit_explainer_forward.12} parent=5 // pred_check_branch
      %423 = sbr.rel (%p420) target = $region76
    $region75: #{ltt_vit_explainer_forward.12} parent=5 // pred_region
      %s424 = ssub.s32 %s20, 1
      %p425 = scmp.lt.s32.totalorder %s25, 1
      %s426 = scalar_select %p425, %s25, 1
      %s427 = smul.addr %s426, 8
      %s428 = scalar_lea.vmem %s0, %s427
      %p429 = pneg %p46
      %p430 = pneg %p43
      %p431 = scmp.lt.s32.totalorder %s25, 1
      %s432 = scalar_select %p431, %s25, 1
      %s433 = scalar_lea.vmem %s1, %s432
      %p434 = pneg %p72
      %p435 = pneg %p69
      %p436 = pneg %p93
      %p437 = pneg %p90
      %p438 = pneg %p114
      %p439 = pneg %p111
      %p440 = pneg %p135
      %p441 = pneg %p132
      %p442 = pneg %p156
      %p443 = pneg %p153
      %p444 = pneg %p177
      %p445 = pneg %p174
      %p446 = pneg %p198
      %p447 = pneg %p195
      %p448 = pneg %p219
      %p449 = pneg %p216
      %p450 = pneg %p240
      %p451 = pneg %p237
      %p452 = pneg %p261
      %p453 = pneg %p258
      %p454 = pneg %p282
      %p455 = pneg %p279
      %p456 = pneg %p303
      %p457 = pneg %p300
      %p458 = pneg %p324
      %p459 = pneg %p321
      %p460 = pneg %p350
      %p461 = pneg %p347
      %p462 = scmp.lt.s32.totalorder %s25, 1
      %s463 = scalar_select %p462, %s25, 1
      %s464 = smul.addr %s463, 8
      %s465 = scalar_lea.vmem %s14, %s464
      %p466 = scmp.lt.s32.totalorder %s25, 1
      %s467 = scalar_select %p466, %s25, 1
      %s468 = smul.addr %s467, 8
      %s469 = scalar_lea.vmem %s0, %s468
      %p470 = scmp.lt.s32.totalorder %s25, 1
      %s471 = scalar_select %p470, %s25, 1
      %s472 = scalar_lea.vmem %s1, %s471
      %p473 = scmp.lt.s32.totalorder %s25, 1
      %s474 = scalar_select %p473, %s25, 1
      %s475 = smul.addr %s474, 8
      %s476 = scalar_lea.vmem %s14, %s475
      %v478 = vld [vmem:[%s469] sm:$0x1f]
      %v479 = vld [vmem:[%s472] sm:$0x1]
      %v480 = vld [vmem:[%s2] sm:$0x1]
      %v481 = vld [vmem:[%s3] sm:$0x1]
      %vm482 = vcmask 126976
      %v483 = vsel %vm482, %v478, 0.0
      %484 = vadd.xlane.f32.xlu0 %v483
      %v485 = vpop.xlane.xlu0 %484
      %v486 = vrcp.pop 16.0
      %v487 = vmul.f32 %v485, %v486
      %v488 = vsub.f32 %v478, %v487
      %v489 = vmul.f32 %v488, %v488
      %v490 = vsel %vm482, %v489, 0.0
      %491 = vadd.xlane.f32.xlu0 %v490
      %v492 = vpop.xlane.xlu0 %491
      %v493 = vmul.f32 %v492, %v486
      %v494 = vadd.f32 %v493, 1e-12
      %v495 = vrsqrt.pop %v494
      %v496 = vmul.f32 %v488, %v495
      %v498 = vlaneseq
      %v499 = vshrl.u32 %v498, 7
      %v500 = vsub.s32 0, %v499
      %v501 = vrot.slane %v480, %v500
      %v503 = vmul.f32 %v496, %v501
      %v505 = vlaneseq
      %v506 = vshrl.u32 %v505, 7
      %v507 = vsub.s32 0, %v506
      %v508 = vrot.slane %v481, %v507
      %v510 = vadd.f32 %v503, %v508
      %v511 = vld [vmem:[%s4] sm:$0xf]
      %v512 = vld [vmem:[%s4 + $0x4] sm:$0xf]
      %v513 = vld [vmem:[%s5] sm:$0x1]
      %v514 = vpack.c.bf16 %v510, %v510
      %v516 = vlaneseq
      %v517 = vshrl.u32 %v516, 7
      %v518 = vsub.s32 0, %v517
      %v519 = vrot.slane %v513, %v518
      %v523 = vunpack.c.l.b16 %v511
      %v524 = vunpack.c.l.b16 %v512
      %v525 = vpack.c.b16 %v524, %v523
      %vm527 = vcmask 130048
      %v529 = vsel %vm527, %v514, 0
      %531 = vmatprep.subr.bf16.mxu0 0
      %532 = vmatpush1.bf16.msra.mxu0 %v525
      %533 = vmatprep.subr.bf16.mxu0 0
      %534 = vmatpush1.bf16.msra.mxu0 0
      %535 = vmatprep.subr.bf16.mxu0 0
      %536 = vmatpush1.bf16.msra.mxu0 0
      %537 = vmatprep.subr.bf16.mxu0 0
      %538 = vmatpush1.bf16.msra.mxu0 0
      %539 = vmatprep.subr.bf16.mxu0 0
      %540 = vmatpush1.bf16.msra.mxu0 0
      %541 = vmatprep.subr.bf16.mxu0 0
      %542 = vmatpush1.bf16.msra.mxu0 0
      %543 = vmatprep.subr.bf16.mxu0 0
      %544 = vmatpush1.bf16.msra.mxu0 0
      %545 = vmatprep.subr.bf16.mxu0 0
      %546 = vmatpush1.bf16.msra.mxu0 0
      %547 = vmatprep.subr.bf16.mxu0 0
      %548 = vmatpush1.bf16.msra.mxu0 0
      %549 = vmatprep.subr.bf16.mxu0 0
      %550 = vmatpush1.bf16.msra.mxu0 0
      %551 = vmatprep.subr.bf16.mxu0 0
      %552 = vmatpush1.bf16.msra.mxu0 0
      %553 = vmatprep.subr.bf16.mxu0 0
      %554 = vmatpush1.bf16.msra.mxu0 0
      %555 = vmatprep.subr.bf16.mxu0 0
      %556 = vmatpush1.bf16.msra.mxu0 0
      %557 = vmatprep.subr.bf16.mxu0 0
      %558 = vmatpush1.bf16.msra.mxu0 0
      %559 = vmatprep.subr.bf16.mxu0 0
      %560 = vmatpush1.bf16.msra.mxu0 0
      %561 = vmatprep.subr.bf16.mxu0 0
      %562 = vmatpush1.bf16.msra.mxu0 0
      %563 = vmatprep.mubr.bf16.mxu0 0
      %564 = vmatmul.mubr.bf16.gmra.mrb[0].mxu0 %v529
      %v565 = vpop.f32.mrb[0].mxu0
      %v566 = vadd.f32 %v519, %v565
      %v567 = vpop.f32.mrb[0].mxu0
      %v568 = vpop.f32.mrb[0].mxu0
      %v569 = vpop.f32.mrb[0].mxu0
      %570 = vdwg.mxu0
      %v571 = vpack.c.bf16 %v566, %v566
      %573 = vrot.lane.b32.xlu0 %v571, 112
      %v574 = vpop.permute.xlu0 %573
      %vm575 = vcmask 31744
      %v577 = vsel %vm575, %v571, 0
      %v580 = vsel %vm575, %v574, 0
      %582 = vmatprep.subr.bf16.mxu0 0
      %583 = vmatpush1.bf16.xpose.msra.mxu0 %v580
      %584 = vmatprep.subr.bf16.mxu0 0
      %585 = vmatpush1.bf16.xpose.msra.mxu0 0
      %586 = vmatprep.subr.bf16.mxu0 0
      %587 = vmatpush1.bf16.xpose.msra.mxu0 0
      %588 = vmatprep.subr.bf16.mxu0 0
      %589 = vmatpush1.bf16.xpose.msra.mxu0 0
      %590 = vmatprep.subr.bf16.mxu0 0
      %591 = vmatpush1.bf16.xpose.msra.mxu0 0
      %592 = vmatprep.subr.bf16.mxu0 0
      %593 = vmatpush1.bf16.xpose.msra.mxu0 0
      %594 = vmatprep.subr.bf16.mxu0 0
      %595 = vmatpush1.bf16.xpose.msra.mxu0 0
      %596 = vmatprep.subr.bf16.mxu0 0
      %597 = vmatpush1.bf16.xpose.msra.mxu0 0
      %598 = vmatprep.subr.bf16.mxu0 0
      %599 = vmatpush1.bf16.xpose.msra.mxu0 0
      %600 = vmatprep.subr.bf16.mxu0 0
      %601 = vmatpush1.bf16.xpose.msra.mxu0 0
      %602 = vmatprep.subr.bf16.mxu0 0
      %603 = vmatpush1.bf16.xpose.msra.mxu0 0
      %604 = vmatprep.subr.bf16.mxu0 0
      %605 = vmatpush1.bf16.xpose.msra.mxu0 0
      %606 = vmatprep.subr.bf16.mxu0 0
      %607 = vmatpush1.bf16.xpose.msra.mxu0 0
      %608 = vmatprep.subr.bf16.mxu0 0
      %609 = vmatpush1.bf16.xpose.msra.mxu0 0
      %610 = vmatprep.subr.bf16.mxu0 0
      %611 = vmatpush1.bf16.xpose.msra.mxu0 0
      %612 = vmatprep.subr.bf16.mxu0 0
      %613 = vmatpush1.bf16.xpose.msra.mxu0 0
      %614 = vmatprep.mubr.bf16.mxu0 0
      %615 = vmatmul.mubr.bf16.gmra.mrb[0].mxu0 %v577
      %v616 = vpop.f32.mrb[0].mxu0
      %v617 = vadd.f32 0.0, %v616
      %v618 = vpop.f32.mrb[0].mxu0
      %v619 = vpop.f32.mrb[0].mxu0
      %v620 = vpop.f32.mrb[0].mxu0
      %621 = vdwg.mxu0
      %v622 = vmul.f32 %v617, 0.5
      %v624 = vlaneseq
      %v625 = vshrl.u32 %v624, 7
      %v626 = vsub.s32 0, %v625
      %v627 = vrot.slane %v479, %v626
      %v629 = vadd.f32 %v622, %v627
      %vm630 = vcmask 36864
      %v631 = vsel %vm630, %v629, -inf
      %632 = vmax.xlane.f32.xlu0 %v631
      %v633 = vpop.xlane.xlu0 %632
      %v634 = vsub.f32 %v629, %v633
      %v635 = vmul.f32 %v634, 1.442695
      %v636 = vpow.pop %v635
      %v637 = vsel %vm630, %v636, 0.0
      %638 = vadd.xlane.f32.xlu0 %v637
      %v639 = vpop.xlane.xlu0 %638
      %v640 = vrcp.pop %v639
      %v641 = vmul.f32 %v636, %v640
      %v642 = vpack.c.bf16 %v641, %v641
      %643 = vrot.lane.b32.xlu0 %v571, 96
      %v644 = vpop.permute.xlu0 %643
      %vm645 = vcmask 39936
      %v647 = vsel %vm645, %v642, 0
      %vm649 = vcmask 1041408
      %vm650 = vcmask 1042432
      %v651 = vsel %vm649, 4294967295, 65535
      %v652 = vsel %vm650, %v651, 0
      %v654 = vand.u32 %v644, %v652
      %656 = vmatprep.subr.bf16.mxu0 0
      %657 = vmatpush1.bf16.msra.mxu0 %v654
      %658 = vmatprep.subr.bf16.mxu0 0
      %659 = vmatpush1.bf16.msra.mxu0 0
      %660 = vmatprep.subr.bf16.mxu0 0
      %661 = vmatpush1.bf16.msra.mxu0 0
      %662 = vmatprep.subr.bf16.mxu0 0
      %663 = vmatpush1.bf16.msra.mxu0 0
      %664 = vmatprep.subr.bf16.mxu0 0
      %665 = vmatpush1.bf16.msra.mxu0 0
      %666 = vmatprep.subr.bf16.mxu0 0
      %667 = vmatpush1.bf16.msra.mxu0 0
      %668 = vmatprep.subr.bf16.mxu0 0
      %669 = vmatpush1.bf16.msra.mxu0 0
      %670 = vmatprep.subr.bf16.mxu0 0
      %671 = vmatpush1.bf16.msra.mxu0 0
      %672 = vmatprep.subr.bf16.mxu0 0
      %673 = vmatpush1.bf16.msra.mxu0 0
      %674 = vmatprep.subr.bf16.mxu0 0
      %675 = vmatpush1.bf16.msra.mxu0 0
      %676 = vmatprep.subr.bf16.mxu0 0
      %677 = vmatpush1.bf16.msra.mxu0 0
      %678 = vmatprep.subr.bf16.mxu0 0
      %679 = vmatpush1.bf16.msra.mxu0 0
      %680 = vmatprep.subr.bf16.mxu0 0
      %681 = vmatpush1.bf16.msra.mxu0 0
      %682 = vmatprep.subr.bf16.mxu0 0
      %683 = vmatpush1.bf16.msra.mxu0 0
      %684 = vmatprep.subr.bf16.mxu0 0
      %685 = vmatpush1.bf16.msra.mxu0 0
      %686 = vmatprep.subr.bf16.mxu0 0
      %687 = vmatpush1.bf16.msra.mxu0 0
      %688 = vmatprep.mubr.bf16.mxu0 0
      %689 = vmatmul.mubr.bf16.gmra.mrb[0].mxu0 %v647
      %v690 = vpop.f32.mrb[0].mxu0
      %v691 = vadd.f32 0.0, %v690
      %v692 = vpop.f32.mrb[0].mxu0
      %v693 = vpop.f32.mrb[0].mxu0
      %v694 = vpop.f32.mrb[0].mxu0
      %695 = vdwg.mxu0
      %696 = vrot.lane.b32.xlu0 %v571, 124
      %v697 = vpop.permute.xlu0 %696
      %698 = vrot.lane.b32.xlu0 %v571, 108
      %v699 = vpop.permute.xlu0 %698
      %v701 = vsel %vm575, %v697, 0
      %v704 = vsel %vm575, %v699, 0
      %706 = vmatprep.subr.bf16.mxu0 0
      %707 = vmatpush1.bf16.xpose.msra.mxu0 %v704
      %708 = vmatprep.subr.bf16.mxu0 0
      %709 = vmatpush1.bf16.xpose.msra.mxu0 0
      %710 = vmatprep.subr.bf16.mxu0 0
      %711 = vmatpush1.bf16.xpose.msra.mxu0 0
      %712 = vmatprep.subr.bf16.mxu0 0
      %713 = vmatpush1.bf16.xpose.msra.mxu0 0
      %714 = vmatprep.subr.bf16.mxu0 0
      %715 = vmatpush1.bf16.xpose.msra.mxu0 0
      %716 = vmatprep.subr.bf16.mxu0 0
      %717 = vmatpush1.bf16.xpose.msra.mxu0 0
      %718 = vmatprep.subr.bf16.mxu0 0
      %719 = vmatpush1.bf16.xpose.msra.mxu0 0
      %720 = vmatprep.subr.bf16.mxu0 0
      %721 = vmatpush1.bf16.xpose.msra.mxu0 0
      %722 = vmatprep.subr.bf16.mxu0 0
      %723 = vmatpush1.bf16.xpose.msra.mxu0 0
      %724 = vmatprep.subr.bf16.mxu0 0
      %725 = vmatpush1.bf16.xpose.msra.mxu0 0
      %726 = vmatprep.subr.bf16.mxu0 0
      %727 = vmatpush1.bf16.xpose.msra.mxu0 0
      %728 = vmatprep.subr.bf16.mxu0 0
      %729 = vmatpush1.bf16.xpose.msra.mxu0 0
      %730 = vmatprep.subr.bf16.mxu0 0
      %731 = vmatpush1.bf16.xpose.msra.mxu0 0
      %732 = vmatprep.subr.bf16.mxu0 0
      %733 = vmatpush1.bf16.xpose.msra.mxu0 0
      %734 = vmatprep.subr.bf16.mxu0 0
      %735 = vmatpush1.bf16.xpose.msra.mxu0 0
      %736 = vmatprep.subr.bf16.mxu0 0
      %737 = vmatpush1.bf16.xpose.msra.mxu0 0
      %738 = vmatprep.mubr.bf16.mxu0 0
      %739 = vmatmul.mubr.bf16.gmra.mrb[0].mxu0 %v701
      %v740 = vpop.f32.mrb[0].mxu0
      %v741 = vadd.f32 0.0, %v740
      %v742 = vpop.f32.mrb[0].mxu0
      %v743 = vpop.f32.mrb[0].mxu0
      %v744 = vpop.f32.mrb[0].mxu0
      %745 = vdwg.mxu0
      %v746 = vmul.f32 %v741, 0.5
      %v747 = vadd.f32 %v746, %v627
      %v748 = vsel %vm630, %v747, -inf
      %749 = vmax.xlane.f32.xlu0 %v748
      %v750 = vpop.xlane.xlu0 %749
      %v751 = vsub.f32 %v747, %v750
      %v752 = vmul.f32 %v751, 1.442695
      %v753 = vpow.pop %v752
      %v754 = vsel %vm630, %v753, 0.0
      %755 = vadd.xlane.f32.xlu0 %v754
      %v756 = vpop.xlane.xlu0 %755
      %v757 = vrcp.pop %v756
      %v758 = vmul.f32 %v753, %v757
      %v759 = vpack.c.bf16 %v758, %v758
      %760 = vrot.lane.b32.xlu0 %v571, 92
      %v761 = vpop.permute.xlu0 %760
      %v763 = vsel %vm645, %v759, 0
      %v766 = vand.u32 %v761, %v652
      %768 = vmatprep.subr.bf16.mxu0 0
      %769 = vmatpush1.bf16.msra.mxu0 %v766
      %770 = vmatprep.subr.bf16.mxu0 0
      %771 = vmatpush1.bf16.msra.mxu0 0
      %772 = vmatprep.subr.bf16.mxu0 0
      %773 = vmatpush1.bf16.msra.mxu0 0
      %774 = vmatprep.subr.bf16.mxu0 0
      %775 = vmatpush1.bf16.msra.mxu0 0
      %776 = vmatprep.subr.bf16.mxu0 0
      %777 = vmatpush1.bf16.msra.mxu0 0
      %778 = vmatprep.subr.bf16.mxu0 0
      %779 = vmatpush1.bf16.msra.mxu0 0
      %780 = vmatprep.subr.bf16.mxu0 0
      %781 = vmatpush1.bf16.msra.mxu0 0
      %782 = vmatprep.subr.bf16.mxu0 0
      %783 = vmatpush1.bf16.msra.mxu0 0
      %784 = vmatprep.subr.bf16.mxu0 0
      %785 = vmatpush1.bf16.msra.mxu0 0
      %786 = vmatprep.subr.bf16.mxu0 0
      %787 = vmatpush1.bf16.msra.mxu0 0
      %788 = vmatprep.subr.bf16.mxu0 0
      %789 = vmatpush1.bf16.msra.mxu0 0
      %790 = vmatprep.subr.bf16.mxu0 0
      %791 = vmatpush1.bf16.msra.mxu0 0
      %792 = vmatprep.subr.bf16.mxu0 0
      %793 = vmatpush1.bf16.msra.mxu0 0
      %794 = vmatprep.subr.bf16.mxu0 0
      %795 = vmatpush1.bf16.msra.mxu0 0
      %796 = vmatprep.subr.bf16.mxu0 0
      %797 = vmatpush1.bf16.msra.mxu0 0
      %798 = vmatprep.subr.bf16.mxu0 0
      %799 = vmatpush1.bf16.msra.mxu0 0
      %800 = vmatprep.mubr.bf16.mxu0 0
      %801 = vmatmul.mubr.bf16.gmra.mrb[0].mxu0 %v763
      %v802 = vpop.f32.mrb[0].mxu0
      %v803 = vadd.f32 0.0, %v802
      %v804 = vpop.f32.mrb[0].mxu0
      %v805 = vpop.f32.mrb[0].mxu0
      %v806 = vpop.f32.mrb[0].mxu0
      %807 = vdwg.mxu0
      %808 = vrot.lane.b32.xlu0 %v571, 120
      %v809 = vpop.permute.xlu0 %808
      %810 = vrot.lane.b32.xlu0 %v571, 104
      %v811 = vpop.permute.xlu0 %810
      %v813 = vsel %vm575, %v809, 0
      %v816 = vsel %vm575, %v811, 0
      %818 = vmatprep.subr.bf16.mxu0 0
      %819 = vmatpush1.bf16.xpose.msra.mxu0 %v816
      %820 = vmatprep.subr.bf16.mxu0 0
      %821 = vmatpush1.bf16.xpose.msra.mxu0 0
      %822 = vmatprep.subr.bf16.mxu0 0
      %823 = vmatpush1.bf16.xpose.msra.mxu0 0
      %824 = vmatprep.subr.bf16.mxu0 0
      %825 = vmatpush1.bf16.xpose.msra.mxu0 0
      %826 = vmatprep.subr.bf16.mxu0 0
      %827 = vmatpush1.bf16.xpose.msra.mxu0 0
      %828 = vmatprep.subr.bf16.mxu0 0
      %829 = vmatpush1.bf16.xpose.msra.mxu0 0
      %830 = vmatprep.subr.bf16.mxu0 0
      %831 = vmatpush1.bf16.xpose.msra.mxu0 0
      %832 = vmatprep.subr.bf16.mxu0 0
      %833 = vmatpush1.bf16.xpose.msra.mxu0 0
      %834 = vmatprep.subr.bf16.mxu0 0
      %835 = vmatpush1.bf16.xpose.msra.mxu0 0
      %836 = vmatprep.subr.bf16.mxu0 0
      %837 = vmatpush1.bf16.xpose.msra.mxu0 0
      %838 = vmatprep.subr.bf16.mxu0 0
      %839 = vmatpush1.bf16.xpose.msra.mxu0 0
      %840 = vmatprep.subr.bf16.mxu0 0
      %841 = vmatpush1.bf16.xpose.msra.mxu0 0
      %842 = vmatprep.subr.bf16.mxu0 0
      %843 = vmatpush1.bf16.xpose.msra.mxu0 0
      %844 = vmatprep.subr.bf16.mxu0 0
      %845 = vmatpush1.bf16.xpose.msra.mxu0 0
      %846 = vmatprep.subr.bf16.mxu0 0
      %847 = vmatpush1.bf16.xpose.msra.mxu0 0
      %848 = vmatprep.subr.bf16.mxu0 0
      %849 = vmatpush1.bf16.xpose.msra.mxu0 0
      %850 = vmatprep.mubr.bf16.mxu0 0
      %851 = vmatmul.mubr.bf16.gmra.mrb[0].mxu0 %v813
      %v852 = vpop.f32.mrb[0].mxu0
      %v853 = vadd.f32 0.0, %v852
      %v854 = vpop.f32.mrb[0].mxu0
      %v855 = vpop.f32.mrb[0].mxu0
      %v856 = vpop.f32.mrb[0].mxu0
      %857 = vdwg.mxu0
      %v858 = vmul.f32 %v853, 0.5
      %v859 = vadd.f32 %v858, %v627
      %v860 = vsel %vm630, %v859, -inf
      %861 = vmax.xlane.f32.xlu0 %v860
      %v862 = vpop.xlane.xlu0 %861
      %v863 = vsub.f32 %v859, %v862
      %v864 = vmul.f32 %v863, 1.442695
      %v865 = vpow.pop %v864
      %v866 = vsel %vm630, %v865, 0.0
      %867 = vadd.xlane.f32.xlu0 %v866
      %v868 = vpop.xlane.xlu0 %867
      %v869 = vrcp.pop %v868
      %v870 = vmul.f32 %v865, %v869
      %v871 = vpack.c.bf16 %v870, %v870
      %872 = vrot.lane.b32.xlu0 %v571, 88
      %v873 = vpop.permute.xlu0 %872
      %v875 = vsel %vm645, %v871, 0
      %v878 = vand.u32 %v873, %v652
      %880 = vmatprep.subr.bf16.mxu0 0
      %881 = vmatpush1.bf16.msra.mxu0 %v878
      %882 = vmatprep.subr.bf16.mxu0 0
      %883 = vmatpush1.bf16.msra.mxu0 0
      %884 = vmatprep.subr.bf16.mxu0 0
      %885 = vmatpush1.bf16.msra.mxu0 0
      %886 = vmatprep.subr.bf16.mxu0 0
      %887 = vmatpush1.bf16.msra.mxu0 0
      %888 = vmatprep.subr.bf16.mxu0 0
      %889 = vmatpush1.bf16.msra.mxu0 0
      %890 = vmatprep.subr.bf16.mxu0 0
      %891 = vmatpush1.bf16.msra.mxu0 0
      %892 = vmatprep.subr.bf16.mxu0 0
      %893 = vmatpush1.bf16.msra.mxu0 0
      %894 = vmatprep.subr.bf16.mxu0 0
      %895 = vmatpush1.bf16.msra.mxu0 0
      %896 = vmatprep.subr.bf16.mxu0 0
      %897 = vmatpush1.bf16.msra.mxu0 0
      %898 = vmatprep.subr.bf16.mxu0 0
      %899 = vmatpush1.bf16.msra.mxu0 0
      %900 = vmatprep.subr.bf16.mxu0 0
      %901 = vmatpush1.bf16.msra.mxu0 0
      %902 = vmatprep.subr.bf16.mxu0 0
      %903 = vmatpush1.bf16.msra.mxu0 0
      %904 = vmatprep.subr.bf16.mxu0 0
      %905 = vmatpush1.bf16.msra.mxu0 0
      %906 = vmatprep.subr.bf16.mxu0 0
      %907 = vmatpush1.bf16.msra.mxu0 0
      %908 = vmatprep.subr.bf16.mxu0 0
      %909 = vmatpush1.bf16.msra.mxu0 0
      %910 = vmatprep.subr.bf16.mxu0 0
      %911 = vmatpush1.bf16.msra.mxu0 0
      %912 = vmatprep.mubr.bf16.mxu0 0
      %913 = vmatmul.mubr.bf16.gmra.mrb[0].mxu0 %v875
      %v914 = vpop.f32.mrb[0].mxu0
      %v915 = vadd.f32 0.0, %v914
      %v916 = vpop.f32.mrb[0].mxu0
      %v917 = vpop.f32.mrb[0].mxu0
      %v918 = vpop.f32.mrb[0].mxu0
      %919 = vdwg.mxu0
      %920 = vrot.lane.b32.xlu0 %v571, 116
      %v921 = vpop.permute.xlu0 %920
      %922 = vrot.lane.b32.xlu0 %v571, 100
      %v923 = vpop.permute.xlu0 %922
      %v925 = vsel %vm575, %v921, 0
      %v928 = vsel %vm575, %v923, 0
      %930 = vmatprep.subr.bf16.mxu0 0
      %931 = vmatpush1.bf16.xpose.msra.mxu0 %v928
      %932 = vmatprep.subr.bf16.mxu0 0
      %933 = vmatpush1.bf16.xpose.msra.mxu0 0
      %934 = vmatprep.subr.bf16.mxu0 0
      %935 = vmatpush1.bf16.xpose.msra.mxu0 0
      %936 = vmatprep.subr.bf16.mxu0 0
      %937 = vmatpush1.bf16.xpose.msra.mxu0 0
      %938 = vmatprep.subr.bf16.mxu0 0
      %939 = vmatpush1.bf16.xpose.msra.mxu0 0
      %940 = vmatprep.subr.bf16.mxu0 0
      %941 = vmatpush1.bf16.xpose.msra.mxu0 0
      %942 = vmatprep.subr.bf16.mxu0 0
      %943 = vmatpush1.bf16.xpose.msra.mxu0 0
      %944 = vmatprep.subr.bf16.mxu0 0
      %945 = vmatpush1.bf16.xpose.msra.mxu0 0
      %946 = vmatprep.subr.bf16.mxu0 0
      %947 = vmatpush1.bf16.xpose.msra.mxu0 0
      %948 = vmatprep.subr.bf16.mxu0 0
      %949 = vmatpush1.bf16.xpose.msra.mxu0 0
      %950 = vmatprep.subr.bf16.mxu0 0
      %951 = vmatpush1.bf16.xpose.msra.mxu0 0
      %952 = vmatprep.subr.bf16.mxu0 0
      %953 = vmatpush1.bf16.xpose.msra.mxu0 0
      %954 = vmatprep.subr.bf16.mxu0 0
      %955 = vmatpush1.bf16.xpose.msra.mxu0 0
      %956 = vmatprep.subr.bf16.mxu0 0
      %957 = vmatpush1.bf16.xpose.msra.mxu0 0
      %958 = vmatprep.subr.bf16.mxu0 0
      %959 = vmatpush1.bf16.xpose.msra.mxu0 0
      %960 = vmatprep.subr.bf16.mxu0 0
      %961 = vmatpush1.bf16.xpose.msra.mxu0 0
      %962 = vmatprep.mubr.bf16.mxu0 0
      %963 = vmatmul.mubr.bf16.gmra.mrb[0].mxu0 %v925
      %v964 = vpop.f32.mrb[0].mxu0
      %v965 = vadd.f32 0.0, %v964
      %v966 = vpop.f32.mrb[0].mxu0
      %v967 = vpop.f32.mrb[0].mxu0
      %v968 = vpop.f32.mrb[0].mxu0
      %969 = vdwg.mxu0
      %v970 = vmul.f32 %v965, 0.5
      %v971 = vadd.f32 %v970, %v627
      %v972 = vsel %vm630, %v971, -inf
      %973 = vmax.xlane.f32.xlu0 %v972
      %v974 = vpop.xlane.xlu0 %973
      %v975 = vsub.f32 %v971, %v974
      %v976 = vmul.f32 %v975, 1.442695
      %v977 = vpow.pop %v976
      %v978 = vsel %vm630, %v977, 0.0
      %979 = vadd.xlane.f32.xlu0 %v978
      %v980 = vpop.xlane.xlu0 %979
      %v981 = vrcp.pop %v980
      %v982 = vmul.f32 %v977, %v981
      %v983 = vpack.c.bf16 %v982, %v982
      %984 = vrot.lane.b32.xlu0 %v571, 84
      %v985 = vpop.permute.xlu0 %984
      %v987 = vsel %vm645, %v983, 0
      %v990 = vand.u32 %v985, %v652
      %992 = vmatprep.subr.bf16.mxu0 0
      %993 = vmatpush1.bf16.msra.mxu0 %v990
      %994 = vmatprep.subr.bf16.mxu0 0
      %995 = vmatpush1.bf16.msra.mxu0 0
      %996 = vmatprep.subr.bf16.mxu0 0
      %997 = vmatpush1.bf16.msra.mxu0 0
      %998 = vmatprep.subr.bf16.mxu0 0
      %999 = vmatpush1.bf16.msra.mxu0 0
      %1000 = vmatprep.subr.bf16.mxu0 0
      %1001 = vmatpush1.bf16.msra.mxu0 0
      %1002 = vmatprep.subr.bf16.mxu0 0
      %1003 = vmatpush1.bf16.msra.mxu0 0
      %1004 = vmatprep.subr.bf16.mxu0 0
      %1005 = vmatpush1.bf16.msra.mxu0 0
      %1006 = vmatprep.subr.bf16.mxu0 0
      %1007 = vmatpush1.bf16.msra.mxu0 0
      %1008 = vmatprep.subr.bf16.mxu0 0
      %1009 = vmatpush1.bf16.msra.mxu0 0
      %1010 = vmatprep.subr.bf16.mxu0 0
      %1011 = vmatpush1.bf16.msra.mxu0 0
      %1012 = vmatprep.subr.bf16.mxu0 0
      %1013 = vmatpush1.bf16.msra.mxu0 0
      %1014 = vmatprep.subr.bf16.mxu0 0
      %1015 = vmatpush1.bf16.msra.mxu0 0
      %1016 = vmatprep.subr.bf16.mxu0 0
      %1017 = vmatpush1.bf16.msra.mxu0 0
      %1018 = vmatprep.subr.bf16.mxu0 0
      %1019 = vmatpush1.bf16.msra.mxu0 0
      %1020 = vmatprep.subr.bf16.mxu0 0
      %1021 = vmatpush1.bf16.msra.mxu0 0
      %1022 = vmatprep.subr.bf16.mxu0 0
      %1023 = vmatpush1.bf16.msra.mxu0 0
      %1024 = vmatprep.mubr.bf16.mxu0 0
      %1025 = vmatmul.mubr.bf16.gmra.mrb[0].mxu0 %v987
      %v1026 = vpop.f32.mrb[0].mxu0
      %v1027 = vadd.f32 0.0, %v1026
      %v1028 = vpop.f32.mrb[0].mxu0
      %v1029 = vpop.f32.mrb[0].mxu0
      %v1030 = vpop.f32.mrb[0].mxu0
      %1031 = vdwg.mxu0
      %1033 = vrot.lane.b32.xlu0 %v803, 4
      %v1034 = vpop.permute.xlu0 %1033
      %1037 = vrot.lane.b32.xlu0 %v915, 8
      %v1038 = vpop.permute.xlu0 %1037
      %1041 = vrot.lane.b32.xlu0 %v1027, 12
      %v1042 = vpop.permute.xlu0 %1041
      %v1044 = vsel %vm575, %v691, %v1034
      %vm1045 = vcmask 64512
      %v1046 = vsel %vm1045, %v1044, %v1038
      %vm1047 = vcmask 97280
      %v1048 = vsel %vm1047, %v1046, %v1042
      %v1049 = vld [vmem:[%s6] sm:$0xf]
      %v1050 = vld [vmem:[%s6 + $0x4] sm:$0xf]
      %v1051 = vld [vmem:[%s7] sm:$0x1]
      %v1052 = vpack.c.bf16 %v1048, %v1048
      %v1054 = vlaneseq
      %v1055 = vshrl.u32 %v1054, 7
      %v1056 = vsub.s32 0, %v1055
      %v1057 = vrot.slane %v1051, %v1056
      %v1061 = vunpack.c.l.b16 %v1049
      %v1062 = vunpack.c.l.b16 %v1050
      %v1063 = vpack.c.b16 %v1062, %v1061
      %v1066 = vsel %vm527, %v1052, 0
      %1068 = vmatprep.subr.bf16.mxu0 0
      %1069 = vmatpush1.bf16.msra.mxu0 %v1063
      %1070 = vmatprep.subr.bf16.mxu0 0
      %1071 = vmatpush1.bf16.msra.mxu0 0
      %1072 = vmatprep.subr.bf16.mxu0 0
      %1073 = vmatpush1.bf16.msra.mxu0 0
      %1074 = vmatprep.subr.bf16.mxu0 0
      %1075 = vmatpush1.bf16.msra.mxu0 0
      %1076 = vmatprep.subr.bf16.mxu0 0
      %1077 = vmatpush1.bf16.msra.mxu0 0
      %1078 = vmatprep.subr.bf16.mxu0 0
      %1079 = vmatpush1.bf16.msra.mxu0 0
      %1080 = vmatprep.subr.bf16.mxu0 0
      %1081 = vmatpush1.bf16.msra.mxu0 0
      %1082 = vmatprep.subr.bf16.mxu0 0
      %1083 = vmatpush1.bf16.msra.mxu0 0
      %1084 = vmatprep.subr.bf16.mxu0 0
      %1085 = vmatpush1.bf16.msra.mxu0 0
      %1086 = vmatprep.subr.bf16.mxu0 0
      %1087 = vmatpush1.bf16.msra.mxu0 0
      %1088 = vmatprep.subr.bf16.mxu0 0
      %1089 = vmatpush1.bf16.msra.mxu0 0
      %1090 = vmatprep.subr.bf16.mxu0 0
      %1091 = vmatpush1.bf16.msra.mxu0 0
      %1092 = vmatprep.subr.bf16.mxu0 0
      %1093 = vmatpush1.bf16.msra.mxu0 0
      %1094 = vmatprep.subr.bf16.mxu0 0
      %1095 = vmatpush1.bf16.msra.mxu0 0
      %1096 = vmatprep.subr.bf16.mxu0 0
      %1097 = vmatpush1.bf16.msra.mxu0 0
      %1098 = vmatprep.subr.bf16.mxu0 0
      %1099 = vmatpush1.bf16.msra.mxu0 0
      %1100 = vmatprep.mubr.bf16.mxu0 0
      %1101 = vmatmul.mubr.bf16.gmra.mrb[0].mxu0 %v1066
      %v1102 = vpop.f32.mrb[0].mxu0
      %v1103 = vadd.f32 %v1057, %v1102
      %v1104 = vpop.f32.mrb[0].mxu0
      %v1105 = vpop.f32.mrb[0].mxu0
      %v1106 = vpop.f32.mrb[0].mxu0
      %1107 = vdwg.mxu0
      %v1108 = vadd.f32 %v478, %v1103
      %v1109 = vld [vmem:[%s8] sm:$0x1]
      %v1110 = vld [vmem:[%s9] sm:$0x1]
      %v1111 = vsel %vm482, %v1108, 0.0
      %1112 = vadd.xlane.f32.xlu0 %v1111
      %v1113 = vpop.xlane.xlu0 %1112
      %v1114 = vmul.f32 %v1113, %v486
      %v1115 = vsub.f32 %v1108, %v1114
      %v1116 = vmul.f32 %v1115, %v1115
      %v1117 = vsel %vm482, %v1116, 0.0
      %1118 = vadd.xlane.f32.xlu0 %v1117
      %v1119 = vpop.xlane.xlu0 %1118
      %v1120 = vmul.f32 %v1119, %v486
      %v1121 = vadd.f32 %v1120, 1e-12
      %v1122 = vrsqrt.pop %v1121
      %v1123 = vmul.f32 %v1115, %v1122
      %v1125 = vlaneseq
      %v1126 = vshrl.u32 %v1125, 7
      %v1127 = vsub.s32 0, %v1126
      %v1128 = vrot.slane %v1109, %v1127
      %v1130 = vmul.f32 %v1123, %v1128
      %v1132 = vlaneseq
      %v1133 = vshrl.u32 %v1132, 7
      %v1134 = vsub.s32 0, %v1133
      %v1135 = vrot.slane %v1110, %v1134
      %v1137 = vadd.f32 %v1130, %v1135
      %v1138 = vld [vmem:[%s10] sm:$0xf]
      %v1139 = vld [vmem:[%s10 + $0x4] sm:$0xf]
      %v1140 = vld [vmem:[%s11] sm:$0x1]
      %v1141 = vpack.c.bf16 %v1137, %v1137
      %v1143 = vlaneseq
      %v1144 = vshrl.u32 %v1143, 7
      %v1145 = vsub.s32 0, %v1144
      %v1146 = vrot.slane %v1140, %v1145
      %v1150 = vunpack.c.l.b16 %v1138
      %v1151 = vunpack.c.l.b16 %v1139
      %v1152 = vpack.c.b16 %v1151, %v1150
      %v1155 = vsel %vm527, %v1141, 0
      %1157 = vmatprep.subr.bf16.mxu0 0
      %1158 = vmatpush1.bf16.msra.mxu0 %v1152
      %1159 = vmatprep.subr.bf16.mxu0 0
      %1160 = vmatpush1.bf16.msra.mxu0 0
      %1161 = vmatprep.subr.bf16.mxu0 0
      %1162 = vmatpush1.bf16.msra.mxu0 0
      %1163 = vmatprep.subr.bf16.mxu0 0
      %1164 = vmatpush1.bf16.msra.mxu0 0
      %1165 = vmatprep.subr.bf16.mxu0 0
      %1166 = vmatpush1.bf16.msra.mxu0 0
      %1167 = vmatprep.subr.bf16.mxu0 0
      %1168 = vmatpush1.bf16.msra.mxu0 0
      %1169 = vmatprep.subr.bf16.mxu0 0
      %1170 = vmatpush1.bf16.msra.mxu0 0
      %1171 = vmatprep.subr.bf16.mxu0 0
      %1172 = vmatpush1.bf16.msra.mxu0 0
      %1173 = vmatprep.subr.bf16.mxu0 0
      %1174 = vmatpush1.bf16.msra.mxu0 0
      %1175 = vmatprep.subr.bf16.mxu0 0
      %1176 = vmatpush1.bf16.msra.mxu0 0
      %1177 = vmatprep.subr.bf16.mxu0 0
      %1178 = vmatpush1.bf16.msra.mxu0 0
      %1179 = vmatprep.subr.bf16.mxu0 0
      %1180 = vmatpush1.bf16.msra.mxu0 0
      %1181 = vmatprep.subr.bf16.mxu0 0
      %1182 = vmatpush1.bf16.msra.mxu0 0
      %1183 = vmatprep.subr.bf16.mxu0 0
      %1184 = vmatpush1.bf16.msra.mxu0 0
      %1185 = vmatprep.subr.bf16.mxu0 0
      %1186 = vmatpush1.bf16.msra.mxu0 0
      %1187 = vmatprep.subr.bf16.mxu0 0
      %1188 = vmatpush1.bf16.msra.mxu0 0
      %1189 = vmatprep.mubr.bf16.mxu0 0
      %1190 = vmatmul.mubr.bf16.gmra.mrb[0].mxu0 %v1155
      %v1191 = vpop.f32.mrb[0].mxu0
      %v1192 = vadd.f32 %v1146, %v1191
      %v1193 = vpop.f32.mrb[0].mxu0
      %v1194 = vpop.f32.mrb[0].mxu0
      %v1195 = vpop.f32.mrb[0].mxu0
      %1196 = vdwg.mxu0
      %v1197 = vmul.f32 %v1192, 0.5
      %v1198 = vmul.f32 %v1192, 0.70710677
      %v1199 = vand.u32 2147483647, %v1198
      %v1200 = vmul.f32 %v1199, 0.3275911
      %v1201 = vadd.f32 %v1200, 1.0
      %v1202 = vrcp.pop %v1201
      %v1203 = vmul.f32 1.0, %v1202
      %v1204 = vmul.f32 %v1203, 1.0614054
      %v1205 = vadd.f32 %v1204, -1.4531521
      %v1206 = vmul.f32 %v1205, %v1203
      %v1207 = vadd.f32 %v1206, 1.4214138
      %v1208 = vmul.f32 %v1207, %v1203
      %v1209 = vadd.f32 %v1208, -0.28449672
      %v1210 = vmul.f32 %v1209, %v1203
      %v1211 = vadd.f32 %v1210, 0.2548296
      %v1212 = vmul.f32 %v1211, %v1203
      %v1213 = vsub.f32 0.0, %v1199
      %v1214 = vmul.f32 %v1213, %v1199
      %v1215 = vmul.f32 %v1214, 1.442695
      %v1216 = vpow.pop %v1215
      %v1217 = vmul.f32 %v1212, %v1216
      %v1218 = vsub.f32 1.0, %v1217
      %vm1219 = vcmp.lt.f32.partialorder %v1198, 0.0
      %v1220 = vsub.f32 0.0, %v1218
      %v1221 = vsel %vm1219, %v1220, %v1218
      %v1222 = vadd.f32 %v1221, 1.0
      %v1223 = vmul.f32 %v1197, %v1222
      %v1224 = vld [vmem:[%s12] sm:$0xf]
      %v1225 = vld [vmem:[%s12 + $0x4] sm:$0xf]
      %v1226 = vld [vmem:[%s12 + $0x8] sm:$0xf]
      %v1227 = vld [vmem:[%s12 + $0xc] sm:$0xf]
      %v1228 = vld [vmem:[%s13] sm:$0x1]
      %v1229 = vpack.c.bf16 %v1223, %v1223
      %v1231 = vlaneseq
      %v1232 = vshrl.u32 %v1231, 7
      %v1233 = vsub.s32 0, %v1232
      %v1234 = vrot.slane %v1228, %v1233
      %v1240 = vunpack.c.l.b16 %v1224
      %v1241 = vunpack.c.l.b16 %v1225
      %v1242 = vunpack.c.l.b16 %v1226
      %v1243 = vunpack.c.l.b16 %v1227
      %v1244 = vpack.c.b16 %v1241, %v1240
      %v1245 = vpack.c.b16 %v1243, %v1242
      %vm1248 = vcmask 261120
      %v1250 = vsel %vm1248, %v1229, 0
      %1252 = vmatprep.subr.bf16.mxu0 0
      %1253 = vmatpush1.bf16.msra.mxu0 %v1244
      %1254 = vmatprep.subr.bf16.mxu0 0
      %1255 = vmatpush1.bf16.msra.mxu0 %v1245
      %1256 = vmatprep.subr.bf16.mxu0 0
      %1257 = vmatpush1.bf16.msra.mxu0 0
      %1258 = vmatprep.subr.bf16.mxu0 0
      %1259 = vmatpush1.bf16.msra.mxu0 0
      %1260 = vmatprep.subr.bf16.mxu0 0
      %1261 = vmatpush1.bf16.msra.mxu0 0
      %1262 = vmatprep.subr.bf16.mxu0 0
      %1263 = vmatpush1.bf16.msra.mxu0 0
      %1264 = vmatprep.subr.bf16.mxu0 0
      %1265 = vmatpush1.bf16.msra.mxu0 0
      %1266 = vmatprep.subr.bf16.mxu0 0
      %1267 = vmatpush1.bf16.msra.mxu0 0
      %1268 = vmatprep.subr.bf16.mxu0 0
      %1269 = vmatpush1.bf16.msra.mxu0 0
      %1270 = vmatprep.subr.bf16.mxu0 0
      %1271 = vmatpush1.bf16.msra.mxu0 0
      %1272 = vmatprep.subr.bf16.mxu0 0
      %1273 = vmatpush1.bf16.msra.mxu0 0
      %1274 = vmatprep.subr.bf16.mxu0 0
      %1275 = vmatpush1.bf16.msra.mxu0 0
      %1276 = vmatprep.subr.bf16.mxu0 0
      %1277 = vmatpush1.bf16.msra.mxu0 0
      %1278 = vmatprep.subr.bf16.mxu0 0
      %1279 = vmatpush1.bf16.msra.mxu0 0
      %1280 = vmatprep.subr.bf16.mxu0 0
      %1281 = vmatpush1.bf16.msra.mxu0 0
      %1282 = vmatprep.subr.bf16.mxu0 0
      %1283 = vmatpush1.bf16.msra.mxu0 0
      %1284 = vmatprep.mubr.bf16.mxu0 0
      %1285 = vmatmul.mubr.bf16.gmra.mrb[0].mxu0 %v1250
      %v1286 = vpop.f32.mrb[0].mxu0
      %v1287 = vadd.f32 %v1234, %v1286
      %v1288 = vpop.f32.mrb[0].mxu0
      %v1289 = vpop.f32.mrb[0].mxu0
      %v1290 = vpop.f32.mrb[0].mxu0
      %1291 = vdwg.mxu0
      %v1292 = vadd.f32 %v1108, %v1287
      %1293 = vst.msk [vmem:[%s476] sm:$0x1f] %vm482, %v1292
      %p1294 = scmp.lt.s32.totalorder %s25, 1
      %s1295 = scalar_select %p1294, %s25, 1
      %s1296 = smul.addr %s1295, 8
      %s1297 = scalar_lea.vmem %s14, %s1296
      // Predicated region
      $region77: #{ltt_vit_explainer_forward.12} parent=75 // pred_check
        %p1298 = pneg %p347
      $region78: #{ltt_vit_explainer_forward.12} parent=75 // pred_check_branch
        %1300 = sbr.rel (%p1298) target = $region80
      $region79: #{ltt_vit_explainer_forward.12} parent=75 // pred_region
        _
      $region80: #{ltt_vit_explainer_forward.12} parent=75 // pred_fallthru
        _
    $region76: #{ltt_vit_explainer_forward.12} parent=5 // pred_fallthru
      _
    %p1301 = scmp.le.s32.totalorder 2, %s20
    // Predicated region
    $region81: #{ltt_vit_explainer_forward.12} parent=5 // pred_check
      %p1302 = pneg %p1301
    $region82: #{ltt_vit_explainer_forward.12} parent=5 // pred_check_branch
      %1304 = sbr.rel (%p1302) target = $region84
    $region83: #{ltt_vit_explainer_forward.12} parent=5 // pred_region
      %s1305 = ssub.s32 %s20, 2
      // Predicated region
      $region85: #{ltt_vit_explainer_forward.12} parent=83 // pred_check
        %p1306 = pneg %p353
      $region86: #{ltt_vit_explainer_forward.12} parent=83 // pred_check_branch
        %1308 = sbr.rel (%p1306) target = $region88
      $region87: #{ltt_vit_explainer_forward.12} parent=83 // pred_region
        %p1309 = scmp.lt.s32.totalorder %s26, 1
        %s1310 = scalar_select %p1309, %s26, 1
        %s1311 = smul.addr %s1310, 8
        %s1312 = scalar_lea.vmem %s14, %s1311
      $region88: #{ltt_vit_explainer_forward.12} parent=83 // pred_fallthru
        _
    $region84: #{ltt_vit_explainer_forward.12} parent=5 // pred_fallthru
      _
  $region6: #{ltt_vit_explainer_forward.12} parent=0 // loop_footer
    %s24 = sadd.s32 1, %s20
  $region7: #{ltt_vit_explainer_forward.12} parent=0 // loop_footer_branch
    %19 = sbr.rel target = $region3
  $region8: #{ltt_vit_explainer_forward.12} parent=0 // loop_exit
    _

// kernel: ltt_vit_explainer_forward.11
$region0: #{ltt_vit_explainer_forward.11}
  #allocation0 [shape = 'u32[]', space=smem, size = 0x4, offset = 0x4, fixed_abs, tag = 'smem constant byte address 0x4 - core index']
  #allocation1 [shape = 'u32[144,128]{1,0:T(1,128)}', space=vmem, size = 0x12000, scoped, tag = 'internal scratch']
  %s0 = inlined_call_operand.vmem [shape: f32[2,5,32], index: 0, kind: input, shape index: {}]
  %s1 = inlined_call_operand.vmem [shape: f32[2,1,5], index: 1, kind: input, shape index: {}]
  %s2 = inlined_call_operand.vmem [shape: f32[2,5,16], index: 2, kind: input, shape index: {}]
  %s3 = inlined_call_operand.vmem [shape: f32[1,32], index: 3, kind: input, shape index: {}]
  %s4 = inlined_call_operand.vmem [shape: f32[1,32], index: 4, kind: input, shape index: {}]
  %s5 = inlined_call_operand.vmem [shape: bf16[32,96], index: 5, kind: input, shape index: {}]
  %s6 = inlined_call_operand.vmem [shape: f32[1,96], index: 6, kind: input, shape index: {}]
  %s7 = inlined_call_operand.vmem [shape: bf16[32,32], index: 7, kind: input, shape index: {}]
  %s8 = inlined_call_operand.vmem [shape: f32[1,32], index: 8, kind: input, shape index: {}]
  %s9 = inlined_call_operand.vmem [shape: f32[1,32], index: 9, kind: input, shape index: {}]
  %s10 = inlined_call_operand.vmem [shape: f32[1,32], index: 10, kind: input, shape index: {}]
  %s11 = inlined_call_operand.vmem [shape: bf16[32,64], index: 11, kind: input, shape index: {}]
  %s12 = inlined_call_operand.vmem [shape: f32[1,64], index: 12, kind: input, shape index: {}]
  %s13 = inlined_call_operand.vmem [shape: bf16[64,32], index: 13, kind: input, shape index: {}]
  %s14 = inlined_call_operand.vmem [shape: f32[1,32], index: 14, kind: input, shape index: {}]
  %s15 = inlined_call_operand.vmem [shape: bf16[32,16], index: 15, kind: input, shape index: {}]
  %s16 = inlined_call_operand.vmem [shape: f32[1,16], index: 16, kind: input, shape index: {}]
  %s17 = inlined_call_operand.vmem [shape: f32[2,5,32], index: 17, kind: output, shape index: {0}]
  %s18 = inlined_call_operand.vmem [shape: f32[2,5,16], index: 18, kind: output, shape index: {1}]
  %19 = xla_tuple %s17, %s18
  %s20 = sld [smem:[#allocation0]]
  $region109: #{ltt_vit_explainer_forward.11} parent=0
    _
  %s22 = ssub.s32 1, %s20
  %s23 = scalar_select 0, %s22, %s20
  loop: start=0, step=1, limit=4
  $region2: #{ltt_vit_explainer_forward.11} parent=0 // loop_pre_header
    _
  $region3: #{ltt_vit_explainer_forward.11} parent=0 // loop_header
    %s25 = sphi 0, %s29
    %p26 = scmp.ge.s32.totalorder %s25, 4
    %s35 = sphi 0, %s37
    %s38 = sphi 0, %s35
    %s39 = sphi 0, %s38
    %s55 = sphi 0, %s39
    %s61 = sphi 0, %s63
    %s64 = sphi 0, %s61
    %s65 = sphi 0, %s64
    %s81 = sphi 0, %s65
    %s87 = sphi 0, %s89
    %s90 = sphi 0, %s87
    %s91 = sphi 0, %s90
    %s107 = sphi 0, %s91
    %s111 = sphi 0, %s111
    %s113 = sphi 0, %s111
    %s114 = sphi 0, %s113
    %s128 = sphi 0, %s114
    %s132 = sphi 0, %s132
    %s134 = sphi 0, %s132
    %s135 = sphi 0, %s134
    %s149 = sphi 0, %s135
    %s153 = sphi 0, %s153
    %s155 = sphi 0, %s153
    %s156 = sphi 0, %s155
    %s170 = sphi 0, %s156
    %s174 = sphi 0, %s174
    %s176 = sphi 0, %s174
    %s177 = sphi 0, %s176
    %s191 = sphi 0, %s177
    %s195 = sphi 0, %s195
    %s197 = sphi 0, %s195
    %s198 = sphi 0, %s197
    %s212 = sphi 0, %s198
    %s216 = sphi 0, %s216
    %s218 = sphi 0, %s216
    %s219 = sphi 0, %s218
    %s233 = sphi 0, %s219
    %s237 = sphi 0, %s237
    %s239 = sphi 0, %s237
    %s240 = sphi 0, %s239
    %s254 = sphi 0, %s240
    %s258 = sphi 0, %s258
    %s260 = sphi 0, %s258
    %s261 = sphi 0, %s260
    %s275 = sphi 0, %s261
    %s279 = sphi 0, %s279
    %s281 = sphi 0, %s279
    %s282 = sphi 0, %s281
    %s296 = sphi 0, %s282
    %s300 = sphi 0, %s300
    %s302 = sphi 0, %s300
    %s303 = sphi 0, %s302
    %s317 = sphi 0, %s303
    %s321 = sphi 0, %s321
    %s323 = sphi 0, %s321
    %s324 = sphi 0, %s323
    %s338 = sphi 0, %s324
    %s342 = sphi 0, %s342
    %s344 = sphi 0, %s342
    %s345 = sphi 0, %s344
    %s359 = sphi 0, %s345
    %s363 = sphi 0, %s363
    %s365 = sphi 0, %s363
    %s366 = sphi 0, %s365
    %s380 = sphi 0, %s366
    %s384 = sphi 0, %s384
    %s386 = sphi 0, %s384
    %s387 = sphi 0, %s386
    %s401 = sphi 0, %s387
    %s407 = sphi 0, %s409
    %s410 = sphi 0, %s407
    %s411 = sphi 0, %s410
    %s427 = sphi 0, %s411
    %s433 = sphi 0, %s435
    %s436 = sphi 0, %s433
    %s437 = sphi 0, %s436
    %s453 = sphi 0, %s437
  $region4: #{ltt_vit_explainer_forward.11} parent=0 // loop_header_branch
    %28 = sbr.rel (%p26) target = $region8
  $region5: #{ltt_vit_explainer_forward.11} parent=0 // loop_body
    %s30 = ssub.s32 %s25, 1
    %s31 = ssub.s32 %s25, 2
    %s32 = sadd.s32 %s25, 1
    %s33 = ssub.s32 %s25, %s32
    %p34 = scmp.eq.s32.totalorder %s33, 0
    %s36 = sadd.s32 %s35, 1
    %s37 = scalar_select %p34, %s35, %s36
    %p40 = pneg %p34
    %p41 = scmp.eq.s32.totalorder %s25, 1
    %p42 = por %p40, %p41
    %p43 = scmp.ne.s32.totalorder %s35, %s38
    %p44 = scmp.eq.s32.totalorder %s25, 0
    %p45 = por %p43, %p44
    %p46 = scmp.ne.s32.totalorder %s35, %s38
    %p47 = scmp.eq.s32.totalorder %s30, 1
    %p48 = por %p46, %p47
    %p49 = scmp.ne.s32.totalorder %s38, %s39
    %p50 = scmp.eq.s32.totalorder %s30, 0
    %p51 = por %p49, %p50
    %p52 = scmp.ne.s32.totalorder %s38, %s39
    %p53 = scmp.eq.s32.totalorder %s31, 1
    %p54 = por %p52, %p53
    %p56 = scmp.ne.s32.totalorder %s39, %s55
    %p57 = scmp.eq.s32.totalorder %s31, 0
    %p58 = por %p56, %p57
    %s59 = ssub.s32 %s25, %s32
    %p60 = scmp.eq.s32.totalorder %s59, 0
    %s62 = sadd.s32 %s61, 1
    %s63 = scalar_select %p60, %s61, %s62
    %p66 = pneg %p60
    %p67 = scmp.eq.s32.totalorder %s25, 1
    %p68 = por %p66, %p67
    %p69 = scmp.ne.s32.totalorder %s61, %s64
    %p70 = scmp.eq.s32.totalorder %s25, 0
    %p71 = por %p69, %p70
    %p72 = scmp.ne.s32.totalorder %s61, %s64
    %p73 = scmp.eq.s32.totalorder %s30, 1
    %p74 = por %p72, %p73
    %p75 = scmp.ne.s32.totalorder %s64, %s65
    %p76 = scmp.eq.s32.totalorder %s30, 0
    %p77 = por %p75, %p76
    %p78 = scmp.ne.s32.totalorder %s64, %s65
    %p79 = scmp.eq.s32.totalorder %s31, 1
    %p80 = por %p78, %p79
    %p82 = scmp.ne.s32.totalorder %s65, %s81
    %p83 = scmp.eq.s32.totalorder %s31, 0
    %p84 = por %p82, %p83
    %s85 = ssub.s32 %s25, %s32
    %p86 = scmp.eq.s32.totalorder %s85, 0
    %s88 = sadd.s32 %s87, 1
    %s89 = scalar_select %p86, %s87, %s88
    %p92 = pneg %p86
    %p93 = scmp.eq.s32.totalorder %s25, 1
    %p94 = por %p92, %p93
    %p95 = scmp.ne.s32.totalorder %s87, %s90
    %p96 = scmp.eq.s32.totalorder %s25, 0
    %p97 = por %p95, %p96
    %p98 = scmp.ne.s32.totalorder %s87, %s90
    %p99 = scmp.eq.s32.totalorder %s30, 1
    %p100 = por %p98, %p99
    %p101 = scmp.ne.s32.totalorder %s90, %s91
    %p102 = scmp.eq.s32.totalorder %s30, 0
    %p103 = por %p101, %p102
    %p104 = scmp.ne.s32.totalorder %s90, %s91
    %p105 = scmp.eq.s32.totalorder %s31, 1
    %p106 = por %p104, %p105
    %p108 = scmp.ne.s32.totalorder %s91, %s107
    %p109 = scmp.eq.s32.totalorder %s31, 0
    %p110 = por %p108, %p109
    %s112 = sadd.s32 %s111, 1
    %p115 = scmp.eq.s32.totalorder %s25, 1
    %p116 = scmp.ne.s32.totalorder %s111, %s113
    %p117 = scmp.eq.s32.totalorder %s25, 0
    %p118 = por %p116, %p117
    %p119 = scmp.ne.s32.totalorder %s111, %s113
    %p120 = scmp.eq.s32.totalorder %s30, 1
    %p121 = por %p119, %p120
    %p122 = scmp.ne.s32.totalorder %s113, %s114
    %p123 = scmp.eq.s32.totalorder %s30, 0
    %p124 = por %p122, %p123
    %p125 = scmp.ne.s32.totalorder %s113, %s114
    %p126 = scmp.eq.s32.totalorder %s31, 1
    %p127 = por %p125, %p126
    %p129 = scmp.ne.s32.totalorder %s114, %s128
    %p130 = scmp.eq.s32.totalorder %s31, 0
    %p131 = por %p129, %p130
    %s133 = sadd.s32 %s132, 1
    %p136 = scmp.eq.s32.totalorder %s25, 1
    %p137 = scmp.ne.s32.totalorder %s132, %s134
    %p138 = scmp.eq.s32.totalorder %s25, 0
    %p139 = por %p137, %p138
    %p140 = scmp.ne.s32.totalorder %s132, %s134
    %p141 = scmp.eq.s32.totalorder %s30, 1
    %p142 = por %p140, %p141
    %p143 = scmp.ne.s32.totalorder %s134, %s135
    %p144 = scmp.eq.s32.totalorder %s30, 0
    %p145 = por %p143, %p144
    %p146 = scmp.ne.s32.totalorder %s134, %s135
    %p147 = scmp.eq.s32.totalorder %s31, 1
    %p148 = por %p146, %p147
    %p150 = scmp.ne.s32.totalorder %s135, %s149
    %p151 = scmp.eq.s32.totalorder %s31, 0
    %p152 = por %p150, %p151
    %s154 = sadd.s32 %s153, 1
    %p157 = scmp.eq.s32.totalorder %s25, 1
    %p158 = scmp.ne.s32.totalorder %s153, %s155
    %p159 = scmp.eq.s32.totalorder %s25, 0
    %p160 = por %p158, %p159
    %p161 = scmp.ne.s32.totalorder %s153, %s155
    %p162 = scmp.eq.s32.totalorder %s30, 1
    %p163 = por %p161, %p162
    %p164 = scmp.ne.s32.totalorder %s155, %s156
    %p165 = scmp.eq.s32.totalorder %s30, 0
    %p166 = por %p164, %p165
    %p167 = scmp.ne.s32.totalorder %s155, %s156
    %p168 = scmp.eq.s32.totalorder %s31, 1
    %p169 = por %p167, %p168
    %p171 = scmp.ne.s32.totalorder %s156, %s170
    %p172 = scmp.eq.s32.totalorder %s31, 0
    %p173 = por %p171, %p172
    %s175 = sadd.s32 %s174, 1
    %p178 = scmp.eq.s32.totalorder %s25, 1
    %p179 = scmp.ne.s32.totalorder %s174, %s176
    %p180 = scmp.eq.s32.totalorder %s25, 0
    %p181 = por %p179, %p180
    %p182 = scmp.ne.s32.totalorder %s174, %s176
    %p183 = scmp.eq.s32.totalorder %s30, 1
    %p184 = por %p182, %p183
    %p185 = scmp.ne.s32.totalorder %s176, %s177
    %p186 = scmp.eq.s32.totalorder %s30, 0
    %p187 = por %p185, %p186
    %p188 = scmp.ne.s32.totalorder %s176, %s177
    %p189 = scmp.eq.s32.totalorder %s31, 1
    %p190 = por %p188, %p189
    %p192 = scmp.ne.s32.totalorder %s177, %s191
    %p193 = scmp.eq.s32.totalorder %s31, 0
    %p194 = por %p192, %p193
    %s196 = sadd.s32 %s195, 1
    %p199 = scmp.eq.s32.totalorder %s25, 1
    %p200 = scmp.ne.s32.totalorder %s195, %s197
    %p201 = scmp.eq.s32.totalorder %s25, 0
    %p202 = por %p200, %p201
    %p203 = scmp.ne.s32.totalorder %s195, %s197
    %p204 = scmp.eq.s32.totalorder %s30, 1
    %p205 = por %p203, %p204
    %p206 = scmp.ne.s32.totalorder %s197, %s198
    %p207 = scmp.eq.s32.totalorder %s30, 0
    %p208 = por %p206, %p207
    %p209 = scmp.ne.s32.totalorder %s197, %s198
    %p210 = scmp.eq.s32.totalorder %s31, 1
    %p211 = por %p209, %p210
    %p213 = scmp.ne.s32.totalorder %s198, %s212
    %p214 = scmp.eq.s32.totalorder %s31, 0
    %p215 = por %p213, %p214
    %s217 = sadd.s32 %s216, 1
    %p220 = scmp.eq.s32.totalorder %s25, 1
    %p221 = scmp.ne.s32.totalorder %s216, %s218
    %p222 = scmp.eq.s32.totalorder %s25, 0
    %p223 = por %p221, %p222
    %p224 = scmp.ne.s32.totalorder %s216, %s218
    %p225 = scmp.eq.s32.totalorder %s30, 1
    %p226 = por %p224, %p225
    %p227 = scmp.ne.s32.totalorder %s218, %s219
    %p228 = scmp.eq.s32.totalorder %s30, 0
    %p229 = por %p227, %p228
    %p230 = scmp.ne.s32.totalorder %s218, %s219
    %p231 = scmp.eq.s32.totalorder %s31, 1
    %p232 = por %p230, %p231
    %p234 = scmp.ne.s32.totalorder %s219, %s233
    %p235 = scmp.eq.s32.totalorder %s31, 0
    %p236 = por %p234, %p235
    %s238 = sadd.s32 %s237, 1
    %p241 = scmp.eq.s32.totalorder %s25, 1
    %p242 = scmp.ne.s32.totalorder %s237, %s239
    %p243 = scmp.eq.s32.totalorder %s25, 0
    %p244 = por %p242, %p243
    %p245 = scmp.ne.s32.totalorder %s237, %s239
    %p246 = scmp.eq.s32.totalorder %s30, 1
    %p247 = por %p245, %p246
    %p248 = scmp.ne.s32.totalorder %s239, %s240
    %p249 = scmp.eq.s32.totalorder %s30, 0
    %p250 = por %p248, %p249
    %p251 = scmp.ne.s32.totalorder %s239, %s240
    %p252 = scmp.eq.s32.totalorder %s31, 1
    %p253 = por %p251, %p252
    %p255 = scmp.ne.s32.totalorder %s240, %s254
    %p256 = scmp.eq.s32.totalorder %s31, 0
    %p257 = por %p255, %p256
    %s259 = sadd.s32 %s258, 1
    %p262 = scmp.eq.s32.totalorder %s25, 1
    %p263 = scmp.ne.s32.totalorder %s258, %s260
    %p264 = scmp.eq.s32.totalorder %s25, 0
    %p265 = por %p263, %p264
    %p266 = scmp.ne.s32.totalorder %s258, %s260
    %p267 = scmp.eq.s32.totalorder %s30, 1
    %p268 = por %p266, %p267
    %p269 = scmp.ne.s32.totalorder %s260, %s261
    %p270 = scmp.eq.s32.totalorder %s30, 0
    %p271 = por %p269, %p270
    %p272 = scmp.ne.s32.totalorder %s260, %s261
    %p273 = scmp.eq.s32.totalorder %s31, 1
    %p274 = por %p272, %p273
    %p276 = scmp.ne.s32.totalorder %s261, %s275
    %p277 = scmp.eq.s32.totalorder %s31, 0
    %p278 = por %p276, %p277
    %s280 = sadd.s32 %s279, 1
    %p283 = scmp.eq.s32.totalorder %s25, 1
    %p284 = scmp.ne.s32.totalorder %s279, %s281
    %p285 = scmp.eq.s32.totalorder %s25, 0
    %p286 = por %p284, %p285
    %p287 = scmp.ne.s32.totalorder %s279, %s281
    %p288 = scmp.eq.s32.totalorder %s30, 1
    %p289 = por %p287, %p288
    %p290 = scmp.ne.s32.totalorder %s281, %s282
    %p291 = scmp.eq.s32.totalorder %s30, 0
    %p292 = por %p290, %p291
    %p293 = scmp.ne.s32.totalorder %s281, %s282
    %p294 = scmp.eq.s32.totalorder %s31, 1
    %p295 = por %p293, %p294
    %p297 = scmp.ne.s32.totalorder %s282, %s296
    %p298 = scmp.eq.s32.totalorder %s31, 0
    %p299 = por %p297, %p298
    %s301 = sadd.s32 %s300, 1
    %p304 = scmp.eq.s32.totalorder %s25, 1
    %p305 = scmp.ne.s32.totalorder %s300, %s302
    %p306 = scmp.eq.s32.totalorder %s25, 0
    %p307 = por %p305, %p306
    %p308 = scmp.ne.s32.totalorder %s300, %s302
    %p309 = scmp.eq.s32.totalorder %s30, 1
    %p310 = por %p308, %p309
    %p311 = scmp.ne.s32.totalorder %s302, %s303
    %p312 = scmp.eq.s32.totalorder %s30, 0
    %p313 = por %p311, %p312
    %p314 = scmp.ne.s32.totalorder %s302, %s303
    %p315 = scmp.eq.s32.totalorder %s31, 1
    %p316 = por %p314, %p315
    %p318 = scmp.ne.s32.totalorder %s303, %s317
    %p319 = scmp.eq.s32.totalorder %s31, 0
    %p320 = por %p318, %p319
    %s322 = sadd.s32 %s321, 1
    %p325 = scmp.eq.s32.totalorder %s25, 1
    %p326 = scmp.ne.s32.totalorder %s321, %s323
    %p327 = scmp.eq.s32.totalorder %s25, 0
    %p328 = por %p326, %p327
    %p329 = scmp.ne.s32.totalorder %s321, %s323
    %p330 = scmp.eq.s32.totalorder %s30, 1
    %p331 = por %p329, %p330
    %p332 = scmp.ne.s32.totalorder %s323, %s324
    %p333 = scmp.eq.s32.totalorder %s30, 0
    %p334 = por %p332, %p333
    %p335 = scmp.ne.s32.totalorder %s323, %s324
    %p336 = scmp.eq.s32.totalorder %s31, 1
    %p337 = por %p335, %p336
    %p339 = scmp.ne.s32.totalorder %s324, %s338
    %p340 = scmp.eq.s32.totalorder %s31, 0
    %p341 = por %p339, %p340
    %s343 = sadd.s32 %s342, 1
    %p346 = scmp.eq.s32.totalorder %s25, 1
    %p347 = scmp.ne.s32.totalorder %s342, %s344
    %p348 = scmp.eq.s32.totalorder %s25, 0
    %p349 = por %p347, %p348
    %p350 = scmp.ne.s32.totalorder %s342, %s344
    %p351 = scmp.eq.s32.totalorder %s30, 1
    %p352 = por %p350, %p351
    %p353 = scmp.ne.s32.totalorder %s344, %s345
    %p354 = scmp.eq.s32.totalorder %s30, 0
    %p355 = por %p353, %p354
    %p356 = scmp.ne.s32.totalorder %s344, %s345
    %p357 = scmp.eq.s32.totalorder %s31, 1
    %p358 = por %p356, %p357
    %p360 = scmp.ne.s32.totalorder %s345, %s359
    %p361 = scmp.eq.s32.totalorder %s31, 0
    %p362 = por %p360, %p361
    %s364 = sadd.s32 %s363, 1
    %p367 = scmp.eq.s32.totalorder %s25, 1
    %p368 = scmp.ne.s32.totalorder %s363, %s365
    %p369 = scmp.eq.s32.totalorder %s25, 0
    %p370 = por %p368, %p369
    %p371 = scmp.ne.s32.totalorder %s363, %s365
    %p372 = scmp.eq.s32.totalorder %s30, 1
    %p373 = por %p371, %p372
    %p374 = scmp.ne.s32.totalorder %s365, %s366
    %p375 = scmp.eq.s32.totalorder %s30, 0
    %p376 = por %p374, %p375
    %p377 = scmp.ne.s32.totalorder %s365, %s366
    %p378 = scmp.eq.s32.totalorder %s31, 1
    %p379 = por %p377, %p378
    %p381 = scmp.ne.s32.totalorder %s366, %s380
    %p382 = scmp.eq.s32.totalorder %s31, 0
    %p383 = por %p381, %p382
    %s385 = sadd.s32 %s384, 1
    %p388 = scmp.eq.s32.totalorder %s25, 1
    %p389 = scmp.ne.s32.totalorder %s384, %s386
    %p390 = scmp.eq.s32.totalorder %s25, 0
    %p391 = por %p389, %p390
    %p392 = scmp.ne.s32.totalorder %s384, %s386
    %p393 = scmp.eq.s32.totalorder %s30, 1
    %p394 = por %p392, %p393
    %p395 = scmp.ne.s32.totalorder %s386, %s387
    %p396 = scmp.eq.s32.totalorder %s30, 0
    %p397 = por %p395, %p396
    %p398 = scmp.ne.s32.totalorder %s386, %s387
    %p399 = scmp.eq.s32.totalorder %s31, 1
    %p400 = por %p398, %p399
    %p402 = scmp.ne.s32.totalorder %s387, %s401
    %p403 = scmp.eq.s32.totalorder %s31, 0
    %p404 = por %p402, %p403
    %s405 = ssub.s32 %s25, %s32
    %p406 = scmp.eq.s32.totalorder %s405, 0
    %s408 = sadd.s32 %s407, 1
    %s409 = scalar_select %p406, %s407, %s408
    %p412 = pneg %p406
    %p413 = scmp.eq.s32.totalorder %s25, 1
    %p414 = por %p412, %p413
    %p415 = scmp.ne.s32.totalorder %s407, %s410
    %p416 = scmp.eq.s32.totalorder %s25, 0
    %p417 = por %p415, %p416
    %p418 = scmp.ne.s32.totalorder %s407, %s410
    %p419 = scmp.eq.s32.totalorder %s30, 1
    %p420 = por %p418, %p419
    %p421 = scmp.ne.s32.totalorder %s410, %s411
    %p422 = scmp.eq.s32.totalorder %s30, 0
    %p423 = por %p421, %p422
    %p424 = scmp.ne.s32.totalorder %s410, %s411
    %p425 = scmp.eq.s32.totalorder %s31, 1
    %p426 = por %p424, %p425
    %p428 = scmp.ne.s32.totalorder %s411, %s427
    %p429 = scmp.eq.s32.totalorder %s31, 0
    %p430 = por %p428, %p429
    %s431 = ssub.s32 %s25, %s32
    %p432 = scmp.eq.s32.totalorder %s431, 0
    %s434 = sadd.s32 %s433, 1
    %s435 = scalar_select %p432, %s433, %s434
    %p438 = pneg %p432
    %p439 = scmp.eq.s32.totalorder %s25, 1
    %p440 = por %p438, %p439
    %p441 = scmp.ne.s32.totalorder %s433, %s436
    %p442 = scmp.eq.s32.totalorder %s25, 0
    %p443 = por %p441, %p442
    %p444 = scmp.ne.s32.totalorder %s433, %s436
    %p445 = scmp.eq.s32.totalorder %s30, 1
    %p446 = por %p444, %p445
    %p447 = scmp.ne.s32.totalorder %s436, %s437
    %p448 = scmp.eq.s32.totalorder %s30, 0
    %p449 = por %p447, %p448
    %p450 = scmp.ne.s32.totalorder %s436, %s437
    %p451 = scmp.eq.s32.totalorder %s31, 1
    %p452 = por %p450, %p451
    %p454 = scmp.ne.s32.totalorder %s437, %s453
    %p455 = scmp.eq.s32.totalorder %s31, 0
    %p456 = por %p454, %p455
    %p457 = scmp.le.s32.totalorder 1, %s25
    %p458 = scmp.lt.s32.totalorder %s25, 3
    %p459 = pnand %p457, %p458
    %p460 = pneg %p459
    // Predicated region
    $region9: #{ltt_vit_explainer_forward.11} parent=5 // pred_check
      _
    $region10: #{ltt_vit_explainer_forward.11} parent=5 // pred_check_branch
      %462 = sbr.rel (%p459) target = $region12
    $region11: #{ltt_vit_explainer_forward.11} parent=5 // pred_region
      %s463 = ssub.s32 %s25, 1
      // Predicated region
      $region13: #{ltt_vit_explainer_forward.11} parent=11 // pred_check
        %p464 = pneg %p124
      $region14: #{ltt_vit_explainer_forward.11} parent=11 // pred_check_branch
        %466 = sbr.rel (%p464) target = $region16
      $region15: #{ltt_vit_explainer_forward.11} parent=11 // pred_region
        _
      $region16: #{ltt_vit_explainer_forward.11} parent=11 // pred_fallthru
        _
      // Predicated region
      $region17: #{ltt_vit_explainer_forward.11} parent=11 // pred_check
        %p467 = pneg %p145
      $region18: #{ltt_vit_explainer_forward.11} parent=11 // pred_check_branch
        %469 = sbr.rel (%p467) target = $region20
      $region19: #{ltt_vit_explainer_forward.11} parent=11 // pred_region
        _
      $region20: #{ltt_vit_explainer_forward.11} parent=11 // pred_fallthru
        _
      // Predicated region
      $region21: #{ltt_vit_explainer_forward.11} parent=11 // pred_check
        %p470 = pneg %p166
      $region22: #{ltt_vit_explainer_forward.11} parent=11 // pred_check_branch
        %472 = sbr.rel (%p470) target = $region24
      $region23: #{ltt_vit_explainer_forward.11} parent=11 // pred_region
        _
      $region24: #{ltt_vit_explainer_forward.11} parent=11 // pred_fallthru
        _
      // Predicated region
      $region25: #{ltt_vit_explainer_forward.11} parent=11 // pred_check
        %p473 = pneg %p187
      $region26: #{ltt_vit_explainer_forward.11} parent=11 // pred_check_branch
        %475 = sbr.rel (%p473) target = $region28
      $region27: #{ltt_vit_explainer_forward.11} parent=11 // pred_region
        _
      $region28: #{ltt_vit_explainer_forward.11} parent=11 // pred_fallthru
        _
      // Predicated region
      $region29: #{ltt_vit_explainer_forward.11} parent=11 // pred_check
        %p476 = pneg %p208
      $region30: #{ltt_vit_explainer_forward.11} parent=11 // pred_check_branch
        %478 = sbr.rel (%p476) target = $region32
      $region31: #{ltt_vit_explainer_forward.11} parent=11 // pred_region
        _
      $region32: #{ltt_vit_explainer_forward.11} parent=11 // pred_fallthru
        _
      // Predicated region
      $region33: #{ltt_vit_explainer_forward.11} parent=11 // pred_check
        %p479 = pneg %p229
      $region34: #{ltt_vit_explainer_forward.11} parent=11 // pred_check_branch
        %481 = sbr.rel (%p479) target = $region36
      $region35: #{ltt_vit_explainer_forward.11} parent=11 // pred_region
        _
      $region36: #{ltt_vit_explainer_forward.11} parent=11 // pred_fallthru
        _
      // Predicated region
      $region37: #{ltt_vit_explainer_forward.11} parent=11 // pred_check
        %p482 = pneg %p250
      $region38: #{ltt_vit_explainer_forward.11} parent=11 // pred_check_branch
        %484 = sbr.rel (%p482) target = $region40
      $region39: #{ltt_vit_explainer_forward.11} parent=11 // pred_region
        _
      $region40: #{ltt_vit_explainer_forward.11} parent=11 // pred_fallthru
        _
      // Predicated region
      $region41: #{ltt_vit_explainer_forward.11} parent=11 // pred_check
        %p485 = pneg %p271
      $region42: #{ltt_vit_explainer_forward.11} parent=11 // pred_check_branch
        %487 = sbr.rel (%p485) target = $region44
      $region43: #{ltt_vit_explainer_forward.11} parent=11 // pred_region
        _
      $region44: #{ltt_vit_explainer_forward.11} parent=11 // pred_fallthru
        _
      // Predicated region
      $region45: #{ltt_vit_explainer_forward.11} parent=11 // pred_check
        %p488 = pneg %p292
      $region46: #{ltt_vit_explainer_forward.11} parent=11 // pred_check_branch
        %490 = sbr.rel (%p488) target = $region48
      $region47: #{ltt_vit_explainer_forward.11} parent=11 // pred_region
        _
      $region48: #{ltt_vit_explainer_forward.11} parent=11 // pred_fallthru
        _
      // Predicated region
      $region49: #{ltt_vit_explainer_forward.11} parent=11 // pred_check
        %p491 = pneg %p313
      $region50: #{ltt_vit_explainer_forward.11} parent=11 // pred_check_branch
        %493 = sbr.rel (%p491) target = $region52
      $region51: #{ltt_vit_explainer_forward.11} parent=11 // pred_region
        _
      $region52: #{ltt_vit_explainer_forward.11} parent=11 // pred_fallthru
        _
      // Predicated region
      $region53: #{ltt_vit_explainer_forward.11} parent=11 // pred_check
        %p494 = pneg %p334
      $region54: #{ltt_vit_explainer_forward.11} parent=11 // pred_check_branch
        %496 = sbr.rel (%p494) target = $region56
      $region55: #{ltt_vit_explainer_forward.11} parent=11 // pred_region
        _
      $region56: #{ltt_vit_explainer_forward.11} parent=11 // pred_fallthru
        _
      // Predicated region
      $region57: #{ltt_vit_explainer_forward.11} parent=11 // pred_check
        %p497 = pneg %p355
      $region58: #{ltt_vit_explainer_forward.11} parent=11 // pred_check_branch
        %499 = sbr.rel (%p497) target = $region60
      $region59: #{ltt_vit_explainer_forward.11} parent=11 // pred_region
        _
      $region60: #{ltt_vit_explainer_forward.11} parent=11 // pred_fallthru
        _
      // Predicated region
      $region61: #{ltt_vit_explainer_forward.11} parent=11 // pred_check
        %p500 = pneg %p376
      $region62: #{ltt_vit_explainer_forward.11} parent=11 // pred_check_branch
        %502 = sbr.rel (%p500) target = $region64
      $region63: #{ltt_vit_explainer_forward.11} parent=11 // pred_region
        _
      $region64: #{ltt_vit_explainer_forward.11} parent=11 // pred_fallthru
        _
      // Predicated region
      $region65: #{ltt_vit_explainer_forward.11} parent=11 // pred_check
        %p503 = pneg %p397
      $region66: #{ltt_vit_explainer_forward.11} parent=11 // pred_check_branch
        %505 = sbr.rel (%p503) target = $region68
      $region67: #{ltt_vit_explainer_forward.11} parent=11 // pred_region
        _
      $region68: #{ltt_vit_explainer_forward.11} parent=11 // pred_fallthru
        _
    $region12: #{ltt_vit_explainer_forward.11} parent=5 // pred_fallthru
      _
    %p506 = scmp.lt.s32.totalorder %s25, 2
    // Predicated region
    $region69: #{ltt_vit_explainer_forward.11} parent=5 // pred_check
      %p507 = pneg %p506
    $region70: #{ltt_vit_explainer_forward.11} parent=5 // pred_check_branch
      %509 = sbr.rel (%p507) target = $region72
    $region71: #{ltt_vit_explainer_forward.11} parent=5 // pred_region
      // Predicated region
      $region73: #{ltt_vit_explainer_forward.11} parent=71 // pred_check
        %p510 = pneg %p45
      $region74: #{ltt_vit_explainer_forward.11} parent=71 // pred_check_branch
        %512 = sbr.rel (%p510) target = $region76
      $region75: #{ltt_vit_explainer_forward.11} parent=71 // pred_region
        %p513 = scmp.lt.s32.totalorder %s25, 1
        %s514 = scalar_select %p513, %s25, 1
        %s515 = smul.addr %s514, 8
        %s516 = scalar_lea.vmem %s0, %s515
      $region76: #{ltt_vit_explainer_forward.11} parent=71 // pred_fallthru
        _
      // Predicated region
      $region77: #{ltt_vit_explainer_forward.11} parent=71 // pred_check
        %p517 = pneg %p71
      $region78: #{ltt_vit_explainer_forward.11} parent=71 // pred_check_branch
        %519 = sbr.rel (%p517) target = $region80
      $region79: #{ltt_vit_explainer_forward.11} parent=71 // pred_region
        %p520 = scmp.lt.s32.totalorder %s25, 1
        %s521 = scalar_select %p520, %s25, 1
        %s522 = scalar_lea.vmem %s1, %s521
      $region80: #{ltt_vit_explainer_forward.11} parent=71 // pred_fallthru
        _
      // Predicated region
      $region81: #{ltt_vit_explainer_forward.11} parent=71 // pred_check
        %p523 = pneg %p97
      $region82: #{ltt_vit_explainer_forward.11} parent=71 // pred_check_branch
        %525 = sbr.rel (%p523) target = $region84
      $region83: #{ltt_vit_explainer_forward.11} parent=71 // pred_region
        %p526 = scmp.lt.s32.totalorder %s25, 1
        %s527 = scalar_select %p526, %s25, 1
        %s528 = smul.addr %s527, 8
        %s529 = scalar_lea.vmem %s2, %s528
      $region84: #{ltt_vit_explainer_forward.11} parent=71 // pred_fallthru
        _
    $region72: #{ltt_vit_explainer_forward.11} parent=5 // pred_fallthru
      _
    %p530 = scmp.le.s32.totalorder 1, %s25
    %p531 = scmp.lt.s32.totalorder %s25, 3
    %p532 = pnand %p530, %p531
    %p533 = pneg %p532
    // Predicated region
    $region85: #{ltt_vit_explainer_forward.11} parent=5 // pred_check
      _
    $region86: #{ltt_vit_explainer_forward.11} parent=5 // pred_check_branch
      %535 = sbr.rel (%p532) target = $region88
    $region87: #{ltt_vit_explainer_forward.11} parent=5 // pred_region
      %s536 = ssub.s32 %s25, 1
      %p537 = scmp.lt.s32.totalorder %s30, 1
      %s538 = scalar_select %p537, %s30, 1
      %s539 = smul.addr %s538, 8
      %s540 = scalar_lea.vmem %s0, %s539
      %p541 = pneg %p51
      %p542 = pneg %p48
      %p543 = scmp.lt.s32.totalorder %s30, 1
      %s544 = scalar_select %p543, %s30, 1
      %s545 = scalar_lea.vmem %s1, %s544
      %p546 = pneg %p77
      %p547 = pneg %p74
      %p548 = scmp.lt.s32.totalorder %s30, 1
      %s549 = scalar_select %p548, %s30, 1
      %s550 = smul.addr %s549, 8
      %s551 = scalar_lea.vmem %s2, %s550
      %p552 = pneg %p103
      %p553 = pneg %p100
      %p554 = pneg %p124
      %p555 = pneg %p121
      %p556 = pneg %p145
      %p557 = pneg %p142
      %p558 = pneg %p166
      %p559 = pneg %p163
      %p560 = pneg %p187
      %p561 = pneg %p184
      %p562 = pneg %p208
      %p563 = pneg %p205
      %p564 = pneg %p229
      %p565 = pneg %p226
      %p566 = pneg %p250
      %p567 = pneg %p247
      %p568 = pneg %p271
      %p569 = pneg %p268
      %p570 = pneg %p292
      %p571 = pneg %p289
      %p572 = pneg %p313
      %p573 = pneg %p310
      %p574 = pneg %p334
      %p575 = pneg %p331
      %p576 = pneg %p355
      %p577 = pneg %p352
      %p578 = pneg %p376
      %p579 = pneg %p373
      %p580 = pneg %p397
      %p581 = pneg %p394
      %p582 = pneg %p423
      %p583 = pneg %p420
      %p584 = scmp.lt.s32.totalorder %s30, 1
      %s585 = scalar_select %p584, %s30, 1
      %s586 = smul.addr %s585, 8
      %s587 = scalar_lea.vmem %s17, %s586
      %p588 = pneg %p449
      %p589 = pneg %p446
      %p590 = scmp.lt.s32.totalorder %s30, 1
      %s591 = scalar_select %p590, %s30, 1
      %s592 = smul.addr %s591, 8
      %s593 = scalar_lea.vmem %s18, %s592
      %p594 = scmp.lt.s32.totalorder %s30, 1
      %s595 = scalar_select %p594, %s30, 1
      %s596 = smul.addr %s595, 8
      %s597 = scalar_lea.vmem %s0, %s596
      %p598 = scmp.lt.s32.totalorder %s30, 1
      %s599 = scalar_select %p598, %s30, 1
      %s600 = scalar_lea.vmem %s1, %s599
      %p601 = scmp.lt.s32.totalorder %s30, 1
      %s602 = scalar_select %p601, %s30, 1
      %s603 = smul.addr %s602, 8
      %s604 = scalar_lea.vmem %s2, %s603
      %p605 = scmp.lt.s32.totalorder %s30, 1
      %s606 = scalar_select %p605, %s30, 1
      %s607 = smul.addr %s606, 8
      %s608 = scalar_lea.vmem %s17, %s607
      %p609 = scmp.lt.s32.totalorder %s30, 1
      %s610 = scalar_select %p609, %s30, 1
      %s611 = smul.addr %s610, 8
      %s612 = scalar_lea.vmem %s18, %s611
      %v614 = vld [vmem:[%s597] sm:$0x1f]
      %v615 = vld [vmem:[%s600] sm:$0x1]
      %v616 = vld [vmem:[%s3] sm:$0x1]
      %v617 = vld [vmem:[%s4] sm:$0x1]
      %vm618 = vcmask 258048
      %v619 = vsel %vm618, %v614, 0.0
      %620 = vadd.xlane.f32.xlu0 %v619
      %v621 = vpop.xlane.xlu0 %620
      %v622 = vrcp.pop 32.0
      %v623 = vmul.f32 %v621, %v622
      %v624 = vsub.f32 %v614, %v623
      %v625 = vmul.f32 %v624, %v624
      %v626 = vsel %vm618, %v625, 0.0
      %627 = vadd.xlane.f32.xlu0 %v626
      %v628 = vpop.xlane.xlu0 %627
      %v629 = vmul.f32 %v628, %v622
      %v630 = vadd.f32 %v629, 1e-12
      %v631 = vrsqrt.pop %v630
      %v632 = vmul.f32 %v624, %v631
      %v634 = vlaneseq
      %v635 = vshrl.u32 %v634, 7
      %v636 = vsub.s32 0, %v635
      %v637 = vrot.slane %v616, %v636
      %v639 = vmul.f32 %v632, %v637
      %v641 = vlaneseq
      %v642 = vshrl.u32 %v641, 7
      %v643 = vsub.s32 0, %v642
      %v644 = vrot.slane %v617, %v643
      %v646 = vadd.f32 %v639, %v644
      %v647 = vld [vmem:[%s5] sm:$0xf]
      %v648 = vld [vmem:[%s5 + $0x4] sm:$0xf]
      %v649 = vld [vmem:[%s5 + $0x8] sm:$0xf]
      %v650 = vld [vmem:[%s5 + $0xc] sm:$0xf]
      %v651 = vld [vmem:[%s6] sm:$0x1]
      %v652 = vpack.c.bf16 %v646, %v646
      %v654 = vlaneseq
      %v655 = vshrl.u32 %v654, 7
      %v656 = vsub.s32 0, %v655
      %v657 = vrot.slane %v651, %v656
      %v663 = vunpack.c.l.b16 %v647
      %v664 = vunpack.c.l.b16 %v648
      %v665 = vunpack.c.l.b16 %v649
      %v666 = vunpack.c.l.b16 %v650
      %v667 = vpack.c.b16 %v664, %v663
      %v668 = vpack.c.b16 %v666, %v665
      %vm671 = vcmask 261120
      %v673 = vsel %vm671, %v652, 0
      %675 = vmatprep.subr.bf16.mxu0 0
      %676 = vmatpush1.bf16.msra.mxu0 %v667
      %677 = vmatprep.subr.bf16.mxu0 0
      %678 = vmatpush1.bf16.msra.mxu0 %v668
      %679 = vmatprep.subr.bf16.mxu0 0
      %680 = vmatpush1.bf16.msra.mxu0 0
      %681 = vmatprep.subr.bf16.mxu0 0
      %682 = vmatpush1.bf16.msra.mxu0 0
      %683 = vmatprep.subr.bf16.mxu0 0
      %684 = vmatpush1.bf16.msra.mxu0 0
      %685 = vmatprep.subr.bf16.mxu0 0
      %686 = vmatpush1.bf16.msra.mxu0 0
      %687 = vmatprep.subr.bf16.mxu0 0
      %688 = vmatpush1.bf16.msra.mxu0 0
      %689 = vmatprep.subr.bf16.mxu0 0
      %690 = vmatpush1.bf16.msra.mxu0 0
      %691 = vmatprep.subr.bf16.mxu0 0
      %692 = vmatpush1.bf16.msra.mxu0 0
      %693 = vmatprep.subr.bf16.mxu0 0
      %694 = vmatpush1.bf16.msra.mxu0 0
      %695 = vmatprep.subr.bf16.mxu0 0
      %696 = vmatpush1.bf16.msra.mxu0 0
      %697 = vmatprep.subr.bf16.mxu0 0
      %698 = vmatpush1.bf16.msra.mxu0 0
      %699 = vmatprep.subr.bf16.mxu0 0
      %700 = vmatpush1.bf16.msra.mxu0 0
      %701 = vmatprep.subr.bf16.mxu0 0
      %702 = vmatpush1.bf16.msra.mxu0 0
      %703 = vmatprep.subr.bf16.mxu0 0
      %704 = vmatpush1.bf16.msra.mxu0 0
      %705 = vmatprep.subr.bf16.mxu0 0
      %706 = vmatpush1.bf16.msra.mxu0 0
      %707 = vmatprep.mubr.bf16.mxu0 0
      %708 = vmatmul.mubr.bf16.gmra.mrb[0].mxu0 %v673
      %v709 = vpop.f32.mrb[0].mxu0
      %v710 = vadd.f32 %v657, %v709
      %v711 = vpop.f32.mrb[0].mxu0
      %v712 = vpop.f32.mrb[0].mxu0
      %v713 = vpop.f32.mrb[0].mxu0
      %714 = vdwg.mxu0
      %v715 = vpack.c.bf16 %v710, %v710
      %717 = vrot.lane.b32.xlu0 %v715, 96
      %v718 = vpop.permute.xlu0 %717
      %vm719 = vcmask 64512
      %v721 = vsel %vm719, %v715, 0
      %v724 = vsel %vm719, %v718, 0
      %726 = vmatprep.subr.bf16.mxu0 0
      %727 = vmatpush1.bf16.xpose.msra.mxu0 %v724
      %728 = vmatprep.subr.bf16.mxu0 0
      %729 = vmatpush1.bf16.xpose.msra.mxu0 0
      %730 = vmatprep.subr.bf16.mxu0 0
      %731 = vmatpush1.bf16.xpose.msra.mxu0 0
      %732 = vmatprep.subr.bf16.mxu0 0
      %733 = vmatpush1.bf16.xpose.msra.mxu0 0
      %734 = vmatprep.subr.bf16.mxu0 0
      %735 = vmatpush1.bf16.xpose.msra.mxu0 0
      %736 = vmatprep.subr.bf16.mxu0 0
      %737 = vmatpush1.bf16.xpose.msra.mxu0 0
      %738 = vmatprep.subr.bf16.mxu0 0
      %739 = vmatpush1.bf16.xpose.msra.mxu0 0
      %740 = vmatprep.subr.bf16.mxu0 0
      %741 = vmatpush1.bf16.xpose.msra.mxu0 0
      %742 = vmatprep.subr.bf16.mxu0 0
      %743 = vmatpush1.bf16.xpose.msra.mxu0 0
      %744 = vmatprep.subr.bf16.mxu0 0
      %745 = vmatpush1.bf16.xpose.msra.mxu0 0
      %746 = vmatprep.subr.bf16.mxu0 0
      %747 = vmatpush1.bf16.xpose.msra.mxu0 0
      %748 = vmatprep.subr.bf16.mxu0 0
      %749 = vmatpush1.bf16.xpose.msra.mxu0 0
      %750 = vmatprep.subr.bf16.mxu0 0
      %751 = vmatpush1.bf16.xpose.msra.mxu0 0
      %752 = vmatprep.subr.bf16.mxu0 0
      %753 = vmatpush1.bf16.xpose.msra.mxu0 0
      %754 = vmatprep.subr.bf16.mxu0 0
      %755 = vmatpush1.bf16.xpose.msra.mxu0 0
      %756 = vmatprep.subr.bf16.mxu0 0
      %757 = vmatpush1.bf16.xpose.msra.mxu0 0
      %758 = vmatprep.mubr.bf16.mxu0 0
      %759 = vmatmul.mubr.bf16.gmra.mrb[0].mxu0 %v721
      %v760 = vpop.f32.mrb[0].mxu0
      %v761 = vadd.f32 0.0, %v760
      %v762 = vpop.f32.mrb[0].mxu0
      %v763 = vpop.f32.mrb[0].mxu0
      %v764 = vpop.f32.mrb[0].mxu0
      %765 = vdwg.mxu0
      %v766 = vmul.f32 %v761, 0.35355338
      %v768 = vlaneseq
      %v769 = vshrl.u32 %v768, 7
      %v770 = vsub.s32 0, %v769
      %v771 = vrot.slane %v615, %v770
      %v773 = vadd.f32 %v766, %v771
      %vm774 = vcmask 36864
      %v775 = vsel %vm774, %v773, -inf
      %776 = vmax.xlane.f32.xlu0 %v775
      %v777 = vpop.xlane.xlu0 %776
      %v778 = vsub.f32 %v773, %v777
      %v779 = vmul.f32 %v778, 1.442695
      %v780 = vpow.pop %v779
      %v781 = vsel %vm774, %v780, 0.0
      %782 = vadd.xlane.f32.xlu0 %v781
      %v783 = vpop.xlane.xlu0 %782
      %v784 = vrcp.pop %v783
      %v785 = vmul.f32 %v780, %v784
      %v786 = vpack.c.bf16 %v785, %v785
      %787 = vrot.lane.b32.xlu0 %v715, 64
      %v788 = vpop.permute.xlu0 %787
      %vm789 = vcmask 39936
      %v791 = vsel %vm789, %v786, 0
      %vm793 = vcmask 1041408
      %vm794 = vcmask 1042432
      %v795 = vsel %vm793, 4294967295, 65535
      %v796 = vsel %vm794, %v795, 0
      %v798 = vand.u32 %v788, %v796
      %800 = vmatprep.subr.bf16.mxu0 0
      %801 = vmatpush1.bf16.msra.mxu0 %v798
      %802 = vmatprep.subr.bf16.mxu0 0
      %803 = vmatpush1.bf16.msra.mxu0 0
      %804 = vmatprep.subr.bf16.mxu0 0
      %805 = vmatpush1.bf16.msra.mxu0 0
      %806 = vmatprep.subr.bf16.mxu0 0
      %807 = vmatpush1.bf16.msra.mxu0 0
      %808 = vmatprep.subr.bf16.mxu0 0
      %809 = vmatpush1.bf16.msra.mxu0 0
      %810 = vmatprep.subr.bf16.mxu0 0
      %811 = vmatpush1.bf16.msra.mxu0 0
      %812 = vmatprep.subr.bf16.mxu0 0
      %813 = vmatpush1.bf16.msra.mxu0 0
      %814 = vmatprep.subr.bf16.mxu0 0
      %815 = vmatpush1.bf16.msra.mxu0 0
      %816 = vmatprep.subr.bf16.mxu0 0
      %817 = vmatpush1.bf16.msra.mxu0 0
      %818 = vmatprep.subr.bf16.mxu0 0
      %819 = vmatpush1.bf16.msra.mxu0 0
      %820 = vmatprep.subr.bf16.mxu0 0
      %821 = vmatpush1.bf16.msra.mxu0 0
      %822 = vmatprep.subr.bf16.mxu0 0
      %823 = vmatpush1.bf16.msra.mxu0 0
      %824 = vmatprep.subr.bf16.mxu0 0
      %825 = vmatpush1.bf16.msra.mxu0 0
      %826 = vmatprep.subr.bf16.mxu0 0
      %827 = vmatpush1.bf16.msra.mxu0 0
      %828 = vmatprep.subr.bf16.mxu0 0
      %829 = vmatpush1.bf16.msra.mxu0 0
      %830 = vmatprep.subr.bf16.mxu0 0
      %831 = vmatpush1.bf16.msra.mxu0 0
      %832 = vmatprep.mubr.bf16.mxu0 0
      %833 = vmatmul.mubr.bf16.gmra.mrb[0].mxu0 %v791
      %v834 = vpop.f32.mrb[0].mxu0
      %v835 = vadd.f32 0.0, %v834
      %v836 = vpop.f32.mrb[0].mxu0
      %v837 = vpop.f32.mrb[0].mxu0
      %v838 = vpop.f32.mrb[0].mxu0
      %839 = vdwg.mxu0
      %840 = vrot.lane.b32.xlu0 %v715, 120
      %v841 = vpop.permute.xlu0 %840
      %842 = vrot.lane.b32.xlu0 %v715, 88
      %v843 = vpop.permute.xlu0 %842
      %v845 = vsel %vm719, %v841, 0
      %v848 = vsel %vm719, %v843, 0
      %850 = vmatprep.subr.bf16.mxu0 0
      %851 = vmatpush1.bf16.xpose.msra.mxu0 %v848
      %852 = vmatprep.subr.bf16.mxu0 0
      %853 = vmatpush1.bf16.xpose.msra.mxu0 0
      %854 = vmatprep.subr.bf16.mxu0 0
      %855 = vmatpush1.bf16.xpose.msra.mxu0 0
      %856 = vmatprep.subr.bf16.mxu0 0
      %857 = vmatpush1.bf16.xpose.msra.mxu0 0
      %858 = vmatprep.subr.bf16.mxu0 0
      %859 = vmatpush1.bf16.xpose.msra.mxu0 0
      %860 = vmatprep.subr.bf16.mxu0 0
      %861 = vmatpush1.bf16.xpose.msra.mxu0 0
      %862 = vmatprep.subr.bf16.mxu0 0
      %863 = vmatpush1.bf16.xpose.msra.mxu0 0
      %864 = vmatprep.subr.bf16.mxu0 0
      %865 = vmatpush1.bf16.xpose.msra.mxu0 0
      %866 = vmatprep.subr.bf16.mxu0 0
      %867 = vmatpush1.bf16.xpose.msra.mxu0 0
      %868 = vmatprep.subr.bf16.mxu0 0
      %869 = vmatpush1.bf16.xpose.msra.mxu0 0
      %870 = vmatprep.subr.bf16.mxu0 0
      %871 = vmatpush1.bf16.xpose.msra.mxu0 0
      %872 = vmatprep.subr.bf16.mxu0 0
      %873 = vmatpush1.bf16.xpose.msra.mxu0 0
      %874 = vmatprep.subr.bf16.mxu0 0
      %875 = vmatpush1.bf16.xpose.msra.mxu0 0
      %876 = vmatprep.subr.bf16.mxu0 0
      %877 = vmatpush1.bf16.xpose.msra.mxu0 0
      %878 = vmatprep.subr.bf16.mxu0 0
      %879 = vmatpush1.bf16.xpose.msra.mxu0 0
      %880 = vmatprep.subr.bf16.mxu0 0
      %881 = vmatpush1.bf16.xpose.msra.mxu0 0
      %882 = vmatprep.mubr.bf16.mxu0 0
      %883 = vmatmul.mubr.bf16.gmra.mrb[0].mxu0 %v845
      %v884 = vpop.f32.mrb[0].mxu0
      %v885 = vadd.f32 0.0, %v884
      %v886 = vpop.f32.mrb[0].mxu0
      %v887 = vpop.f32.mrb[0].mxu0
      %v888 = vpop.f32.mrb[0].mxu0
      %889 = vdwg.mxu0
      %v890 = vmul.f32 %v885, 0.35355338
      %v891 = vadd.f32 %v890, %v771
      %v892 = vsel %vm774, %v891, -inf
      %893 = vmax.xlane.f32.xlu0 %v892
      %v894 = vpop.xlane.xlu0 %893
      %v895 = vsub.f32 %v891, %v894
      %v896 = vmul.f32 %v895, 1.442695
      %v897 = vpow.pop %v896
      %v898 = vsel %vm774, %v897, 0.0
      %899 = vadd.xlane.f32.xlu0 %v898
      %v900 = vpop.xlane.xlu0 %899
      %v901 = vrcp.pop %v900
      %v902 = vmul.f32 %v897, %v901
      %v903 = vpack.c.bf16 %v902, %v902
      %904 = vrot.lane.b32.xlu0 %v715, 56
      %v905 = vpop.permute.xlu0 %904
      %v907 = vsel %vm789, %v903, 0
      %v910 = vand.u32 %v905, %v796
      %912 = vmatprep.subr.bf16.mxu0 0
      %913 = vmatpush1.bf16.msra.mxu0 %v910
      %914 = vmatprep.subr.bf16.mxu0 0
      %915 = vmatpush1.bf16.msra.mxu0 0
      %916 = vmatprep.subr.bf16.mxu0 0
      %917 = vmatpush1.bf16.msra.mxu0 0
      %918 = vmatprep.subr.bf16.mxu0 0
      %919 = vmatpush1.bf16.msra.mxu0 0
      %920 = vmatprep.subr.bf16.mxu0 0
      %921 = vmatpush1.bf16.msra.mxu0 0
      %922 = vmatprep.subr.bf16.mxu0 0
      %923 = vmatpush1.bf16.msra.mxu0 0
      %924 = vmatprep.subr.bf16.mxu0 0
      %925 = vmatpush1.bf16.msra.mxu0 0
      %926 = vmatprep.subr.bf16.mxu0 0
      %927 = vmatpush1.bf16.msra.mxu0 0
      %928 = vmatprep.subr.bf16.mxu0 0
      %929 = vmatpush1.bf16.msra.mxu0 0
      %930 = vmatprep.subr.bf16.mxu0 0
      %931 = vmatpush1.bf16.msra.mxu0 0
      %932 = vmatprep.subr.bf16.mxu0 0
      %933 = vmatpush1.bf16.msra.mxu0 0
      %934 = vmatprep.subr.bf16.mxu0 0
      %935 = vmatpush1.bf16.msra.mxu0 0
      %936 = vmatprep.subr.bf16.mxu0 0
      %937 = vmatpush1.bf16.msra.mxu0 0
      %938 = vmatprep.subr.bf16.mxu0 0
      %939 = vmatpush1.bf16.msra.mxu0 0
      %940 = vmatprep.subr.bf16.mxu0 0
      %941 = vmatpush1.bf16.msra.mxu0 0
      %942 = vmatprep.subr.bf16.mxu0 0
      %943 = vmatpush1.bf16.msra.mxu0 0
      %944 = vmatprep.mubr.bf16.mxu0 0
      %945 = vmatmul.mubr.bf16.gmra.mrb[0].mxu0 %v907
      %v946 = vpop.f32.mrb[0].mxu0
      %v947 = vadd.f32 0.0, %v946
      %v948 = vpop.f32.mrb[0].mxu0
      %v949 = vpop.f32.mrb[0].mxu0
      %v950 = vpop.f32.mrb[0].mxu0
      %951 = vdwg.mxu0
      %952 = vrot.lane.b32.xlu0 %v715, 112
      %v953 = vpop.permute.xlu0 %952
      %954 = vrot.lane.b32.xlu0 %v715, 80
      %v955 = vpop.permute.xlu0 %954
      %v957 = vsel %vm719, %v953, 0
      %v960 = vsel %vm719, %v955, 0
      %962 = vmatprep.subr.bf16.mxu0 0
      %963 = vmatpush1.bf16.xpose.msra.mxu0 %v960
      %964 = vmatprep.subr.bf16.mxu0 0
      %965 = vmatpush1.bf16.xpose.msra.mxu0 0
      %966 = vmatprep.subr.bf16.mxu0 0
      %967 = vmatpush1.bf16.xpose.msra.mxu0 0
      %968 = vmatprep.subr.bf16.mxu0 0
      %969 = vmatpush1.bf16.xpose.msra.mxu0 0
      %970 = vmatprep.subr.bf16.mxu0 0
      %971 = vmatpush1.bf16.xpose.msra.mxu0 0
      %972 = vmatprep.subr.bf16.mxu0 0
      %973 = vmatpush1.bf16.xpose.msra.mxu0 0
      %974 = vmatprep.subr.bf16.mxu0 0
      %975 = vmatpush1.bf16.xpose.msra.mxu0 0
      %976 = vmatprep.subr.bf16.mxu0 0
      %977 = vmatpush1.bf16.xpose.msra.mxu0 0
      %978 = vmatprep.subr.bf16.mxu0 0
      %979 = vmatpush1.bf16.xpose.msra.mxu0 0
      %980 = vmatprep.subr.bf16.mxu0 0
      %981 = vmatpush1.bf16.xpose.msra.mxu0 0
      %982 = vmatprep.subr.bf16.mxu0 0
      %983 = vmatpush1.bf16.xpose.msra.mxu0 0
      %984 = vmatprep.subr.bf16.mxu0 0
      %985 = vmatpush1.bf16.xpose.msra.mxu0 0
      %986 = vmatprep.subr.bf16.mxu0 0
      %987 = vmatpush1.bf16.xpose.msra.mxu0 0
      %988 = vmatprep.subr.bf16.mxu0 0
      %989 = vmatpush1.bf16.xpose.msra.mxu0 0
      %990 = vmatprep.subr.bf16.mxu0 0
      %991 = vmatpush1.bf16.xpose.msra.mxu0 0
      %992 = vmatprep.subr.bf16.mxu0 0
      %993 = vmatpush1.bf16.xpose.msra.mxu0 0
      %994 = vmatprep.mubr.bf16.mxu0 0
      %995 = vmatmul.mubr.bf16.gmra.mrb[0].mxu0 %v957
      %v996 = vpop.f32.mrb[0].mxu0
      %v997 = vadd.f32 0.0, %v996
      %v998 = vpop.f32.mrb[0].mxu0
      %v999 = vpop.f32.mrb[0].mxu0
      %v1000 = vpop.f32.mrb[0].mxu0
      %1001 = vdwg.mxu0
      %v1002 = vmul.f32 %v997, 0.35355338
      %v1003 = vadd.f32 %v1002, %v771
      %v1004 = vsel %vm774, %v1003, -inf
      %1005 = vmax.xlane.f32.xlu0 %v1004
      %v1006 = vpop.xlane.xlu0 %1005
      %v1007 = vsub.f32 %v1003, %v1006
      %v1008 = vmul.f32 %v1007, 1.442695
      %v1009 = vpow.pop %v1008
      %v1010 = vsel %vm774, %v1009, 0.0
      %1011 = vadd.xlane.f32.xlu0 %v1010
      %v1012 = vpop.xlane.xlu0 %1011
      %v1013 = vrcp.pop %v1012
      %v1014 = vmul.f32 %v1009, %v1013
      %v1015 = vpack.c.bf16 %v1014, %v1014
      %1016 = vrot.lane.b32.xlu0 %v715, 48
      %v1017 = vpop.permute.xlu0 %1016
      %v1019 = vsel %vm789, %v1015, 0
      %v1022 = vand.u32 %v1017, %v796
      %1024 = vmatprep.subr.bf16.mxu0 0
      %1025 = vmatpush1.bf16.msra.mxu0 %v1022
      %1026 = vmatprep.subr.bf16.mxu0 0
      %1027 = vmatpush1.bf16.msra.mxu0 0
      %1028 = vmatprep.subr.bf16.mxu0 0
      %1029 = vmatpush1.bf16.msra.mxu0 0
      %1030 = vmatprep.subr.bf16.mxu0 0
      %1031 = vmatpush1.bf16.msra.mxu0 0
      %1032 = vmatprep.subr.bf16.mxu0 0
      %1033 = vmatpush1.bf16.msra.mxu0 0
      %1034 = vmatprep.subr.bf16.mxu0 0
      %1035 = vmatpush1.bf16.msra.mxu0 0
      %1036 = vmatprep.subr.bf16.mxu0 0
      %1037 = vmatpush1.bf16.msra.mxu0 0
      %1038 = vmatprep.subr.bf16.mxu0 0
      %1039 = vmatpush1.bf16.msra.mxu0 0
      %1040 = vmatprep.subr.bf16.mxu0 0
      %1041 = vmatpush1.bf16.msra.mxu0 0
      %1042 = vmatprep.subr.bf16.mxu0 0
      %1043 = vmatpush1.bf16.msra.mxu0 0
      %1044 = vmatprep.subr.bf16.mxu0 0
      %1045 = vmatpush1.bf16.msra.mxu0 0
      %1046 = vmatprep.subr.bf16.mxu0 0
      %1047 = vmatpush1.bf16.msra.mxu0 0
      %1048 = vmatprep.subr.bf16.mxu0 0
      %1049 = vmatpush1.bf16.msra.mxu0 0
      %1050 = vmatprep.subr.bf16.mxu0 0
      %1051 = vmatpush1.bf16.msra.mxu0 0
      %1052 = vmatprep.subr.bf16.mxu0 0
      %1053 = vmatpush1.bf16.msra.mxu0 0
      %1054 = vmatprep.subr.bf16.mxu0 0
      %1055 = vmatpush1.bf16.msra.mxu0 0
      %1056 = vmatprep.mubr.bf16.mxu0 0
      %1057 = vmatmul.mubr.bf16.gmra.mrb[0].mxu0 %v1019
      %v1058 = vpop.f32.mrb[0].mxu0
      %v1059 = vadd.f32 0.0, %v1058
      %v1060 = vpop.f32.mrb[0].mxu0
      %v1061 = vpop.f32.mrb[0].mxu0
      %v1062 = vpop.f32.mrb[0].mxu0
      %1063 = vdwg.mxu0
      %1064 = vrot.lane.b32.xlu0 %v715, 104
      %v1065 = vpop.permute.xlu0 %1064
      %1066 = vrot.lane.b32.xlu0 %v715, 72
      %v1067 = vpop.permute.xlu0 %1066
      %v1069 = vsel %vm719, %v1065, 0
      %v1072 = vsel %vm719, %v1067, 0
      %1074 = vmatprep.subr.bf16.mxu0 0
      %1075 = vmatpush1.bf16.xpose.msra.mxu0 %v1072
      %1076 = vmatprep.subr.bf16.mxu0 0
      %1077 = vmatpush1.bf16.xpose.msra.mxu0 0
      %1078 = vmatprep.subr.bf16.mxu0 0
      %1079 = vmatpush1.bf16.xpose.msra.mxu0 0
      %1080 = vmatprep.subr.bf16.mxu0 0
      %1081 = vmatpush1.bf16.xpose.msra.mxu0 0
      %1082 = vmatprep.subr.bf16.mxu0 0
      %1083 = vmatpush1.bf16.xpose.msra.mxu0 0
      %1084 = vmatprep.subr.bf16.mxu0 0
      %1085 = vmatpush1.bf16.xpose.msra.mxu0 0
      %1086 = vmatprep.subr.bf16.mxu0 0
      %1087 = vmatpush1.bf16.xpose.msra.mxu0 0
      %1088 = vmatprep.subr.bf16.mxu0 0
      %1089 = vmatpush1.bf16.xpose.msra.mxu0 0
      %1090 = vmatprep.subr.bf16.mxu0 0
      %1091 = vmatpush1.bf16.xpose.msra.mxu0 0
      %1092 = vmatprep.subr.bf16.mxu0 0
      %1093 = vmatpush1.bf16.xpose.msra.mxu0 0
      %1094 = vmatprep.subr.bf16.mxu0 0
      %1095 = vmatpush1.bf16.xpose.msra.mxu0 0
      %1096 = vmatprep.subr.bf16.mxu0 0
      %1097 = vmatpush1.bf16.xpose.msra.mxu0 0
      %1098 = vmatprep.subr.bf16.mxu0 0
      %1099 = vmatpush1.bf16.xpose.msra.mxu0 0
      %1100 = vmatprep.subr.bf16.mxu0 0
      %1101 = vmatpush1.bf16.xpose.msra.mxu0 0
      %1102 = vmatprep.subr.bf16.mxu0 0
      %1103 = vmatpush1.bf16.xpose.msra.mxu0 0
      %1104 = vmatprep.subr.bf16.mxu0 0
      %1105 = vmatpush1.bf16.xpose.msra.mxu0 0
      %1106 = vmatprep.mubr.bf16.mxu0 0
      %1107 = vmatmul.mubr.bf16.gmra.mrb[0].mxu0 %v1069
      %v1108 = vpop.f32.mrb[0].mxu0
      %v1109 = vadd.f32 0.0, %v1108
      %v1110 = vpop.f32.mrb[0].mxu0
      %v1111 = vpop.f32.mrb[0].mxu0
      %v1112 = vpop.f32.mrb[0].mxu0
      %1113 = vdwg.mxu0
      %v1114 = vmul.f32 %v1109, 0.35355338
      %v1115 = vadd.f32 %v1114, %v771
      %v1116 = vsel %vm774, %v1115, -inf
      %1117 = vmax.xlane.f32.xlu0 %v1116
      %v1118 = vpop.xlane.xlu0 %1117
      %v1119 = vsub.f32 %v1115, %v1118
      %v1120 = vmul.f32 %v1119, 1.442695
      %v1121 = vpow.pop %v1120
      %v1122 = vsel %vm774, %v1121, 0.0
      %1123 = vadd.xlane.f32.xlu0 %v1122
      %v1124 = vpop.xlane.xlu0 %1123
      %v1125 = vrcp.pop %v1124
      %v1126 = vmul.f32 %v1121, %v1125
      %v1127 = vpack.c.bf16 %v1126, %v1126
      %1128 = vrot.lane.b32.xlu0 %v715, 40
      %v1129 = vpop.permute.xlu0 %1128
      %v1131 = vsel %vm789, %v1127, 0
      %v1134 = vand.u32 %v1129, %v796
      %1136 = vmatprep.subr.bf16.mxu0 0
      %1137 = vmatpush1.bf16.msra.mxu0 %v1134
      %1138 = vmatprep.subr.bf16.mxu0 0
      %1139 = vmatpush1.bf16.msra.mxu0 0
      %1140 = vmatprep.subr.bf16.mxu0 0
      %1141 = vmatpush1.bf16.msra.mxu0 0
      %1142 = vmatprep.subr.bf16.mxu0 0
      %1143 = vmatpush1.bf16.msra.mxu0 0
      %1144 = vmatprep.subr.bf16.mxu0 0
      %1145 = vmatpush1.bf16.msra.mxu0 0
      %1146 = vmatprep.subr.bf16.mxu0 0
      %1147 = vmatpush1.bf16.msra.mxu0 0
      %1148 = vmatprep.subr.bf16.mxu0 0
      %1149 = vmatpush1.bf16.msra.mxu0 0
      %1150 = vmatprep.subr.bf16.mxu0 0
      %1151 = vmatpush1.bf16.msra.mxu0 0
      %1152 = vmatprep.subr.bf16.mxu0 0
      %1153 = vmatpush1.bf16.msra.mxu0 0
      %1154 = vmatprep.subr.bf16.mxu0 0
      %1155 = vmatpush1.bf16.msra.mxu0 0
      %1156 = vmatprep.subr.bf16.mxu0 0
      %1157 = vmatpush1.bf16.msra.mxu0 0
      %1158 = vmatprep.subr.bf16.mxu0 0
      %1159 = vmatpush1.bf16.msra.mxu0 0
      %1160 = vmatprep.subr.bf16.mxu0 0
      %1161 = vmatpush1.bf16.msra.mxu0 0
      %1162 = vmatprep.subr.bf16.mxu0 0
      %1163 = vmatpush1.bf16.msra.mxu0 0
      %1164 = vmatprep.subr.bf16.mxu0 0
      %1165 = vmatpush1.bf16.msra.mxu0 0
      %1166 = vmatprep.subr.bf16.mxu0 0
      %1167 = vmatpush1.bf16.msra.mxu0 0
      %1168 = vmatprep.mubr.bf16.mxu0 0
      %1169 = vmatmul.mubr.bf16.gmra.mrb[0].mxu0 %v1131
      %v1170 = vpop.f32.mrb[0].mxu0
      %v1171 = vadd.f32 0.0, %v1170
      %v1172 = vpop.f32.mrb[0].mxu0
      %v1173 = vpop.f32.mrb[0].mxu0
      %v1174 = vpop.f32.mrb[0].mxu0
      %1175 = vdwg.mxu0
      %1177 = vrot.lane.b32.xlu0 %v947, 8
      %v1178 = vpop.permute.xlu0 %1177
      %1181 = vrot.lane.b32.xlu0 %v1059, 16
      %v1182 = vpop.permute.xlu0 %1181
      %1185 = vrot.lane.b32.xlu0 %v1171, 24
      %v1186 = vpop.permute.xlu0 %1185
      %v1188 = vsel %vm719, %v835, %v1178
      %vm1189 = vcmask 130048
      %v1190 = vsel %vm1189, %v1188, %v1182
      %vm1191 = vcmask 195584
      %v1192 = vsel %vm1191, %v1190, %v1186
      %v1193 = vld [vmem:[%s7] sm:$0xf]
      %v1194 = vld [vmem:[%s7 + $0x4] sm:$0xf]
      %v1195 = vld [vmem:[%s7 + $0x8] sm:$0xf]
      %v1196 = vld [vmem:[%s7 + $0xc] sm:$0xf]
      %v1197 = vld [vmem:[%s8] sm:$0x1]
      %v1198 = vpack.c.bf16 %v1192, %v1192
      %v1200 = vlaneseq
      %v1201 = vshrl.u32 %v1200, 7
      %v1202 = vsub.s32 0, %v1201
      %v1203 = vrot.slane %v1197, %v1202
      %v1209 = vunpack.c.l.b16 %v1193
      %v1210 = vunpack.c.l.b16 %v1194
      %v1211 = vunpack.c.l.b16 %v1195
      %v1212 = vunpack.c.l.b16 %v1196
      %v1213 = vpack.c.b16 %v1210, %v1209
      %v1214 = vpack.c.b16 %v1212, %v1211
      %v1218 = vsel %vm671, %v1198, 0
      %1220 = vmatprep.subr.bf16.mxu0 0
      %1221 = vmatpush1.bf16.msra.mxu0 %v1213
      %1222 = vmatprep.subr.bf16.mxu0 0
      %1223 = vmatpush1.bf16.msra.mxu0 %v1214
      %1224 = vmatprep.subr.bf16.mxu0 0
      %1225 = vmatpush1.bf16.msra.mxu0 0
      %1226 = vmatprep.subr.bf16.mxu0 0
      %1227 = vmatpush1.bf16.msra.mxu0 0
      %1228 = vmatprep.subr.bf16.mxu0 0
      %1229 = vmatpush1.bf16.msra.mxu0 0
      %1230 = vmatprep.subr.bf16.mxu0 0
      %1231 = vmatpush1.bf16.msra.mxu0 0
      %1232 = vmatprep.subr.bf16.mxu0 0
      %1233 = vmatpush1.bf16.msra.mxu0 0
      %1234 = vmatprep.subr.bf16.mxu0 0
      %1235 = vmatpush1.bf16.msra.mxu0 0
      %1236 = vmatprep.subr.bf16.mxu0 0
      %1237 = vmatpush1.bf16.msra.mxu0 0
      %1238 = vmatprep.subr.bf16.mxu0 0
      %1239 = vmatpush1.bf16.msra.mxu0 0
      %1240 = vmatprep.subr.bf16.mxu0 0
      %1241 = vmatpush1.bf16.msra.mxu0 0
      %1242 = vmatprep.subr.bf16.mxu0 0
      %1243 = vmatpush1.bf16.msra.mxu0 0
      %1244 = vmatprep.subr.bf16.mxu0 0
      %1245 = vmatpush1.bf16.msra.mxu0 0
      %1246 = vmatprep.subr.bf16.mxu0 0
      %1247 = vmatpush1.bf16.msra.mxu0 0
      %1248 = vmatprep.subr.bf16.mxu0 0
      %1249 = vmatpush1.bf16.msra.mxu0 0
      %1250 = vmatprep.subr.bf16.mxu0 0
      %1251 = vmatpush1.bf16.msra.mxu0 0
      %1252 = vmatprep.mubr.bf16.mxu0 0
      %1253 = vmatmul.mubr.bf16.gmra.mrb[0].mxu0 %v1218
      %v1254 = vpop.f32.mrb[0].mxu0
      %v1255 = vadd.f32 %v1203, %v1254
      %v1256 = vpop.f32.mrb[0].mxu0
      %v1257 = vpop.f32.mrb[0].mxu0
      %v1258 = vpop.f32.mrb[0].mxu0
      %1259 = vdwg.mxu0
      %v1260 = vadd.f32 %v614, %v1255
      %v1261 = vld [vmem:[%s9] sm:$0x1]
      %v1262 = vld [vmem:[%s10] sm:$0x1]
      %v1263 = vsel %vm618, %v1260, 0.0
      %1264 = vadd.xlane.f32.xlu0 %v1263
      %v1265 = vpop.xlane.xlu0 %1264
      %v1266 = vmul.f32 %v1265, %v622
      %v1267 = vsub.f32 %v1260, %v1266
      %v1268 = vmul.f32 %v1267, %v1267
      %v1269 = vsel %vm618, %v1268, 0.0
      %1270 = vadd.xlane.f32.xlu0 %v1269
      %v1271 = vpop.xlane.xlu0 %1270
      %v1272 = vmul.f32 %v1271, %v622
      %v1273 = vadd.f32 %v1272, 1e-12
      %v1274 = vrsqrt.pop %v1273
      %v1275 = vmul.f32 %v1267, %v1274
      %v1277 = vlaneseq
      %v1278 = vshrl.u32 %v1277, 7
      %v1279 = vsub.s32 0, %v1278
      %v1280 = vrot.slane %v1261, %v1279
      %v1282 = vmul.f32 %v1275, %v1280
      %v1284 = vlaneseq
      %v1285 = vshrl.u32 %v1284, 7
      %v1286 = vsub.s32 0, %v1285
      %v1287 = vrot.slane %v1262, %v1286
      %v1289 = vadd.f32 %v1282, %v1287
      %v1290 = vld [vmem:[%s11] sm:$0xf]
      %v1291 = vld [vmem:[%s11 + $0x4] sm:$0xf]
      %v1292 = vld [vmem:[%s11 + $0x8] sm:$0xf]
      %v1293 = vld [vmem:[%s11 + $0xc] sm:$0xf]
      %v1294 = vld [vmem:[%s12] sm:$0x1]
      %v1295 = vpack.c.bf16 %v1289, %v1289
      %v1297 = vlaneseq
      %v1298 = vshrl.u32 %v1297, 7
      %v1299 = vsub.s32 0, %v1298
      %v1300 = vrot.slane %v1294, %v1299
      %v1306 = vunpack.c.l.b16 %v1290
      %v1307 = vunpack.c.l.b16 %v1291
      %v1308 = vunpack.c.l.b16 %v1292
      %v1309 = vunpack.c.l.b16 %v1293
      %v1310 = vpack.c.b16 %v1307, %v1306
      %v1311 = vpack.c.b16 %v1309, %v1308
      %v1315 = vsel %vm671, %v1295, 0
      %1317 = vmatprep.subr.bf16.mxu0 0
      %1318 = vmatpush1.bf16.msra.mxu0 %v1310
      %1319 = vmatprep.subr.bf16.mxu0 0
      %1320 = vmatpush1.bf16.msra.mxu0 %v1311
      %1321 = vmatprep.subr.bf16.mxu0 0
      %1322 = vmatpush1.bf16.msra.mxu0 0
      %1323 = vmatprep.subr.bf16.mxu0 0
      %1324 = vmatpush1.bf16.msra.mxu0 0
      %1325 = vmatprep.subr.bf16.mxu0 0
      %1326 = vmatpush1.bf16.msra.mxu0 0
      %1327 = vmatprep.subr.bf16.mxu0 0
      %1328 = vmatpush1.bf16.msra.mxu0 0
      %1329 = vmatprep.subr.bf16.mxu0 0
      %1330 = vmatpush1.bf16.msra.mxu0 0
      %1331 = vmatprep.subr.bf16.mxu0 0
      %1332 = vmatpush1.bf16.msra.mxu0 0
      %1333 = vmatprep.subr.bf16.mxu0 0
      %1334 = vmatpush1.bf16.msra.mxu0 0
      %1335 = vmatprep.subr.bf16.mxu0 0
      %1336 = vmatpush1.bf16.msra.mxu0 0
      %1337 = vmatprep.subr.bf16.mxu0 0
      %1338 = vmatpush1.bf16.msra.mxu0 0
      %1339 = vmatprep.subr.bf16.mxu0 0
      %1340 = vmatpush1.bf16.msra.mxu0 0
      %1341 = vmatprep.subr.bf16.mxu0 0
      %1342 = vmatpush1.bf16.msra.mxu0 0
      %1343 = vmatprep.subr.bf16.mxu0 0
      %1344 = vmatpush1.bf16.msra.mxu0 0
      %1345 = vmatprep.subr.bf16.mxu0 0
      %1346 = vmatpush1.bf16.msra.mxu0 0
      %1347 = vmatprep.subr.bf16.mxu0 0
      %1348 = vmatpush1.bf16.msra.mxu0 0
      %1349 = vmatprep.mubr.bf16.mxu0 0
      %1350 = vmatmul.mubr.bf16.gmra.mrb[0].mxu0 %v1315
      %v1351 = vpop.f32.mrb[0].mxu0
      %v1352 = vadd.f32 %v1300, %v1351
      %v1353 = vpop.f32.mrb[0].mxu0
      %v1354 = vpop.f32.mrb[0].mxu0
      %v1355 = vpop.f32.mrb[0].mxu0
      %1356 = vdwg.mxu0
      %v1357 = vmul.f32 %v1352, 0.5
      %v1358 = vmul.f32 %v1352, 0.70710677
      %v1359 = vand.u32 2147483647, %v1358
      %v1360 = vmul.f32 %v1359, 0.3275911
      %v1361 = vadd.f32 %v1360, 1.0
      %v1362 = vrcp.pop %v1361
      %v1363 = vmul.f32 1.0, %v1362
      %v1364 = vmul.f32 %v1363, 1.0614054
      %v1365 = vadd.f32 %v1364, -1.4531521
      %v1366 = vmul.f32 %v1365, %v1363
      %v1367 = vadd.f32 %v1366, 1.4214138
      %v1368 = vmul.f32 %v1367, %v1363
      %v1369 = vadd.f32 %v1368, -0.28449672
      %v1370 = vmul.f32 %v1369, %v1363
      %v1371 = vadd.f32 %v1370, 0.2548296
      %v1372 = vmul.f32 %v1371, %v1363
      %v1373 = vsub.f32 0.0, %v1359
      %v1374 = vmul.f32 %v1373, %v1359
      %v1375 = vmul.f32 %v1374, 1.442695
      %v1376 = vpow.pop %v1375
      %v1377 = vmul.f32 %v1372, %v1376
      %v1378 = vsub.f32 1.0, %v1377
      %vm1379 = vcmp.lt.f32.partialorder %v1358, 0.0
      %v1380 = vsub.f32 0.0, %v1378
      %v1381 = vsel %vm1379, %v1380, %v1378
      %v1382 = vadd.f32 %v1381, 1.0
      %v1383 = vmul.f32 %v1357, %v1382
      %v1384 = vld [vmem:[%s13] sm:$0xf]
      %v1385 = vld [vmem:[%s13 + $0x4] sm:$0xf]
      %v1386 = vld [vmem:[%s13 + $0x8] sm:$0xf]
      %v1387 = vld [vmem:[%s13 + $0xc] sm:$0xf]
      %v1388 = vld [vmem:[%s13 + $0x10] sm:$0xf]
      %v1389 = vld [vmem:[%s13 + $0x14] sm:$0xf]
      %v1390 = vld [vmem:[%s13 + $0x18] sm:$0xf]
      %v1391 = vld [vmem:[%s13 + $0x1c] sm:$0xf]
      %v1392 = vld [vmem:[%s14] sm:$0x1]
      %v1393 = vpack.c.bf16 %v1383, %v1383
      %v1395 = vlaneseq
      %v1396 = vshrl.u32 %v1395, 7
      %v1397 = vsub.s32 0, %v1396
      %v1398 = vrot.slane %v1392, %v1397
      %v1408 = vunpack.c.l.b16 %v1384
      %v1409 = vunpack.c.l.b16 %v1385
      %v1410 = vunpack.c.l.b16 %v1386
      %v1411 = vunpack.c.l.b16 %v1387
      %v1412 = vunpack.c.l.b16 %v1388
      %v1413 = vunpack.c.l.b16 %v1389
      %v1414 = vunpack.c.l.b16 %v1390
      %v1415 = vunpack.c.l.b16 %v1391
      %v1416 = vpack.c.b16 %v1409, %v1408
      %v1417 = vpack.c.b16 %v1411, %v1410
      %v1418 = vpack.c.b16 %v1413, %v1412
      %v1419 = vpack.c.b16 %v1415, %v1414
      %vm1424 = vcmask 523264
      %v1426 = vsel %vm1424, %v1393, 0
      %1428 = vmatprep.subr.bf16.mxu0 0
      %1429 = vmatpush1.bf16.msra.mxu0 %v1416
      %1430 = vmatprep.subr.bf16.mxu0 0
      %1431 = vmatpush1.bf16.msra.mxu0 %v1417
      %1432 = vmatprep.subr.bf16.mxu0 0
      %1433 = vmatpush1.bf16.msra.mxu0 %v1418
      %1434 = vmatprep.subr.bf16.mxu0 0
      %1435 = vmatpush1.bf16.msra.mxu0 %v1419
      %1436 = vmatprep.subr.bf16.mxu0 0
      %1437 = vmatpush1.bf16.msra.mxu0 0
      %1438 = vmatprep.subr.bf16.mxu0 0
      %1439 = vmatpush1.bf16.msra.mxu0 0
      %1440 = vmatprep.subr.bf16.mxu0 0
      %1441 = vmatpush1.bf16.msra.mxu0 0
      %1442 = vmatprep.subr.bf16.mxu0 0
      %1443 = vmatpush1.bf16.msra.mxu0 0
      %1444 = vmatprep.subr.bf16.mxu0 0
      %1445 = vmatpush1.bf16.msra.mxu0 0
      %1446 = vmatprep.subr.bf16.mxu0 0
      %1447 = vmatpush1.bf16.msra.mxu0 0
      %1448 = vmatprep.subr.bf16.mxu0 0
      %1449 = vmatpush1.bf16.msra.mxu0 0
      %1450 = vmatprep.subr.bf16.mxu0 0
      %1451 = vmatpush1.bf16.msra.mxu0 0
      %1452 = vmatprep.subr.bf16.mxu0 0
      %1453 = vmatpush1.bf16.msra.mxu0 0
      %1454 = vmatprep.subr.bf16.mxu0 0
      %1455 = vmatpush1.bf16.msra.mxu0 0
      %1456 = vmatprep.subr.bf16.mxu0 0
      %1457 = vmatpush1.bf16.msra.mxu0 0
      %1458 = vmatprep.subr.bf16.mxu0 0
      %1459 = vmatpush1.bf16.msra.mxu0 0
      %1460 = vmatprep.mubr.bf16.mxu0 0
      %1461 = vmatmul.mubr.bf16.gmra.mrb[0].mxu0 %v1426
      %v1462 = vpop.f32.mrb[0].mxu0
      %v1463 = vadd.f32 %v1398, %v1462
      %v1464 = vpop.f32.mrb[0].mxu0
      %v1465 = vpop.f32.mrb[0].mxu0
      %v1466 = vpop.f32.mrb[0].mxu0
      %1467 = vdwg.mxu0
      %v1468 = vadd.f32 %v1260, %v1463
      %1469 = vst.msk [vmem:[%s608] sm:$0x1f] %vm618, %v1468
      %v1470 = vld [vmem:[%s604] sm:$0x1f]
      %v1471 = vld [vmem:[%s15] sm:$0xf]
      %v1472 = vld [vmem:[%s15 + $0x4] sm:$0xf]
      %v1473 = vld [vmem:[%s15 + $0x8] sm:$0xf]
      %v1474 = vld [vmem:[%s15 + $0xc] sm:$0xf]
      %v1475 = vld [vmem:[%s16] sm:$0x1]
      %v1476 = vpack.c.bf16 %v1468, %v1468
      %v1478 = vlaneseq
      %v1479 = vshrl.u32 %v1478, 7
      %v1480 = vsub.s32 0, %v1479
      %v1481 = vrot.slane %v1475, %v1480
      %v1487 = vunpack.c.l.b16 %v1471
      %v1488 = vunpack.c.l.b16 %v1472
      %v1489 = vunpack.c.l.b16 %v1473
      %v1490 = vunpack.c.l.b16 %v1474
      %v1491 = vpack.c.b16 %v1488, %v1487
      %v1492 = vpack.c.b16 %v1490, %v1489
      %v1496 = vsel %vm671, %v1476, 0
      %1498 = vmatprep.subr.bf16.mxu0 0
      %1499 = vmatpush1.bf16.msra.mxu0 %v1491
      %1500 = vmatprep.subr.bf16.mxu0 0
      %1501 = vmatpush1.bf16.msra.mxu0 %v1492
      %1502 = vmatprep.subr.bf16.mxu0 0
      %1503 = vmatpush1.bf16.msra.mxu0 0
      %1504 = vmatprep.subr.bf16.mxu0 0
      %1505 = vmatpush1.bf16.msra.mxu0 0
      %1506 = vmatprep.subr.bf16.mxu0 0
      %1507 = vmatpush1.bf16.msra.mxu0 0
      %1508 = vmatprep.subr.bf16.mxu0 0
      %1509 = vmatpush1.bf16.msra.mxu0 0
      %1510 = vmatprep.subr.bf16.mxu0 0
      %1511 = vmatpush1.bf16.msra.mxu0 0
      %1512 = vmatprep.subr.bf16.mxu0 0
      %1513 = vmatpush1.bf16.msra.mxu0 0
      %1514 = vmatprep.subr.bf16.mxu0 0
      %1515 = vmatpush1.bf16.msra.mxu0 0
      %1516 = vmatprep.subr.bf16.mxu0 0
      %1517 = vmatpush1.bf16.msra.mxu0 0
      %1518 = vmatprep.subr.bf16.mxu0 0
      %1519 = vmatpush1.bf16.msra.mxu0 0
      %1520 = vmatprep.subr.bf16.mxu0 0
      %1521 = vmatpush1.bf16.msra.mxu0 0
      %1522 = vmatprep.subr.bf16.mxu0 0
      %1523 = vmatpush1.bf16.msra.mxu0 0
      %1524 = vmatprep.subr.bf16.mxu0 0
      %1525 = vmatpush1.bf16.msra.mxu0 0
      %1526 = vmatprep.subr.bf16.mxu0 0
      %1527 = vmatpush1.bf16.msra.mxu0 0
      %1528 = vmatprep.subr.bf16.mxu0 0
      %1529 = vmatpush1.bf16.msra.mxu0 0
      %1530 = vmatprep.mubr.bf16.mxu0 0
      %1531 = vmatmul.mubr.bf16.gmra.mrb[0].mxu0 %v1496
      %v1532 = vpop.f32.mrb[0].mxu0
      %v1533 = vadd.f32 %v1481, %v1532
      %v1534 = vpop.f32.mrb[0].mxu0
      %v1535 = vpop.f32.mrb[0].mxu0
      %v1536 = vpop.f32.mrb[0].mxu0
      %1537 = vdwg.mxu0
      %v1538 = vmul.f32 %v1533, 0.5
      %v1539 = vmul.f32 %v1533, 0.70710677
      %v1540 = vand.u32 2147483647, %v1539
      %v1541 = vmul.f32 %v1540, 0.3275911
      %v1542 = vadd.f32 %v1541, 1.0
      %v1543 = vrcp.pop %v1542
      %v1544 = vmul.f32 1.0, %v1543
      %v1545 = vmul.f32 %v1544, 1.0614054
      %v1546 = vadd.f32 %v1545, -1.4531521
      %v1547 = vmul.f32 %v1546, %v1544
      %v1548 = vadd.f32 %v1547, 1.4214138
      %v1549 = vmul.f32 %v1548, %v1544
      %v1550 = vadd.f32 %v1549, -0.28449672
      %v1551 = vmul.f32 %v1550, %v1544
      %v1552 = vadd.f32 %v1551, 0.2548296
      %v1553 = vmul.f32 %v1552, %v1544
      %v1554 = vsub.f32 0.0, %v1540
      %v1555 = vmul.f32 %v1554, %v1540
      %v1556 = vmul.f32 %v1555, 1.442695
      %v1557 = vpow.pop %v1556
      %v1558 = vmul.f32 %v1553, %v1557
      %v1559 = vsub.f32 1.0, %v1558
      %vm1560 = vcmp.lt.f32.partialorder %v1539, 0.0
      %v1561 = vsub.f32 0.0, %v1559
      %v1562 = vsel %vm1560, %v1561, %v1559
      %v1563 = vadd.f32 %v1562, 1.0
      %v1564 = vmul.f32 %v1538, %v1563
      %v1565 = vadd.f32 %v1470, %v1564
      %vm1566 = vcmask 126976
      %1567 = vst.msk [vmem:[%s612] sm:$0x1f] %vm1566, %v1565
      %p1568 = scmp.lt.s32.totalorder %s30, 1
      %s1569 = scalar_select %p1568, %s30, 1
      %s1570 = smul.addr %s1569, 8
      %s1571 = scalar_lea.vmem %s17, %s1570
      %p1572 = scmp.lt.s32.totalorder %s30, 1
      %s1573 = scalar_select %p1572, %s30, 1
      %s1574 = smul.addr %s1573, 8
      %s1575 = scalar_lea.vmem %s18, %s1574
      // Predicated region
      $region89: #{ltt_vit_explainer_forward.11} parent=87 // pred_check
        %p1576 = pneg %p420
      $region90: #{ltt_vit_explainer_forward.11} parent=87 // pred_check_branch
        %1578 = sbr.rel (%p1576) target = $region92
      $region91: #{ltt_vit_explainer_forward.11} parent=87 // pred_region
        _
      $region92: #{ltt_vit_explainer_forward.11} parent=87 // pred_fallthru
        _
      // Predicated region
      $region93: #{ltt_vit_explainer_forward.11} parent=87 // pred_check
        %p1579 = pneg %p446
      $region94: #{ltt_vit_explainer_forward.11} parent=87 // pred_check_branch
        %1581 = sbr.rel (%p1579) target = $region96
      $region95: #{ltt_vit_explainer_forward.11} parent=87 // pred_region
        _
      $region96: #{ltt_vit_explainer_forward.11} parent=87 // pred_fallthru
        _
    $region88: #{ltt_vit_explainer_forward.11} parent=5 // pred_fallthru
      _
    %p1582 = scmp.le.s32.totalorder 2, %s25
    // Predicated region
    $region97: #{ltt_vit_explainer_forward.11} parent=5 // pred_check
      %p1583 = pneg %p1582
    $region98: #{ltt_vit_explainer_forward.11} parent=5 // pred_check_branch
      %1585 = sbr.rel (%p1583) target = $region100
    $region99: #{ltt_vit_explainer_forward.11} parent=5 // pred_region
      %s1586 = ssub.s32 %s25, 2
      // Predicated region
      $region101: #{ltt_vit_explainer_forward.11} parent=99 // pred_check
        %p1587 = pneg %p426
      $region102: #{ltt_vit_explainer_forward.11} parent=99 // pred_check_branch
        %1589 = sbr.rel (%p1587) target = $region104
      $region103: #{ltt_vit_explainer_forward.11} parent=99 // pred_region
        %p1590 = scmp.lt.s32.totalorder %s31, 1
        %s1591 = scalar_select %p1590, %s31, 1
        %s1592 = smul.addr %s1591, 8
        %s1593 = scalar_lea.vmem %s17, %s1592
      $region104: #{ltt_vit_explainer_forward.11} parent=99 // pred_fallthru
        _
      // Predicated region
      $region105: #{ltt_vit_explainer_forward.11} parent=99 // pred_check
        %p1594 = pneg %p452
      $region106: #{ltt_vit_explainer_forward.11} parent=99 // pred_check_branch
        %1596 = sbr.rel (%p1594) target = $region108
      $region107: #{ltt_vit_explainer_forward.11} parent=99 // pred_region
        %p1597 = scmp.lt.s32.totalorder %s31, 1
        %s1598 = scalar_select %p1597, %s31, 1
        %s1599 = smul.addr %s1598, 8
        %s1600 = scalar_lea.vmem %s18, %s1599
      $region108: #{ltt_vit_explainer_forward.11} parent=99 // pred_fallthru
        _
    $region100: #{ltt_vit_explainer_forward.11} parent=5 // pred_fallthru
      _
  $region6: #{ltt_vit_explainer_forward.11} parent=0 // loop_footer
    %s29 = sadd.s32 1, %s25
  $region7: #{ltt_vit_explainer_forward.11} parent=0 // loop_footer_branch
    %24 = sbr.rel target = $region3
  $region8: #{ltt_vit_explainer_forward.11} parent=0 // loop_exit
    _

// kernel: ltt_vit_explainer_forward.19
$region0: #{ltt_vit_explainer_forward.19}
  #allocation0 [shape = 'u32[]', space=smem, size = 0x4, offset = 0x4, fixed_abs, tag = 'smem constant byte address 0x4 - core index']
  #allocation1 [shape = 'u32[144,128]{1,0:T(1,128)}', space=vmem, size = 0x12000, scoped, tag = 'internal scratch']
  %s0 = inlined_call_operand.vmem [shape: f32[2,5,16], index: 0, kind: input, shape index: {}]
  %s1 = inlined_call_operand.vmem [shape: f32[1,16], index: 1, kind: input, shape index: {}]
  %s2 = inlined_call_operand.vmem [shape: f32[1,16], index: 2, kind: input, shape index: {}]
  %s3 = inlined_call_operand.vmem [shape: bf16[16,24], index: 3, kind: input, shape index: {}]
  %s4 = inlined_call_operand.vmem [shape: f32[1,24], index: 4, kind: input, shape index: {}]
  %s5 = inlined_call_operand.vmem [shape: bf16[24,24], index: 5, kind: input, shape index: {}]
  %s6 = inlined_call_operand.vmem [shape: f32[1,24], index: 6, kind: input, shape index: {}]
  %s7 = inlined_call_operand.vmem [shape: bf16[24,10], index: 7, kind: input, shape index: {}]
  %s8 = inlined_call_operand.vmem [shape: f32[1,10], index: 8, kind: input, shape index: {}]
  %s9 = inlined_call_operand.vmem [shape: f32[2,5,10], index: 9, kind: output, shape index: {}]
  %s10 = sld [smem:[#allocation0]]
  $region69: #{ltt_vit_explainer_forward.19} parent=0
    _
  %s12 = ssub.s32 1, %s10
  %s13 = scalar_select 0, %s12, %s10
  loop: start=0, step=1, limit=4
  $region2: #{ltt_vit_explainer_forward.19} parent=0 // loop_pre_header
    _
  $region3: #{ltt_vit_explainer_forward.19} parent=0 // loop_header
    %s15 = sphi 0, %s19
    %p16 = scmp.ge.s32.totalorder %s15, 4
    %s25 = sphi 0, %s27
    %s28 = sphi 0, %s25
    %s29 = sphi 0, %s28
    %s45 = sphi 0, %s29
    %s49 = sphi 0, %s49
    %s51 = sphi 0, %s49
    %s52 = sphi 0, %s51
    %s66 = sphi 0, %s52
    %s70 = sphi 0, %s70
    %s72 = sphi 0, %s70
    %s73 = sphi 0, %s72
    %s87 = sphi 0, %s73
    %s91 = sphi 0, %s91
    %s93 = sphi 0, %s91
    %s94 = sphi 0, %s93
    %s108 = sphi 0, %s94
    %s112 = sphi 0, %s112
    %s114 = sphi 0, %s112
    %s115 = sphi 0, %s114
    %s129 = sphi 0, %s115
    %s133 = sphi 0, %s133
    %s135 = sphi 0, %s133
    %s136 = sphi 0, %s135
    %s150 = sphi 0, %s136
    %s154 = sphi 0, %s154
    %s156 = sphi 0, %s154
    %s157 = sphi 0, %s156
    %s171 = sphi 0, %s157
    %s175 = sphi 0, %s175
    %s177 = sphi 0, %s175
    %s178 = sphi 0, %s177
    %s192 = sphi 0, %s178
    %s196 = sphi 0, %s196
    %s198 = sphi 0, %s196
    %s199 = sphi 0, %s198
    %s213 = sphi 0, %s199
    %s219 = sphi 0, %s221
    %s222 = sphi 0, %s219
    %s223 = sphi 0, %s222
    %s239 = sphi 0, %s223
  $region4: #{ltt_vit_explainer_forward.19} parent=0 // loop_header_branch
    %18 = sbr.rel (%p16) target = $region8
  $region5: #{ltt_vit_explainer_forward.19} parent=0 // loop_body
    %s20 = ssub.s32 %s15, 1
    %s21 = ssub.s32 %s15, 2
    %s22 = sadd.s32 %s15, 1
    %s23 = ssub.s32 %s15, %s22
    %p24 = scmp.eq.s32.totalorder %s23, 0
    %s26 = sadd.s32 %s25, 1
    %s27 = scalar_select %p24, %s25, %s26
    %p30 = pneg %p24
    %p31 = scmp.eq.s32.totalorder %s15, 1
    %p32 = por %p30, %p31
    %p33 = scmp.ne.s32.totalorder %s25, %s28
    %p34 = scmp.eq.s32.totalorder %s15, 0
    %p35 = por %p33, %p34
    %p36 = scmp.ne.s32.totalorder %s25, %s28
    %p37 = scmp.eq.s32.totalorder %s20, 1
    %p38 = por %p36, %p37
    %p39 = scmp.ne.s32.totalorder %s28, %s29
    %p40 = scmp.eq.s32.totalorder %s20, 0
    %p41 = por %p39, %p40
    %p42 = scmp.ne.s32.totalorder %s28, %s29
    %p43 = scmp.eq.s32.totalorder %s21, 1
    %p44 = por %p42, %p43
    %p46 = scmp.ne.s32.totalorder %s29, %s45
    %p47 = scmp.eq.s32.totalorder %s21, 0
    %p48 = por %p46, %p47
    %s50 = sadd.s32 %s49, 1
    %p53 = scmp.eq.s32.totalorder %s15, 1
    %p54 = scmp.ne.s32.totalorder %s49, %s51
    %p55 = scmp.eq.s32.totalorder %s15, 0
    %p56 = por %p54, %p55
    %p57 = scmp.ne.s32.totalorder %s49, %s51
    %p58 = scmp.eq.s32.totalorder %s20, 1
    %p59 = por %p57, %p58
    %p60 = scmp.ne.s32.totalorder %s51, %s52
    %p61 = scmp.eq.s32.totalorder %s20, 0
    %p62 = por %p60, %p61
    %p63 = scmp.ne.s32.totalorder %s51, %s52
    %p64 = scmp.eq.s32.totalorder %s21, 1
    %p65 = por %p63, %p64
    %p67 = scmp.ne.s32.totalorder %s52, %s66
    %p68 = scmp.eq.s32.totalorder %s21, 0
    %p69 = por %p67, %p68
    %s71 = sadd.s32 %s70, 1
    %p74 = scmp.eq.s32.totalorder %s15, 1
    %p75 = scmp.ne.s32.totalorder %s70, %s72
    %p76 = scmp.eq.s32.totalorder %s15, 0
    %p77 = por %p75, %p76
    %p78 = scmp.ne.s32.totalorder %s70, %s72
    %p79 = scmp.eq.s32.totalorder %s20, 1
    %p80 = por %p78, %p79
    %p81 = scmp.ne.s32.totalorder %s72, %s73
    %p82 = scmp.eq.s32.totalorder %s20, 0
    %p83 = por %p81, %p82
    %p84 = scmp.ne.s32.totalorder %s72, %s73
    %p85 = scmp.eq.s32.totalorder %s21, 1
    %p86 = por %p84, %p85
    %p88 = scmp.ne.s32.totalorder %s73, %s87
    %p89 = scmp.eq.s32.totalorder %s21, 0
    %p90 = por %p88, %p89
    %s92 = sadd.s32 %s91, 1
    %p95 = scmp.eq.s32.totalorder %s15, 1
    %p96 = scmp.ne.s32.totalorder %s91, %s93
    %p97 = scmp.eq.s32.totalorder %s15, 0
    %p98 = por %p96, %p97
    %p99 = scmp.ne.s32.totalorder %s91, %s93
    %p100 = scmp.eq.s32.totalorder %s20, 1
    %p101 = por %p99, %p100
    %p102 = scmp.ne.s32.totalorder %s93, %s94
    %p103 = scmp.eq.s32.totalorder %s20, 0
    %p104 = por %p102, %p103
    %p105 = scmp.ne.s32.totalorder %s93, %s94
    %p106 = scmp.eq.s32.totalorder %s21, 1
    %p107 = por %p105, %p106
    %p109 = scmp.ne.s32.totalorder %s94, %s108
    %p110 = scmp.eq.s32.totalorder %s21, 0
    %p111 = por %p109, %p110
    %s113 = sadd.s32 %s112, 1
    %p116 = scmp.eq.s32.totalorder %s15, 1
    %p117 = scmp.ne.s32.totalorder %s112, %s114
    %p118 = scmp.eq.s32.totalorder %s15, 0
    %p119 = por %p117, %p118
    %p120 = scmp.ne.s32.totalorder %s112, %s114
    %p121 = scmp.eq.s32.totalorder %s20, 1
    %p122 = por %p120, %p121
    %p123 = scmp.ne.s32.totalorder %s114, %s115
    %p124 = scmp.eq.s32.totalorder %s20, 0
    %p125 = por %p123, %p124
    %p126 = scmp.ne.s32.totalorder %s114, %s115
    %p127 = scmp.eq.s32.totalorder %s21, 1
    %p128 = por %p126, %p127
    %p130 = scmp.ne.s32.totalorder %s115, %s129
    %p131 = scmp.eq.s32.totalorder %s21, 0
    %p132 = por %p130, %p131
    %s134 = sadd.s32 %s133, 1
    %p137 = scmp.eq.s32.totalorder %s15, 1
    %p138 = scmp.ne.s32.totalorder %s133, %s135
    %p139 = scmp.eq.s32.totalorder %s15, 0
    %p140 = por %p138, %p139
    %p141 = scmp.ne.s32.totalorder %s133, %s135
    %p142 = scmp.eq.s32.totalorder %s20, 1
    %p143 = por %p141, %p142
    %p144 = scmp.ne.s32.totalorder %s135, %s136
    %p145 = scmp.eq.s32.totalorder %s20, 0
    %p146 = por %p144, %p145
    %p147 = scmp.ne.s32.totalorder %s135, %s136
    %p148 = scmp.eq.s32.totalorder %s21, 1
    %p149 = por %p147, %p148
    %p151 = scmp.ne.s32.totalorder %s136, %s150
    %p152 = scmp.eq.s32.totalorder %s21, 0
    %p153 = por %p151, %p152
    %s155 = sadd.s32 %s154, 1
    %p158 = scmp.eq.s32.totalorder %s15, 1
    %p159 = scmp.ne.s32.totalorder %s154, %s156
    %p160 = scmp.eq.s32.totalorder %s15, 0
    %p161 = por %p159, %p160
    %p162 = scmp.ne.s32.totalorder %s154, %s156
    %p163 = scmp.eq.s32.totalorder %s20, 1
    %p164 = por %p162, %p163
    %p165 = scmp.ne.s32.totalorder %s156, %s157
    %p166 = scmp.eq.s32.totalorder %s20, 0
    %p167 = por %p165, %p166
    %p168 = scmp.ne.s32.totalorder %s156, %s157
    %p169 = scmp.eq.s32.totalorder %s21, 1
    %p170 = por %p168, %p169
    %p172 = scmp.ne.s32.totalorder %s157, %s171
    %p173 = scmp.eq.s32.totalorder %s21, 0
    %p174 = por %p172, %p173
    %s176 = sadd.s32 %s175, 1
    %p179 = scmp.eq.s32.totalorder %s15, 1
    %p180 = scmp.ne.s32.totalorder %s175, %s177
    %p181 = scmp.eq.s32.totalorder %s15, 0
    %p182 = por %p180, %p181
    %p183 = scmp.ne.s32.totalorder %s175, %s177
    %p184 = scmp.eq.s32.totalorder %s20, 1
    %p185 = por %p183, %p184
    %p186 = scmp.ne.s32.totalorder %s177, %s178
    %p187 = scmp.eq.s32.totalorder %s20, 0
    %p188 = por %p186, %p187
    %p189 = scmp.ne.s32.totalorder %s177, %s178
    %p190 = scmp.eq.s32.totalorder %s21, 1
    %p191 = por %p189, %p190
    %p193 = scmp.ne.s32.totalorder %s178, %s192
    %p194 = scmp.eq.s32.totalorder %s21, 0
    %p195 = por %p193, %p194
    %s197 = sadd.s32 %s196, 1
    %p200 = scmp.eq.s32.totalorder %s15, 1
    %p201 = scmp.ne.s32.totalorder %s196, %s198
    %p202 = scmp.eq.s32.totalorder %s15, 0
    %p203 = por %p201, %p202
    %p204 = scmp.ne.s32.totalorder %s196, %s198
    %p205 = scmp.eq.s32.totalorder %s20, 1
    %p206 = por %p204, %p205
    %p207 = scmp.ne.s32.totalorder %s198, %s199
    %p208 = scmp.eq.s32.totalorder %s20, 0
    %p209 = por %p207, %p208
    %p210 = scmp.ne.s32.totalorder %s198, %s199
    %p211 = scmp.eq.s32.totalorder %s21, 1
    %p212 = por %p210, %p211
    %p214 = scmp.ne.s32.totalorder %s199, %s213
    %p215 = scmp.eq.s32.totalorder %s21, 0
    %p216 = por %p214, %p215
    %s217 = ssub.s32 %s15, %s22
    %p218 = scmp.eq.s32.totalorder %s217, 0
    %s220 = sadd.s32 %s219, 1
    %s221 = scalar_select %p218, %s219, %s220
    %p224 = pneg %p218
    %p225 = scmp.eq.s32.totalorder %s15, 1
    %p226 = por %p224, %p225
    %p227 = scmp.ne.s32.totalorder %s219, %s222
    %p228 = scmp.eq.s32.totalorder %s15, 0
    %p229 = por %p227, %p228
    %p230 = scmp.ne.s32.totalorder %s219, %s222
    %p231 = scmp.eq.s32.totalorder %s20, 1
    %p232 = por %p230, %p231
    %p233 = scmp.ne.s32.totalorder %s222, %s223
    %p234 = scmp.eq.s32.totalorder %s20, 0
    %p235 = por %p233, %p234
    %p236 = scmp.ne.s32.totalorder %s222, %s223
    %p237 = scmp.eq.s32.totalorder %s21, 1
    %p238 = por %p236, %p237
    %p240 = scmp.ne.s32.totalorder %s223, %s239
    %p241 = scmp.eq.s32.totalorder %s21, 0
    %p242 = por %p240, %p241
    %p243 = scmp.le.s32.totalorder 1, %s15
    %p244 = scmp.lt.s32.totalorder %s15, 3
    %p245 = pnand %p243, %p244
    %p246 = pneg %p245
    // Predicated region
    $region9: #{ltt_vit_explainer_forward.19} parent=5 // pred_check
      _
    $region10: #{ltt_vit_explainer_forward.19} parent=5 // pred_check_branch
      %248 = sbr.rel (%p245) target = $region12
    $region11: #{ltt_vit_explainer_forward.19} parent=5 // pred_region
      %s249 = ssub.s32 %s15, 1
      // Predicated region
      $region13: #{ltt_vit_explainer_forward.19} parent=11 // pred_check
        %p250 = pneg %p62
      $region14: #{ltt_vit_explainer_forward.19} parent=11 // pred_check_branch
        %252 = sbr.rel (%p250) target = $region16
      $region15: #{ltt_vit_explainer_forward.19} parent=11 // pred_region
        _
      $region16: #{ltt_vit_explainer_forward.19} parent=11 // pred_fallthru
        _
      // Predicated region
      $region17: #{ltt_vit_explainer_forward.19} parent=11 // pred_check
        %p253 = pneg %p83
      $region18: #{ltt_vit_explainer_forward.19} parent=11 // pred_check_branch
        %255 = sbr.rel (%p253) target = $region20
      $region19: #{ltt_vit_explainer_forward.19} parent=11 // pred_region
        _
      $region20: #{ltt_vit_explainer_forward.19} parent=11 // pred_fallthru
        _
      // Predicated region
      $region21: #{ltt_vit_explainer_forward.19} parent=11 // pred_check
        %p256 = pneg %p104
      $region22: #{ltt_vit_explainer_forward.19} parent=11 // pred_check_branch
        %258 = sbr.rel (%p256) target = $region24
      $region23: #{ltt_vit_explainer_forward.19} parent=11 // pred_region
        _
      $region24: #{ltt_vit_explainer_forward.19} parent=11 // pred_fallthru
        _
      // Predicated region
      $region25: #{ltt_vit_explainer_forward.19} parent=11 // pred_check
        %p259 = pneg %p125
      $region26: #{ltt_vit_explainer_forward.19} parent=11 // pred_check_branch
        %261 = sbr.rel (%p259) target = $region28
      $region27: #{ltt_vit_explainer_forward.19} parent=11 // pred_region
        _
      $region28: #{ltt_vit_explainer_forward.19} parent=11 // pred_fallthru
        _
      // Predicated region
      $region29: #{ltt_vit_explainer_forward.19} parent=11 // pred_check
        %p262 = pneg %p146
      $region30: #{ltt_vit_explainer_forward.19} parent=11 // pred_check_branch
        %264 = sbr.rel (%p262) target = $region32
      $region31: #{ltt_vit_explainer_forward.19} parent=11 // pred_region
        _
      $region32: #{ltt_vit_explainer_forward.19} parent=11 // pred_fallthru
        _
      // Predicated region
      $region33: #{ltt_vit_explainer_forward.19} parent=11 // pred_check
        %p265 = pneg %p167
      $region34: #{ltt_vit_explainer_forward.19} parent=11 // pred_check_branch
        %267 = sbr.rel (%p265) target = $region36
      $region35: #{ltt_vit_explainer_forward.19} parent=11 // pred_region
        _
      $region36: #{ltt_vit_explainer_forward.19} parent=11 // pred_fallthru
        _
      // Predicated region
      $region37: #{ltt_vit_explainer_forward.19} parent=11 // pred_check
        %p268 = pneg %p188
      $region38: #{ltt_vit_explainer_forward.19} parent=11 // pred_check_branch
        %270 = sbr.rel (%p268) target = $region40
      $region39: #{ltt_vit_explainer_forward.19} parent=11 // pred_region
        _
      $region40: #{ltt_vit_explainer_forward.19} parent=11 // pred_fallthru
        _
      // Predicated region
      $region41: #{ltt_vit_explainer_forward.19} parent=11 // pred_check
        %p271 = pneg %p209
      $region42: #{ltt_vit_explainer_forward.19} parent=11 // pred_check_branch
        %273 = sbr.rel (%p271) target = $region44
      $region43: #{ltt_vit_explainer_forward.19} parent=11 // pred_region
        _
      $region44: #{ltt_vit_explainer_forward.19} parent=11 // pred_fallthru
        _
    $region12: #{ltt_vit_explainer_forward.19} parent=5 // pred_fallthru
      _
    %p274 = scmp.lt.s32.totalorder %s15, 2
    // Predicated region
    $region45: #{ltt_vit_explainer_forward.19} parent=5 // pred_check
      %p275 = pneg %p274
    $region46: #{ltt_vit_explainer_forward.19} parent=5 // pred_check_branch
      %277 = sbr.rel (%p275) target = $region48
    $region47: #{ltt_vit_explainer_forward.19} parent=5 // pred_region
      // Predicated region
      $region49: #{ltt_vit_explainer_forward.19} parent=47 // pred_check
        %p278 = pneg %p35
      $region50: #{ltt_vit_explainer_forward.19} parent=47 // pred_check_branch
        %280 = sbr.rel (%p278) target = $region52
      $region51: #{ltt_vit_explainer_forward.19} parent=47 // pred_region
        %p281 = scmp.lt.s32.totalorder %s15, 1
        %s282 = scalar_select %p281, %s15, 1
        %s283 = smul.addr %s282, 8
        %s284 = scalar_lea.vmem %s0, %s283
      $region52: #{ltt_vit_explainer_forward.19} parent=47 // pred_fallthru
        _
    $region48: #{ltt_vit_explainer_forward.19} parent=5 // pred_fallthru
      _
    %p285 = scmp.le.s32.totalorder 1, %s15
    %p286 = scmp.lt.s32.totalorder %s15, 3
    %p287 = pnand %p285, %p286
    %p288 = pneg %p287
    // Predicated region
    $region53: #{ltt_vit_explainer_forward.19} parent=5 // pred_check
      _
    $region54: #{ltt_vit_explainer_forward.19} parent=5 // pred_check_branch
      %290 = sbr.rel (%p287) target = $region56
    $region55: #{ltt_vit_explainer_forward.19} parent=5 // pred_region
      %s291 = ssub.s32 %s15, 1
      %p292 = scmp.lt.s32.totalorder %s20, 1
      %s293 = scalar_select %p292, %s20, 1
      %s294 = smul.addr %s293, 8
      %s295 = scalar_lea.vmem %s0, %s294
      %p296 = pneg %p41
      %p297 = pneg %p38
      %p298 = pneg %p62
      %p299 = pneg %p59
      %p300 = pneg %p83
      %p301 = pneg %p80
      %p302 = pneg %p104
      %p303 = pneg %p101
      %p304 = pneg %p125
      %p305 = pneg %p122
      %p306 = pneg %p146
      %p307 = pneg %p143
      %p308 = pneg %p167
      %p309 = pneg %p164
      %p310 = pneg %p188
      %p311 = pneg %p185
      %p312 = pneg %p209
      %p313 = pneg %p206
      %p314 = pneg %p235
      %p315 = pneg %p232
      %p316 = scmp.lt.s32.totalorder %s20, 1
      %s317 = scalar_select %p316, %s20, 1
      %s318 = smul.addr %s317, 8
      %s319 = scalar_lea.vmem %s9, %s318
      %p320 = scmp.lt.s32.totalorder %s20, 1
      %s321 = scalar_select %p320, %s20, 1
      %s322 = smul.addr %s321, 8
      %s323 = scalar_lea.vmem %s0, %s322
      %p324 = scmp.lt.s32.totalorder %s20, 1
      %s325 = scalar_select %p324, %s20, 1
      %s326 = smul.addr %s325, 8
      %s327 = scalar_lea.vmem %s9, %s326
      %v329 = vld [vmem:[%s323] sm:$0x1f]
      %v330 = vld [vmem:[%s1] sm:$0x1]
      %v331 = vld [vmem:[%s2] sm:$0x1]
      %vm332 = vcmask 126976
      %v333 = vsel %vm332, %v329, 0.0
      %334 = vadd.xlane.f32.xlu0 %v333
      %v335 = vpop.xlane.xlu0 %334
      %v336 = vrcp.pop 16.0
      %v337 = vmul.f32 %v335, %v336
      %v338 = vsub.f32 %v329, %v337
      %v339 = vmul.f32 %v338, %v338
      %v340 = vsel %vm332, %v339, 0.0
      %341 = vadd.xlane.f32.xlu0 %v340
      %v342 = vpop.xlane.xlu0 %341
      %v343 = vmul.f32 %v342, %v336
      %v344 = vadd.f32 %v343, 1e-05
      %v345 = vrsqrt.pop %v344
      %v346 = vmul.f32 %v338, %v345
      %v348 = vlaneseq
      %v349 = vshrl.u32 %v348, 7
      %v350 = vsub.s32 0, %v349
      %v351 = vrot.slane %v330, %v350
      %v353 = vmul.f32 %v346, %v351
      %v355 = vlaneseq
      %v356 = vshrl.u32 %v355, 7
      %v357 = vsub.s32 0, %v356
      %v358 = vrot.slane %v331, %v357
      %v360 = vadd.f32 %v353, %v358
      %v361 = vld [vmem:[%s3] sm:$0xf]
      %v362 = vld [vmem:[%s3 + $0x4] sm:$0xf]
      %v363 = vld [vmem:[%s4] sm:$0x1]
      %v364 = vpack.c.bf16 %v360, %v360
      %v366 = vlaneseq
      %v367 = vshrl.u32 %v366, 7
      %v368 = vsub.s32 0, %v367
      %v369 = vrot.slane %v363, %v368
      %v373 = vunpack.c.l.b16 %v361
      %v374 = vunpack.c.l.b16 %v362
      %v375 = vpack.c.b16 %v374, %v373
      %vm377 = vcmask 130048
      %v379 = vsel %vm377, %v364, 0
      %381 = vmatprep.subr.bf16.mxu0 0
      %382 = vmatpush1.bf16.msra.mxu0 %v375
      %383 = vmatprep.subr.bf16.mxu0 0
      %384 = vmatpush1.bf16.msra.mxu0 0
      %385 = vmatprep.subr.bf16.mxu0 0
      %386 = vmatpush1.bf16.msra.mxu0 0
      %387 = vmatprep.subr.bf16.mxu0 0
      %388 = vmatpush1.bf16.msra.mxu0 0
      %389 = vmatprep.subr.bf16.mxu0 0
      %390 = vmatpush1.bf16.msra.mxu0 0
      %391 = vmatprep.subr.bf16.mxu0 0
      %392 = vmatpush1.bf16.msra.mxu0 0
      %393 = vmatprep.subr.bf16.mxu0 0
      %394 = vmatpush1.bf16.msra.mxu0 0
      %395 = vmatprep.subr.bf16.mxu0 0
      %396 = vmatpush1.bf16.msra.mxu0 0
      %397 = vmatprep.subr.bf16.mxu0 0
      %398 = vmatpush1.bf16.msra.mxu0 0
      %399 = vmatprep.subr.bf16.mxu0 0
      %400 = vmatpush1.bf16.msra.mxu0 0
      %401 = vmatprep.subr.bf16.mxu0 0
      %402 = vmatpush1.bf16.msra.mxu0 0
      %403 = vmatprep.subr.bf16.mxu0 0
      %404 = vmatpush1.bf16.msra.mxu0 0
      %405 = vmatprep.subr.bf16.mxu0 0
      %406 = vmatpush1.bf16.msra.mxu0 0
      %407 = vmatprep.subr.bf16.mxu0 0
      %408 = vmatpush1.bf16.msra.mxu0 0
      %409 = vmatprep.subr.bf16.mxu0 0
      %410 = vmatpush1.bf16.msra.mxu0 0
      %411 = vmatprep.subr.bf16.mxu0 0
      %412 = vmatpush1.bf16.msra.mxu0 0
      %413 = vmatprep.mubr.bf16.mxu0 0
      %414 = vmatmul.mubr.bf16.gmra.mrb[0].mxu0 %v379
      %v415 = vpop.f32.mrb[0].mxu0
      %v416 = vadd.f32 %v369, %v415
      %v417 = vpop.f32.mrb[0].mxu0
      %v418 = vpop.f32.mrb[0].mxu0
      %v419 = vpop.f32.mrb[0].mxu0
      %420 = vdwg.mxu0
      %v421 = vmul.f32 %v416, 0.5
      %v422 = vmul.f32 %v416, 0.70710677
      %v423 = vand.u32 2147483647, %v422
      %v424 = vmul.f32 %v423, 0.3275911
      %v425 = vadd.f32 %v424, 1.0
      %v426 = vrcp.pop %v425
      %v427 = vmul.f32 1.0, %v426
      %v428 = vmul.f32 %v427, 1.0614054
      %v429 = vadd.f32 %v428, -1.4531521
      %v430 = vmul.f32 %v429, %v427
      %v431 = vadd.f32 %v430, 1.4214138
      %v432 = vmul.f32 %v431, %v427
      %v433 = vadd.f32 %v432, -0.28449672
      %v434 = vmul.f32 %v433, %v427
      %v435 = vadd.f32 %v434, 0.2548296
      %v436 = vmul.f32 %v435, %v427
      %v437 = vsub.f32 0.0, %v423
      %v438 = vmul.f32 %v437, %v423
      %v439 = vmul.f32 %v438, 1.442695
      %v440 = vpow.pop %v439
      %v441 = vmul.f32 %v436, %v440
      %v442 = vsub.f32 1.0, %v441
      %vm443 = vcmp.lt.f32.partialorder %v422, 0.0
      %v444 = vsub.f32 0.0, %v442
      %v445 = vsel %vm443, %v444, %v442
      %v446 = vadd.f32 %v445, 1.0
      %v447 = vmul.f32 %v421, %v446
      %v448 = vld [vmem:[%s5] sm:$0xf]
      %v449 = vld [vmem:[%s5 + $0x4] sm:$0xf]
      %v450 = vld [vmem:[%s5 + $0x8] sm:$0xf]
      %v451 = vld [vmem:[%s6] sm:$0x1]
      %v452 = vpack.c.bf16 %v447, %v447
      %v454 = vlaneseq
      %v455 = vshrl.u32 %v454, 7
      %v456 = vsub.s32 0, %v455
      %v457 = vrot.slane %v451, %v456
      %v462 = vunpack.c.l.b16 %v448
      %v463 = vunpack.c.l.b16 %v449
      %v464 = vunpack.c.l.b16 %v450
      %v465 = vpack.c.b16 %v463, %v462
      %v466 = vpack.c.b16 %v464, %v464
      %vm468 = vcmask 195584
      %v470 = vsel %vm468, %v452, 0
      %vm472 = vcmask 1043456
      %v474 = vsel %vm472, %v466, 0
      %476 = vmatprep.subr.bf16.mxu0 0
      %477 = vmatpush1.bf16.msra.mxu0 %v465
      %478 = vmatprep.subr.bf16.mxu0 0
      %479 = vmatpush1.bf16.msra.mxu0 %v474
      %480 = vmatprep.subr.bf16.mxu0 0
      %481 = vmatpush1.bf16.msra.mxu0 0
      %482 = vmatprep.subr.bf16.mxu0 0
      %483 = vmatpush1.bf16.msra.mxu0 0
      %484 = vmatprep.subr.bf16.mxu0 0
      %485 = vmatpush1.bf16.msra.mxu0 0
      %486 = vmatprep.subr.bf16.mxu0 0
      %487 = vmatpush1.bf16.msra.mxu0 0
      %488 = vmatprep.subr.bf16.mxu0 0
      %489 = vmatpush1.bf16.msra.mxu0 0
      %490 = vmatprep.subr.bf16.mxu0 0
      %491 = vmatpush1.bf16.msra.mxu0 0
      %492 = vmatprep.subr.bf16.mxu0 0
      %493 = vmatpush1.bf16.msra.mxu0 0
      %494 = vmatprep.subr.bf16.mxu0 0
      %495 = vmatpush1.bf16.msra.mxu0 0
      %496 = vmatprep.subr.bf16.mxu0 0
      %497 = vmatpush1.bf16.msra.mxu0 0
      %498 = vmatprep.subr.bf16.mxu0 0
      %499 = vmatpush1.bf16.msra.mxu0 0
      %500 = vmatprep.subr.bf16.mxu0 0
      %501 = vmatpush1.bf16.msra.mxu0 0
      %502 = vmatprep.subr.bf16.mxu0 0
      %503 = vmatpush1.bf16.msra.mxu0 0
      %504 = vmatprep.subr.bf16.mxu0 0
      %505 = vmatpush1.bf16.msra.mxu0 0
      %506 = vmatprep.subr.bf16.mxu0 0
      %507 = vmatpush1.bf16.msra.mxu0 0
      %508 = vmatprep.mubr.bf16.mxu0 0
      %509 = vmatmul.mubr.bf16.gmra.mrb[0].mxu0 %v470
      %v510 = vpop.f32.mrb[0].mxu0
      %v511 = vadd.f32 %v457, %v510
      %v512 = vpop.f32.mrb[0].mxu0
      %v513 = vpop.f32.mrb[0].mxu0
      %v514 = vpop.f32.mrb[0].mxu0
      %515 = vdwg.mxu0
      %v516 = vmul.f32 %v511, 0.5
      %v517 = vmul.f32 %v511, 0.70710677
      %v518 = vand.u32 2147483647, %v517
      %v519 = vmul.f32 %v518, 0.3275911
      %v520 = vadd.f32 %v519, 1.0
      %v521 = vrcp.pop %v520
      %v522 = vmul.f32 1.0, %v521
      %v523 = vmul.f32 %v522, 1.0614054
      %v524 = vadd.f32 %v523, -1.4531521
      %v525 = vmul.f32 %v524, %v522
      %v526 = vadd.f32 %v525, 1.4214138
      %v527 = vmul.f32 %v526, %v522
      %v528 = vadd.f32 %v527, -0.28449672
      %v529 = vmul.f32 %v528, %v522
      %v530 = vadd.f32 %v529, 0.2548296
      %v531 = vmul.f32 %v530, %v522
      %v532 = vsub.f32 0.0, %v518
      %v533 = vmul.f32 %v532, %v518
      %v534 = vmul.f32 %v533, 1.442695
      %v535 = vpow.pop %v534
      %v536 = vmul.f32 %v531, %v535
      %v537 = vsub.f32 1.0, %v536
      %vm538 = vcmp.lt.f32.partialorder %v517, 0.0
      %v539 = vsub.f32 0.0, %v537
      %v540 = vsel %vm538, %v539, %v537
      %v541 = vadd.f32 %v540, 1.0
      %v542 = vmul.f32 %v516, %v541
      %v543 = vld [vmem:[%s7] sm:$0xf]
      %v544 = vld [vmem:[%s7 + $0x4] sm:$0xf]
      %v545 = vld [vmem:[%s7 + $0x8] sm:$0xf]
      %v546 = vld [vmem:[%s8] sm:$0x1]
      %v547 = vpack.c.bf16 %v542, %v542
      %v549 = vlaneseq
      %v550 = vshrl.u32 %v549, 7
      %v551 = vsub.s32 0, %v550
      %v552 = vrot.slane %v546, %v551
      %v557 = vunpack.c.l.b16 %v543
      %v558 = vunpack.c.l.b16 %v544
      %v559 = vunpack.c.l.b16 %v545
      %v560 = vpack.c.b16 %v558, %v557
      %v561 = vpack.c.b16 %v559, %v559
      %v564 = vsel %vm468, %v547, 0
      %v567 = vsel %vm472, %v561, 0
      %569 = vmatprep.subr.bf16.mxu0 0
      %570 = vmatpush1.bf16.msra.mxu0 %v560
      %571 = vmatprep.subr.bf16.mxu0 0
      %572 = vmatpush1.bf16.msra.mxu0 %v567
      %573 = vmatprep.subr.bf16.mxu0 0
      %574 = vmatpush1.bf16.msra.mxu0 0
      %575 = vmatprep.subr.bf16.mxu0 0
      %576 = vmatpush1.bf16.msra.mxu0 0
      %577 = vmatprep.subr.bf16.mxu0 0
      %578 = vmatpush1.bf16.msra.mxu0 0
      %579 = vmatprep.subr.bf16.mxu0 0
      %580 = vmatpush1.bf16.msra.mxu0 0
      %581 = vmatprep.subr.bf16.mxu0 0
      %582 = vmatpush1.bf16.msra.mxu0 0
      %583 = vmatprep.subr.bf16.mxu0 0
      %584 = vmatpush1.bf16.msra.mxu0 0
      %585 = vmatprep.subr.bf16.mxu0 0
      %586 = vmatpush1.bf16.msra.mxu0 0
      %587 = vmatprep.subr.bf16.mxu0 0
      %588 = vmatpush1.bf16.msra.mxu0 0
      %589 = vmatprep.subr.bf16.mxu0 0
      %590 = vmatpush1.bf16.msra.mxu0 0
      %591 = vmatprep.subr.bf16.mxu0 0
      %592 = vmatpush1.bf16.msra.mxu0 0
      %593 = vmatprep.subr.bf16.mxu0 0
      %594 = vmatpush1.bf16.msra.mxu0 0
      %595 = vmatprep.subr.bf16.mxu0 0
      %596 = vmatpush1.bf16.msra.mxu0 0
      %597 = vmatprep.subr.bf16.mxu0 0
      %598 = vmatpush1.bf16.msra.mxu0 0
      %599 = vmatprep.subr.bf16.mxu0 0
      %600 = vmatpush1.bf16.msra.mxu0 0
      %601 = vmatprep.mubr.bf16.mxu0 0
      %602 = vmatmul.mubr.bf16.gmra.mrb[0].mxu0 %v564
      %v603 = vpop.f32.mrb[0].mxu0
      %v604 = vadd.f32 %v552, %v603
      %v605 = vpop.f32.mrb[0].mxu0
      %v606 = vpop.f32.mrb[0].mxu0
      %v607 = vpop.f32.mrb[0].mxu0
      %608 = vdwg.mxu0
      %vm609 = vcmask 77824
      %610 = vst.msk [vmem:[%s327] sm:$0x1f] %vm609, %v604
      %p611 = scmp.lt.s32.totalorder %s20, 1
      %s612 = scalar_select %p611, %s20, 1
      %s613 = smul.addr %s612, 8
      %s614 = scalar_lea.vmem %s9, %s613
      // Predicated region
      $region57: #{ltt_vit_explainer_forward.19} parent=55 // pred_check
        %p615 = pneg %p232
      $region58: #{ltt_vit_explainer_forward.19} parent=55 // pred_check_branch
        %617 = sbr.rel (%p615) target = $region60
      $region59: #{ltt_vit_explainer_forward.19} parent=55 // pred_region
        _
      $region60: #{ltt_vit_explainer_forward.19} parent=55 // pred_fallthru
        _
    $region56: #{ltt_vit_explainer_forward.19} parent=5 // pred_fallthru
      _
    %p618 = scmp.le.s32.totalorder 2, %s15
    // Predicated region
    $region61: #{ltt_vit_explainer_forward.19} parent=5 // pred_check
      %p619 = pneg %p618
    $region62: #{ltt_vit_explainer_forward.19} parent=5 // pred_check_branch
      %621 = sbr.rel (%p619) target = $region64
    $region63: #{ltt_vit_explainer_forward.19} parent=5 // pred_region
      %s622 = ssub.s32 %s15, 2
      // Predicated region
      $region65: #{ltt_vit_explainer_forward.19} parent=63 // pred_check
        %p623 = pneg %p238
      $region66: #{ltt_vit_explainer_forward.19} parent=63 // pred_check_branch
        %625 = sbr.rel (%p623) target = $region68
      $region67: #{ltt_vit_explainer_forward.19} parent=63 // pred_region
        %p626 = scmp.lt.s32.totalorder %s21, 1
        %s627 = scalar_select %p626, %s21, 1
        %s628 = smul.addr %s627, 8
        %s629 = scalar_lea.vmem %s9, %s628
      $region68: #{ltt_vit_explainer_forward.19} parent=63 // pred_fallthru
        _
    $region64: #{ltt_vit_explainer_forward.19} parent=5 // pred_fallthru
      _
  $region6: #{ltt_vit_explainer_forward.19} parent=0 // loop_footer
    %s19 = sadd.s32 1, %s15
  $region7: #{ltt_vit_explainer_forward.19} parent=0 // loop_footer_branch
    %14 = sbr.rel target = $region3
  $region8: #{ltt_vit_explainer_forward.19} parent=0 // loop_exit
    _

// kernel: ltt_vit_explainer_forward.17
$region0: #{ltt_vit_explainer_forward.17}
  #allocation0 [shape = 'u32[]', space=smem, size = 0x4, offset = 0x4, fixed_abs, tag = 'smem constant byte address 0x4 - core index']
  #allocation1 [shape = 'u32[144,128]{1,0:T(1,128)}', space=vmem, size = 0x12000, scoped, tag = 'internal scratch']
  %s0 = inlined_call_operand.vmem [shape: f32[2,5,16], index: 0, kind: input, shape index: {}]
  %s1 = inlined_call_operand.vmem [shape: f32[2,1,5], index: 1, kind: input, shape index: {}]
  %s2 = inlined_call_operand.vmem [shape: f32[1,16], index: 2, kind: input, shape index: {}]
  %s3 = inlined_call_operand.vmem [shape: f32[1,16], index: 3, kind: input, shape index: {}]
  %s4 = inlined_call_operand.vmem [shape: bf16[16,48], index: 4, kind: input, shape index: {}]
  %s5 = inlined_call_operand.vmem [shape: f32[1,48], index: 5, kind: input, shape index: {}]
  %s6 = inlined_call_operand.vmem [shape: bf16[16,16], index: 6, kind: input, shape index: {}]
  %s7 = inlined_call_operand.vmem [shape: f32[1,16], index: 7, kind: input, shape index: {}]
  %s8 = inlined_call_operand.vmem [shape: f32[1,16], index: 8, kind: input, shape index: {}]
  %s9 = inlined_call_operand.vmem [shape: f32[1,16], index: 9, kind: input, shape index: {}]
  %s10 = inlined_call_operand.vmem [shape: bf16[16,32], index: 10, kind: input, shape index: {}]
  %s11 = inlined_call_operand.vmem [shape: f32[1,32], index: 11, kind: input, shape index: {}]
  %s12 = inlined_call_operand.vmem [shape: bf16[32,16], index: 12, kind: input, shape index: {}]
  %s13 = inlined_call_operand.vmem [shape: f32[1,16], index: 13, kind: input, shape index: {}]
  %s14 = inlined_call_operand.vmem [shape: f32[2,5,16], index: 14, kind: output, shape index: {}]
  %s15 = sld [smem:[#allocation0]]
  $region89: #{ltt_vit_explainer_forward.17} parent=0
    _
  %s17 = ssub.s32 1, %s15
  %s18 = scalar_select 0, %s17, %s15
  loop: start=0, step=1, limit=4
  $region2: #{ltt_vit_explainer_forward.17} parent=0 // loop_pre_header
    _
  $region3: #{ltt_vit_explainer_forward.17} parent=0 // loop_header
    %s20 = sphi 0, %s24
    %p21 = scmp.ge.s32.totalorder %s20, 4
    %s30 = sphi 0, %s32
    %s33 = sphi 0, %s30
    %s34 = sphi 0, %s33
    %s50 = sphi 0, %s34
    %s56 = sphi 0, %s58
    %s59 = sphi 0, %s56
    %s60 = sphi 0, %s59
    %s76 = sphi 0, %s60
    %s80 = sphi 0, %s80
    %s82 = sphi 0, %s80
    %s83 = sphi 0, %s82
    %s97 = sphi 0, %s83
    %s101 = sphi 0, %s101
    %s103 = sphi 0, %s101
    %s104 = sphi 0, %s103
    %s118 = sphi 0, %s104
    %s122 = sphi 0, %s122
    %s124 = sphi 0, %s122
    %s125 = sphi 0, %s124
    %s139 = sphi 0, %s125
    %s143 = sphi 0, %s143
    %s145 = sphi 0, %s143
    %s146 = sphi 0, %s145
    %s160 = sphi 0, %s146
    %s164 = sphi 0, %s164
    %s166 = sphi 0, %s164
    %s167 = sphi 0, %s166
    %s181 = sphi 0, %s167
    %s185 = sphi 0, %s185
    %s187 = sphi 0, %s185
    %s188 = sphi 0, %s187
    %s202 = sphi 0, %s188
    %s206 = sphi 0, %s206
    %s208 = sphi 0, %s206
    %s209 = sphi 0, %s208
    %s223 = sphi 0, %s209
    %s227 = sphi 0, %s227
    %s229 = sphi 0, %s227
    %s230 = sphi 0, %s229
    %s244 = sphi 0, %s230
    %s248 = sphi 0, %s248
    %s250 = sphi 0, %s248
    %s251 = sphi 0, %s250
    %s265 = sphi 0, %s251
    %s269 = sphi 0, %s269
    %s271 = sphi 0, %s269
    %s272 = sphi 0, %s271
    %s286 = sphi 0, %s272
    %s290 = sphi 0, %s290
    %s292 = sphi 0, %s290
    %s293 = sphi 0, %s292
    %s307 = sphi 0, %s293
    %s311 = sphi 0, %s311
    %s313 = sphi 0, %s311
    %s314 = sphi 0, %s313
    %s328 = sphi 0, %s314
    %s334 = sphi 0, %s336
    %s337 = sphi 0, %s334
    %s338 = sphi 0, %s337
    %s354 = sphi 0, %s338
  $region4: #{ltt_vit_explainer_forward.17} parent=0 // loop_header_branch
    %23 = sbr.rel (%p21) target = $region8
  $region5: #{ltt_vit_explainer_forward.17} parent=0 // loop_body
    %s25 = ssub.s32 %s20, 1
    %s26 = ssub.s32 %s20, 2
    %s27 = sadd.s32 %s20, 1
    %s28 = ssub.s32 %s20, %s27
    %p29 = scmp.eq.s32.totalorder %s28, 0
    %s31 = sadd.s32 %s30, 1
    %s32 = scalar_select %p29, %s30, %s31
    %p35 = pneg %p29
    %p36 = scmp.eq.s32.totalorder %s20, 1
    %p37 = por %p35, %p36
    %p38 = scmp.ne.s32.totalorder %s30, %s33
    %p39 = scmp.eq.s32.totalorder %s20, 0
    %p40 = por %p38, %p39
    %p41 = scmp.ne.s32.totalorder %s30, %s33
    %p42 = scmp.eq.s32.totalorder %s25, 1
    %p43 = por %p41, %p42
    %p44 = scmp.ne.s32.totalorder %s33, %s34
    %p45 = scmp.eq.s32.totalorder %s25, 0
    %p46 = por %p44, %p45
    %p47 = scmp.ne.s32.totalorder %s33, %s34
    %p48 = scmp.eq.s32.totalorder %s26, 1
    %p49 = por %p47, %p48
    %p51 = scmp.ne.s32.totalorder %s34, %s50
    %p52 = scmp.eq.s32.totalorder %s26, 0
    %p53 = por %p51, %p52
    %s54 = ssub.s32 %s20, %s27
    %p55 = scmp.eq.s32.totalorder %s54, 0
    %s57 = sadd.s32 %s56, 1
    %s58 = scalar_select %p55, %s56, %s57
    %p61 = pneg %p55
    %p62 = scmp.eq.s32.totalorder %s20, 1
    %p63 = por %p61, %p62
    %p64 = scmp.ne.s32.totalorder %s56, %s59
    %p65 = scmp.eq.s32.totalorder %s20, 0
    %p66 = por %p64, %p65
    %p67 = scmp.ne.s32.totalorder %s56, %s59
    %p68 = scmp.eq.s32.totalorder %s25, 1
    %p69 = por %p67, %p68
    %p70 = scmp.ne.s32.totalorder %s59, %s60
    %p71 = scmp.eq.s32.totalorder %s25, 0
    %p72 = por %p70, %p71
    %p73 = scmp.ne.s32.totalorder %s59, %s60
    %p74 = scmp.eq.s32.totalorder %s26, 1
    %p75 = por %p73, %p74
    %p77 = scmp.ne.s32.totalorder %s60, %s76
    %p78 = scmp.eq.s32.totalorder %s26, 0
    %p79 = por %p77, %p78
    %s81 = sadd.s32 %s80, 1
    %p84 = scmp.eq.s32.totalorder %s20, 1
    %p85 = scmp.ne.s32.totalorder %s80, %s82
    %p86 = scmp.eq.s32.totalorder %s20, 0
    %p87 = por %p85, %p86
    %p88 = scmp.ne.s32.totalorder %s80, %s82
    %p89 = scmp.eq.s32.totalorder %s25, 1
    %p90 = por %p88, %p89
    %p91 = scmp.ne.s32.totalorder %s82, %s83
    %p92 = scmp.eq.s32.totalorder %s25, 0
    %p93 = por %p91, %p92
    %p94 = scmp.ne.s32.totalorder %s82, %s83
    %p95 = scmp.eq.s32.totalorder %s26, 1
    %p96 = por %p94, %p95
    %p98 = scmp.ne.s32.totalorder %s83, %s97
    %p99 = scmp.eq.s32.totalorder %s26, 0
    %p100 = por %p98, %p99
    %s102 = sadd.s32 %s101, 1
    %p105 = scmp.eq.s32.totalorder %s20, 1
    %p106 = scmp.ne.s32.totalorder %s101, %s103
    %p107 = scmp.eq.s32.totalorder %s20, 0
    %p108 = por %p106, %p107
    %p109 = scmp.ne.s32.totalorder %s101, %s103
    %p110 = scmp.eq.s32.totalorder %s25, 1
    %p111 = por %p109, %p110
    %p112 = scmp.ne.s32.totalorder %s103, %s104
    %p113 = scmp.eq.s32.totalorder %s25, 0
    %p114 = por %p112, %p113
    %p115 = scmp.ne.s32.totalorder %s103, %s104
    %p116 = scmp.eq.s32.totalorder %s26, 1
    %p117 = por %p115, %p116
    %p119 = scmp.ne.s32.totalorder %s104, %s118
    %p120 = scmp.eq.s32.totalorder %s26, 0
    %p121 = por %p119, %p120
    %s123 = sadd.s32 %s122, 1
    %p126 = scmp.eq.s32.totalorder %s20, 1
    %p127 = scmp.ne.s32.totalorder %s122, %s124
    %p128 = scmp.eq.s32.totalorder %s20, 0
    %p129 = por %p127, %p128
    %p130 = scmp.ne.s32.totalorder %s122, %s124
    %p131 = scmp.eq.s32.totalorder %s25, 1
    %p132 = por %p130, %p131
    %p133 = scmp.ne.s32.totalorder %s124, %s125
    %p134 = scmp.eq.s32.totalorder %s25, 0
    %p135 = por %p133, %p134
    %p136 = scmp.ne.s32.totalorder %s124, %s125
    %p137 = scmp.eq.s32.totalorder %s26, 1
    %p138 = por %p136, %p137
    %p140 = scmp.ne.s32.totalorder %s125, %s139
    %p141 = scmp.eq.s32.totalorder %s26, 0
    %p142 = por %p140, %p141
    %s144 = sadd.s32 %s143, 1
    %p147 = scmp.eq.s32.totalorder %s20, 1
    %p148 = scmp.ne.s32.totalorder %s143, %s145
    %p149 = scmp.eq.s32.totalorder %s20, 0
    %p150 = por %p148, %p149
    %p151 = scmp.ne.s32.totalorder %s143, %s145
    %p152 = scmp.eq.s32.totalorder %s25, 1
    %p153 = por %p151, %p152
    %p154 = scmp.ne.s32.totalorder %s145, %s146
    %p155 = scmp.eq.s32.totalorder %s25, 0
    %p156 = por %p154, %p155
    %p157 = scmp.ne.s32.totalorder %s145, %s146
    %p158 = scmp.eq.s32.totalorder %s26, 1
    %p159 = por %p157, %p158
    %p161 = scmp.ne.s32.totalorder %s146, %s160
    %p162 = scmp.eq.s32.totalorder %s26, 0
    %p163 = por %p161, %p162
    %s165 = sadd.s32 %s164, 1
    %p168 = scmp.eq.s32.totalorder %s20, 1
    %p169 = scmp.ne.s32.totalorder %s164, %s166
    %p170 = scmp.eq.s32.totalorder %s20, 0
    %p171 = por %p169, %p170
    %p172 = scmp.ne.s32.totalorder %s164, %s166
    %p173 = scmp.eq.s32.totalorder %s25, 1
    %p174 = por %p172, %p173
    %p175 = scmp.ne.s32.totalorder %s166, %s167
    %p176 = scmp.eq.s32.totalorder %s25, 0
    %p177 = por %p175, %p176
    %p178 = scmp.ne.s32.totalorder %s166, %s167
    %p179 = scmp.eq.s32.totalorder %s26, 1
    %p180 = por %p178, %p179
    %p182 = scmp.ne.s32.totalorder %s167, %s181
    %p183 = scmp.eq.s32.totalorder %s26, 0
    %p184 = por %p182, %p183
    %s186 = sadd.s32 %s185, 1
    %p189 = scmp.eq.s32.totalorder %s20, 1
    %p190 = scmp.ne.s32.totalorder %s185, %s187
    %p191 = scmp.eq.s32.totalorder %s20, 0
    %p192 = por %p190, %p191
    %p193 = scmp.ne.s32.totalorder %s185, %s187
    %p194 = scmp.eq.s32.totalorder %s25, 1
    %p195 = por %p193, %p194
    %p196 = scmp.ne.s32.totalorder %s187, %s188
    %p197 = scmp.eq.s32.totalorder %s25, 0
    %p198 = por %p196, %p197
    %p199 = scmp.ne.s32.totalorder %s187, %s188
    %p200 = scmp.eq.s32.totalorder %s26, 1
    %p201 = por %p199, %p200
    %p203 = scmp.ne.s32.totalorder %s188, %s202
    %p204 = scmp.eq.s32.totalorder %s26, 0
    %p205 = por %p203, %p204
    %s207 = sadd.s32 %s206, 1
    %p210 = scmp.eq.s32.totalorder %s20, 1
    %p211 = scmp.ne.s32.totalorder %s206, %s208
    %p212 = scmp.eq.s32.totalorder %s20, 0
    %p213 = por %p211, %p212
    %p214 = scmp.ne.s32.totalorder %s206, %s208
    %p215 = scmp.eq.s32.totalorder %s25, 1
    %p216 = por %p214, %p215
    %p217 = scmp.ne.s32.totalorder %s208, %s209
    %p218 = scmp.eq.s32.totalorder %s25, 0
    %p219 = por %p217, %p218
    %p220 = scmp.ne.s32.totalorder %s208, %s209
    %p221 = scmp.eq.s32.totalorder %s26, 1
    %p222 = por %p220, %p221
    %p224 = scmp.ne.s32.totalorder %s209, %s223
    %p225 = scmp.eq.s32.totalorder %s26, 0
    %p226 = por %p224, %p225
    %s228 = sadd.s32 %s227, 1
    %p231 = scmp.eq.s32.totalorder %s20, 1
    %p232 = scmp.ne.s32.totalorder %s227, %s229
    %p233 = scmp.eq.s32.totalorder %s20, 0
    %p234 = por %p232, %p233
    %p235 = scmp.ne.s32.totalorder %s227, %s229
    %p236 = scmp.eq.s32.totalorder %s25, 1
    %p237 = por %p235, %p236
    %p238 = scmp.ne.s32.totalorder %s229, %s230
    %p239 = scmp.eq.s32.totalorder %s25, 0
    %p240 = por %p238, %p239
    %p241 = scmp.ne.s32.totalorder %s229, %s230
    %p242 = scmp.eq.s32.totalorder %s26, 1
    %p243 = por %p241, %p242
    %p245 = scmp.ne.s32.totalorder %s230, %s244
    %p246 = scmp.eq.s32.totalorder %s26, 0
    %p247 = por %p245, %p246
    %s249 = sadd.s32 %s248, 1
    %p252 = scmp.eq.s32.totalorder %s20, 1
    %p253 = scmp.ne.s32.totalorder %s248, %s250
    %p254 = scmp.eq.s32.totalorder %s20, 0
    %p255 = por %p253, %p254
    %p256 = scmp.ne.s32.totalorder %s248, %s250
    %p257 = scmp.eq.s32.totalorder %s25, 1
    %p258 = por %p256, %p257
    %p259 = scmp.ne.s32.totalorder %s250, %s251
    %p260 = scmp.eq.s32.totalorder %s25, 0
    %p261 = por %p259, %p260
    %p262 = scmp.ne.s32.totalorder %s250, %s251
    %p263 = scmp.eq.s32.totalorder %s26, 1
    %p264 = por %p262, %p263
    %p266 = scmp.ne.s32.totalorder %s251, %s265
    %p267 = scmp.eq.s32.totalorder %s26, 0
    %p268 = por %p266, %p267
    %s270 = sadd.s32 %s269, 1
    %p273 = scmp.eq.s32.totalorder %s20, 1
    %p274 = scmp.ne.s32.totalorder %s269, %s271
    %p275 = scmp.eq.s32.totalorder %s20, 0
    %p276 = por %p274, %p275
    %p277 = scmp.ne.s32.totalorder %s269, %s271
    %p278 = scmp.eq.s32.totalorder %s25, 1
    %p279 = por %p277, %p278
    %p280 = scmp.ne.s32.totalorder %s271, %s272
    %p281 = scmp.eq.s32.totalorder %s25, 0
    %p282 = por %p280, %p281
    %p283 = scmp.ne.s32.totalorder %s271, %s272
    %p284 = scmp.eq.s32.totalorder %s26, 1
    %p285 = por %p283, %p284
    %p287 = scmp.ne.s32.totalorder %s272, %s286
    %p288 = scmp.eq.s32.totalorder %s26, 0
    %p289 = por %p287, %p288
    %s291 = sadd.s32 %s290, 1
    %p294 = scmp.eq.s32.totalorder %s20, 1
    %p295 = scmp.ne.s32.totalorder %s290, %s292
    %p296 = scmp.eq.s32.totalorder %s20, 0
    %p297 = por %p295, %p296
    %p298 = scmp.ne.s32.totalorder %s290, %s292
    %p299 = scmp.eq.s32.totalorder %s25, 1
    %p300 = por %p298, %p299
    %p301 = scmp.ne.s32.totalorder %s292, %s293
    %p302 = scmp.eq.s32.totalorder %s25, 0
    %p303 = por %p301, %p302
    %p304 = scmp.ne.s32.totalorder %s292, %s293
    %p305 = scmp.eq.s32.totalorder %s26, 1
    %p306 = por %p304, %p305
    %p308 = scmp.ne.s32.totalorder %s293, %s307
    %p309 = scmp.eq.s32.totalorder %s26, 0
    %p310 = por %p308, %p309
    %s312 = sadd.s32 %s311, 1
    %p315 = scmp.eq.s32.totalorder %s20, 1
    %p316 = scmp.ne.s32.totalorder %s311, %s313
    %p317 = scmp.eq.s32.totalorder %s20, 0
    %p318 = por %p316, %p317
    %p319 = scmp.ne.s32.totalorder %s311, %s313
    %p320 = scmp.eq.s32.totalorder %s25, 1
    %p321 = por %p319, %p320
    %p322 = scmp.ne.s32.totalorder %s313, %s314
    %p323 = scmp.eq.s32.totalorder %s25, 0
    %p324 = por %p322, %p323
    %p325 = scmp.ne.s32.totalorder %s313, %s314
    %p326 = scmp.eq.s32.totalorder %s26, 1
    %p327 = por %p325, %p326
    %p329 = scmp.ne.s32.totalorder %s314, %s328
    %p330 = scmp.eq.s32.totalorder %s26, 0
    %p331 = por %p329, %p330
    %s332 = ssub.s32 %s20, %s27
    %p333 = scmp.eq.s32.totalorder %s332, 0
    %s335 = sadd.s32 %s334, 1
    %s336 = scalar_select %p333, %s334, %s335
    %p339 = pneg %p333
    %p340 = scmp.eq.s32.totalorder %s20, 1
    %p341 = por %p339, %p340
    %p342 = scmp.ne.s32.totalorder %s334, %s337
    %p343 = scmp.eq.s32.totalorder %s20, 0
    %p344 = por %p342, %p343
    %p345 = scmp.ne.s32.totalorder %s334, %s337
    %p346 = scmp.eq.s32.totalorder %s25, 1
    %p347 = por %p345, %p346
    %p348 = scmp.ne.s32.totalorder %s337, %s338
    %p349 = scmp.eq.s32.totalorder %s25, 0
    %p350 = por %p348, %p349
    %p351 = scmp.ne.s32.totalorder %s337, %s338
    %p352 = scmp.eq.s32.totalorder %s26, 1
    %p353 = por %p351, %p352
    %p355 = scmp.ne.s32.totalorder %s338, %s354
    %p356 = scmp.eq.s32.totalorder %s26, 0
    %p357 = por %p355, %p356
    %p358 = scmp.le.s32.totalorder 1, %s20
    %p359 = scmp.lt.s32.totalorder %s20, 3
    %p360 = pnand %p358, %p359
    %p361 = pneg %p360
    // Predicated region
    $region9: #{ltt_vit_explainer_forward.17} parent=5 // pred_check
      _
    $region10: #{ltt_vit_explainer_forward.17} parent=5 // pred_check_branch
      %363 = sbr.rel (%p360) target = $region12
    $region11: #{ltt_vit_explainer_forward.17} parent=5 // pred_region
      %s364 = ssub.s32 %s20, 1
      // Predicated region
      $region13: #{ltt_vit_explainer_forward.17} parent=11 // pred_check
        %p365 = pneg %p93
      $region14: #{ltt_vit_explainer_forward.17} parent=11 // pred_check_branch
        %367 = sbr.rel (%p365) target = $region16
      $region15: #{ltt_vit_explainer_forward.17} parent=11 // pred_region
        _
      $region16: #{ltt_vit_explainer_forward.17} parent=11 // pred_fallthru
        _
      // Predicated region
      $region17: #{ltt_vit_explainer_forward.17} parent=11 // pred_check
        %p368 = pneg %p114
      $region18: #{ltt_vit_explainer_forward.17} parent=11 // pred_check_branch
        %370 = sbr.rel (%p368) target = $region20
      $region19: #{ltt_vit_explainer_forward.17} parent=11 // pred_region
        _
      $region20: #{ltt_vit_explainer_forward.17} parent=11 // pred_fallthru
        _
      // Predicated region
      $region21: #{ltt_vit_explainer_forward.17} parent=11 // pred_check
        %p371 = pneg %p135
      $region22: #{ltt_vit_explainer_forward.17} parent=11 // pred_check_branch
        %373 = sbr.rel (%p371) target = $region24
      $region23: #{ltt_vit_explainer_forward.17} parent=11 // pred_region
        _
      $region24: #{ltt_vit_explainer_forward.17} parent=11 // pred_fallthru
        _
      // Predicated region
      $region25: #{ltt_vit_explainer_forward.17} parent=11 // pred_check
        %p374 = pneg %p156
      $region26: #{ltt_vit_explainer_forward.17} parent=11 // pred_check_branch
        %376 = sbr.rel (%p374) target = $region28
      $region27: #{ltt_vit_explainer_forward.17} parent=11 // pred_region
        _
      $region28: #{ltt_vit_explainer_forward.17} parent=11 // pred_fallthru
        _
      // Predicated region
      $region29: #{ltt_vit_explainer_forward.17} parent=11 // pred_check
        %p377 = pneg %p177
      $region30: #{ltt_vit_explainer_forward.17} parent=11 // pred_check_branch
        %379 = sbr.rel (%p377) target = $region32
      $region31: #{ltt_vit_explainer_forward.17} parent=11 // pred_region
        _
      $region32: #{ltt_vit_explainer_forward.17} parent=11 // pred_fallthru
        _
      // Predicated region
      $region33: #{ltt_vit_explainer_forward.17} parent=11 // pred_check
        %p380 = pneg %p198
      $region34: #{ltt_vit_explainer_forward.17} parent=11 // pred_check_branch
        %382 = sbr.rel (%p380) target = $region36
      $region35: #{ltt_vit_explainer_forward.17} parent=11 // pred_region
        _
      $region36: #{ltt_vit_explainer_forward.17} parent=11 // pred_fallthru
        _
      // Predicated region
      $region37: #{ltt_vit_explainer_forward.17} parent=11 // pred_check
        %p383 = pneg %p219
      $region38: #{ltt_vit_explainer_forward.17} parent=11 // pred_check_branch
        %385 = sbr.rel (%p383) target = $region40
      $region39: #{ltt_vit_explainer_forward.17} parent=11 // pred_region
        _
      $region40: #{ltt_vit_explainer_forward.17} parent=11 // pred_fallthru
        _
      // Predicated region
      $region41: #{ltt_vit_explainer_forward.17} parent=11 // pred_check
        %p386 = pneg %p240
      $region42: #{ltt_vit_explainer_forward.17} parent=11 // pred_check_branch
        %388 = sbr.rel (%p386) target = $region44
      $region43: #{ltt_vit_explainer_forward.17} parent=11 // pred_region
        _
      $region44: #{ltt_vit_explainer_forward.17} parent=11 // pred_fallthru
        _
      // Predicated region
      $region45: #{ltt_vit_explainer_forward.17} parent=11 // pred_check
        %p389 = pneg %p261
      $region46: #{ltt_vit_explainer_forward.17} parent=11 // pred_check_branch
        %391 = sbr.rel (%p389) target = $region48
      $region47: #{ltt_vit_explainer_forward.17} parent=11 // pred_region
        _
      $region48: #{ltt_vit_explainer_forward.17} parent=11 // pred_fallthru
        _
      // Predicated region
      $region49: #{ltt_vit_explainer_forward.17} parent=11 // pred_check
        %p392 = pneg %p282
      $region50: #{ltt_vit_explainer_forward.17} parent=11 // pred_check_branch
        %394 = sbr.rel (%p392) target = $region52
      $region51: #{ltt_vit_explainer_forward.17} parent=11 // pred_region
        _
      $region52: #{ltt_vit_explainer_forward.17} parent=11 // pred_fallthru
        _
      // Predicated region
      $region53: #{ltt_vit_explainer_forward.17} parent=11 // pred_check
        %p395 = pneg %p303
      $region54: #{ltt_vit_explainer_forward.17} parent=11 // pred_check_branch
        %397 = sbr.rel (%p395) target = $region56
      $region55: #{ltt_vit_explainer_forward.17} parent=11 // pred_region
        _
      $region56: #{ltt_vit_explainer_forward.17} parent=11 // pred_fallthru
        _
      // Predicated region
      $region57: #{ltt_vit_explainer_forward.17} parent=11 // pred_check
        %p398 = pneg %p324
      $region58: #{ltt_vit_explainer_forward.17} parent=11 // pred_check_branch
        %400 = sbr.rel (%p398) target = $region60
      $region59: #{ltt_vit_explainer_forward.17} parent=11 // pred_region
        _
      $region60: #{ltt_vit_explainer_forward.17} parent=11 // pred_fallthru
        _
    $region12: #{ltt_vit_explainer_forward.17} parent=5 // pred_fallthru
      _
    %p401 = scmp.lt.s32.totalorder %s20, 2
    // Predicated region
    $region61: #{ltt_vit_explainer_forward.17} parent=5 // pred_check
      %p402 = pneg %p401
    $region62: #{ltt_vit_explainer_forward.17} parent=5 // pred_check_branch
      %404 = sbr.rel (%p402) target = $region64
    $region63: #{ltt_vit_explainer_forward.17} parent=5 // pred_region
      // Predicated region
      $region65: #{ltt_vit_explainer_forward.17} parent=63 // pred_check
        %p405 = pneg %p40
      $region66: #{ltt_vit_explainer_forward.17} parent=63 // pred_check_branch
        %407 = sbr.rel (%p405) target = $region68
      $region67: #{ltt_vit_explainer_forward.17} parent=63 // pred_region
        %p408 = scmp.lt.s32.totalorder %s20, 1
        %s409 = scalar_select %p408, %s20, 1
        %s410 = smul.addr %s409, 8
        %s411 = scalar_lea.vmem %s0, %s410
      $region68: #{ltt_vit_explainer_forward.17} parent=63 // pred_fallthru
        _
      // Predicated region
      $region69: #{ltt_vit_explainer_forward.17} parent=63 // pred_check
        %p412 = pneg %p66
      $region70: #{ltt_vit_explainer_forward.17} parent=63 // pred_check_branch
        %414 = sbr.rel (%p412) target = $region72
      $region71: #{ltt_vit_explainer_forward.17} parent=63 // pred_region
        %p415 = scmp.lt.s32.totalorder %s20, 1
        %s416 = scalar_select %p415, %s20, 1
        %s417 = scalar_lea.vmem %s1, %s416
      $region72: #{ltt_vit_explainer_forward.17} parent=63 // pred_fallthru
        _
    $region64: #{ltt_vit_explainer_forward.17} parent=5 // pred_fallthru
      _
    %p418 = scmp.le.s32.totalorder 1, %s20
    %p419 = scmp.lt.s32.totalorder %s20, 3
    %p420 = pnand %p418, %p419
    %p421 = pneg %p420
    // Predicated region
    $region73: #{ltt_vit_explainer_forward.17} parent=5 // pred_check
      _
    $region74: #{ltt_vit_explainer_forward.17} parent=5 // pred_check_branch
      %423 = sbr.rel (%p420) target = $region76
    $region75: #{ltt_vit_explainer_forward.17} parent=5 // pred_region
      %s424 = ssub.s32 %s20, 1
      %p425 = scmp.lt.s32.totalorder %s25, 1
      %s426 = scalar_select %p425, %s25, 1
      %s427 = smul.addr %s426, 8
      %s428 = scalar_lea.vmem %s0, %s427
      %p429 = pneg %p46
      %p430 = pneg %p43
      %p431 = scmp.lt.s32.totalorder %s25, 1
      %s432 = scalar_select %p431, %s25, 1
      %s433 = scalar_lea.vmem %s1, %s432
      %p434 = pneg %p72
      %p435 = pneg %p69
      %p436 = pneg %p93
      %p437 = pneg %p90
      %p438 = pneg %p114
      %p439 = pneg %p111
      %p440 = pneg %p135
      %p441 = pneg %p132
      %p442 = pneg %p156
      %p443 = pneg %p153
      %p444 = pneg %p177
      %p445 = pneg %p174
      %p446 = pneg %p198
      %p447 = pneg %p195
      %p448 = pneg %p219
      %p449 = pneg %p216
      %p450 = pneg %p240
      %p451 = pneg %p237
      %p452 = pneg %p261
      %p453 = pneg %p258
      %p454 = pneg %p282
      %p455 = pneg %p279
      %p456 = pneg %p303
      %p457 = pneg %p300
      %p458 = pneg %p324
      %p459 = pneg %p321
      %p460 = pneg %p350
      %p461 = pneg %p347
      %p462 = scmp.lt.s32.totalorder %s25, 1
      %s463 = scalar_select %p462, %s25, 1
      %s464 = smul.addr %s463, 8
      %s465 = scalar_lea.vmem %s14, %s464
      %p466 = scmp.lt.s32.totalorder %s25, 1
      %s467 = scalar_select %p466, %s25, 1
      %s468 = smul.addr %s467, 8
      %s469 = scalar_lea.vmem %s0, %s468
      %p470 = scmp.lt.s32.totalorder %s25, 1
      %s471 = scalar_select %p470, %s25, 1
      %s472 = scalar_lea.vmem %s1, %s471
      %p473 = scmp.lt.s32.totalorder %s25, 1
      %s474 = scalar_select %p473, %s25, 1
      %s475 = smul.addr %s474, 8
      %s476 = scalar_lea.vmem %s14, %s475
      %v478 = vld [vmem:[%s469] sm:$0x1f]
      %v479 = vld [vmem:[%s472] sm:$0x1]
      %v480 = vld [vmem:[%s4] sm:$0xf]
      %v481 = vld [vmem:[%s4 + $0x4] sm:$0xf]
      %v482 = vld [vmem:[%s5] sm:$0x1]
      %v483 = vpack.c.bf16 %v478, %v478
      %v485 = vlaneseq
      %v486 = vshrl.u32 %v485, 7
      %v487 = vsub.s32 0, %v486
      %v488 = vrot.slane %v482, %v487
      %v492 = vunpack.c.l.b16 %v480
      %v493 = vunpack.c.l.b16 %v481
      %v494 = vpack.c.b16 %v493, %v492
      %vm496 = vcmask 130048
      %v498 = vsel %vm496, %v483, 0
      %500 = vmatprep.subr.bf16.mxu0 0
      %501 = vmatpush1.bf16.msra.mxu0 %v494
      %502 = vmatprep.subr.bf16.mxu0 0
      %503 = vmatpush1.bf16.msra.mxu0 0
      %504 = vmatprep.subr.bf16.mxu0 0
      %505 = vmatpush1.bf16.msra.mxu0 0
      %506 = vmatprep.subr.bf16.mxu0 0
      %507 = vmatpush1.bf16.msra.mxu0 0
      %508 = vmatprep.subr.bf16.mxu0 0
      %509 = vmatpush1.bf16.msra.mxu0 0
      %510 = vmatprep.subr.bf16.mxu0 0
      %511 = vmatpush1.bf16.msra.mxu0 0
      %512 = vmatprep.subr.bf16.mxu0 0
      %513 = vmatpush1.bf16.msra.mxu0 0
      %514 = vmatprep.subr.bf16.mxu0 0
      %515 = vmatpush1.bf16.msra.mxu0 0
      %516 = vmatprep.subr.bf16.mxu0 0
      %517 = vmatpush1.bf16.msra.mxu0 0
      %518 = vmatprep.subr.bf16.mxu0 0
      %519 = vmatpush1.bf16.msra.mxu0 0
      %520 = vmatprep.subr.bf16.mxu0 0
      %521 = vmatpush1.bf16.msra.mxu0 0
      %522 = vmatprep.subr.bf16.mxu0 0
      %523 = vmatpush1.bf16.msra.mxu0 0
      %524 = vmatprep.subr.bf16.mxu0 0
      %525 = vmatpush1.bf16.msra.mxu0 0
      %526 = vmatprep.subr.bf16.mxu0 0
      %527 = vmatpush1.bf16.msra.mxu0 0
      %528 = vmatprep.subr.bf16.mxu0 0
      %529 = vmatpush1.bf16.msra.mxu0 0
      %530 = vmatprep.subr.bf16.mxu0 0
      %531 = vmatpush1.bf16.msra.mxu0 0
      %532 = vmatprep.mubr.bf16.mxu0 0
      %533 = vmatmul.mubr.bf16.gmra.mrb[0].mxu0 %v498
      %v534 = vpop.f32.mrb[0].mxu0
      %v535 = vadd.f32 %v488, %v534
      %v536 = vpop.f32.mrb[0].mxu0
      %v537 = vpop.f32.mrb[0].mxu0
      %v538 = vpop.f32.mrb[0].mxu0
      %539 = vdwg.mxu0
      %v540 = vpack.c.bf16 %v535, %v535
      %542 = vrot.lane.b32.xlu0 %v540, 112
      %v543 = vpop.permute.xlu0 %542
      %vm544 = vcmask 31744
      %v546 = vsel %vm544, %v540, 0
      %v549 = vsel %vm544, %v543, 0
      %551 = vmatprep.subr.bf16.mxu0 0
      %552 = vmatpush1.bf16.xpose.msra.mxu0 %v549
      %553 = vmatprep.subr.bf16.mxu0 0
      %554 = vmatpush1.bf16.xpose.msra.mxu0 0
      %555 = vmatprep.subr.bf16.mxu0 0
      %556 = vmatpush1.bf16.xpose.msra.mxu0 0
      %557 = vmatprep.subr.bf16.mxu0 0
      %558 = vmatpush1.bf16.xpose.msra.mxu0 0
      %559 = vmatprep.subr.bf16.mxu0 0
      %560 = vmatpush1.bf16.xpose.msra.mxu0 0
      %561 = vmatprep.subr.bf16.mxu0 0
      %562 = vmatpush1.bf16.xpose.msra.mxu0 0
      %563 = vmatprep.subr.bf16.mxu0 0
      %564 = vmatpush1.bf16.xpose.msra.mxu0 0
      %565 = vmatprep.subr.bf16.mxu0 0
      %566 = vmatpush1.bf16.xpose.msra.mxu0 0
      %567 = vmatprep.subr.bf16.mxu0 0
      %568 = vmatpush1.bf16.xpose.msra.mxu0 0
      %569 = vmatprep.subr.bf16.mxu0 0
      %570 = vmatpush1.bf16.xpose.msra.mxu0 0
      %571 = vmatprep.subr.bf16.mxu0 0
      %572 = vmatpush1.bf16.xpose.msra.mxu0 0
      %573 = vmatprep.subr.bf16.mxu0 0
      %574 = vmatpush1.bf16.xpose.msra.mxu0 0
      %575 = vmatprep.subr.bf16.mxu0 0
      %576 = vmatpush1.bf16.xpose.msra.mxu0 0
      %577 = vmatprep.subr.bf16.mxu0 0
      %578 = vmatpush1.bf16.xpose.msra.mxu0 0
      %579 = vmatprep.subr.bf16.mxu0 0
      %580 = vmatpush1.bf16.xpose.msra.mxu0 0
      %581 = vmatprep.subr.bf16.mxu0 0
      %582 = vmatpush1.bf16.xpose.msra.mxu0 0
      %583 = vmatprep.mubr.bf16.mxu0 0
      %584 = vmatmul.mubr.bf16.gmra.mrb[0].mxu0 %v546
      %v585 = vpop.f32.mrb[0].mxu0
      %v586 = vadd.f32 0.0, %v585
      %v587 = vpop.f32.mrb[0].mxu0
      %v588 = vpop.f32.mrb[0].mxu0
      %v589 = vpop.f32.mrb[0].mxu0
      %590 = vdwg.mxu0
      %v591 = vmul.f32 %v586, 0.5
      %v593 = vlaneseq
      %v594 = vshrl.u32 %v593, 7
      %v595 = vsub.s32 0, %v594
      %v596 = vrot.slane %v479, %v595
      %v598 = vadd.f32 %v591, %v596
      %vm599 = vcmask 36864
      %v600 = vsel %vm599, %v598, -inf
      %601 = vmax.xlane.f32.xlu0 %v600
      %v602 = vpop.xlane.xlu0 %601
      %v603 = vsub.f32 %v598, %v602
      %v604 = vmul.f32 %v603, 1.442695
      %v605 = vpow.pop %v604
      %v606 = vsel %vm599, %v605, 0.0
      %607 = vadd.xlane.f32.xlu0 %v606
      %v608 = vpop.xlane.xlu0 %607
      %v609 = vrcp.pop %v608
      %v610 = vmul.f32 %v605, %v609
      %v611 = vpack.c.bf16 %v610, %v610
      %612 = vrot.lane.b32.xlu0 %v540, 96
      %v613 = vpop.permute.xlu0 %612
      %vm614 = vcmask 39936
      %v616 = vsel %vm614, %v611, 0
      %vm618 = vcmask 1041408
      %vm619 = vcmask 1042432
      %v620 = vsel %vm618, 4294967295, 65535
      %v621 = vsel %vm619, %v620, 0
      %v623 = vand.u32 %v613, %v621
      %625 = vmatprep.subr.bf16.mxu0 0
      %626 = vmatpush1.bf16.msra.mxu0 %v623
      %627 = vmatprep.subr.bf16.mxu0 0
      %628 = vmatpush1.bf16.msra.mxu0 0
      %629 = vmatprep.subr.bf16.mxu0 0
      %630 = vmatpush1.bf16.msra.mxu0 0
      %631 = vmatprep.subr.bf16.mxu0 0
      %632 = vmatpush1.bf16.msra.mxu0 0
      %633 = vmatprep.subr.bf16.mxu0 0
      %634 = vmatpush1.bf16.msra.mxu0 0
      %635 = vmatprep.subr.bf16.mxu0 0
      %636 = vmatpush1.bf16.msra.mxu0 0
      %637 = vmatprep.subr.bf16.mxu0 0
      %638 = vmatpush1.bf16.msra.mxu0 0
      %639 = vmatprep.subr.bf16.mxu0 0
      %640 = vmatpush1.bf16.msra.mxu0 0
      %641 = vmatprep.subr.bf16.mxu0 0
      %642 = vmatpush1.bf16.msra.mxu0 0
      %643 = vmatprep.subr.bf16.mxu0 0
      %644 = vmatpush1.bf16.msra.mxu0 0
      %645 = vmatprep.subr.bf16.mxu0 0
      %646 = vmatpush1.bf16.msra.mxu0 0
      %647 = vmatprep.subr.bf16.mxu0 0
      %648 = vmatpush1.bf16.msra.mxu0 0
      %649 = vmatprep.subr.bf16.mxu0 0
      %650 = vmatpush1.bf16.msra.mxu0 0
      %651 = vmatprep.subr.bf16.mxu0 0
      %652 = vmatpush1.bf16.msra.mxu0 0
      %653 = vmatprep.subr.bf16.mxu0 0
      %654 = vmatpush1.bf16.msra.mxu0 0
      %655 = vmatprep.subr.bf16.mxu0 0
      %656 = vmatpush1.bf16.msra.mxu0 0
      %657 = vmatprep.mubr.bf16.mxu0 0
      %658 = vmatmul.mubr.bf16.gmra.mrb[0].mxu0 %v616
      %v659 = vpop.f32.mrb[0].mxu0
      %v660 = vadd.f32 0.0, %v659
      %v661 = vpop.f32.mrb[0].mxu0
      %v662 = vpop.f32.mrb[0].mxu0
      %v663 = vpop.f32.mrb[0].mxu0
      %664 = vdwg.mxu0
      %665 = vrot.lane.b32.xlu0 %v540, 124
      %v666 = vpop.permute.xlu0 %665
      %667 = vrot.lane.b32.xlu0 %v540, 108
      %v668 = vpop.permute.xlu0 %667
      %v670 = vsel %vm544, %v666, 0
      %v673 = vsel %vm544, %v668, 0
      %675 = vmatprep.subr.bf16.mxu0 0
      %676 = vmatpush1.bf16.xpose.msra.mxu0 %v673
      %677 = vmatprep.subr.bf16.mxu0 0
      %678 = vmatpush1.bf16.xpose.msra.mxu0 0
      %679 = vmatprep.subr.bf16.mxu0 0
      %680 = vmatpush1.bf16.xpose.msra.mxu0 0
      %681 = vmatprep.subr.bf16.mxu0 0
      %682 = vmatpush1.bf16.xpose.msra.mxu0 0
      %683 = vmatprep.subr.bf16.mxu0 0
      %684 = vmatpush1.bf16.xpose.msra.mxu0 0
      %685 = vmatprep.subr.bf16.mxu0 0
      %686 = vmatpush1.bf16.xpose.msra.mxu0 0
      %687 = vmatprep.subr.bf16.mxu0 0
      %688 = vmatpush1.bf16.xpose.msra.mxu0 0
      %689 = vmatprep.subr.bf16.mxu0 0
      %690 = vmatpush1.bf16.xpose.msra.mxu0 0
      %691 = vmatprep.subr.bf16.mxu0 0
      %692 = vmatpush1.bf16.xpose.msra.mxu0 0
      %693 = vmatprep.subr.bf16.mxu0 0
      %694 = vmatpush1.bf16.xpose.msra.mxu0 0
      %695 = vmatprep.subr.bf16.mxu0 0
      %696 = vmatpush1.bf16.xpose.msra.mxu0 0
      %697 = vmatprep.subr.bf16.mxu0 0
      %698 = vmatpush1.bf16.xpose.msra.mxu0 0
      %699 = vmatprep.subr.bf16.mxu0 0
      %700 = vmatpush1.bf16.xpose.msra.mxu0 0
      %701 = vmatprep.subr.bf16.mxu0 0
      %702 = vmatpush1.bf16.xpose.msra.mxu0 0
      %703 = vmatprep.subr.bf16.mxu0 0
      %704 = vmatpush1.bf16.xpose.msra.mxu0 0
      %705 = vmatprep.subr.bf16.mxu0 0
      %706 = vmatpush1.bf16.xpose.msra.mxu0 0
      %707 = vmatprep.mubr.bf16.mxu0 0
      %708 = vmatmul.mubr.bf16.gmra.mrb[0].mxu0 %v670
      %v709 = vpop.f32.mrb[0].mxu0
      %v710 = vadd.f32 0.0, %v709
      %v711 = vpop.f32.mrb[0].mxu0
      %v712 = vpop.f32.mrb[0].mxu0
      %v713 = vpop.f32.mrb[0].mxu0
      %714 = vdwg.mxu0
      %v715 = vmul.f32 %v710, 0.5
      %v716 = vadd.f32 %v715, %v596
      %v717 = vsel %vm599, %v716, -inf
      %718 = vmax.xlane.f32.xlu0 %v717
      %v719 = vpop.xlane.xlu0 %718
      %v720 = vsub.f32 %v716, %v719
      %v721 = vmul.f32 %v720, 1.442695
      %v722 = vpow.pop %v721
      %v723 = vsel %vm599, %v722, 0.0
      %724 = vadd.xlane.f32.xlu0 %v723
      %v725 = vpop.xlane.xlu0 %724
      %v726 = vrcp.pop %v725
      %v727 = vmul.f32 %v722, %v726
      %v728 = vpack.c.bf16 %v727, %v727
      %729 = vrot.lane.b32.xlu0 %v540, 92
      %v730 = vpop.permute.xlu0 %729
      %v732 = vsel %vm614, %v728, 0
      %v735 = vand.u32 %v730, %v621
      %737 = vmatprep.subr.bf16.mxu0 0
      %738 = vmatpush1.bf16.msra.mxu0 %v735
      %739 = vmatprep.subr.bf16.mxu0 0
      %740 = vmatpush1.bf16.msra.mxu0 0
      %741 = vmatprep.subr.bf16.mxu0 0
      %742 = vmatpush1.bf16.msra.mxu0 0
      %743 = vmatprep.subr.bf16.mxu0 0
      %744 = vmatpush1.bf16.msra.mxu0 0
      %745 = vmatprep.subr.bf16.mxu0 0
      %746 = vmatpush1.bf16.msra.mxu0 0
      %747 = vmatprep.subr.bf16.mxu0 0
      %748 = vmatpush1.bf16.msra.mxu0 0
      %749 = vmatprep.subr.bf16.mxu0 0
      %750 = vmatpush1.bf16.msra.mxu0 0
      %751 = vmatprep.subr.bf16.mxu0 0
      %752 = vmatpush1.bf16.msra.mxu0 0
      %753 = vmatprep.subr.bf16.mxu0 0
      %754 = vmatpush1.bf16.msra.mxu0 0
      %755 = vmatprep.subr.bf16.mxu0 0
      %756 = vmatpush1.bf16.msra.mxu0 0
      %757 = vmatprep.subr.bf16.mxu0 0
      %758 = vmatpush1.bf16.msra.mxu0 0
      %759 = vmatprep.subr.bf16.mxu0 0
      %760 = vmatpush1.bf16.msra.mxu0 0
      %761 = vmatprep.subr.bf16.mxu0 0
      %762 = vmatpush1.bf16.msra.mxu0 0
      %763 = vmatprep.subr.bf16.mxu0 0
      %764 = vmatpush1.bf16.msra.mxu0 0
      %765 = vmatprep.subr.bf16.mxu0 0
      %766 = vmatpush1.bf16.msra.mxu0 0
      %767 = vmatprep.subr.bf16.mxu0 0
      %768 = vmatpush1.bf16.msra.mxu0 0
      %769 = vmatprep.mubr.bf16.mxu0 0
      %770 = vmatmul.mubr.bf16.gmra.mrb[0].mxu0 %v732
      %v771 = vpop.f32.mrb[0].mxu0
      %v772 = vadd.f32 0.0, %v771
      %v773 = vpop.f32.mrb[0].mxu0
      %v774 = vpop.f32.mrb[0].mxu0
      %v775 = vpop.f32.mrb[0].mxu0
      %776 = vdwg.mxu0
      %777 = vrot.lane.b32.xlu0 %v540, 120
      %v778 = vpop.permute.xlu0 %777
      %779 = vrot.lane.b32.xlu0 %v540, 104
      %v780 = vpop.permute.xlu0 %779
      %v782 = vsel %vm544, %v778, 0
      %v785 = vsel %vm544, %v780, 0
      %787 = vmatprep.subr.bf16.mxu0 0
      %788 = vmatpush1.bf16.xpose.msra.mxu0 %v785
      %789 = vmatprep.subr.bf16.mxu0 0
      %790 = vmatpush1.bf16.xpose.msra.mxu0 0
      %791 = vmatprep.subr.bf16.mxu0 0
      %792 = vmatpush1.bf16.xpose.msra.mxu0 0
      %793 = vmatprep.subr.bf16.mxu0 0
      %794 = vmatpush1.bf16.xpose.msra.mxu0 0
      %795 = vmatprep.subr.bf16.mxu0 0
      %796 = vmatpush1.bf16.xpose.msra.mxu0 0
      %797 = vmatprep.subr.bf16.mxu0 0
      %798 = vmatpush1.bf16.xpose.msra.mxu0 0
      %799 = vmatprep.subr.bf16.mxu0 0
      %800 = vmatpush1.bf16.xpose.msra.mxu0 0
      %801 = vmatprep.subr.bf16.mxu0 0
      %802 = vmatpush1.bf16.xpose.msra.mxu0 0
      %803 = vmatprep.subr.bf16.mxu0 0
      %804 = vmatpush1.bf16.xpose.msra.mxu0 0
      %805 = vmatprep.subr.bf16.mxu0 0
      %806 = vmatpush1.bf16.xpose.msra.mxu0 0
      %807 = vmatprep.subr.bf16.mxu0 0
      %808 = vmatpush1.bf16.xpose.msra.mxu0 0
      %809 = vmatprep.subr.bf16.mxu0 0
      %810 = vmatpush1.bf16.xpose.msra.mxu0 0
      %811 = vmatprep.subr.bf16.mxu0 0
      %812 = vmatpush1.bf16.xpose.msra.mxu0 0
      %813 = vmatprep.subr.bf16.mxu0 0
      %814 = vmatpush1.bf16.xpose.msra.mxu0 0
      %815 = vmatprep.subr.bf16.mxu0 0
      %816 = vmatpush1.bf16.xpose.msra.mxu0 0
      %817 = vmatprep.subr.bf16.mxu0 0
      %818 = vmatpush1.bf16.xpose.msra.mxu0 0
      %819 = vmatprep.mubr.bf16.mxu0 0
      %820 = vmatmul.mubr.bf16.gmra.mrb[0].mxu0 %v782
      %v821 = vpop.f32.mrb[0].mxu0
      %v822 = vadd.f32 0.0, %v821
      %v823 = vpop.f32.mrb[0].mxu0
      %v824 = vpop.f32.mrb[0].mxu0
      %v825 = vpop.f32.mrb[0].mxu0
      %826 = vdwg.mxu0
      %v827 = vmul.f32 %v822, 0.5
      %v828 = vadd.f32 %v827, %v596
      %v829 = vsel %vm599, %v828, -inf
      %830 = vmax.xlane.f32.xlu0 %v829
      %v831 = vpop.xlane.xlu0 %830
      %v832 = vsub.f32 %v828, %v831
      %v833 = vmul.f32 %v832, 1.442695
      %v834 = vpow.pop %v833
      %v835 = vsel %vm599, %v834, 0.0
      %836 = vadd.xlane.f32.xlu0 %v835
      %v837 = vpop.xlane.xlu0 %836
      %v838 = vrcp.pop %v837
      %v839 = vmul.f32 %v834, %v838
      %v840 = vpack.c.bf16 %v839, %v839
      %841 = vrot.lane.b32.xlu0 %v540, 88
      %v842 = vpop.permute.xlu0 %841
      %v844 = vsel %vm614, %v840, 0
      %v847 = vand.u32 %v842, %v621
      %849 = vmatprep.subr.bf16.mxu0 0
      %850 = vmatpush1.bf16.msra.mxu0 %v847
      %851 = vmatprep.subr.bf16.mxu0 0
      %852 = vmatpush1.bf16.msra.mxu0 0
      %853 = vmatprep.subr.bf16.mxu0 0
      %854 = vmatpush1.bf16.msra.mxu0 0
      %855 = vmatprep.subr.bf16.mxu0 0
      %856 = vmatpush1.bf16.msra.mxu0 0
      %857 = vmatprep.subr.bf16.mxu0 0
      %858 = vmatpush1.bf16.msra.mxu0 0
      %859 = vmatprep.subr.bf16.mxu0 0
      %860 = vmatpush1.bf16.msra.mxu0 0
      %861 = vmatprep.subr.bf16.mxu0 0
      %862 = vmatpush1.bf16.msra.mxu0 0
      %863 = vmatprep.subr.bf16.mxu0 0
      %864 = vmatpush1.bf16.msra.mxu0 0
      %865 = vmatprep.subr.bf16.mxu0 0
      %866 = vmatpush1.bf16.msra.mxu0 0
      %867 = vmatprep.subr.bf16.mxu0 0
      %868 = vmatpush1.bf16.msra.mxu0 0
      %869 = vmatprep.subr.bf16.mxu0 0
      %870 = vmatpush1.bf16.msra.mxu0 0
      %871 = vmatprep.subr.bf16.mxu0 0
      %872 = vmatpush1.bf16.msra.mxu0 0
      %873 = vmatprep.subr.bf16.mxu0 0
      %874 = vmatpush1.bf16.msra.mxu0 0
      %875 = vmatprep.subr.bf16.mxu0 0
      %876 = vmatpush1.bf16.msra.mxu0 0
      %877 = vmatprep.subr.bf16.mxu0 0
      %878 = vmatpush1.bf16.msra.mxu0 0
      %879 = vmatprep.subr.bf16.mxu0 0
      %880 = vmatpush1.bf16.msra.mxu0 0
      %881 = vmatprep.mubr.bf16.mxu0 0
      %882 = vmatmul.mubr.bf16.gmra.mrb[0].mxu0 %v844
      %v883 = vpop.f32.mrb[0].mxu0
      %v884 = vadd.f32 0.0, %v883
      %v885 = vpop.f32.mrb[0].mxu0
      %v886 = vpop.f32.mrb[0].mxu0
      %v887 = vpop.f32.mrb[0].mxu0
      %888 = vdwg.mxu0
      %889 = vrot.lane.b32.xlu0 %v540, 116
      %v890 = vpop.permute.xlu0 %889
      %891 = vrot.lane.b32.xlu0 %v540, 100
      %v892 = vpop.permute.xlu0 %891
      %v894 = vsel %vm544, %v890, 0
      %v897 = vsel %vm544, %v892, 0
      %899 = vmatprep.subr.bf16.mxu0 0
      %900 = vmatpush1.bf16.xpose.msra.mxu0 %v897
      %901 = vmatprep.subr.bf16.mxu0 0
      %902 = vmatpush1.bf16.xpose.msra.mxu0 0
      %903 = vmatprep.subr.bf16.mxu0 0
      %904 = vmatpush1.bf16.xpose.msra.mxu0 0
      %905 = vmatprep.subr.bf16.mxu0 0
      %906 = vmatpush1.bf16.xpose.msra.mxu0 0
      %907 = vmatprep.subr.bf16.mxu0 0
      %908 = vmatpush1.bf16.xpose.msra.mxu0 0
      %909 = vmatprep.subr.bf16.mxu0 0
      %910 = vmatpush1.bf16.xpose.msra.mxu0 0
      %911 = vmatprep.subr.bf16.mxu0 0
      %912 = vmatpush1.bf16.xpose.msra.mxu0 0
      %913 = vmatprep.subr.bf16.mxu0 0
      %914 = vmatpush1.bf16.xpose.msra.mxu0 0
      %915 = vmatprep.subr.bf16.mxu0 0
      %916 = vmatpush1.bf16.xpose.msra.mxu0 0
      %917 = vmatprep.subr.bf16.mxu0 0
      %918 = vmatpush1.bf16.xpose.msra.mxu0 0
      %919 = vmatprep.subr.bf16.mxu0 0
      %920 = vmatpush1.bf16.xpose.msra.mxu0 0
      %921 = vmatprep.subr.bf16.mxu0 0
      %922 = vmatpush1.bf16.xpose.msra.mxu0 0
      %923 = vmatprep.subr.bf16.mxu0 0
      %924 = vmatpush1.bf16.xpose.msra.mxu0 0
      %925 = vmatprep.subr.bf16.mxu0 0
      %926 = vmatpush1.bf16.xpose.msra.mxu0 0
      %927 = vmatprep.subr.bf16.mxu0 0
      %928 = vmatpush1.bf16.xpose.msra.mxu0 0
      %929 = vmatprep.subr.bf16.mxu0 0
      %930 = vmatpush1.bf16.xpose.msra.mxu0 0
      %931 = vmatprep.mubr.bf16.mxu0 0
      %932 = vmatmul.mubr.bf16.gmra.mrb[0].mxu0 %v894
      %v933 = vpop.f32.mrb[0].mxu0
      %v934 = vadd.f32 0.0, %v933
      %v935 = vpop.f32.mrb[0].mxu0
      %v936 = vpop.f32.mrb[0].mxu0
      %v937 = vpop.f32.mrb[0].mxu0
      %938 = vdwg.mxu0
      %v939 = vmul.f32 %v934, 0.5
      %v940 = vadd.f32 %v939, %v596
      %v941 = vsel %vm599, %v940, -inf
      %942 = vmax.xlane.f32.xlu0 %v941
      %v943 = vpop.xlane.xlu0 %942
      %v944 = vsub.f32 %v940, %v943
      %v945 = vmul.f32 %v944, 1.442695
      %v946 = vpow.pop %v945
      %v947 = vsel %vm599, %v946, 0.0
      %948 = vadd.xlane.f32.xlu0 %v947
      %v949 = vpop.xlane.xlu0 %948
      %v950 = vrcp.pop %v949
      %v951 = vmul.f32 %v946, %v950
      %v952 = vpack.c.bf16 %v951, %v951
      %953 = vrot.lane.b32.xlu0 %v540, 84
      %v954 = vpop.permute.xlu0 %953
      %v956 = vsel %vm614, %v952, 0
      %v959 = vand.u32 %v954, %v621
      %961 = vmatprep.subr.bf16.mxu0 0
      %962 = vmatpush1.bf16.msra.mxu0 %v959
      %963 = vmatprep.subr.bf16.mxu0 0
      %964 = vmatpush1.bf16.msra.mxu0 0
      %965 = vmatprep.subr.bf16.mxu0 0
      %966 = vmatpush1.bf16.msra.mxu0 0
      %967 = vmatprep.subr.bf16.mxu0 0
      %968 = vmatpush1.bf16.msra.mxu0 0
      %969 = vmatprep.subr.bf16.mxu0 0
      %970 = vmatpush1.bf16.msra.mxu0 0
      %971 = vmatprep.subr.bf16.mxu0 0
      %972 = vmatpush1.bf16.msra.mxu0 0
      %973 = vmatprep.subr.bf16.mxu0 0
      %974 = vmatpush1.bf16.msra.mxu0 0
      %975 = vmatprep.subr.bf16.mxu0 0
      %976 = vmatpush1.bf16.msra.mxu0 0
      %977 = vmatprep.subr.bf16.mxu0 0
      %978 = vmatpush1.bf16.msra.mxu0 0
      %979 = vmatprep.subr.bf16.mxu0 0
      %980 = vmatpush1.bf16.msra.mxu0 0
      %981 = vmatprep.subr.bf16.mxu0 0
      %982 = vmatpush1.bf16.msra.mxu0 0
      %983 = vmatprep.subr.bf16.mxu0 0
      %984 = vmatpush1.bf16.msra.mxu0 0
      %985 = vmatprep.subr.bf16.mxu0 0
      %986 = vmatpush1.bf16.msra.mxu0 0
      %987 = vmatprep.subr.bf16.mxu0 0
      %988 = vmatpush1.bf16.msra.mxu0 0
      %989 = vmatprep.subr.bf16.mxu0 0
      %990 = vmatpush1.bf16.msra.mxu0 0
      %991 = vmatprep.subr.bf16.mxu0 0
      %992 = vmatpush1.bf16.msra.mxu0 0
      %993 = vmatprep.mubr.bf16.mxu0 0
      %994 = vmatmul.mubr.bf16.gmra.mrb[0].mxu0 %v956
      %v995 = vpop.f32.mrb[0].mxu0
      %v996 = vadd.f32 0.0, %v995
      %v997 = vpop.f32.mrb[0].mxu0
      %v998 = vpop.f32.mrb[0].mxu0
      %v999 = vpop.f32.mrb[0].mxu0
      %1000 = vdwg.mxu0
      %1002 = vrot.lane.b32.xlu0 %v772, 4
      %v1003 = vpop.permute.xlu0 %1002
      %1006 = vrot.lane.b32.xlu0 %v884, 8
      %v1007 = vpop.permute.xlu0 %1006
      %1010 = vrot.lane.b32.xlu0 %v996, 12
      %v1011 = vpop.permute.xlu0 %1010
      %v1013 = vsel %vm544, %v660, %v1003
      %vm1014 = vcmask 64512
      %v1015 = vsel %vm1014, %v1013, %v1007
      %vm1016 = vcmask 97280
      %v1017 = vsel %vm1016, %v1015, %v1011
      %v1018 = vld [vmem:[%s6] sm:$0xf]
      %v1019 = vld [vmem:[%s6 + $0x4] sm:$0xf]
      %v1020 = vld [vmem:[%s7] sm:$0x1]
      %v1021 = vpack.c.bf16 %v1017, %v1017
      %v1023 = vlaneseq
      %v1024 = vshrl.u32 %v1023, 7
      %v1025 = vsub.s32 0, %v1024
      %v1026 = vrot.slane %v1020, %v1025
      %v1030 = vunpack.c.l.b16 %v1018
      %v1031 = vunpack.c.l.b16 %v1019
      %v1032 = vpack.c.b16 %v1031, %v1030
      %v1035 = vsel %vm496, %v1021, 0
      %1037 = vmatprep.subr.bf16.mxu0 0
      %1038 = vmatpush1.bf16.msra.mxu0 %v1032
      %1039 = vmatprep.subr.bf16.mxu0 0
      %1040 = vmatpush1.bf16.msra.mxu0 0
      %1041 = vmatprep.subr.bf16.mxu0 0
      %1042 = vmatpush1.bf16.msra.mxu0 0
      %1043 = vmatprep.subr.bf16.mxu0 0
      %1044 = vmatpush1.bf16.msra.mxu0 0
      %1045 = vmatprep.subr.bf16.mxu0 0
      %1046 = vmatpush1.bf16.msra.mxu0 0
      %1047 = vmatprep.subr.bf16.mxu0 0
      %1048 = vmatpush1.bf16.msra.mxu0 0
      %1049 = vmatprep.subr.bf16.mxu0 0
      %1050 = vmatpush1.bf16.msra.mxu0 0
      %1051 = vmatprep.subr.bf16.mxu0 0
      %1052 = vmatpush1.bf16.msra.mxu0 0
      %1053 = vmatprep.subr.bf16.mxu0 0
      %1054 = vmatpush1.bf16.msra.mxu0 0
      %1055 = vmatprep.subr.bf16.mxu0 0
      %1056 = vmatpush1.bf16.msra.mxu0 0
      %1057 = vmatprep.subr.bf16.mxu0 0
      %1058 = vmatpush1.bf16.msra.mxu0 0
      %1059 = vmatprep.subr.bf16.mxu0 0
      %1060 = vmatpush1.bf16.msra.mxu0 0
      %1061 = vmatprep.subr.bf16.mxu0 0
      %1062 = vmatpush1.bf16.msra.mxu0 0
      %1063 = vmatprep.subr.bf16.mxu0 0
      %1064 = vmatpush1.bf16.msra.mxu0 0
      %1065 = vmatprep.subr.bf16.mxu0 0
      %1066 = vmatpush1.bf16.msra.mxu0 0
      %1067 = vmatprep.subr.bf16.mxu0 0
      %1068 = vmatpush1.bf16.msra.mxu0 0
      %1069 = vmatprep.mubr.bf16.mxu0 0
      %1070 = vmatmul.mubr.bf16.gmra.mrb[0].mxu0 %v1035
      %v1071 = vpop.f32.mrb[0].mxu0
      %v1072 = vadd.f32 %v1026, %v1071
      %v1073 = vpop.f32.mrb[0].mxu0
      %v1074 = vpop.f32.mrb[0].mxu0
      %v1075 = vpop.f32.mrb[0].mxu0
      %1076 = vdwg.mxu0
      %v1077 = vadd.f32 %v478, %v1072
      %v1078 = vld [vmem:[%s8] sm:$0x1]
      %v1079 = vld [vmem:[%s9] sm:$0x1]
      %vm1080 = vcmask 126976
      %v1081 = vsel %vm1080, %v1077, 0.0
      %1082 = vadd.xlane.f32.xlu0 %v1081
      %v1083 = vpop.xlane.xlu0 %1082
      %v1084 = vrcp.pop 16.0
      %v1085 = vmul.f32 %v1083, %v1084
      %v1086 = vsub.f32 %v1077, %v1085
      %v1087 = vmul.f32 %v1086, %v1086
      %v1088 = vsel %vm1080, %v1087, 0.0
      %1089 = vadd.xlane.f32.xlu0 %v1088
      %v1090 = vpop.xlane.xlu0 %1089
      %v1091 = vmul.f32 %v1090, %v1084
      %v1092 = vadd.f32 %v1091, 1e-12
      %v1093 = vrsqrt.pop %v1092
      %v1094 = vmul.f32 %v1086, %v1093
      %v1096 = vlaneseq
      %v1097 = vshrl.u32 %v1096, 7
      %v1098 = vsub.s32 0, %v1097
      %v1099 = vrot.slane %v1078, %v1098
      %v1101 = vmul.f32 %v1094, %v1099
      %v1103 = vlaneseq
      %v1104 = vshrl.u32 %v1103, 7
      %v1105 = vsub.s32 0, %v1104
      %v1106 = vrot.slane %v1079, %v1105
      %v1108 = vadd.f32 %v1101, %v1106
      %v1109 = vld [vmem:[%s10] sm:$0xf]
      %v1110 = vld [vmem:[%s10 + $0x4] sm:$0xf]
      %v1111 = vld [vmem:[%s11] sm:$0x1]
      %v1112 = vpack.c.bf16 %v1108, %v1108
      %v1114 = vlaneseq
      %v1115 = vshrl.u32 %v1114, 7
      %v1116 = vsub.s32 0, %v1115
      %v1117 = vrot.slane %v1111, %v1116
      %v1121 = vunpack.c.l.b16 %v1109
      %v1122 = vunpack.c.l.b16 %v1110
      %v1123 = vpack.c.b16 %v1122, %v1121
      %v1126 = vsel %vm496, %v1112, 0
      %1128 = vmatprep.subr.bf16.mxu0 0
      %1129 = vmatpush1.bf16.msra.mxu0 %v1123
      %1130 = vmatprep.subr.bf16.mxu0 0
      %1131 = vmatpush1.bf16.msra.mxu0 0
      %1132 = vmatprep.subr.bf16.mxu0 0
      %1133 = vmatpush1.bf16.msra.mxu0 0
      %1134 = vmatprep.subr.bf16.mxu0 0
      %1135 = vmatpush1.bf16.msra.mxu0 0
      %1136 = vmatprep.subr.bf16.mxu0 0
      %1137 = vmatpush1.bf16.msra.mxu0 0
      %1138 = vmatprep.subr.bf16.mxu0 0
      %1139 = vmatpush1.bf16.msra.mxu0 0
      %1140 = vmatprep.subr.bf16.mxu0 0
      %1141 = vmatpush1.bf16.msra.mxu0 0
      %1142 = vmatprep.subr.bf16.mxu0 0
      %1143 = vmatpush1.bf16.msra.mxu0 0
      %1144 = vmatprep.subr.bf16.mxu0 0
      %1145 = vmatpush1.bf16.msra.mxu0 0
      %1146 = vmatprep.subr.bf16.mxu0 0
      %1147 = vmatpush1.bf16.msra.mxu0 0
      %1148 = vmatprep.subr.bf16.mxu0 0
      %1149 = vmatpush1.bf16.msra.mxu0 0
      %1150 = vmatprep.subr.bf16.mxu0 0
      %1151 = vmatpush1.bf16.msra.mxu0 0
      %1152 = vmatprep.subr.bf16.mxu0 0
      %1153 = vmatpush1.bf16.msra.mxu0 0
      %1154 = vmatprep.subr.bf16.mxu0 0
      %1155 = vmatpush1.bf16.msra.mxu0 0
      %1156 = vmatprep.subr.bf16.mxu0 0
      %1157 = vmatpush1.bf16.msra.mxu0 0
      %1158 = vmatprep.subr.bf16.mxu0 0
      %1159 = vmatpush1.bf16.msra.mxu0 0
      %1160 = vmatprep.mubr.bf16.mxu0 0
      %1161 = vmatmul.mubr.bf16.gmra.mrb[0].mxu0 %v1126
      %v1162 = vpop.f32.mrb[0].mxu0
      %v1163 = vadd.f32 %v1117, %v1162
      %v1164 = vpop.f32.mrb[0].mxu0
      %v1165 = vpop.f32.mrb[0].mxu0
      %v1166 = vpop.f32.mrb[0].mxu0
      %1167 = vdwg.mxu0
      %v1168 = vmul.f32 %v1163, 0.5
      %v1169 = vmul.f32 %v1163, 0.70710677
      %v1170 = vand.u32 2147483647, %v1169
      %v1171 = vmul.f32 %v1170, 0.3275911
      %v1172 = vadd.f32 %v1171, 1.0
      %v1173 = vrcp.pop %v1172
      %v1174 = vmul.f32 1.0, %v1173
      %v1175 = vmul.f32 %v1174, 1.0614054
      %v1176 = vadd.f32 %v1175, -1.4531521
      %v1177 = vmul.f32 %v1176, %v1174
      %v1178 = vadd.f32 %v1177, 1.4214138
      %v1179 = vmul.f32 %v1178, %v1174
      %v1180 = vadd.f32 %v1179, -0.28449672
      %v1181 = vmul.f32 %v1180, %v1174
      %v1182 = vadd.f32 %v1181, 0.2548296
      %v1183 = vmul.f32 %v1182, %v1174
      %v1184 = vsub.f32 0.0, %v1170
      %v1185 = vmul.f32 %v1184, %v1170
      %v1186 = vmul.f32 %v1185, 1.442695
      %v1187 = vpow.pop %v1186
      %v1188 = vmul.f32 %v1183, %v1187
      %v1189 = vsub.f32 1.0, %v1188
      %vm1190 = vcmp.lt.f32.partialorder %v1169, 0.0
      %v1191 = vsub.f32 0.0, %v1189
      %v1192 = vsel %vm1190, %v1191, %v1189
      %v1193 = vadd.f32 %v1192, 1.0
      %v1194 = vmul.f32 %v1168, %v1193
      %v1195 = vld [vmem:[%s12] sm:$0xf]
      %v1196 = vld [vmem:[%s12 + $0x4] sm:$0xf]
      %v1197 = vld [vmem:[%s12 + $0x8] sm:$0xf]
      %v1198 = vld [vmem:[%s12 + $0xc] sm:$0xf]
      %v1199 = vld [vmem:[%s13] sm:$0x1]
      %v1200 = vpack.c.bf16 %v1194, %v1194
      %v1202 = vlaneseq
      %v1203 = vshrl.u32 %v1202, 7
      %v1204 = vsub.s32 0, %v1203
      %v1205 = vrot.slane %v1199, %v1204
      %v1211 = vunpack.c.l.b16 %v1195
      %v1212 = vunpack.c.l.b16 %v1196
      %v1213 = vunpack.c.l.b16 %v1197
      %v1214 = vunpack.c.l.b16 %v1198
      %v1215 = vpack.c.b16 %v1212, %v1211
      %v1216 = vpack.c.b16 %v1214, %v1213
      %vm1219 = vcmask 261120
      %v1221 = vsel %vm1219, %v1200, 0
      %1223 = vmatprep.subr.bf16.mxu0 0
      %1224 = vmatpush1.bf16.msra.mxu0 %v1215
      %1225 = vmatprep.subr.bf16.mxu0 0
      %1226 = vmatpush1.bf16.msra.mxu0 %v1216
      %1227 = vmatprep.subr.bf16.mxu0 0
      %1228 = vmatpush1.bf16.msra.mxu0 0
      %1229 = vmatprep.subr.bf16.mxu0 0
      %1230 = vmatpush1.bf16.msra.mxu0 0
      %1231 = vmatprep.subr.bf16.mxu0 0
      %1232 = vmatpush1.bf16.msra.mxu0 0
      %1233 = vmatprep.subr.bf16.mxu0 0
      %1234 = vmatpush1.bf16.msra.mxu0 0
      %1235 = vmatprep.subr.bf16.mxu0 0
      %1236 = vmatpush1.bf16.msra.mxu0 0
      %1237 = vmatprep.subr.bf16.mxu0 0
      %1238 = vmatpush1.bf16.msra.mxu0 0
      %1239 = vmatprep.subr.bf16.mxu0 0
      %1240 = vmatpush1.bf16.msra.mxu0 0
      %1241 = vmatprep.subr.bf16.mxu0 0
      %1242 = vmatpush1.bf16.msra.mxu0 0
      %1243 = vmatprep.subr.bf16.mxu0 0
      %1244 = vmatpush1.bf16.msra.mxu0 0
      %1245 = vmatprep.subr.bf16.mxu0 0
      %1246 = vmatpush1.bf16.msra.mxu0 0
      %1247 = vmatprep.subr.bf16.mxu0 0
      %1248 = vmatpush1.bf16.msra.mxu0 0
      %1249 = vmatprep.subr.bf16.mxu0 0
      %1250 = vmatpush1.bf16.msra.mxu0 0
      %1251 = vmatprep.subr.bf16.mxu0 0
      %1252 = vmatpush1.bf16.msra.mxu0 0
      %1253 = vmatprep.subr.bf16.mxu0 0
      %1254 = vmatpush1.bf16.msra.mxu0 0
      %1255 = vmatprep.mubr.bf16.mxu0 0
      %1256 = vmatmul.mubr.bf16.gmra.mrb[0].mxu0 %v1221
      %v1257 = vpop.f32.mrb[0].mxu0
      %v1258 = vadd.f32 %v1205, %v1257
      %v1259 = vpop.f32.mrb[0].mxu0
      %v1260 = vpop.f32.mrb[0].mxu0
      %v1261 = vpop.f32.mrb[0].mxu0
      %1262 = vdwg.mxu0
      %v1263 = vadd.f32 %v1077, %v1258
      %1264 = vst.msk [vmem:[%s476] sm:$0x1f] %vm1080, %v1263
      %p1265 = scmp.lt.s32.totalorder %s25, 1
      %s1266 = scalar_select %p1265, %s25, 1
      %s1267 = smul.addr %s1266, 8
      %s1268 = scalar_lea.vmem %s14, %s1267
      // Predicated region
      $region77: #{ltt_vit_explainer_forward.17} parent=75 // pred_check
        %p1269 = pneg %p347
      $region78: #{ltt_vit_explainer_forward.17} parent=75 // pred_check_branch
        %1271 = sbr.rel (%p1269) target = $region80
      $region79: #{ltt_vit_explainer_forward.17} parent=75 // pred_region
        _
      $region80: #{ltt_vit_explainer_forward.17} parent=75 // pred_fallthru
        _
    $region76: #{ltt_vit_explainer_forward.17} parent=5 // pred_fallthru
      _
    %p1272 = scmp.le.s32.totalorder 2, %s20
    // Predicated region
    $region81: #{ltt_vit_explainer_forward.17} parent=5 // pred_check
      %p1273 = pneg %p1272
    $region82: #{ltt_vit_explainer_forward.17} parent=5 // pred_check_branch
      %1275 = sbr.rel (%p1273) target = $region84
    $region83: #{ltt_vit_explainer_forward.17} parent=5 // pred_region
      %s1276 = ssub.s32 %s20, 2
      // Predicated region
      $region85: #{ltt_vit_explainer_forward.17} parent=83 // pred_check
        %p1277 = pneg %p353
      $region86: #{ltt_vit_explainer_forward.17} parent=83 // pred_check_branch
        %1279 = sbr.rel (%p1277) target = $region88
      $region87: #{ltt_vit_explainer_forward.17} parent=83 // pred_region
        %p1280 = scmp.lt.s32.totalorder %s26, 1
        %s1281 = scalar_select %p1280, %s26, 1
        %s1282 = smul.addr %s1281, 8
        %s1283 = scalar_lea.vmem %s14, %s1282
      $region88: #{ltt_vit_explainer_forward.17} parent=83 // pred_fallthru
        _
    $region84: #{ltt_vit_explainer_forward.17} parent=5 // pred_fallthru
      _
  $region6: #{ltt_vit_explainer_forward.17} parent=0 // loop_footer
    %s24 = sadd.s32 1, %s20
  $region7: #{ltt_vit_explainer_forward.17} parent=0 // loop_footer_branch
    %19 = sbr.rel target = $region3
  $region8: #{ltt_vit_explainer_forward.17} parent=0 // loop_exit
    _

// kernel: ltt_vit_explainer_forward.15
$region0: #{ltt_vit_explainer_forward.15}
  #allocation0 [shape = 'u32[]', space=smem, size = 0x4, offset = 0x4, fixed_abs, tag = 'smem constant byte address 0x4 - core index']
  #allocation1 [shape = 'u32[144,128]{1,0:T(1,128)}', space=vmem, size = 0x12000, scoped, tag = 'internal scratch']
  %s0 = inlined_call_operand.vmem [shape: f32[2,32], index: 0, kind: input, shape index: {}]
  %s1 = inlined_call_operand.vmem [shape: f32[1,32], index: 1, kind: input, shape index: {}]
  %s2 = inlined_call_operand.vmem [shape: f32[1,32], index: 2, kind: input, shape index: {}]
  %s3 = inlined_call_operand.vmem [shape: bf16[32,10], index: 3, kind: input, shape index: {}]
  %s4 = inlined_call_operand.vmem [shape: f32[1,10], index: 4, kind: input, shape index: {}]
  %s5 = inlined_call_operand.hbm [shape: f32[2,10], index: 5, kind: output, shape index: {}]
  %s6 = sld [smem:[#allocation0]]
  $region30: #{ltt_vit_explainer_forward.15} parent=0
    _
  %s8 = ssub.s32 1, %s6
  %s9 = scalar_select 0, %s8, %s6
  $region1: #{ltt_vit_explainer_forward.15} parent=0
    #allocation2 [shape = 'u8[1024]{0}', space=vmem, size = 0x400, scoped, tag = 'output window, operand 0, single buffered']
    #allocation3 [shape = 's32[1]{0}', space=sflag, size = 0x4, scoped, tag = 'scoped memory for ltt_vit_explainer_forward.15']
    %10 = vsyncpa [#allocation3], 0
    // Predicated region
    $region2: #{ltt_vit_explainer_forward.15} parent=1 // pred_check
      _
    $region3: #{ltt_vit_explainer_forward.15} parent=1 // pred_check_branch
      %12 = sbr.rel (0) target = $region5
    $region4: #{ltt_vit_explainer_forward.15} parent=1 // pred_region
      _
    $region5: #{ltt_vit_explainer_forward.15} parent=1 // pred_fallthru
      _
    // Predicated region
    $region6: #{ltt_vit_explainer_forward.15} parent=1 // pred_check
      _
    $region7: #{ltt_vit_explainer_forward.15} parent=1 // pred_check_branch
      %14 = sbr.rel (0) target = $region9
    $region8: #{ltt_vit_explainer_forward.15} parent=1 // pred_region
      _
    $region9: #{ltt_vit_explainer_forward.15} parent=1 // pred_fallthru
      _
    // Predicated region
    $region10: #{ltt_vit_explainer_forward.15} parent=1 // pred_check
      _
    $region11: #{ltt_vit_explainer_forward.15} parent=1 // pred_check_branch
      %16 = sbr.rel (0) target = $region13
    $region12: #{ltt_vit_explainer_forward.15} parent=1 // pred_region
      _
    $region13: #{ltt_vit_explainer_forward.15} parent=1 // pred_fallthru
      _
    // Predicated region
    $region14: #{ltt_vit_explainer_forward.15} parent=1 // pred_check
      _
    $region15: #{ltt_vit_explainer_forward.15} parent=1 // pred_check_branch
      %18 = sbr.rel (0) target = $region17
    $region16: #{ltt_vit_explainer_forward.15} parent=1 // pred_region
      _
    $region17: #{ltt_vit_explainer_forward.15} parent=1 // pred_fallthru
      _
    // Predicated region
    $region18: #{ltt_vit_explainer_forward.15} parent=1 // pred_check
      _
    $region19: #{ltt_vit_explainer_forward.15} parent=1 // pred_check_branch
      %20 = sbr.rel (0) target = $region21
    $region20: #{ltt_vit_explainer_forward.15} parent=1 // pred_region
      _
    $region21: #{ltt_vit_explainer_forward.15} parent=1 // pred_fallthru
      _
    %v22 = vld [vmem:[%s0] sm:$0x3]
    %v23 = vld [vmem:[%s1] sm:$0x1]
    %v24 = vld [vmem:[%s2] sm:$0x1]
    %vm25 = vcmask 254976
    %v26 = vsel %vm25, %v22, 0.0
    %27 = vadd.xlane.f32.xlu0 %v26
    %v28 = vpop.xlane.xlu0 %27
    %v29 = vrcp.pop 32.0
    %v30 = vmul.f32 %v28, %v29
    %v31 = vsub.f32 %v22, %v30
    %v32 = vmul.f32 %v31, %v31
    %v33 = vsel %vm25, %v32, 0.0
    %34 = vadd.xlane.f32.xlu0 %v33
    %v35 = vpop.xlane.xlu0 %34
    %v36 = vmul.f32 %v35, %v29
    %v37 = vadd.f32 %v36, 1e-12
    %v38 = vrsqrt.pop %v37
    %v39 = vmul.f32 %v31, %v38
    %v41 = vlaneseq
    %v42 = vshrl.u32 %v41, 7
    %v43 = vsub.s32 0, %v42
    %v44 = vrot.slane %v23, %v43
    %v46 = vmul.f32 %v39, %v44
    %v48 = vlaneseq
    %v49 = vshrl.u32 %v48, 7
    %v50 = vsub.s32 0, %v49
    %v51 = vrot.slane %v24, %v50
    %v53 = vadd.f32 %v46, %v51
    %v54 = vld [vmem:[%s3] sm:$0xf]
    %v55 = vld [vmem:[%s3 + $0x4] sm:$0xf]
    %v56 = vld [vmem:[%s3 + $0x8] sm:$0xf]
    %v57 = vld [vmem:[%s3 + $0xc] sm:$0xf]
    %v58 = vld [vmem:[%s4] sm:$0x1]
    %v59 = vpack.c.bf16 %v53, %v53
    %v61 = vlaneseq
    %v62 = vshrl.u32 %v61, 7
    %v63 = vsub.s32 0, %v62
    %v64 = vrot.slane %v58, %v63
    %v70 = vunpack.c.l.b16 %v54
    %v71 = vunpack.c.l.b16 %v55
    %v72 = vunpack.c.l.b16 %v56
    %v73 = vunpack.c.l.b16 %v57
    %v74 = vpack.c.b16 %v71, %v70
    %v75 = vpack.c.b16 %v73, %v72
    %vm78 = vcmask 261120
    %v80 = vsel %vm78, %v59, 0
    %82 = vmatprep.subr.bf16.mxu0 0
    %83 = vmatpush1.bf16.msra.mxu0 %v74
    %84 = vmatprep.subr.bf16.mxu0 0
    %85 = vmatpush1.bf16.msra.mxu0 %v75
    %86 = vmatprep.subr.bf16.mxu0 0
    %87 = vmatpush1.bf16.msra.mxu0 0
    %88 = vmatprep.subr.bf16.mxu0 0
    %89 = vmatpush1.bf16.msra.mxu0 0
    %90 = vmatprep.subr.bf16.mxu0 0
    %91 = vmatpush1.bf16.msra.mxu0 0
    %92 = vmatprep.subr.bf16.mxu0 0
    %93 = vmatpush1.bf16.msra.mxu0 0
    %94 = vmatprep.subr.bf16.mxu0 0
    %95 = vmatpush1.bf16.msra.mxu0 0
    %96 = vmatprep.subr.bf16.mxu0 0
    %97 = vmatpush1.bf16.msra.mxu0 0
    %98 = vmatprep.subr.bf16.mxu0 0
    %99 = vmatpush1.bf16.msra.mxu0 0
    %100 = vmatprep.subr.bf16.mxu0 0
    %101 = vmatpush1.bf16.msra.mxu0 0
    %102 = vmatprep.subr.bf16.mxu0 0
    %103 = vmatpush1.bf16.msra.mxu0 0
    %104 = vmatprep.subr.bf16.mxu0 0
    %105 = vmatpush1.bf16.msra.mxu0 0
    %106 = vmatprep.subr.bf16.mxu0 0
    %107 = vmatpush1.bf16.msra.mxu0 0
    %108 = vmatprep.subr.bf16.mxu0 0
    %109 = vmatpush1.bf16.msra.mxu0 0
    %110 = vmatprep.subr.bf16.mxu0 0
    %111 = vmatpush1.bf16.msra.mxu0 0
    %112 = vmatprep.subr.bf16.mxu0 0
    %113 = vmatpush1.bf16.msra.mxu0 0
    %114 = vmatprep.mubr.bf16.mxu0 0
    %115 = vmatmul.mubr.bf16.gmra.mrb[0].mxu0 %v80
    %v116 = vpop.f32.mrb[0].mxu0
    %v117 = vadd.f32 %v64, %v116
    %v118 = vpop.f32.mrb[0].mxu0
    %v119 = vpop.f32.mrb[0].mxu0
    %v120 = vpop.f32.mrb[0].mxu0
    %121 = vdwg.mxu0
    %vm122 = vcmask 74752
    %v123 = vsel %vm122, %v117, -inf
    %124 = vmax.xlane.f32.xlu0 %v123
    %v125 = vpop.xlane.xlu0 %124
    %v126 = vsub.f32 %v117, %v125
    %v127 = vmul.f32 %v126, 1.442695
    %v128 = vpow.pop %v127
    %v129 = vsel %vm122, %v128, 0.0
    %130 = vadd.xlane.f32.xlu0 %v129
    %v131 = vpop.xlane.xlu0 %130
    %v132 = vrcp.pop %v131
    %v133 = vmul.f32 %v128, %v132
    %134 = vst.msk [vmem:[#allocation2] sm:$0x3] %vm122, %v133
    // Predicated region
    $region22: #{ltt_vit_explainer_forward.15} parent=1 // pred_check
      _
    $region23: #{ltt_vit_explainer_forward.15} parent=1 // pred_check_branch
      %136 = sbr.rel (0) target = $region25
    $region24: #{ltt_vit_explainer_forward.15} parent=1 // pred_region
      %s138 = ssub.s32 32, 32
      %139 = vsyncadd [#allocation3], %s138
      %s141 = sshll.u32 [#allocation2], 4
      %s142 = int_to_ptr.vmem [resolvable:$true] %s141
      %144 = dma.vmem_to_hbm [thread:$0]  %s142, 32, %s5, [#allocation3]
    $region25: #{ltt_vit_explainer_forward.15} parent=1 // pred_fallthru
      _
    // Predicated region
    $region26: #{ltt_vit_explainer_forward.15} parent=1 // pred_check
      _
    $region27: #{ltt_vit_explainer_forward.15} parent=1 // pred_check_branch
      %146 = sbr.rel (0) target = $region29
    $region28: #{ltt_vit_explainer_forward.15} parent=1 // pred_region
      %147 = dma.done [#allocation3], 32
    $region29: #{ltt_vit_explainer_forward.15} parent=1 // pred_fallthru
      _
    %148 = vsyncpa [#allocation3], 1

</llo_original>
